<compile_context>
chip_gen: v6e
topology: v6e:2x2x1
jax: 0.10.0
libtpu: 0.0.40
codegen_flags: <defaults>
</compile_context>

<pallas_src>
import functools

import jax
import jax.numpy as jnp
from jax import lax
from jax.experimental import pallas as pl
from jax.experimental.pallas import tpu as pltpu


def _zero_border(ref, H, W):
    """Zero the 1-pixel spatial border of a (B, H+2, W+2, C) VMEM scratch."""
    B, _, _, C = ref.shape
    z_row = jnp.zeros((B, 1, W + 2, C), ref.dtype)
    z_col = jnp.zeros((B, H + 2, 1, C), ref.dtype)
    ref[:, 0:1, :, :] = z_row
    ref[:, H + 1:H + 2, :, :] = z_row
    ref[:, :, 0:1, :] = z_col
    ref[:, :, W + 1:W + 2, :] = z_col


def _residual_block_kernel(x_ref, w1_ref, b1_ref, w2_ref, b2_ref, ws_ref, bs_ref,
                           out_ref, xp_ref, h1p_ref):
    """Processes a block of B images per grid step.

    x_ref   : (B, H, W, Cin)        bf16 input block
    w1_ref  : (9, Cin, Cmid)        conv1 weights (BN1 scale folded in), bf16
    b1_ref  : (1, Cmid)             folded BN1 bias, f32
    w2_ref  : (9, Cmid, CP)         conv2 weights (BN2 scale folded, out padded), bf16
    b2_ref  : (1, CP)               folded BN2 bias (padded), f32
    ws_ref  : (Cin, CP)             1x1 shortcut weights (BN scale folded, padded), bf16
    bs_ref  : (1, CP)               folded shortcut-BN bias (padded), f32
    out_ref : (B, H, W, CP)         f32 output, lane-dense (CP multiple of 128)
    xp_ref  : (B, H+2, W+2, Cin)    f32 scratch: zero-padded input
    h1p_ref : (B, H+2, W+2, Cmid)   f32 scratch: zero-padded conv1 output
    """
    B, H, W, CP = out_ref.shape
    Cin = x_ref.shape[3]
    Cmid = h1p_ref.shape[3]
    M = B * H * W

    # Stage the input into a spatially zero-padded scratch.  Only the 1-wide border
    # is (re)zeroed; the interior is fully overwritten every step, so iterations are
    # independent and the batch grid axis can run in parallel across cores.
    _zero_border(xp_ref, H, W)
    xp_ref[:, 1:H + 1, 1:W + 1, :] = x_ref[...].astype(xp_ref.dtype)
    xp = xp_ref[...]

    # The 9 shifted 3x3 taps, flattened to (M, Cin) bf16 matmul operands.
    # Tap 4 (kh=kw=1) is the un-shifted input and doubles as the 1x1-shortcut input.
    wins1 = [xp[:, kh:kh + H, kw:kw + W, :].reshape(M, Cin).astype(jnp.bfloat16)
             for kh in range(3) for kw in range(3)]

    # conv1 (3x3, pad 1) + folded BN1 + ReLU.  One big-M matmul per tap with f32
    # accumulation (each tap's K already fits in a single MXU pass at these widths).
    acc1 = jnp.dot(wins1[0], w1_ref[0], preferred_element_type=jnp.float32)
    for t in range(1, 9):
        acc1 = acc1 + jnp.dot(wins1[t], w1_ref[t], preferred_element_type=jnp.float32)
    h1 = jnp.maximum(acc1 + b1_ref[...], 0.0)                    # (M, Cmid) f32

    # Shortcut: 1x1 conv + folded BN, reusing the centre tap.
    sc = jnp.dot(wins1[4], ws_ref[...], preferred_element_type=jnp.float32)
    sc = sc + bs_ref[...]                                        # (M, CP) f32

    # Stage conv1 output into a zero-padded scratch for conv2's pad=1 windows.
    _zero_border(h1p_ref, H, W)
    h1p_ref[:, 1:H + 1, 1:W + 1, :] = h1.reshape(B, H, W, Cmid)
    h1p = h1p_ref[...]

    wins2 = [h1p[:, kh:kh + H, kw:kw + W, :].reshape(M, Cmid).astype(jnp.bfloat16)
             for kh in range(3) for kw in range(3)]

    # conv2 (3x3, pad 1) + folded BN2.
    acc2 = jnp.dot(wins2[0], w2_ref[0], preferred_element_type=jnp.float32)
    for t in range(1, 9):
        acc2 = acc2 + jnp.dot(wins2[t], w2_ref[t], preferred_element_type=jnp.float32)

    # Residual add + final ReLU; full-lane (CP = multiple of 128) unmasked store.
    out = jnp.maximum(acc2 + b2_ref[...] + sc, 0.0)
    out_ref[...] = out.reshape(B, H, W, CP).astype(out_ref.dtype)


def _pick_batch_block(N, H, W, Cin, Cmid, CP,
                      vmem_budget=12 * 1024 * 1024, min_steps=2):
    """Largest divisor of N whose VMEM footprint fits the budget while keeping at
    least `min_steps` grid steps (so a 2-TensorCore chip has work for both cores)."""
    m = H * W
    per_image = (
        2 * m * Cin * 2                           # double-buffered bf16 input block
        + 2 * m * CP * 4                          # double-buffered f32 output block
        + (H + 2) * (W + 2) * (Cin + Cmid) * 4    # padded f32 scratches
        + m * CP * 4 * 3                          # f32 accumulators / output value
        + m * 9 * (Cin + Cmid) * 6                # window temporaries (f32 + bf16)
    )
    best = 1
    for b in range(1, N + 1):
        if N % b != 0 or b * per_image > vmem_budget:
            continue
        if N // b < min(min_steps, N):
            continue
        best = b
    return best


def residual_block_pallas(x_nchw, packed_params, stride=1, batch_block=None):
    """Fused residual block.  x_nchw: (N, Cin, H, W) f32 -> (N, Cout, H, W) f32.

    `packed_params` comes from `prepare_params` (BN folded, channels padded, bf16).
    """
    # TODO(synk): stride != 1 (strided spatial sampling) is not implemented in the
    # fused kernel; stride=1 is the nn.Module default and the path exercised here.
    assert stride == 1, "only stride=1 supported in this Pallas kernel"
    w1, b1, w2, b2, ws, bs = packed_params

    N, Cin, H, W = x_nchw.shape
    Cmid = w1.shape[-1]            # real out_channels
    CP = w2.shape[-1]              # lane-padded out_channels (multiple of 128)

    # NCHW -> NHWC (channels on lanes) + bf16 cast for the MXU.
    # TODO(synk): an NHWC-end-to-end pipeline would remove this transpose HBM pass.
    x_nhwc = jnp.transpose(x_nchw, (0, 2, 3, 1)).astype(jnp.bfloat16)

    if batch_block is None:
        batch_block = _pick_batch_block(N, H, W, Cin, Cmid, CP)
    assert N % batch_block == 0, "batch_block must divide N"
    grid = (N // batch_block,)

    out = pl.pallas_call(
        _residual_block_kernel,
        out_shape=jax.ShapeDtypeStruct((N, H, W, CP), jnp.float32),
        grid_spec=pltpu.PrefetchScalarGridSpec(
            num_scalar_prefetch=0,
            grid=grid,
            in_specs=[
                pl.BlockSpec((batch_block, H, W, Cin), lambda n: (n, 0, 0, 0)),
                pl.BlockSpec((9, Cin, Cmid), lambda n: (0, 0, 0)),
                pl.BlockSpec((1, Cmid), lambda n: (0, 0)),
                pl.BlockSpec((9, Cmid, CP), lambda n: (0, 0, 0)),
                pl.BlockSpec((1, CP), lambda n: (0, 0)),
                pl.BlockSpec((Cin, CP), lambda n: (0, 0)),
                pl.BlockSpec((1, CP), lambda n: (0, 0)),
            ],
            out_specs=pl.BlockSpec((batch_block, H, W, CP),
                                   lambda n: (n, 0, 0, 0)),
            scratch_shapes=[
                pltpu.VMEM((batch_block, H + 2, W + 2, Cin), jnp.float32),
                pltpu.VMEM((batch_block, H + 2, W + 2, Cmid), jnp.float32),
            ],
        ),
        compiler_params=pltpu.CompilerParams(
            dimension_semantics=("parallel",),
            vmem_limit_bytes=32 * 1024 * 1024,
        ),
    )(x_nhwc, w1, b1, w2, b2, ws, bs)

    # Drop the lane padding and go back to NCHW to match the PyTorch module contract.
    return jnp.transpose(out[..., :Cmid], (0, 3, 1, 2))


# ----------------------------- parameters & reference -----------------------------

def make_params(key, in_channels, out_channels):
    """Deterministic parameters mirroring the PyTorch module (eval mode).
    Conv weights are HWIO; each BatchNorm is (gamma, beta, running_mean, running_var)."""
    ks = jax.random.split(key, 6)

    def bn(k, c):
        k1, k2, k3, k4 = jax.random.split(k, 4)
        return (jax.random.uniform(k1, (c,), jnp.float32, 0.5, 1.5),   # gamma
                0.1 * jax.random.normal(k2, (c,), jnp.float32),        # beta
                0.1 * jax.random.normal(k3, (c,), jnp.float32),        # running_mean
                jax.random.uniform(k4, (c,), jnp.float32, 0.5, 1.5))   # running_var

    return dict(
        w1=0.1 * jax.random.normal(ks[0], (3, 3, in_channels, out_channels), jnp.float32),
        w2=0.1 * jax.random.normal(ks[1], (3, 3, out_channels, out_channels), jnp.float32),
        ws=0.1 * jax.random.normal(ks[2], (in_channels, out_channels), jnp.float32),
        bn1=bn(ks[3], out_channels),
        bn2=bn(ks[4], out_channels),
        bns=bn(ks[5], out_channels),
    )


def _bn_scale_bias(bn, eps=1e-5):
    gamma, beta, mean, var = bn
    scale = gamma / jnp.sqrt(var + eps)
    return scale, beta - mean * scale


def prepare_params(params, lane=128):
    """One-time constant transform for the kernel:
      * fold eval-mode BN scales into the conv weights (only bias adds remain),
      * pad the final output channels up to a multiple of `lane` (lane-dense stores),
      * reshape the 3x3 kernels to (9, Cin, Cout) matmul form,
      * cast weights to bf16 (biases stay f32)."""
    Cin = params["w1"].shape[2]
    Cout = params["w1"].shape[3]
    CP = ((Cout + lane - 1) // lane) * lane
    pad = CP - Cout

    s1, b1 = _bn_scale_bias(params["bn1"])
    s2, b2 = _bn_scale_bias(params["bn2"])
    ss, bs = _bn_scale_bias(params["bns"])

    w1 = (params["w1"] * s1).reshape(9, Cin, Cout)
    w2 = jnp.pad((params["w2"] * s2).reshape(9, Cout, Cout),
                 ((0, 0), (0, 0), (0, pad)))
    ws = jnp.pad(params["ws"] * ss, ((0, 0), (0, pad)))
    b1 = b1.reshape(1, Cout)
    b2 = jnp.pad(b2.reshape(1, Cout), ((0, 0), (0, pad)))
    bs = jnp.pad(bs.reshape(1, Cout), ((0, 0), (0, pad)))

    return (w1.astype(jnp.bfloat16), b1,
            w2.astype(jnp.bfloat16), b2,
            ws.astype(jnp.bfloat16), bs)


def residual_block_ref(x_nchw, params):
    """Pure-JAX f32 reference matching the PyTorch module in eval mode."""
    s1, b1 = _bn_scale_bias(params["bn1"])
    s2, b2 = _bn_scale_bias(params["bn2"])
    ss, bs = _bn_scale_bias(params["bns"])
    x = jnp.transpose(x_nchw, (0, 2, 3, 1))
    dn = ('NHWC', 'HWIO', 'NHWC')
    conv = functools.partial(lax.conv_general_dilated, window_strides=(1, 1),
                             dimension_numbers=dn)
    h1 = jnp.maximum(conv(x, params["w1"], padding=[(1, 1), (1, 1)]) * s1 + b1, 0.0)
    out2 = conv(h1, params["w2"], padding=[(1, 1), (1, 1)]) * s2 + b2
    sc = conv(x, params["ws"][None, None], padding=[(0, 0), (0, 0)]) * ss + bs
    return jnp.transpose(jnp.maximum(out2 + sc, 0.0), (0, 3, 1, 2))


if __name__ == "__main__":
    key = jax.random.PRNGKey(0)
    kx, kp = jax.random.split(key)

    # in_channels != out_channels so the 1x1-conv/BN shortcut path is exercised;
    # N=4 lets the kernel batch 2 images per grid step while keeping 2 grid steps.
    N, Cin, Cout, H, W = 4, 4, 8, 16, 16
    x = jax.random.normal(kx, (N, Cin, H, W), jnp.float32)
    params = make_params(kp, Cin, Cout)
    packed = prepare_params(params)

    out = residual_block_pallas(x, packed, stride=1)
    out = jax.block_until_ready(out)

    ref = residual_block_ref(x, params)
    assert out.shape == (N, Cout, H, W)
    # bf16 matmul inputs with f32 accumulation -> slightly looser tolerance than pure f32.
    max_err = float(jnp.max(jnp.abs(out - ref)))
    assert jnp.allclose(out, ref, atol=3e-2, rtol=3e-2), (
        f"Pallas output mismatch vs JAX reference (max abs err {max_err:.4g})")
    print("KERNEL_OK")
</pallas_src>

<mosaic_0001>
module attributes {stable_mosaic.version = 11 : i64} {
  func.func @_residual_block_kernel(%arg0: i32, %arg1: memref<2x16x16x4xbf16, #tpu.memory_space<vmem>>, %arg2: memref<9x4x8xbf16, #tpu.memory_space<vmem>>, %arg3: memref<1x8xf32, #tpu.memory_space<vmem>>, %arg4: memref<9x8x128xbf16, #tpu.memory_space<vmem>>, %arg5: memref<1x128xf32, #tpu.memory_space<vmem>>, %arg6: memref<4x128xbf16, #tpu.memory_space<vmem>>, %arg7: memref<1x128xf32, #tpu.memory_space<vmem>>, %arg8: memref<2x16x16x128xf32, #tpu.memory_space<vmem>>, %arg9: memref<2x18x18x4xf32, #tpu.memory_space<vmem>>, %arg10: memref<2x18x18x8xf32, #tpu.memory_space<vmem>>) attributes {dimension_semantics = [#tpu.dimension_semantics<parallel>], iteration_bounds = array<i64: 2>, scalar_prefetch = 0 : i64, scratch_operands = 2 : i64, tpu.core_type = #tpu.core_type<tc>, window_params = [{transform_indices = @transform_0, window_bounds = array<i64: 2, 16, 16, 4>}, {pipeline_mode = #tpu.pipeline_mode<synchronous>, transform_indices = @transform_1, window_bounds = array<i64: 9, 4, 8>}, {pipeline_mode = #tpu.pipeline_mode<synchronous>, transform_indices = @transform_2, window_bounds = array<i64: 1, 8>}, {pipeline_mode = #tpu.pipeline_mode<synchronous>, transform_indices = @transform_3, window_bounds = array<i64: 9, 8, 128>}, {pipeline_mode = #tpu.pipeline_mode<synchronous>, transform_indices = @transform_4, window_bounds = array<i64: 1, 128>}, {pipeline_mode = #tpu.pipeline_mode<synchronous>, transform_indices = @transform_5, window_bounds = array<i64: 4, 128>}, {pipeline_mode = #tpu.pipeline_mode<synchronous>, transform_indices = @transform_6, window_bounds = array<i64: 1, 128>}, {transform_indices = @transform_7, window_bounds = array<i64: 2, 16, 16, 128>}]} {
    %cst = arith.constant 0.000000e+00 : f32
    %0 = vector.broadcast %cst : f32 to vector<2x1x18x4xf32>
    %cst_0 = arith.constant 0.000000e+00 : f32
    %1 = vector.broadcast %cst_0 : f32 to vector<2x18x1x4xf32>
    %c0 = arith.constant 0 : index
    %c0_1 = arith.constant 0 : index
    %c0_2 = arith.constant 0 : index
    %c0_3 = arith.constant 0 : index
    %2 = vector.load %arg9[%c0, %c0_1, %c0_2, %c0_3] : memref<2x18x18x4xf32, #tpu.memory_space<vmem>>, vector<2x1x18x4xf32>
    tpu.vector_store %arg9[%c0, %c0_1, %c0_2, %c0_3], %0 {strides = array<i32>} : memref<2x18x18x4xf32, #tpu.memory_space<vmem>>, vector<2x1x18x4xf32>,
    %c0_4 = arith.constant 0 : index
    %c17 = arith.constant 17 : index
    %c0_5 = arith.constant 0 : index
    %c0_6 = arith.constant 0 : index
    %3 = vector.load %arg9[%c0_4, %c17, %c0_5, %c0_6] : memref<2x18x18x4xf32, #tpu.memory_space<vmem>>, vector<2x1x18x4xf32>
    tpu.vector_store %arg9[%c0_4, %c17, %c0_5, %c0_6], %0 {strides = array<i32>} : memref<2x18x18x4xf32, #tpu.memory_space<vmem>>, vector<2x1x18x4xf32>,
    %c0_7 = arith.constant 0 : index
    %c0_8 = arith.constant 0 : index
    %c0_9 = arith.constant 0 : index
    %c0_10 = arith.constant 0 : index
    %4 = vector.load %arg9[%c0_7, %c0_8, %c0_9, %c0_10] : memref<2x18x18x4xf32, #tpu.memory_space<vmem>>, vector<2x18x1x4xf32>
    tpu.vector_store %arg9[%c0_7, %c0_8, %c0_9, %c0_10], %1 {strides = array<i32>} : memref<2x18x18x4xf32, #tpu.memory_space<vmem>>, vector<2x18x1x4xf32>,
    %c0_11 = arith.constant 0 : index
    %c0_12 = arith.constant 0 : index
    %c17_13 = arith.constant 17 : index
    %c0_14 = arith.constant 0 : index
    %5 = vector.load %arg9[%c0_11, %c0_12, %c17_13, %c0_14] : memref<2x18x18x4xf32, #tpu.memory_space<vmem>>, vector<2x18x1x4xf32>
    tpu.vector_store %arg9[%c0_11, %c0_12, %c17_13, %c0_14], %1 {strides = array<i32>} : memref<2x18x18x4xf32, #tpu.memory_space<vmem>>, vector<2x18x1x4xf32>,
    %c0_15 = arith.constant 0 : index
    %c0_16 = arith.constant 0 : index
    %c0_17 = arith.constant 0 : index
    %c0_18 = arith.constant 0 : index
    %6 = vector.load %arg1[%c0_15, %c0_16, %c0_17, %c0_18] : memref<2x16x16x4xbf16, #tpu.memory_space<vmem>>, vector<2x16x16x4xbf16>
    %7 = arith.extf %6 : vector<2x16x16x4xbf16> to vector<2x16x16x4xf32>
    %c0_19 = arith.constant 0 : index
    %c1 = arith.constant 1 : index
    %c1_20 = arith.constant 1 : index
    %c0_21 = arith.constant 0 : index
    %8 = vector.load %arg9[%c0_19, %c1, %c1_20, %c0_21] : memref<2x18x18x4xf32, #tpu.memory_space<vmem>>, vector<2x16x16x4xf32>
    tpu.vector_store %arg9[%c0_19, %c1, %c1_20, %c0_21], %7 {strides = array<i32>} : memref<2x18x18x4xf32, #tpu.memory_space<vmem>>, vector<2x16x16x4xf32>,
    %c0_22 = arith.constant 0 : index
    %c0_23 = arith.constant 0 : index
    %c0_24 = arith.constant 0 : index
    %c0_25 = arith.constant 0 : index
    %9 = vector.load %arg9[%c0_22, %c0_23, %c0_24, %c0_25] : memref<2x18x18x4xf32, #tpu.memory_space<vmem>>, vector<2x18x18x4xf32>
    %10 = vector.extract_strided_slice %9 {offsets = [0, 0, 0, 0], sizes = [2, 16, 16, 4], strides = [1, 1, 1, 1]} : vector<2x18x18x4xf32> to vector<2x16x16x4xf32>
    %11 = vector.shape_cast %10 : vector<2x16x16x4xf32> to vector<512x4xf32>
    %12 = arith.truncf %11 : vector<512x4xf32> to vector<512x4xbf16>
    %13 = vector.extract_strided_slice %9 {offsets = [0, 0, 1, 0], sizes = [2, 16, 16, 4], strides = [1, 1, 1, 1]} : vector<2x18x18x4xf32> to vector<2x16x16x4xf32>
    %14 = vector.shape_cast %13 : vector<2x16x16x4xf32> to vector<512x4xf32>
    %15 = arith.truncf %14 : vector<512x4xf32> to vector<512x4xbf16>
    %16 = vector.extract_strided_slice %9 {offsets = [0, 0, 2, 0], sizes = [2, 16, 16, 4], strides = [1, 1, 1, 1]} : vector<2x18x18x4xf32> to vector<2x16x16x4xf32>
    %17 = vector.shape_cast %16 : vector<2x16x16x4xf32> to vector<512x4xf32>
    %18 = arith.truncf %17 : vector<512x4xf32> to vector<512x4xbf16>
    %19 = vector.extract_strided_slice %9 {offsets = [0, 1, 0, 0], sizes = [2, 16, 16, 4], strides = [1, 1, 1, 1]} : vector<2x18x18x4xf32> to vector<2x16x16x4xf32>
    %20 = vector.shape_cast %19 : vector<2x16x16x4xf32> to vector<512x4xf32>
    %21 = arith.truncf %20 : vector<512x4xf32> to vector<512x4xbf16>
    %22 = vector.extract_strided_slice %9 {offsets = [0, 1, 1, 0], sizes = [2, 16, 16, 4], strides = [1, 1, 1, 1]} : vector<2x18x18x4xf32> to vector<2x16x16x4xf32>
    %23 = vector.shape_cast %22 : vector<2x16x16x4xf32> to vector<512x4xf32>
    %24 = arith.truncf %23 : vector<512x4xf32> to vector<512x4xbf16>
    %25 = vector.extract_strided_slice %9 {offsets = [0, 1, 2, 0], sizes = [2, 16, 16, 4], strides = [1, 1, 1, 1]} : vector<2x18x18x4xf32> to vector<2x16x16x4xf32>
    %26 = vector.shape_cast %25 : vector<2x16x16x4xf32> to vector<512x4xf32>
    %27 = arith.truncf %26 : vector<512x4xf32> to vector<512x4xbf16>
    %28 = vector.extract_strided_slice %9 {offsets = [0, 2, 0, 0], sizes = [2, 16, 16, 4], strides = [1, 1, 1, 1]} : vector<2x18x18x4xf32> to vector<2x16x16x4xf32>
    %29 = vector.shape_cast %28 : vector<2x16x16x4xf32> to vector<512x4xf32>
    %30 = arith.truncf %29 : vector<512x4xf32> to vector<512x4xbf16>
    %31 = vector.extract_strided_slice %9 {offsets = [0, 2, 1, 0], sizes = [2, 16, 16, 4], strides = [1, 1, 1, 1]} : vector<2x18x18x4xf32> to vector<2x16x16x4xf32>
    %32 = vector.shape_cast %31 : vector<2x16x16x4xf32> to vector<512x4xf32>
    %33 = arith.truncf %32 : vector<512x4xf32> to vector<512x4xbf16>
    %34 = vector.extract_strided_slice %9 {offsets = [0, 2, 2, 0], sizes = [2, 16, 16, 4], strides = [1, 1, 1, 1]} : vector<2x18x18x4xf32> to vector<2x16x16x4xf32>
    %35 = vector.shape_cast %34 : vector<2x16x16x4xf32> to vector<512x4xf32>
    %36 = arith.truncf %35 : vector<512x4xf32> to vector<512x4xbf16>
    %c0_26 = arith.constant 0 : index
    %c0_27 = arith.constant 0 : index
    %c0_28 = arith.constant 0 : index
    %37 = vector.load %arg2[%c0_26, %c0_27, %c0_28] : memref<9x4x8xbf16, #tpu.memory_space<vmem>>, vector<1x4x8xbf16>
    %38 = vector.shape_cast %37 : vector<1x4x8xbf16> to vector<4x8xbf16>
    %cst_29 = arith.constant dense<0.000000e+00> : vector<512x8xf32>
    %39 = tpu.matmul %12, %38, %cst_29 {dimension_numbers = #tpu.dot_dimension_numbers<[1], [0], [0], [1], [0, 0, 1, 1], [], []>} : vector<512x4xbf16>, vector<4x8xbf16>, vector<512x8xf32> -> vector<512x8xf32>
    %c1_30 = arith.constant 1 : index
    %c0_31 = arith.constant 0 : index
    %c0_32 = arith.constant 0 : index
    %40 = vector.load %arg2[%c1_30, %c0_31, %c0_32] : memref<9x4x8xbf16, #tpu.memory_space<vmem>>, vector<1x4x8xbf16>
    %41 = vector.shape_cast %40 : vector<1x4x8xbf16> to vector<4x8xbf16>
    %cst_33 = arith.constant dense<0.000000e+00> : vector<512x8xf32>
    %42 = tpu.matmul %15, %41, %cst_33 {dimension_numbers = #tpu.dot_dimension_numbers<[1], [0], [0], [1], [0, 0, 1, 1], [], []>} : vector<512x4xbf16>, vector<4x8xbf16>, vector<512x8xf32> -> vector<512x8xf32>
    %43 = arith.addf %39, %42 : vector<512x8xf32>
    %c2 = arith.constant 2 : index
    %c0_34 = arith.constant 0 : index
    %c0_35 = arith.constant 0 : index
    %44 = vector.load %arg2[%c2, %c0_34, %c0_35] : memref<9x4x8xbf16, #tpu.memory_space<vmem>>, vector<1x4x8xbf16>
    %45 = vector.shape_cast %44 : vector<1x4x8xbf16> to vector<4x8xbf16>
    %cst_36 = arith.constant dense<0.000000e+00> : vector<512x8xf32>
    %46 = tpu.matmul %18, %45, %cst_36 {dimension_numbers = #tpu.dot_dimension_numbers<[1], [0], [0], [1], [0, 0, 1, 1], [], []>} : vector<512x4xbf16>, vector<4x8xbf16>, vector<512x8xf32> -> vector<512x8xf32>
    %47 = arith.addf %43, %46 : vector<512x8xf32>
    %c3 = arith.constant 3 : index
    %c0_37 = arith.constant 0 : index
    %c0_38 = arith.constant 0 : index
    %48 = vector.load %arg2[%c3, %c0_37, %c0_38] : memref<9x4x8xbf16, #tpu.memory_space<vmem>>, vector<1x4x8xbf16>
    %49 = vector.shape_cast %48 : vector<1x4x8xbf16> to vector<4x8xbf16>
    %cst_39 = arith.constant dense<0.000000e+00> : vector<512x8xf32>
    %50 = tpu.matmul %21, %49, %cst_39 {dimension_numbers = #tpu.dot_dimension_numbers<[1], [0], [0], [1], [0, 0, 1, 1], [], []>} : vector<512x4xbf16>, vector<4x8xbf16>, vector<512x8xf32> -> vector<512x8xf32>
    %51 = arith.addf %47, %50 : vector<512x8xf32>
    %c4 = arith.constant 4 : index
    %c0_40 = arith.constant 0 : index
    %c0_41 = arith.constant 0 : index
    %52 = vector.load %arg2[%c4, %c0_40, %c0_41] : memref<9x4x8xbf16, #tpu.memory_space<vmem>>, vector<1x4x8xbf16>
    %53 = vector.shape_cast %52 : vector<1x4x8xbf16> to vector<4x8xbf16>
    %cst_42 = arith.constant dense<0.000000e+00> : vector<512x8xf32>
    %54 = tpu.matmul %24, %53, %cst_42 {dimension_numbers = #tpu.dot_dimension_numbers<[1], [0], [0], [1], [0, 0, 1, 1], [], []>} : vector<512x4xbf16>, vector<4x8xbf16>, vector<512x8xf32> -> vector<512x8xf32>
    %55 = arith.addf %51, %54 : vector<512x8xf32>
    %c5 = arith.constant 5 : index
    %c0_43 = arith.constant 0 : index
    %c0_44 = arith.constant 0 : index
    %56 = vector.load %arg2[%c5, %c0_43, %c0_44] : memref<9x4x8xbf16, #tpu.memory_space<vmem>>, vector<1x4x8xbf16>
    %57 = vector.shape_cast %56 : vector<1x4x8xbf16> to vector<4x8xbf16>
    %cst_45 = arith.constant dense<0.000000e+00> : vector<512x8xf32>
    %58 = tpu.matmul %27, %57, %cst_45 {dimension_numbers = #tpu.dot_dimension_numbers<[1], [0], [0], [1], [0, 0, 1, 1], [], []>} : vector<512x4xbf16>, vector<4x8xbf16>, vector<512x8xf32> -> vector<512x8xf32>
    %59 = arith.addf %55, %58 : vector<512x8xf32>
    %c6 = arith.constant 6 : index
    %c0_46 = arith.constant 0 : index
    %c0_47 = arith.constant 0 : index
    %60 = vector.load %arg2[%c6, %c0_46, %c0_47] : memref<9x4x8xbf16, #tpu.memory_space<vmem>>, vector<1x4x8xbf16>
    %61 = vector.shape_cast %60 : vector<1x4x8xbf16> to vector<4x8xbf16>
    %cst_48 = arith.constant dense<0.000000e+00> : vector<512x8xf32>
    %62 = tpu.matmul %30, %61, %cst_48 {dimension_numbers = #tpu.dot_dimension_numbers<[1], [0], [0], [1], [0, 0, 1, 1], [], []>} : vector<512x4xbf16>, vector<4x8xbf16>, vector<512x8xf32> -> vector<512x8xf32>
    %63 = arith.addf %59, %62 : vector<512x8xf32>
    %c7 = arith.constant 7 : index
    %c0_49 = arith.constant 0 : index
    %c0_50 = arith.constant 0 : index
    %64 = vector.load %arg2[%c7, %c0_49, %c0_50] : memref<9x4x8xbf16, #tpu.memory_space<vmem>>, vector<1x4x8xbf16>
    %65 = vector.shape_cast %64 : vector<1x4x8xbf16> to vector<4x8xbf16>
    %cst_51 = arith.constant dense<0.000000e+00> : vector<512x8xf32>
    %66 = tpu.matmul %33, %65, %cst_51 {dimension_numbers = #tpu.dot_dimension_numbers<[1], [0], [0], [1], [0, 0, 1, 1], [], []>} : vector<512x4xbf16>, vector<4x8xbf16>, vector<512x8xf32> -> vector<512x8xf32>
    %67 = arith.addf %63, %66 : vector<512x8xf32>
    %c8 = arith.constant 8 : index
    %c0_52 = arith.constant 0 : index
    %c0_53 = arith.constant 0 : index
    %68 = vector.load %arg2[%c8, %c0_52, %c0_53] : memref<9x4x8xbf16, #tpu.memory_space<vmem>>, vector<1x4x8xbf16>
    %69 = vector.shape_cast %68 : vector<1x4x8xbf16> to vector<4x8xbf16>
    %cst_54 = arith.constant dense<0.000000e+00> : vector<512x8xf32>
    %70 = tpu.matmul %36, %69, %cst_54 {dimension_numbers = #tpu.dot_dimension_numbers<[1], [0], [0], [1], [0, 0, 1, 1], [], []>} : vector<512x4xbf16>, vector<4x8xbf16>, vector<512x8xf32> -> vector<512x8xf32>
    %71 = arith.addf %67, %70 : vector<512x8xf32>
    %c0_55 = arith.constant 0 : index
    %c0_56 = arith.constant 0 : index
    %72 = vector.load %arg3[%c0_55, %c0_56] : memref<1x8xf32, #tpu.memory_space<vmem>>, vector<1x8xf32>
    %73 = vector.broadcast %72 : vector<1x8xf32> to vector<512x8xf32>
    %74 = arith.addf %71, %73 : vector<512x8xf32>
    %cst_57 = arith.constant 0.000000e+00 : f32
    %75 = vector.broadcast %cst_57 : f32 to vector<512x8xf32>
    %76 = arith.maximumf %74, %75 : vector<512x8xf32>
    %c0_58 = arith.constant 0 : index
    %c0_59 = arith.constant 0 : index
    %77 = vector.load %arg6[%c0_58, %c0_59] : memref<4x128xbf16, #tpu.memory_space<vmem>>, vector<4x128xbf16>
    %cst_60 = arith.constant dense<0.000000e+00> : vector<512x128xf32>
    %78 = tpu.matmul %24, %77, %cst_60 {dimension_numbers = #tpu.dot_dimension_numbers<[1], [0], [0], [1], [0, 0, 1, 1], [], []>} : vector<512x4xbf16>, vector<4x128xbf16>, vector<512x128xf32> -> vector<512x128xf32>
    %c0_61 = arith.constant 0 : index
    %c0_62 = arith.constant 0 : index
    %79 = vector.load %arg7[%c0_61, %c0_62] : memref<1x128xf32, #tpu.memory_space<vmem>>, vector<1x128xf32>
    %80 = vector.broadcast %79 : vector<1x128xf32> to vector<512x128xf32>
    %81 = arith.addf %78, %80 : vector<512x128xf32>
    %cst_63 = arith.constant 0.000000e+00 : f32
    %82 = vector.broadcast %cst_63 : f32 to vector<2x1x18x8xf32>
    %cst_64 = arith.constant 0.000000e+00 : f32
    %83 = vector.broadcast %cst_64 : f32 to vector<2x18x1x8xf32>
    %c0_65 = arith.constant 0 : index
    %c0_66 = arith.constant 0 : index
    %c0_67 = arith.constant 0 : index
    %c0_68 = arith.constant 0 : index
    %84 = vector.load %arg10[%c0_65, %c0_66, %c0_67, %c0_68] : memref<2x18x18x8xf32, #tpu.memory_space<vmem>>, vector<2x1x18x8xf32>
    tpu.vector_store %arg10[%c0_65, %c0_66, %c0_67, %c0_68], %82 {strides = array<i32>} : memref<2x18x18x8xf32, #tpu.memory_space<vmem>>, vector<2x1x18x8xf32>,
    %c0_69 = arith.constant 0 : index
    %c17_70 = arith.constant 17 : index
    %c0_71 = arith.constant 0 : index
    %c0_72 = arith.constant 0 : index
    %85 = vector.load %arg10[%c0_69, %c17_70, %c0_71, %c0_72] : memref<2x18x18x8xf32, #tpu.memory_space<vmem>>, vector<2x1x18x8xf32>
    tpu.vector_store %arg10[%c0_69, %c17_70, %c0_71, %c0_72], %82 {strides = array<i32>} : memref<2x18x18x8xf32, #tpu.memory_space<vmem>>, vector<2x1x18x8xf32>,
    %c0_73 = arith.constant 0 : index
    %c0_74 = arith.constant 0 : index
    %c0_75 = arith.constant 0 : index
    %c0_76 = arith.constant 0 : index
    %86 = vector.load %arg10[%c0_73, %c0_74, %c0_75, %c0_76] : memref<2x18x18x8xf32, #tpu.memory_space<vmem>>, vector<2x18x1x8xf32>
    tpu.vector_store %arg10[%c0_73, %c0_74, %c0_75, %c0_76], %83 {strides = array<i32>} : memref<2x18x18x8xf32, #tpu.memory_space<vmem>>, vector<2x18x1x8xf32>,
    %c0_77 = arith.constant 0 : index
    %c0_78 = arith.constant 0 : index
    %c17_79 = arith.constant 17 : index
    %c0_80 = arith.constant 0 : index
    %87 = vector.load %arg10[%c0_77, %c0_78, %c17_79, %c0_80] : memref<2x18x18x8xf32, #tpu.memory_space<vmem>>, vector<2x18x1x8xf32>
    tpu.vector_store %arg10[%c0_77, %c0_78, %c17_79, %c0_80], %83 {strides = array<i32>} : memref<2x18x18x8xf32, #tpu.memory_space<vmem>>, vector<2x18x1x8xf32>,
    %88 = vector.shape_cast %76 : vector<512x8xf32> to vector<2x16x16x8xf32>
    %c0_81 = arith.constant 0 : index
    %c1_82 = arith.constant 1 : index
    %c1_83 = arith.constant 1 : index
    %c0_84 = arith.constant 0 : index
    %89 = vector.load %arg10[%c0_81, %c1_82, %c1_83, %c0_84] : memref<2x18x18x8xf32, #tpu.memory_space<vmem>>, vector<2x16x16x8xf32>
    tpu.vector_store %arg10[%c0_81, %c1_82, %c1_83, %c0_84], %88 {strides = array<i32>} : memref<2x18x18x8xf32, #tpu.memory_space<vmem>>, vector<2x16x16x8xf32>,
    %c0_85 = arith.constant 0 : index
    %c0_86 = arith.constant 0 : index
    %c0_87 = arith.constant 0 : index
    %c0_88 = arith.constant 0 : index
    %90 = vector.load %arg10[%c0_85, %c0_86, %c0_87, %c0_88] : memref<2x18x18x8xf32, #tpu.memory_space<vmem>>, vector<2x18x18x8xf32>
    %91 = vector.extract_strided_slice %90 {offsets = [0, 0, 0, 0], sizes = [2, 16, 16, 8], strides = [1, 1, 1, 1]} : vector<2x18x18x8xf32> to vector<2x16x16x8xf32>
    %92 = vector.shape_cast %91 : vector<2x16x16x8xf32> to vector<512x8xf32>
    %93 = arith.truncf %92 : vector<512x8xf32> to vector<512x8xbf16>
    %94 = vector.extract_strided_slice %90 {offsets = [0, 0, 1, 0], sizes = [2, 16, 16, 8], strides = [1, 1, 1, 1]} : vector<2x18x18x8xf32> to vector<2x16x16x8xf32>
    %95 = vector.shape_cast %94 : vector<2x16x16x8xf32> to vector<512x8xf32>
    %96 = arith.truncf %95 : vector<512x8xf32> to vector<512x8xbf16>
    %97 = vector.extract_strided_slice %90 {offsets = [0, 0, 2, 0], sizes = [2, 16, 16, 8], strides = [1, 1, 1, 1]} : vector<2x18x18x8xf32> to vector<2x16x16x8xf32>
    %98 = vector.shape_cast %97 : vector<2x16x16x8xf32> to vector<512x8xf32>
    %99 = arith.truncf %98 : vector<512x8xf32> to vector<512x8xbf16>
    %100 = vector.extract_strided_slice %90 {offsets = [0, 1, 0, 0], sizes = [2, 16, 16, 8], strides = [1, 1, 1, 1]} : vector<2x18x18x8xf32> to vector<2x16x16x8xf32>
    %101 = vector.shape_cast %100 : vector<2x16x16x8xf32> to vector<512x8xf32>
    %102 = arith.truncf %101 : vector<512x8xf32> to vector<512x8xbf16>
    %103 = vector.extract_strided_slice %90 {offsets = [0, 1, 1, 0], sizes = [2, 16, 16, 8], strides = [1, 1, 1, 1]} : vector<2x18x18x8xf32> to vector<2x16x16x8xf32>
    %104 = vector.shape_cast %103 : vector<2x16x16x8xf32> to vector<512x8xf32>
    %105 = arith.truncf %104 : vector<512x8xf32> to vector<512x8xbf16>
    %106 = vector.extract_strided_slice %90 {offsets = [0, 1, 2, 0], sizes = [2, 16, 16, 8], strides = [1, 1, 1, 1]} : vector<2x18x18x8xf32> to vector<2x16x16x8xf32>
    %107 = vector.shape_cast %106 : vector<2x16x16x8xf32> to vector<512x8xf32>
    %108 = arith.truncf %107 : vector<512x8xf32> to vector<512x8xbf16>
    %109 = vector.extract_strided_slice %90 {offsets = [0, 2, 0, 0], sizes = [2, 16, 16, 8], strides = [1, 1, 1, 1]} : vector<2x18x18x8xf32> to vector<2x16x16x8xf32>
    %110 = vector.shape_cast %109 : vector<2x16x16x8xf32> to vector<512x8xf32>
    %111 = arith.truncf %110 : vector<512x8xf32> to vector<512x8xbf16>
    %112 = vector.extract_strided_slice %90 {offsets = [0, 2, 1, 0], sizes = [2, 16, 16, 8], strides = [1, 1, 1, 1]} : vector<2x18x18x8xf32> to vector<2x16x16x8xf32>
    %113 = vector.shape_cast %112 : vector<2x16x16x8xf32> to vector<512x8xf32>
    %114 = arith.truncf %113 : vector<512x8xf32> to vector<512x8xbf16>
    %115 = vector.extract_strided_slice %90 {offsets = [0, 2, 2, 0], sizes = [2, 16, 16, 8], strides = [1, 1, 1, 1]} : vector<2x18x18x8xf32> to vector<2x16x16x8xf32>
    %116 = vector.shape_cast %115 : vector<2x16x16x8xf32> to vector<512x8xf32>
    %117 = arith.truncf %116 : vector<512x8xf32> to vector<512x8xbf16>
    %c0_89 = arith.constant 0 : index
    %c0_90 = arith.constant 0 : index
    %c0_91 = arith.constant 0 : index
    %118 = vector.load %arg4[%c0_89, %c0_90, %c0_91] : memref<9x8x128xbf16, #tpu.memory_space<vmem>>, vector<1x8x128xbf16>
    %119 = vector.shape_cast %118 : vector<1x8x128xbf16> to vector<8x128xbf16>
    %cst_92 = arith.constant dense<0.000000e+00> : vector<512x128xf32>
    %120 = tpu.matmul %93, %119, %cst_92 {dimension_numbers = #tpu.dot_dimension_numbers<[1], [0], [0], [1], [0, 0, 1, 1], [], []>} : vector<512x8xbf16>, vector<8x128xbf16>, vector<512x128xf32> -> vector<512x128xf32>
    %c1_93 = arith.constant 1 : index
    %c0_94 = arith.constant 0 : index
    %c0_95 = arith.constant 0 : index
    %121 = vector.load %arg4[%c1_93, %c0_94, %c0_95] : memref<9x8x128xbf16, #tpu.memory_space<vmem>>, vector<1x8x128xbf16>
    %122 = vector.shape_cast %121 : vector<1x8x128xbf16> to vector<8x128xbf16>
    %cst_96 = arith.constant dense<0.000000e+00> : vector<512x128xf32>
    %123 = tpu.matmul %96, %122, %cst_96 {dimension_numbers = #tpu.dot_dimension_numbers<[1], [0], [0], [1], [0, 0, 1, 1], [], []>} : vector<512x8xbf16>, vector<8x128xbf16>, vector<512x128xf32> -> vector<512x128xf32>
    %124 = arith.addf %120, %123 : vector<512x128xf32>
    %c2_97 = arith.constant 2 : index
    %c0_98 = arith.constant 0 : index
    %c0_99 = arith.constant 0 : index
    %125 = vector.load %arg4[%c2_97, %c0_98, %c0_99] : memref<9x8x128xbf16, #tpu.memory_space<vmem>>, vector<1x8x128xbf16>
    %126 = vector.shape_cast %125 : vector<1x8x128xbf16> to vector<8x128xbf16>
    %cst_100 = arith.constant dense<0.000000e+00> : vector<512x128xf32>
    %127 = tpu.matmul %99, %126, %cst_100 {dimension_numbers = #tpu.dot_dimension_numbers<[1], [0], [0], [1], [0, 0, 1, 1], [], []>} : vector<512x8xbf16>, vector<8x128xbf16>, vector<512x128xf32> -> vector<512x128xf32>
    %128 = arith.addf %124, %127 : vector<512x128xf32>
    %c3_101 = arith.constant 3 : index
    %c0_102 = arith.constant 0 : index
    %c0_103 = arith.constant 0 : index
    %129 = vector.load %arg4[%c3_101, %c0_102, %c0_103] : memref<9x8x128xbf16, #tpu.memory_space<vmem>>, vector<1x8x128xbf16>
    %130 = vector.shape_cast %129 : vector<1x8x128xbf16> to vector<8x128xbf16>
    %cst_104 = arith.constant dense<0.000000e+00> : vector<512x128xf32>
    %131 = tpu.matmul %102, %130, %cst_104 {dimension_numbers = #tpu.dot_dimension_numbers<[1], [0], [0], [1], [0, 0, 1, 1], [], []>} : vector<512x8xbf16>, vector<8x128xbf16>, vector<512x128xf32> -> vector<512x128xf32>
    %132 = arith.addf %128, %131 : vector<512x128xf32>
    %c4_105 = arith.constant 4 : index
    %c0_106 = arith.constant 0 : index
    %c0_107 = arith.constant 0 : index
    %133 = vector.load %arg4[%c4_105, %c0_106, %c0_107] : memref<9x8x128xbf16, #tpu.memory_space<vmem>>, vector<1x8x128xbf16>
    %134 = vector.shape_cast %133 : vector<1x8x128xbf16> to vector<8x128xbf16>
    %cst_108 = arith.constant dense<0.000000e+00> : vector<512x128xf32>
    %135 = tpu.matmul %105, %134, %cst_108 {dimension_numbers = #tpu.dot_dimension_numbers<[1], [0], [0], [1], [0, 0, 1, 1], [], []>} : vector<512x8xbf16>, vector<8x128xbf16>, vector<512x128xf32> -> vector<512x128xf32>
    %136 = arith.addf %132, %135 : vector<512x128xf32>
    %c5_109 = arith.constant 5 : index
    %c0_110 = arith.constant 0 : index
    %c0_111 = arith.constant 0 : index
    %137 = vector.load %arg4[%c5_109, %c0_110, %c0_111] : memref<9x8x128xbf16, #tpu.memory_space<vmem>>, vector<1x8x128xbf16>
    %138 = vector.shape_cast %137 : vector<1x8x128xbf16> to vector<8x128xbf16>
    %cst_112 = arith.constant dense<0.000000e+00> : vector<512x128xf32>
    %139 = tpu.matmul %108, %138, %cst_112 {dimension_numbers = #tpu.dot_dimension_numbers<[1], [0], [0], [1], [0, 0, 1, 1], [], []>} : vector<512x8xbf16>, vector<8x128xbf16>, vector<512x128xf32> -> vector<512x128xf32>
    %140 = arith.addf %136, %139 : vector<512x128xf32>
    %c6_113 = arith.constant 6 : index
    %c0_114 = arith.constant 0 : index
    %c0_115 = arith.constant 0 : index
    %141 = vector.load %arg4[%c6_113, %c0_114, %c0_115] : memref<9x8x128xbf16, #tpu.memory_space<vmem>>, vector<1x8x128xbf16>
    %142 = vector.shape_cast %141 : vector<1x8x128xbf16> to vector<8x128xbf16>
    %cst_116 = arith.constant dense<0.000000e+00> : vector<512x128xf32>
    %143 = tpu.matmul %111, %142, %cst_116 {dimension_numbers = #tpu.dot_dimension_numbers<[1], [0], [0], [1], [0, 0, 1, 1], [], []>} : vector<512x8xbf16>, vector<8x128xbf16>, vector<512x128xf32> -> vector<512x128xf32>
    %144 = arith.addf %140, %143 : vector<512x128xf32>
    %c7_117 = arith.constant 7 : index
    %c0_118 = arith.constant 0 : index
    %c0_119 = arith.constant 0 : index
    %145 = vector.load %arg4[%c7_117, %c0_118, %c0_119] : memref<9x8x128xbf16, #tpu.memory_space<vmem>>, vector<1x8x128xbf16>
    %146 = vector.shape_cast %145 : vector<1x8x128xbf16> to vector<8x128xbf16>
    %cst_120 = arith.constant dense<0.000000e+00> : vector<512x128xf32>
    %147 = tpu.matmul %114, %146, %cst_120 {dimension_numbers = #tpu.dot_dimension_numbers<[1], [0], [0], [1], [0, 0, 1, 1], [], []>} : vector<512x8xbf16>, vector<8x128xbf16>, vector<512x128xf32> -> vector<512x128xf32>
    %148 = arith.addf %144, %147 : vector<512x128xf32>
    %c8_121 = arith.constant 8 : index
    %c0_122 = arith.constant 0 : index
    %c0_123 = arith.constant 0 : index
    %149 = vector.load %arg4[%c8_121, %c0_122, %c0_123] : memref<9x8x128xbf16, #tpu.memory_space<vmem>>, vector<1x8x128xbf16>
    %150 = vector.shape_cast %149 : vector<1x8x128xbf16> to vector<8x128xbf16>
    %cst_124 = arith.constant dense<0.000000e+00> : vector<512x128xf32>
    %151 = tpu.matmul %117, %150, %cst_124 {dimension_numbers = #tpu.dot_dimension_numbers<[1], [0], [0], [1], [0, 0, 1, 1], [], []>} : vector<512x8xbf16>, vector<8x128xbf16>, vector<512x128xf32> -> vector<512x128xf32>
    %152 = arith.addf %148, %151 : vector<512x128xf32>
    %c0_125 = arith.constant 0 : index
    %c0_126 = arith.constant 0 : index
    %153 = vector.load %arg5[%c0_125, %c0_126] : memref<1x128xf32, #tpu.memory_space<vmem>>, vector<1x128xf32>
    %154 = vector.broadcast %153 : vector<1x128xf32> to vector<512x128xf32>
    %155 = arith.addf %152, %154 : vector<512x128xf32>
    %156 = arith.addf %155, %81 : vector<512x128xf32>
    %cst_127 = arith.constant 0.000000e+00 : f32
    %157 = vector.broadcast %cst_127 : f32 to vector<512x128xf32>
    %158 = arith.maximumf %156, %157 : vector<512x128xf32>
    %159 = vector.shape_cast %158 : vector<512x128xf32> to vector<2x16x16x128xf32>
    %c0_128 = arith.constant 0 : index
    %c0_129 = arith.constant 0 : index
    %c0_130 = arith.constant 0 : index
    %c0_131 = arith.constant 0 : index
    %160 = vector.load %arg8[%c0_128, %c0_129, %c0_130, %c0_131] : memref<2x16x16x128xf32, #tpu.memory_space<vmem>>, vector<2x16x16x128xf32>
    tpu.vector_store %arg8[%c0_128, %c0_129, %c0_130, %c0_131], %159 {strides = array<i32>} : memref<2x16x16x128xf32, #tpu.memory_space<vmem>>, vector<2x16x16x128xf32>,
    return
  }
  func.func @transform_0(%arg0: i32) -> (i32, i32, i32, i32) {
    %c0_i32 = arith.constant 0 : i32
    %c0_i32_0 = arith.constant 0 : i32
    %c0_i32_1 = arith.constant 0 : i32
    %c0_i32_2 = arith.constant 0 : i32
    return %arg0, %c0_i32, %c0_i32_0, %c0_i32_1 : i32, i32, i32, i32
  }
  func.func @transform_1(%arg0: i32) -> (i32, i32, i32) {
    %c0_i32 = arith.constant 0 : i32
    %c0_i32_0 = arith.constant 0 : i32
    %c0_i32_1 = arith.constant 0 : i32
    %c0_i32_2 = arith.constant 0 : i32
    return %c0_i32, %c0_i32_0, %c0_i32_1 : i32, i32, i32
  }
  func.func @transform_2(%arg0: i32) -> (i32, i32) {
    %c0_i32 = arith.constant 0 : i32
    %c0_i32_0 = arith.constant 0 : i32
    %c0_i32_1 = arith.constant 0 : i32
    return %c0_i32, %c0_i32_0 : i32, i32
  }
  func.func @transform_3(%arg0: i32) -> (i32, i32, i32) {
    %c0_i32 = arith.constant 0 : i32
    %c0_i32_0 = arith.constant 0 : i32
    %c0_i32_1 = arith.constant 0 : i32
    %c0_i32_2 = arith.constant 0 : i32
    return %c0_i32, %c0_i32_0, %c0_i32_1 : i32, i32, i32
  }
  func.func @transform_4(%arg0: i32) -> (i32, i32) {
    %c0_i32 = arith.constant 0 : i32
    %c0_i32_0 = arith.constant 0 : i32
    %c0_i32_1 = arith.constant 0 : i32
    return %c0_i32, %c0_i32_0 : i32, i32
  }
  func.func @transform_5(%arg0: i32) -> (i32, i32) {
    %c0_i32 = arith.constant 0 : i32
    %c0_i32_0 = arith.constant 0 : i32
    %c0_i32_1 = arith.constant 0 : i32
    return %c0_i32, %c0_i32_0 : i32, i32
  }
  func.func @transform_6(%arg0: i32) -> (i32, i32) {
    %c0_i32 = arith.constant 0 : i32
    %c0_i32_0 = arith.constant 0 : i32
    %c0_i32_1 = arith.constant 0 : i32
    return %c0_i32, %c0_i32_0 : i32, i32
  }
  func.func @transform_7(%arg0: i32) -> (i32, i32, i32, i32) {
    %c0_i32 = arith.constant 0 : i32
    %c0_i32_0 = arith.constant 0 : i32
    %c0_i32_1 = arith.constant 0 : i32
    %c0_i32_2 = arith.constant 0 : i32
    return %arg0, %c0_i32, %c0_i32_0, %c0_i32_1 : i32, i32, i32, i32
  }
}

</mosaic_0001>

<llo_original>
// kernel: tpu_custom_call.1
$region0: #{tpu_custom_call.1}
  #allocation0 [shape = 'u32[]', space=smem, size = 0x4, offset = 0x4, fixed_abs, tag = 'smem constant byte address 0x4 - core index']
  #allocation1 [shape = 'u32[144,128]{1,0:T(1,128)}', space=vmem, size = 0x12000, scoped, tag = 'internal scratch']
  #allocation2 [shape = 'f32[2,18,18,4]{3,2,1,0:T(8,128)}', space=vmem, size = 0x6c000, scoped, tag = 'scratch operand']
  #allocation3 [shape = 'f32[2,18,18,8]{3,2,1,0:T(8,128)}', space=vmem, size = 0x6c000, scoped, tag = 'scratch operand']
  %s0 = inlined_call_operand.vmem [shape: bf16[4,16,16,4], index: 0, kind: input, shape index: {}]
  %s1 = inlined_call_operand.vmem [shape: bf16[9,4,8], index: 1, kind: input, shape index: {}]
  %s2 = inlined_call_operand.vmem [shape: f32[1,8], index: 2, kind: input, shape index: {}]
  %s3 = inlined_call_operand.vmem [shape: bf16[9,8,128], index: 3, kind: input, shape index: {}]
  %s4 = inlined_call_operand.vmem [shape: f32[1,128], index: 4, kind: input, shape index: {}]
  %s5 = inlined_call_operand.vmem [shape: bf16[4,128], index: 5, kind: input, shape index: {}]
  %s6 = inlined_call_operand.vmem [shape: f32[1,128], index: 6, kind: input, shape index: {}]
  %s7 = inlined_call_operand.hbm [shape: f32[4,16,16,128], index: 7, kind: output, shape index: {}]
  %s8 = sld [smem:[#allocation0]]
  $region61: #{tpu_custom_call.1} parent=0
    _
  %s10 = ssub.s32 1, %s8
  %s11 = scalar_select 0, %s10, %s8
  $region1: #{tpu_custom_call.1} parent=0
    #allocation4 [shape = 'u8[524288]{0}', space=vmem, size = 0x80000, scoped, tag = 'output window, operand 0']
    #allocation5 [shape = 's32[2]{0}', space=sflag, size = 0x8, scoped, tag = 'scoped memory for tpu_custom_call.1']
    %12 = vsyncpa [#allocation5], 0
    %s13 = scalar_lea.sflag [#allocation5], 1
    %14 = vsyncpa %s13, 0
    loop: start=0, step=1, limit=4
    $region2: #{tpu_custom_call.1} parent=1 // loop_pre_header
      _
    $region3: #{tpu_custom_call.1} parent=1 // loop_header
      %s16 = sphi 0, %s20
      %p17 = scmp.ge.s32.totalorder %s16, 4
      %s26 = sphi 0, %s28
      %s29 = sphi 0, %s26
      %s30 = sphi 0, %s29
      %s46 = sphi 0, %s30
      %s50 = sphi 0, %s50
      %s52 = sphi 0, %s50
      %s53 = sphi 0, %s52
      %s67 = sphi 0, %s53
      %s71 = sphi 0, %s71
      %s73 = sphi 0, %s71
      %s74 = sphi 0, %s73
      %s88 = sphi 0, %s74
      %s92 = sphi 0, %s92
      %s94 = sphi 0, %s92
      %s95 = sphi 0, %s94
      %s109 = sphi 0, %s95
      %s113 = sphi 0, %s113
      %s115 = sphi 0, %s113
      %s116 = sphi 0, %s115
      %s130 = sphi 0, %s116
      %s134 = sphi 0, %s134
      %s136 = sphi 0, %s134
      %s137 = sphi 0, %s136
      %s151 = sphi 0, %s137
      %s155 = sphi 0, %s155
      %s157 = sphi 0, %s155
      %s158 = sphi 0, %s157
      %s172 = sphi 0, %s158
      %s178 = sphi 0, %s180
      %s181 = sphi 0, %s178
      %s182 = sphi 0, %s181
      %s198 = sphi 0, %s182
    $region4: #{tpu_custom_call.1} parent=1 // loop_header_branch
      %19 = sbr.rel (%p17) target = $region8
    $region5: #{tpu_custom_call.1} parent=1 // loop_body
      %s21 = ssub.s32 %s16, 1
      %s22 = ssub.s32 %s16, 2
      %s23 = sadd.s32 %s16, 1
      %s24 = ssub.s32 %s16, %s23
      %p25 = scmp.eq.s32.totalorder %s24, 0
      %s27 = sadd.s32 %s26, 1
      %s28 = scalar_select %p25, %s26, %s27
      %p31 = pneg %p25
      %p32 = scmp.eq.s32.totalorder %s16, 1
      %p33 = por %p31, %p32
      %p34 = scmp.ne.s32.totalorder %s26, %s29
      %p35 = scmp.eq.s32.totalorder %s16, 0
      %p36 = por %p34, %p35
      %p37 = scmp.ne.s32.totalorder %s26, %s29
      %p38 = scmp.eq.s32.totalorder %s21, 1
      %p39 = por %p37, %p38
      %p40 = scmp.ne.s32.totalorder %s29, %s30
      %p41 = scmp.eq.s32.totalorder %s21, 0
      %p42 = por %p40, %p41
      %p43 = scmp.ne.s32.totalorder %s29, %s30
      %p44 = scmp.eq.s32.totalorder %s22, 1
      %p45 = por %p43, %p44
      %p47 = scmp.ne.s32.totalorder %s30, %s46
      %p48 = scmp.eq.s32.totalorder %s22, 0
      %p49 = por %p47, %p48
      %s51 = sadd.s32 %s50, 1
      %p54 = scmp.eq.s32.totalorder %s16, 1
      %p55 = scmp.ne.s32.totalorder %s50, %s52
      %p56 = scmp.eq.s32.totalorder %s16, 0
      %p57 = por %p55, %p56
      %p58 = scmp.ne.s32.totalorder %s50, %s52
      %p59 = scmp.eq.s32.totalorder %s21, 1
      %p60 = por %p58, %p59
      %p61 = scmp.ne.s32.totalorder %s52, %s53
      %p62 = scmp.eq.s32.totalorder %s21, 0
      %p63 = por %p61, %p62
      %p64 = scmp.ne.s32.totalorder %s52, %s53
      %p65 = scmp.eq.s32.totalorder %s22, 1
      %p66 = por %p64, %p65
      %p68 = scmp.ne.s32.totalorder %s53, %s67
      %p69 = scmp.eq.s32.totalorder %s22, 0
      %p70 = por %p68, %p69
      %s72 = sadd.s32 %s71, 1
      %p75 = scmp.eq.s32.totalorder %s16, 1
      %p76 = scmp.ne.s32.totalorder %s71, %s73
      %p77 = scmp.eq.s32.totalorder %s16, 0
      %p78 = por %p76, %p77
      %p79 = scmp.ne.s32.totalorder %s71, %s73
      %p80 = scmp.eq.s32.totalorder %s21, 1
      %p81 = por %p79, %p80
      %p82 = scmp.ne.s32.totalorder %s73, %s74
      %p83 = scmp.eq.s32.totalorder %s21, 0
      %p84 = por %p82, %p83
      %p85 = scmp.ne.s32.totalorder %s73, %s74
      %p86 = scmp.eq.s32.totalorder %s22, 1
      %p87 = por %p85, %p86
      %p89 = scmp.ne.s32.totalorder %s74, %s88
      %p90 = scmp.eq.s32.totalorder %s22, 0
      %p91 = por %p89, %p90
      %s93 = sadd.s32 %s92, 1
      %p96 = scmp.eq.s32.totalorder %s16, 1
      %p97 = scmp.ne.s32.totalorder %s92, %s94
      %p98 = scmp.eq.s32.totalorder %s16, 0
      %p99 = por %p97, %p98
      %p100 = scmp.ne.s32.totalorder %s92, %s94
      %p101 = scmp.eq.s32.totalorder %s21, 1
      %p102 = por %p100, %p101
      %p103 = scmp.ne.s32.totalorder %s94, %s95
      %p104 = scmp.eq.s32.totalorder %s21, 0
      %p105 = por %p103, %p104
      %p106 = scmp.ne.s32.totalorder %s94, %s95
      %p107 = scmp.eq.s32.totalorder %s22, 1
      %p108 = por %p106, %p107
      %p110 = scmp.ne.s32.totalorder %s95, %s109
      %p111 = scmp.eq.s32.totalorder %s22, 0
      %p112 = por %p110, %p111
      %s114 = sadd.s32 %s113, 1
      %p117 = scmp.eq.s32.totalorder %s16, 1
      %p118 = scmp.ne.s32.totalorder %s113, %s115
      %p119 = scmp.eq.s32.totalorder %s16, 0
      %p120 = por %p118, %p119
      %p121 = scmp.ne.s32.totalorder %s113, %s115
      %p122 = scmp.eq.s32.totalorder %s21, 1
      %p123 = por %p121, %p122
      %p124 = scmp.ne.s32.totalorder %s115, %s116
      %p125 = scmp.eq.s32.totalorder %s21, 0
      %p126 = por %p124, %p125
      %p127 = scmp.ne.s32.totalorder %s115, %s116
      %p128 = scmp.eq.s32.totalorder %s22, 1
      %p129 = por %p127, %p128
      %p131 = scmp.ne.s32.totalorder %s116, %s130
      %p132 = scmp.eq.s32.totalorder %s22, 0
      %p133 = por %p131, %p132
      %s135 = sadd.s32 %s134, 1
      %p138 = scmp.eq.s32.totalorder %s16, 1
      %p139 = scmp.ne.s32.totalorder %s134, %s136
      %p140 = scmp.eq.s32.totalorder %s16, 0
      %p141 = por %p139, %p140
      %p142 = scmp.ne.s32.totalorder %s134, %s136
      %p143 = scmp.eq.s32.totalorder %s21, 1
      %p144 = por %p142, %p143
      %p145 = scmp.ne.s32.totalorder %s136, %s137
      %p146 = scmp.eq.s32.totalorder %s21, 0
      %p147 = por %p145, %p146
      %p148 = scmp.ne.s32.totalorder %s136, %s137
      %p149 = scmp.eq.s32.totalorder %s22, 1
      %p150 = por %p148, %p149
      %p152 = scmp.ne.s32.totalorder %s137, %s151
      %p153 = scmp.eq.s32.totalorder %s22, 0
      %p154 = por %p152, %p153
      %s156 = sadd.s32 %s155, 1
      %p159 = scmp.eq.s32.totalorder %s16, 1
      %p160 = scmp.ne.s32.totalorder %s155, %s157
      %p161 = scmp.eq.s32.totalorder %s16, 0
      %p162 = por %p160, %p161
      %p163 = scmp.ne.s32.totalorder %s155, %s157
      %p164 = scmp.eq.s32.totalorder %s21, 1
      %p165 = por %p163, %p164
      %p166 = scmp.ne.s32.totalorder %s157, %s158
      %p167 = scmp.eq.s32.totalorder %s21, 0
      %p168 = por %p166, %p167
      %p169 = scmp.ne.s32.totalorder %s157, %s158
      %p170 = scmp.eq.s32.totalorder %s22, 1
      %p171 = por %p169, %p170
      %p173 = scmp.ne.s32.totalorder %s158, %s172
      %p174 = scmp.eq.s32.totalorder %s22, 0
      %p175 = por %p173, %p174
      %s176 = ssub.s32 %s16, %s23
      %p177 = scmp.eq.s32.totalorder %s176, 0
      %s179 = sadd.s32 %s178, 1
      %s180 = scalar_select %p177, %s178, %s179
      %p183 = pneg %p177
      %p184 = scmp.eq.s32.totalorder %s16, 1
      %p185 = por %p183, %p184
      %p186 = scmp.ne.s32.totalorder %s178, %s181
      %p187 = scmp.eq.s32.totalorder %s16, 0
      %p188 = por %p186, %p187
      %p189 = scmp.ne.s32.totalorder %s178, %s181
      %p190 = scmp.eq.s32.totalorder %s21, 1
      %p191 = por %p189, %p190
      %p192 = scmp.ne.s32.totalorder %s181, %s182
      %p193 = scmp.eq.s32.totalorder %s21, 0
      %p194 = por %p192, %p193
      %p195 = scmp.ne.s32.totalorder %s181, %s182
      %p196 = scmp.eq.s32.totalorder %s22, 1
      %p197 = por %p195, %p196
      %p199 = scmp.ne.s32.totalorder %s182, %s198
      %p200 = scmp.eq.s32.totalorder %s22, 0
      %p201 = por %p199, %p200
      %p202 = scmp.le.s32.totalorder 1, %s16
      %p203 = scmp.lt.s32.totalorder %s16, 3
      %p204 = pnand %p202, %p203
      %p205 = pneg %p204
      // Predicated region
      $region9: #{tpu_custom_call.1} parent=5 // pred_check
        _
      $region10: #{tpu_custom_call.1} parent=5 // pred_check_branch
        %207 = sbr.rel (%p204) target = $region12
      $region11: #{tpu_custom_call.1} parent=5 // pred_region
        %s208 = ssub.s32 %s16, 1
        // Predicated region
        $region13: #{tpu_custom_call.1} parent=11 // pred_check
          %p209 = pneg %p63
        $region14: #{tpu_custom_call.1} parent=11 // pred_check_branch
          %211 = sbr.rel (%p209) target = $region16
        $region15: #{tpu_custom_call.1} parent=11 // pred_region
          _
        $region16: #{tpu_custom_call.1} parent=11 // pred_fallthru
          _
        // Predicated region
        $region17: #{tpu_custom_call.1} parent=11 // pred_check
          %p212 = pneg %p84
        $region18: #{tpu_custom_call.1} parent=11 // pred_check_branch
          %214 = sbr.rel (%p212) target = $region20
        $region19: #{tpu_custom_call.1} parent=11 // pred_region
          _
        $region20: #{tpu_custom_call.1} parent=11 // pred_fallthru
          _
        // Predicated region
        $region21: #{tpu_custom_call.1} parent=11 // pred_check
          %p215 = pneg %p105
        $region22: #{tpu_custom_call.1} parent=11 // pred_check_branch
          %217 = sbr.rel (%p215) target = $region24
        $region23: #{tpu_custom_call.1} parent=11 // pred_region
          _
        $region24: #{tpu_custom_call.1} parent=11 // pred_fallthru
          _
        // Predicated region
        $region25: #{tpu_custom_call.1} parent=11 // pred_check
          %p218 = pneg %p126
        $region26: #{tpu_custom_call.1} parent=11 // pred_check_branch
          %220 = sbr.rel (%p218) target = $region28
        $region27: #{tpu_custom_call.1} parent=11 // pred_region
          _
        $region28: #{tpu_custom_call.1} parent=11 // pred_fallthru
          _
        // Predicated region
        $region29: #{tpu_custom_call.1} parent=11 // pred_check
          %p221 = pneg %p147
        $region30: #{tpu_custom_call.1} parent=11 // pred_check_branch
          %223 = sbr.rel (%p221) target = $region32
        $region31: #{tpu_custom_call.1} parent=11 // pred_region
          _
        $region32: #{tpu_custom_call.1} parent=11 // pred_fallthru
          _
        // Predicated region
        $region33: #{tpu_custom_call.1} parent=11 // pred_check
          %p224 = pneg %p168
        $region34: #{tpu_custom_call.1} parent=11 // pred_check_branch
          %226 = sbr.rel (%p224) target = $region36
        $region35: #{tpu_custom_call.1} parent=11 // pred_region
          _
        $region36: #{tpu_custom_call.1} parent=11 // pred_fallthru
          _
      $region12: #{tpu_custom_call.1} parent=5 // pred_fallthru
        _
      %p227 = scmp.lt.s32.totalorder %s16, 2
      // Predicated region
      $region37: #{tpu_custom_call.1} parent=5 // pred_check
        %p228 = pneg %p227
      $region38: #{tpu_custom_call.1} parent=5 // pred_check_branch
        %230 = sbr.rel (%p228) target = $region40
      $region39: #{tpu_custom_call.1} parent=5 // pred_region
        // Predicated region
        $region41: #{tpu_custom_call.1} parent=39 // pred_check
          %p231 = pneg %p36
        $region42: #{tpu_custom_call.1} parent=39 // pred_check_branch
          %233 = sbr.rel (%p231) target = $region44
        $region43: #{tpu_custom_call.1} parent=39 // pred_region
          %s234 = smul.u32 2, %s16
          %p235 = scmp.lt.s32.totalorder %s234, 3
          %s236 = scalar_select %p235, %s234, 3
          %s237 = smul.addr %s236, 32
          %s238 = smul.addr %s237, 4
          %s239 = scalar_lea.vmem %s0, %s238
          %s240 = smul.u32 2, %s16
        $region44: #{tpu_custom_call.1} parent=39 // pred_fallthru
          _
      $region40: #{tpu_custom_call.1} parent=5 // pred_fallthru
        _
      %p241 = scmp.le.s32.totalorder 1, %s16
      %p242 = scmp.lt.s32.totalorder %s16, 3
      %p243 = pnand %p241, %p242
      %p244 = pneg %p243
      // Predicated region
      $region45: #{tpu_custom_call.1} parent=5 // pred_check
        _
      $region46: #{tpu_custom_call.1} parent=5 // pred_check_branch
        %246 = sbr.rel (%p243) target = $region48
      $region47: #{tpu_custom_call.1} parent=5 // pred_region
        %s247 = ssub.s32 %s16, 1
        %s248 = smul.u32 2, %s21
        %p249 = scmp.lt.s32.totalorder %s248, 3
        %s250 = scalar_select %p249, %s248, 3
        %s251 = smul.addr %s250, 32
        %s252 = smul.addr %s251, 4
        %s253 = scalar_lea.vmem %s0, %s252
        %p254 = pneg %p42
        %p255 = pneg %p39
        %p256 = pneg %p63
        %p257 = pneg %p60
        %p258 = pneg %p84
        %p259 = pneg %p81
        %p260 = pneg %p105
        %p261 = pneg %p102
        %p262 = pneg %p126
        %p263 = pneg %p123
        %p264 = pneg %p147
        %p265 = pneg %p144
        %p266 = pneg %p168
        %p267 = pneg %p165
        %p268 = pneg %p194
        %p269 = pneg %p191
        %s270 = sand.u32 %s181, 1
        %s271 = scalar_lea.sflag [#allocation5], %s270
        %s272 = sand.u32 %s181, 1
        %s273 = smul.addr %s272, 512
        %s274 = scalar_lea.vmem [#allocation4], %s273
        %s275 = smul.u32 2, %s21
        %p276 = scmp.lt.s32.totalorder %s275, 3
        %s277 = scalar_select %p276, %s275, 3
        %s278 = smul.addr %s277, 32
        %s279 = smul.addr %s278, 4
        %s280 = scalar_lea.vmem %s0, %s279
        %s281 = smul.u32 2, %s21
        %s282 = smul.u32 2, %s21
        %vm284 = vcmask 31744
        %285 = vst.msk [vmem:[#allocation2] sm:$0xff] %vm284, 0.0
        %286 = vst.msk [vmem:[#allocation2 + $0x8] sm:$0xff] %vm284, 0.0
        %vm287 = vcmask 25600
        %288 = vst.msk [vmem:[#allocation2 + $0x10] sm:$0x3] %vm287, 0.0
        %289 = vst.msk [vmem:[#allocation2 + $0x1b0] sm:$0xff] %vm284, 0.0
        %290 = vst.msk [vmem:[#allocation2 + $0x1b8] sm:$0xff] %vm284, 0.0
        %291 = vst.msk [vmem:[#allocation2 + $0x1c0] sm:$0x3] %vm287, 0.0
        %s292 = scalar_lea.vmem [#allocation2], 408
        %293 = vst.msk [vmem:[%s292] sm:$0xff] %vm284, 0.0
        %294 = vst.msk [vmem:[%s292 + $0x8] sm:$0xff] %vm284, 0.0
        %295 = vst.msk [vmem:[%s292 + $0x10] sm:$0x3] %vm287, 0.0
        %296 = vst.msk [vmem:[%s292 + $0x1b0] sm:$0xff] %vm284, 0.0
        %297 = vst.msk [vmem:[%s292 + $0x1b8] sm:$0xff] %vm284, 0.0
        %298 = vst.msk [vmem:[%s292 + $0x1c0] sm:$0x3] %vm287, 0.0
        %vm299 = vcmask 24576
        %300 = vst.msk [vmem:[#allocation2] sm:$0x1] %vm299, 0.0
        %301 = vst.msk [vmem:[#allocation2 + $0x18] sm:$0x1] %vm299, 0.0
        %302 = vst.msk [vmem:[#allocation2 + $0x30] sm:$0x1] %vm299, 0.0
        %303 = vst.msk [vmem:[#allocation2 + $0x48] sm:$0x1] %vm299, 0.0
        %304 = vst.msk [vmem:[#allocation2 + $0x60] sm:$0x1] %vm299, 0.0
        %305 = vst.msk [vmem:[#allocation2 + $0x78] sm:$0x1] %vm299, 0.0
        %306 = vst.msk [vmem:[#allocation2 + $0x90] sm:$0x1] %vm299, 0.0
        %307 = vst.msk [vmem:[#allocation2 + $0xa8] sm:$0x1] %vm299, 0.0
        %308 = vst.msk [vmem:[#allocation2 + $0xc0] sm:$0x1] %vm299, 0.0
        %309 = vst.msk [vmem:[#allocation2 + $0xd8] sm:$0x1] %vm299, 0.0
        %310 = vst.msk [vmem:[#allocation2 + $0xf0] sm:$0x1] %vm299, 0.0
        %311 = vst.msk [vmem:[#allocation2 + $0x108] sm:$0x1] %vm299, 0.0
        %312 = vst.msk [vmem:[#allocation2 + $0x120] sm:$0x1] %vm299, 0.0
        %313 = vst.msk [vmem:[#allocation2 + $0x138] sm:$0x1] %vm299, 0.0
        %314 = vst.msk [vmem:[#allocation2 + $0x150] sm:$0x1] %vm299, 0.0
        %315 = vst.msk [vmem:[#allocation2 + $0x168] sm:$0x1] %vm299, 0.0
        %316 = vst.msk [vmem:[#allocation2 + $0x180] sm:$0x1] %vm299, 0.0
        %317 = vst.msk [vmem:[#allocation2 + $0x198] sm:$0x1] %vm299, 0.0
        %318 = vst.msk [vmem:[#allocation2 + $0x1b0] sm:$0x1] %vm299, 0.0
        %319 = vst.msk [vmem:[#allocation2 + $0x1c8] sm:$0x1] %vm299, 0.0
        %320 = vst.msk [vmem:[#allocation2 + $0x1e0] sm:$0x1] %vm299, 0.0
        %321 = vst.msk [vmem:[#allocation2 + $0x1f8] sm:$0x1] %vm299, 0.0
        %322 = vst.msk [vmem:[#allocation2 + $0x210] sm:$0x1] %vm299, 0.0
        %323 = vst.msk [vmem:[#allocation2 + $0x228] sm:$0x1] %vm299, 0.0
        %324 = vst.msk [vmem:[#allocation2 + $0x240] sm:$0x1] %vm299, 0.0
        %325 = vst.msk [vmem:[#allocation2 + $0x258] sm:$0x1] %vm299, 0.0
        %326 = vst.msk [vmem:[#allocation2 + $0x270] sm:$0x1] %vm299, 0.0
        %327 = vst.msk [vmem:[#allocation2 + $0x288] sm:$0x1] %vm299, 0.0
        %328 = vst.msk [vmem:[#allocation2 + $0x2a0] sm:$0x1] %vm299, 0.0
        %329 = vst.msk [vmem:[#allocation2 + $0x2b8] sm:$0x1] %vm299, 0.0
        %330 = vst.msk [vmem:[#allocation2 + $0x2d0] sm:$0x1] %vm299, 0.0
        %331 = vst.msk [vmem:[#allocation2 + $0x2e8] sm:$0x1] %vm299, 0.0
        %332 = vst.msk [vmem:[#allocation2 + $0x300] sm:$0x1] %vm299, 0.0
        %333 = vst.msk [vmem:[#allocation2 + $0x318] sm:$0x1] %vm299, 0.0
        %334 = vst.msk [vmem:[#allocation2 + $0x330] sm:$0x1] %vm299, 0.0
        %335 = vst.msk [vmem:[#allocation2 + $0x348] sm:$0x1] %vm299, 0.0
        %336 = vst.msk [vmem:[#allocation2 + $0x11] sm:$0x1] %vm299, 0.0
        %337 = vst.msk [vmem:[#allocation2 + $0x29] sm:$0x1] %vm299, 0.0
        %338 = vst.msk [vmem:[#allocation2 + $0x41] sm:$0x1] %vm299, 0.0
        %339 = vst.msk [vmem:[#allocation2 + $0x59] sm:$0x1] %vm299, 0.0
        %340 = vst.msk [vmem:[#allocation2 + $0x71] sm:$0x1] %vm299, 0.0
        %341 = vst.msk [vmem:[#allocation2 + $0x89] sm:$0x1] %vm299, 0.0
        %342 = vst.msk [vmem:[#allocation2 + $0xa1] sm:$0x1] %vm299, 0.0
        %343 = vst.msk [vmem:[#allocation2 + $0xb9] sm:$0x1] %vm299, 0.0
        %344 = vst.msk [vmem:[#allocation2 + $0xd1] sm:$0x1] %vm299, 0.0
        %345 = vst.msk [vmem:[#allocation2 + $0xe9] sm:$0x1] %vm299, 0.0
        %346 = vst.msk [vmem:[#allocation2 + $0x101] sm:$0x1] %vm299, 0.0
        %347 = vst.msk [vmem:[#allocation2 + $0x119] sm:$0x1] %vm299, 0.0
        %348 = vst.msk [vmem:[#allocation2 + $0x131] sm:$0x1] %vm299, 0.0
        %349 = vst.msk [vmem:[#allocation2 + $0x149] sm:$0x1] %vm299, 0.0
        %350 = vst.msk [vmem:[#allocation2 + $0x161] sm:$0x1] %vm299, 0.0
        %351 = vst.msk [vmem:[#allocation2 + $0x179] sm:$0x1] %vm299, 0.0
        %352 = vst.msk [vmem:[#allocation2 + $0x191] sm:$0x1] %vm299, 0.0
        %353 = vst.msk [vmem:[#allocation2 + $0x1a9] sm:$0x1] %vm299, 0.0
        %354 = vst.msk [vmem:[#allocation2 + $0x1c1] sm:$0x1] %vm299, 0.0
        %355 = vst.msk [vmem:[#allocation2 + $0x1d9] sm:$0x1] %vm299, 0.0
        %356 = vst.msk [vmem:[#allocation2 + $0x1f1] sm:$0x1] %vm299, 0.0
        %357 = vst.msk [vmem:[#allocation2 + $0x209] sm:$0x1] %vm299, 0.0
        %358 = vst.msk [vmem:[#allocation2 + $0x221] sm:$0x1] %vm299, 0.0
        %359 = vst.msk [vmem:[#allocation2 + $0x239] sm:$0x1] %vm299, 0.0
        %360 = vst.msk [vmem:[#allocation2 + $0x251] sm:$0x1] %vm299, 0.0
        %361 = vst.msk [vmem:[#allocation2 + $0x269] sm:$0x1] %vm299, 0.0
        %362 = vst.msk [vmem:[#allocation2 + $0x281] sm:$0x1] %vm299, 0.0
        %363 = vst.msk [vmem:[#allocation2 + $0x299] sm:$0x1] %vm299, 0.0
        %364 = vst.msk [vmem:[#allocation2 + $0x2b1] sm:$0x1] %vm299, 0.0
        %365 = vst.msk [vmem:[#allocation2 + $0x2c9] sm:$0x1] %vm299, 0.0
        %366 = vst.msk [vmem:[#allocation2 + $0x2e1] sm:$0x1] %vm299, 0.0
        %367 = vst.msk [vmem:[#allocation2 + $0x2f9] sm:$0x1] %vm299, 0.0
        %368 = vst.msk [vmem:[#allocation2 + $0x311] sm:$0x1] %vm299, 0.0
        %369 = vst.msk [vmem:[#allocation2 + $0x329] sm:$0x1] %vm299, 0.0
        %370 = vst.msk [vmem:[#allocation2 + $0x341] sm:$0x1] %vm299, 0.0
        %371 = vst.msk [vmem:[#allocation2 + $0x359] sm:$0x1] %vm299, 0.0
        %v372 = vld [vmem:[%s280] sm:$0xf]
        %v373 = vld [vmem:[%s280 + $0x4] sm:$0xf]
        %v374 = vld [vmem:[%s280 + $0x8] sm:$0xf]
        %v375 = vld [vmem:[%s280 + $0xc] sm:$0xf]
        %v376 = vld [vmem:[%s280 + $0x10] sm:$0xf]
        %v377 = vld [vmem:[%s280 + $0x14] sm:$0xf]
        %v378 = vld [vmem:[%s280 + $0x18] sm:$0xf]
        %v379 = vld [vmem:[%s280 + $0x1c] sm:$0xf]
        %v380 = vld [vmem:[%s280 + $0x20] sm:$0xf]
        %v381 = vld [vmem:[%s280 + $0x24] sm:$0xf]
        %v382 = vld [vmem:[%s280 + $0x28] sm:$0xf]
        %v383 = vld [vmem:[%s280 + $0x2c] sm:$0xf]
        %v384 = vld [vmem:[%s280 + $0x30] sm:$0xf]
        %v385 = vld [vmem:[%s280 + $0x34] sm:$0xf]
        %v386 = vld [vmem:[%s280 + $0x38] sm:$0xf]
        %v387 = vld [vmem:[%s280 + $0x3c] sm:$0xf]
        %v388 = vld [vmem:[%s280 + $0x40] sm:$0xf]
        %v389 = vld [vmem:[%s280 + $0x44] sm:$0xf]
        %v390 = vld [vmem:[%s280 + $0x48] sm:$0xf]
        %v391 = vld [vmem:[%s280 + $0x4c] sm:$0xf]
        %v392 = vld [vmem:[%s280 + $0x50] sm:$0xf]
        %v393 = vld [vmem:[%s280 + $0x54] sm:$0xf]
        %v394 = vld [vmem:[%s280 + $0x58] sm:$0xf]
        %v395 = vld [vmem:[%s280 + $0x5c] sm:$0xf]
        %v396 = vld [vmem:[%s280 + $0x60] sm:$0xf]
        %v397 = vld [vmem:[%s280 + $0x64] sm:$0xf]
        %v398 = vld [vmem:[%s280 + $0x68] sm:$0xf]
        %v399 = vld [vmem:[%s280 + $0x6c] sm:$0xf]
        %v400 = vld [vmem:[%s280 + $0x70] sm:$0xf]
        %v401 = vld [vmem:[%s280 + $0x74] sm:$0xf]
        %v402 = vld [vmem:[%s280 + $0x78] sm:$0xf]
        %v403 = vld [vmem:[%s280 + $0x7c] sm:$0xf]
        %v404 = vld [vmem:[%s280 + $0x80] sm:$0xf]
        %v405 = vld [vmem:[%s280 + $0x84] sm:$0xf]
        %v406 = vld [vmem:[%s280 + $0x88] sm:$0xf]
        %v407 = vld [vmem:[%s280 + $0x8c] sm:$0xf]
        %v408 = vld [vmem:[%s280 + $0x90] sm:$0xf]
        %v409 = vld [vmem:[%s280 + $0x94] sm:$0xf]
        %v410 = vld [vmem:[%s280 + $0x98] sm:$0xf]
        %v411 = vld [vmem:[%s280 + $0x9c] sm:$0xf]
        %v412 = vld [vmem:[%s280 + $0xa0] sm:$0xf]
        %v413 = vld [vmem:[%s280 + $0xa4] sm:$0xf]
        %v414 = vld [vmem:[%s280 + $0xa8] sm:$0xf]
        %v415 = vld [vmem:[%s280 + $0xac] sm:$0xf]
        %v416 = vld [vmem:[%s280 + $0xb0] sm:$0xf]
        %v417 = vld [vmem:[%s280 + $0xb4] sm:$0xf]
        %v418 = vld [vmem:[%s280 + $0xb8] sm:$0xf]
        %v419 = vld [vmem:[%s280 + $0xbc] sm:$0xf]
        %v420 = vld [vmem:[%s280 + $0xc0] sm:$0xf]
        %v421 = vld [vmem:[%s280 + $0xc4] sm:$0xf]
        %v422 = vld [vmem:[%s280 + $0xc8] sm:$0xf]
        %v423 = vld [vmem:[%s280 + $0xcc] sm:$0xf]
        %v424 = vld [vmem:[%s280 + $0xd0] sm:$0xf]
        %v425 = vld [vmem:[%s280 + $0xd4] sm:$0xf]
        %v426 = vld [vmem:[%s280 + $0xd8] sm:$0xf]
        %v427 = vld [vmem:[%s280 + $0xdc] sm:$0xf]
        %v428 = vld [vmem:[%s280 + $0xe0] sm:$0xf]
        %v429 = vld [vmem:[%s280 + $0xe4] sm:$0xf]
        %v430 = vld [vmem:[%s280 + $0xe8] sm:$0xf]
        %v431 = vld [vmem:[%s280 + $0xec] sm:$0xf]
        %v432 = vld [vmem:[%s280 + $0xf0] sm:$0xf]
        %v433 = vld [vmem:[%s280 + $0xf4] sm:$0xf]
        %v434 = vld [vmem:[%s280 + $0xf8] sm:$0xf]
        %v435 = vld [vmem:[%s280 + $0xfc] sm:$0xf]
        %v436 = vunpack.c.l.bf16 %v372
        %v437 = vunpack.c.l.bf16 %v373
        %v438 = vunpack.c.l.bf16 %v374
        %v439 = vunpack.c.l.bf16 %v375
        %v440 = vunpack.c.l.bf16 %v376
        %v441 = vunpack.c.l.bf16 %v377
        %v442 = vunpack.c.l.bf16 %v378
        %v443 = vunpack.c.l.bf16 %v379
        %v444 = vunpack.c.l.bf16 %v380
        %v445 = vunpack.c.l.bf16 %v381
        %v446 = vunpack.c.l.bf16 %v382
        %v447 = vunpack.c.l.bf16 %v383
        %v448 = vunpack.c.l.bf16 %v384
        %v449 = vunpack.c.l.bf16 %v385
        %v450 = vunpack.c.l.bf16 %v386
        %v451 = vunpack.c.l.bf16 %v387
        %v452 = vunpack.c.l.bf16 %v388
        %v453 = vunpack.c.l.bf16 %v389
        %v454 = vunpack.c.l.bf16 %v390
        %v455 = vunpack.c.l.bf16 %v391
        %v456 = vunpack.c.l.bf16 %v392
        %v457 = vunpack.c.l.bf16 %v393
        %v458 = vunpack.c.l.bf16 %v394
        %v459 = vunpack.c.l.bf16 %v395
        %v460 = vunpack.c.l.bf16 %v396
        %v461 = vunpack.c.l.bf16 %v397
        %v462 = vunpack.c.l.bf16 %v398
        %v463 = vunpack.c.l.bf16 %v399
        %v464 = vunpack.c.l.bf16 %v400
        %v465 = vunpack.c.l.bf16 %v401
        %v466 = vunpack.c.l.bf16 %v402
        %v467 = vunpack.c.l.bf16 %v403
        %v468 = vunpack.c.l.bf16 %v404
        %v469 = vunpack.c.l.bf16 %v405
        %v470 = vunpack.c.l.bf16 %v406
        %v471 = vunpack.c.l.bf16 %v407
        %v472 = vunpack.c.l.bf16 %v408
        %v473 = vunpack.c.l.bf16 %v409
        %v474 = vunpack.c.l.bf16 %v410
        %v475 = vunpack.c.l.bf16 %v411
        %v476 = vunpack.c.l.bf16 %v412
        %v477 = vunpack.c.l.bf16 %v413
        %v478 = vunpack.c.l.bf16 %v414
        %v479 = vunpack.c.l.bf16 %v415
        %v480 = vunpack.c.l.bf16 %v416
        %v481 = vunpack.c.l.bf16 %v417
        %v482 = vunpack.c.l.bf16 %v418
        %v483 = vunpack.c.l.bf16 %v419
        %v484 = vunpack.c.l.bf16 %v420
        %v485 = vunpack.c.l.bf16 %v421
        %v486 = vunpack.c.l.bf16 %v422
        %v487 = vunpack.c.l.bf16 %v423
        %v488 = vunpack.c.l.bf16 %v424
        %v489 = vunpack.c.l.bf16 %v425
        %v490 = vunpack.c.l.bf16 %v426
        %v491 = vunpack.c.l.bf16 %v427
        %v492 = vunpack.c.l.bf16 %v428
        %v493 = vunpack.c.l.bf16 %v429
        %v494 = vunpack.c.l.bf16 %v430
        %v495 = vunpack.c.l.bf16 %v431
        %v496 = vunpack.c.l.bf16 %v432
        %v497 = vunpack.c.l.bf16 %v433
        %v498 = vunpack.c.l.bf16 %v434
        %v499 = vunpack.c.l.bf16 %v435
        %s500 = scalar_lea.vmem [#allocation2], 24
        %501 = vst.msk [vmem:[%s500 + $0x1] sm:$0xff] %vm284, %v436
        %502 = vst.msk [vmem:[%s500 + $0x9] sm:$0xff] %vm284, %v437
        %503 = vst.msk [vmem:[%s500 + $0x19] sm:$0xff] %vm284, %v438
        %504 = vst.msk [vmem:[%s500 + $0x21] sm:$0xff] %vm284, %v439
        %505 = vst.msk [vmem:[%s500 + $0x31] sm:$0xff] %vm284, %v440
        %506 = vst.msk [vmem:[%s500 + $0x39] sm:$0xff] %vm284, %v441
        %507 = vst.msk [vmem:[%s500 + $0x49] sm:$0xff] %vm284, %v442
        %508 = vst.msk [vmem:[%s500 + $0x51] sm:$0xff] %vm284, %v443
        %509 = vst.msk [vmem:[%s500 + $0x61] sm:$0xff] %vm284, %v444
        %510 = vst.msk [vmem:[%s500 + $0x69] sm:$0xff] %vm284, %v445
        %511 = vst.msk [vmem:[%s500 + $0x79] sm:$0xff] %vm284, %v446
        %512 = vst.msk [vmem:[%s500 + $0x81] sm:$0xff] %vm284, %v447
        %513 = vst.msk [vmem:[%s500 + $0x91] sm:$0xff] %vm284, %v448
        %514 = vst.msk [vmem:[%s500 + $0x99] sm:$0xff] %vm284, %v449
        %515 = vst.msk [vmem:[%s500 + $0xa9] sm:$0xff] %vm284, %v450
        %516 = vst.msk [vmem:[%s500 + $0xb1] sm:$0xff] %vm284, %v451
        %517 = vst.msk [vmem:[%s500 + $0xc1] sm:$0xff] %vm284, %v452
        %518 = vst.msk [vmem:[%s500 + $0xc9] sm:$0xff] %vm284, %v453
        %519 = vst.msk [vmem:[%s500 + $0xd9] sm:$0xff] %vm284, %v454
        %520 = vst.msk [vmem:[%s500 + $0xe1] sm:$0xff] %vm284, %v455
        %521 = vst.msk [vmem:[%s500 + $0xf1] sm:$0xff] %vm284, %v456
        %522 = vst.msk [vmem:[%s500 + $0xf9] sm:$0xff] %vm284, %v457
        %523 = vst.msk [vmem:[%s500 + $0x109] sm:$0xff] %vm284, %v458
        %524 = vst.msk [vmem:[%s500 + $0x111] sm:$0xff] %vm284, %v459
        %525 = vst.msk [vmem:[%s500 + $0x121] sm:$0xff] %vm284, %v460
        %526 = vst.msk [vmem:[%s500 + $0x129] sm:$0xff] %vm284, %v461
        %527 = vst.msk [vmem:[%s500 + $0x139] sm:$0xff] %vm284, %v462
        %528 = vst.msk [vmem:[%s500 + $0x141] sm:$0xff] %vm284, %v463
        %529 = vst.msk [vmem:[%s500 + $0x151] sm:$0xff] %vm284, %v464
        %530 = vst.msk [vmem:[%s500 + $0x159] sm:$0xff] %vm284, %v465
        %531 = vst.msk [vmem:[%s500 + $0x169] sm:$0xff] %vm284, %v466
        %532 = vst.msk [vmem:[%s500 + $0x171] sm:$0xff] %vm284, %v467
        %533 = vst.msk [vmem:[%s500 + $0x1b1] sm:$0xff] %vm284, %v468
        %534 = vst.msk [vmem:[%s500 + $0x1b9] sm:$0xff] %vm284, %v469
        %535 = vst.msk [vmem:[%s500 + $0x1c9] sm:$0xff] %vm284, %v470
        %536 = vst.msk [vmem:[%s500 + $0x1d1] sm:$0xff] %vm284, %v471
        %537 = vst.msk [vmem:[%s500 + $0x1e1] sm:$0xff] %vm284, %v472
        %538 = vst.msk [vmem:[%s500 + $0x1e9] sm:$0xff] %vm284, %v473
        %539 = vst.msk [vmem:[%s500 + $0x1f9] sm:$0xff] %vm284, %v474
        %540 = vst.msk [vmem:[%s500 + $0x201] sm:$0xff] %vm284, %v475
        %541 = vst.msk [vmem:[%s500 + $0x211] sm:$0xff] %vm284, %v476
        %542 = vst.msk [vmem:[%s500 + $0x219] sm:$0xff] %vm284, %v477
        %543 = vst.msk [vmem:[%s500 + $0x229] sm:$0xff] %vm284, %v478
        %544 = vst.msk [vmem:[%s500 + $0x231] sm:$0xff] %vm284, %v479
        %545 = vst.msk [vmem:[%s500 + $0x241] sm:$0xff] %vm284, %v480
        %546 = vst.msk [vmem:[%s500 + $0x249] sm:$0xff] %vm284, %v481
        %547 = vst.msk [vmem:[%s500 + $0x259] sm:$0xff] %vm284, %v482
        %548 = vst.msk [vmem:[%s500 + $0x261] sm:$0xff] %vm284, %v483
        %549 = vst.msk [vmem:[%s500 + $0x271] sm:$0xff] %vm284, %v484
        %550 = vst.msk [vmem:[%s500 + $0x279] sm:$0xff] %vm284, %v485
        %551 = vst.msk [vmem:[%s500 + $0x289] sm:$0xff] %vm284, %v486
        %552 = vst.msk [vmem:[%s500 + $0x291] sm:$0xff] %vm284, %v487
        %553 = vst.msk [vmem:[%s500 + $0x2a1] sm:$0xff] %vm284, %v488
        %554 = vst.msk [vmem:[%s500 + $0x2a9] sm:$0xff] %vm284, %v489
        %555 = vst.msk [vmem:[%s500 + $0x2b9] sm:$0xff] %vm284, %v490
        %556 = vst.msk [vmem:[%s500 + $0x2c1] sm:$0xff] %vm284, %v491
        %557 = vst.msk [vmem:[%s500 + $0x2d1] sm:$0xff] %vm284, %v492
        %558 = vst.msk [vmem:[%s500 + $0x2d9] sm:$0xff] %vm284, %v493
        %559 = vst.msk [vmem:[%s500 + $0x2e9] sm:$0xff] %vm284, %v494
        %560 = vst.msk [vmem:[%s500 + $0x2f1] sm:$0xff] %vm284, %v495
        %561 = vst.msk [vmem:[%s500 + $0x301] sm:$0xff] %vm284, %v496
        %562 = vst.msk [vmem:[%s500 + $0x309] sm:$0xff] %vm284, %v497
        %563 = vst.msk [vmem:[%s500 + $0x319] sm:$0xff] %vm284, %v498
        %564 = vst.msk [vmem:[%s500 + $0x321] sm:$0xff] %vm284, %v499
        %v565 = vld [vmem:[#allocation2] sm:$0xff]
        %v566 = vld [vmem:[#allocation2 + $0x8] sm:$0xff]
        %v567 = vld [vmem:[#allocation2 + $0x10] sm:$0x3]
        %v568 = vld [vmem:[#allocation2 + $0x18] sm:$0xff]
        %v569 = vld [vmem:[#allocation2 + $0x20] sm:$0xff]
        %v570 = vld [vmem:[#allocation2 + $0x28] sm:$0x3]
        %v571 = vld [vmem:[#allocation2 + $0x30] sm:$0xff]
        %v572 = vld [vmem:[#allocation2 + $0x38] sm:$0xff]
        %v573 = vld [vmem:[#allocation2 + $0x40] sm:$0x3]
        %v574 = vld [vmem:[#allocation2 + $0x48] sm:$0xff]
        %v575 = vld [vmem:[#allocation2 + $0x50] sm:$0xff]
        %v576 = vld [vmem:[#allocation2 + $0x58] sm:$0x3]
        %v577 = vld [vmem:[#allocation2 + $0x60] sm:$0xff]
        %v578 = vld [vmem:[#allocation2 + $0x68] sm:$0xff]
        %v579 = vld [vmem:[#allocation2 + $0x70] sm:$0x3]
        %v580 = vld [vmem:[#allocation2 + $0x78] sm:$0xff]
        %v581 = vld [vmem:[#allocation2 + $0x80] sm:$0xff]
        %v582 = vld [vmem:[#allocation2 + $0x88] sm:$0x3]
        %v583 = vld [vmem:[#allocation2 + $0x90] sm:$0xff]
        %v584 = vld [vmem:[#allocation2 + $0x98] sm:$0xff]
        %v585 = vld [vmem:[#allocation2 + $0xa0] sm:$0x3]
        %v586 = vld [vmem:[#allocation2 + $0xa8] sm:$0xff]
        %v587 = vld [vmem:[#allocation2 + $0xb0] sm:$0xff]
        %v588 = vld [vmem:[#allocation2 + $0xb8] sm:$0x3]
        %v589 = vld [vmem:[#allocation2 + $0xc0] sm:$0xff]
        %v590 = vld [vmem:[#allocation2 + $0xc8] sm:$0xff]
        %v591 = vld [vmem:[#allocation2 + $0xd0] sm:$0x3]
        %v592 = vld [vmem:[#allocation2 + $0xd8] sm:$0xff]
        %v593 = vld [vmem:[#allocation2 + $0xe0] sm:$0xff]
        %v594 = vld [vmem:[#allocation2 + $0xe8] sm:$0x3]
        %v595 = vld [vmem:[#allocation2 + $0xf0] sm:$0xff]
        %v596 = vld [vmem:[#allocation2 + $0xf8] sm:$0xff]
        %v597 = vld [vmem:[#allocation2 + $0x100] sm:$0x3]
        %v598 = vld [vmem:[#allocation2 + $0x108] sm:$0xff]
        %v599 = vld [vmem:[#allocation2 + $0x110] sm:$0xff]
        %v600 = vld [vmem:[#allocation2 + $0x118] sm:$0x3]
        %v601 = vld [vmem:[#allocation2 + $0x120] sm:$0xff]
        %v602 = vld [vmem:[#allocation2 + $0x128] sm:$0xff]
        %v603 = vld [vmem:[#allocation2 + $0x130] sm:$0x3]
        %v604 = vld [vmem:[#allocation2 + $0x138] sm:$0xff]
        %v605 = vld [vmem:[#allocation2 + $0x140] sm:$0xff]
        %v606 = vld [vmem:[#allocation2 + $0x148] sm:$0x3]
        %v607 = vld [vmem:[#allocation2 + $0x150] sm:$0xff]
        %v608 = vld [vmem:[#allocation2 + $0x158] sm:$0xff]
        %v609 = vld [vmem:[#allocation2 + $0x160] sm:$0x3]
        %v610 = vld [vmem:[#allocation2 + $0x168] sm:$0xff]
        %v611 = vld [vmem:[#allocation2 + $0x170] sm:$0xff]
        %v612 = vld [vmem:[#allocation2 + $0x178] sm:$0x3]
        %v613 = vld [vmem:[#allocation2 + $0x180] sm:$0xff]
        %v614 = vld [vmem:[#allocation2 + $0x188] sm:$0xff]
        %v615 = vld [vmem:[#allocation2 + $0x190] sm:$0x3]
        %v616 = vld [vmem:[#allocation2 + $0x198] sm:$0xff]
        %v617 = vld [vmem:[#allocation2 + $0x1a0] sm:$0xff]
        %v618 = vld [vmem:[#allocation2 + $0x1a8] sm:$0x3]
        %v619 = vld [vmem:[#allocation2 + $0x1b0] sm:$0xff]
        %v620 = vld [vmem:[#allocation2 + $0x1b8] sm:$0xff]
        %v621 = vld [vmem:[#allocation2 + $0x1c0] sm:$0x3]
        %v622 = vld [vmem:[#allocation2 + $0x1c8] sm:$0xff]
        %v623 = vld [vmem:[#allocation2 + $0x1d0] sm:$0xff]
        %v624 = vld [vmem:[#allocation2 + $0x1d8] sm:$0x3]
        %v625 = vld [vmem:[#allocation2 + $0x1e0] sm:$0xff]
        %v626 = vld [vmem:[#allocation2 + $0x1e8] sm:$0xff]
        %v627 = vld [vmem:[#allocation2 + $0x1f0] sm:$0x3]
        %v628 = vld [vmem:[#allocation2 + $0x1f8] sm:$0xff]
        %v629 = vld [vmem:[#allocation2 + $0x200] sm:$0xff]
        %v630 = vld [vmem:[#allocation2 + $0x208] sm:$0x3]
        %v631 = vld [vmem:[#allocation2 + $0x210] sm:$0xff]
        %v632 = vld [vmem:[#allocation2 + $0x218] sm:$0xff]
        %v633 = vld [vmem:[#allocation2 + $0x220] sm:$0x3]
        %v634 = vld [vmem:[#allocation2 + $0x228] sm:$0xff]
        %v635 = vld [vmem:[#allocation2 + $0x230] sm:$0xff]
        %v636 = vld [vmem:[#allocation2 + $0x238] sm:$0x3]
        %v637 = vld [vmem:[#allocation2 + $0x240] sm:$0xff]
        %v638 = vld [vmem:[#allocation2 + $0x248] sm:$0xff]
        %v639 = vld [vmem:[#allocation2 + $0x250] sm:$0x3]
        %v640 = vld [vmem:[#allocation2 + $0x258] sm:$0xff]
        %v641 = vld [vmem:[#allocation2 + $0x260] sm:$0xff]
        %v642 = vld [vmem:[#allocation2 + $0x268] sm:$0x3]
        %v643 = vld [vmem:[#allocation2 + $0x270] sm:$0xff]
        %v644 = vld [vmem:[#allocation2 + $0x278] sm:$0xff]
        %v645 = vld [vmem:[#allocation2 + $0x280] sm:$0x3]
        %v646 = vld [vmem:[#allocation2 + $0x288] sm:$0xff]
        %v647 = vld [vmem:[#allocation2 + $0x290] sm:$0xff]
        %v648 = vld [vmem:[#allocation2 + $0x298] sm:$0x3]
        %v649 = vld [vmem:[#allocation2 + $0x2a0] sm:$0xff]
        %v650 = vld [vmem:[#allocation2 + $0x2a8] sm:$0xff]
        %v651 = vld [vmem:[#allocation2 + $0x2b0] sm:$0x3]
        %v652 = vld [vmem:[#allocation2 + $0x2b8] sm:$0xff]
        %v653 = vld [vmem:[#allocation2 + $0x2c0] sm:$0xff]
        %v654 = vld [vmem:[#allocation2 + $0x2c8] sm:$0x3]
        %v655 = vld [vmem:[#allocation2 + $0x2d0] sm:$0xff]
        %v656 = vld [vmem:[#allocation2 + $0x2d8] sm:$0xff]
        %v657 = vld [vmem:[#allocation2 + $0x2e0] sm:$0x3]
        %v658 = vld [vmem:[#allocation2 + $0x2e8] sm:$0xff]
        %v659 = vld [vmem:[#allocation2 + $0x2f0] sm:$0xff]
        %v660 = vld [vmem:[#allocation2 + $0x2f8] sm:$0x3]
        %v661 = vld [vmem:[#allocation2 + $0x300] sm:$0xff]
        %v662 = vld [vmem:[#allocation2 + $0x308] sm:$0xff]
        %v663 = vld [vmem:[#allocation2 + $0x310] sm:$0x3]
        %v664 = vld [vmem:[#allocation2 + $0x318] sm:$0xff]
        %v665 = vld [vmem:[#allocation2 + $0x320] sm:$0xff]
        %v666 = vld [vmem:[#allocation2 + $0x328] sm:$0x3]
        %v667 = vld [vmem:[#allocation2 + $0x330] sm:$0xff]
        %v668 = vld [vmem:[#allocation2 + $0x338] sm:$0xff]
        %v669 = vld [vmem:[#allocation2 + $0x340] sm:$0x3]
        %v670 = vld [vmem:[#allocation2 + $0x348] sm:$0xff]
        %v671 = vld [vmem:[#allocation2 + $0x350] sm:$0xff]
        %v672 = vld [vmem:[#allocation2 + $0x358] sm:$0x3]
        %v673 = vpack.c.bf16 %v566, %v565
        %v674 = vpack.c.bf16 %v569, %v568
        %v675 = vpack.c.bf16 %v572, %v571
        %v676 = vpack.c.bf16 %v575, %v574
        %v677 = vpack.c.bf16 %v578, %v577
        %v678 = vpack.c.bf16 %v581, %v580
        %v679 = vpack.c.bf16 %v584, %v583
        %v680 = vpack.c.bf16 %v587, %v586
        %v681 = vpack.c.bf16 %v590, %v589
        %v682 = vpack.c.bf16 %v593, %v592
        %v683 = vpack.c.bf16 %v596, %v595
        %v684 = vpack.c.bf16 %v599, %v598
        %v685 = vpack.c.bf16 %v602, %v601
        %v686 = vpack.c.bf16 %v605, %v604
        %v687 = vpack.c.bf16 %v608, %v607
        %v688 = vpack.c.bf16 %v611, %v610
        %v689 = vpack.c.bf16 %v620, %v619
        %v690 = vpack.c.bf16 %v623, %v622
        %v691 = vpack.c.bf16 %v626, %v625
        %v692 = vpack.c.bf16 %v629, %v628
        %v693 = vpack.c.bf16 %v632, %v631
        %v694 = vpack.c.bf16 %v635, %v634
        %v695 = vpack.c.bf16 %v638, %v637
        %v696 = vpack.c.bf16 %v641, %v640
        %v697 = vpack.c.bf16 %v644, %v643
        %v698 = vpack.c.bf16 %v647, %v646
        %v699 = vpack.c.bf16 %v650, %v649
        %v700 = vpack.c.bf16 %v653, %v652
        %v701 = vpack.c.bf16 %v656, %v655
        %v702 = vpack.c.bf16 %v659, %v658
        %v703 = vpack.c.bf16 %v662, %v661
        %v704 = vpack.c.bf16 %v665, %v664
        %vm801 = vcmask 1046528
        %v802 = vrot.slane %v565, 1
        %v803 = vrot.slane %v566, 1
        %v804 = vsel %vm801, %v802, %v803
        %v805 = vrot.slane %v567, 1
        %v806 = vsel %vm801, %v803, %v805
        %v807 = vrot.slane %v568, 1
        %v808 = vrot.slane %v569, 1
        %v809 = vsel %vm801, %v807, %v808
        %v810 = vrot.slane %v570, 1
        %v811 = vsel %vm801, %v808, %v810
        %v812 = vrot.slane %v571, 1
        %v813 = vrot.slane %v572, 1
        %v814 = vsel %vm801, %v812, %v813
        %v815 = vrot.slane %v573, 1
        %v816 = vsel %vm801, %v813, %v815
        %v817 = vrot.slane %v574, 1
        %v818 = vrot.slane %v575, 1
        %v819 = vsel %vm801, %v817, %v818
        %v820 = vrot.slane %v576, 1
        %v821 = vsel %vm801, %v818, %v820
        %v822 = vrot.slane %v577, 1
        %v823 = vrot.slane %v578, 1
        %v824 = vsel %vm801, %v822, %v823
        %v825 = vrot.slane %v579, 1
        %v826 = vsel %vm801, %v823, %v825
        %v827 = vrot.slane %v580, 1
        %v828 = vrot.slane %v581, 1
        %v829 = vsel %vm801, %v827, %v828
        %v830 = vrot.slane %v582, 1
        %v831 = vsel %vm801, %v828, %v830
        %v832 = vrot.slane %v583, 1
        %v833 = vrot.slane %v584, 1
        %v834 = vsel %vm801, %v832, %v833
        %v835 = vrot.slane %v585, 1
        %v836 = vsel %vm801, %v833, %v835
        %v837 = vrot.slane %v586, 1
        %v838 = vrot.slane %v587, 1
        %v839 = vsel %vm801, %v837, %v838
        %v840 = vrot.slane %v588, 1
        %v841 = vsel %vm801, %v838, %v840
        %v842 = vrot.slane %v589, 1
        %v843 = vrot.slane %v590, 1
        %v844 = vsel %vm801, %v842, %v843
        %v845 = vrot.slane %v591, 1
        %v846 = vsel %vm801, %v843, %v845
        %v847 = vrot.slane %v592, 1
        %v848 = vrot.slane %v593, 1
        %v849 = vsel %vm801, %v847, %v848
        %v850 = vrot.slane %v594, 1
        %v851 = vsel %vm801, %v848, %v850
        %v852 = vrot.slane %v595, 1
        %v853 = vrot.slane %v596, 1
        %v854 = vsel %vm801, %v852, %v853
        %v855 = vrot.slane %v597, 1
        %v856 = vsel %vm801, %v853, %v855
        %v857 = vrot.slane %v598, 1
        %v858 = vrot.slane %v599, 1
        %v859 = vsel %vm801, %v857, %v858
        %v860 = vrot.slane %v600, 1
        %v861 = vsel %vm801, %v858, %v860
        %v862 = vrot.slane %v601, 1
        %v863 = vrot.slane %v602, 1
        %v864 = vsel %vm801, %v862, %v863
        %v865 = vrot.slane %v603, 1
        %v866 = vsel %vm801, %v863, %v865
        %v867 = vrot.slane %v604, 1
        %v868 = vrot.slane %v605, 1
        %v869 = vsel %vm801, %v867, %v868
        %v870 = vrot.slane %v606, 1
        %v871 = vsel %vm801, %v868, %v870
        %v872 = vrot.slane %v607, 1
        %v873 = vrot.slane %v608, 1
        %v874 = vsel %vm801, %v872, %v873
        %v875 = vrot.slane %v609, 1
        %v876 = vsel %vm801, %v873, %v875
        %v877 = vrot.slane %v610, 1
        %v878 = vrot.slane %v611, 1
        %v879 = vsel %vm801, %v877, %v878
        %v880 = vrot.slane %v612, 1
        %v881 = vsel %vm801, %v878, %v880
        %v882 = vrot.slane %v619, 1
        %v883 = vrot.slane %v620, 1
        %v884 = vsel %vm801, %v882, %v883
        %v885 = vrot.slane %v621, 1
        %v886 = vsel %vm801, %v883, %v885
        %v887 = vrot.slane %v622, 1
        %v888 = vrot.slane %v623, 1
        %v889 = vsel %vm801, %v887, %v888
        %v890 = vrot.slane %v624, 1
        %v891 = vsel %vm801, %v888, %v890
        %v892 = vrot.slane %v625, 1
        %v893 = vrot.slane %v626, 1
        %v894 = vsel %vm801, %v892, %v893
        %v895 = vrot.slane %v627, 1
        %v896 = vsel %vm801, %v893, %v895
        %v897 = vrot.slane %v628, 1
        %v898 = vrot.slane %v629, 1
        %v899 = vsel %vm801, %v897, %v898
        %v900 = vrot.slane %v630, 1
        %v901 = vsel %vm801, %v898, %v900
        %v902 = vrot.slane %v631, 1
        %v903 = vrot.slane %v632, 1
        %v904 = vsel %vm801, %v902, %v903
        %v905 = vrot.slane %v633, 1
        %v906 = vsel %vm801, %v903, %v905
        %v907 = vrot.slane %v634, 1
        %v908 = vrot.slane %v635, 1
        %v909 = vsel %vm801, %v907, %v908
        %v910 = vrot.slane %v636, 1
        %v911 = vsel %vm801, %v908, %v910
        %v912 = vrot.slane %v637, 1
        %v913 = vrot.slane %v638, 1
        %v914 = vsel %vm801, %v912, %v913
        %v915 = vrot.slane %v639, 1
        %v916 = vsel %vm801, %v913, %v915
        %v917 = vrot.slane %v640, 1
        %v918 = vrot.slane %v641, 1
        %v919 = vsel %vm801, %v917, %v918
        %v920 = vrot.slane %v642, 1
        %v921 = vsel %vm801, %v918, %v920
        %v922 = vrot.slane %v643, 1
        %v923 = vrot.slane %v644, 1
        %v924 = vsel %vm801, %v922, %v923
        %v925 = vrot.slane %v645, 1
        %v926 = vsel %vm801, %v923, %v925
        %v927 = vrot.slane %v646, 1
        %v928 = vrot.slane %v647, 1
        %v929 = vsel %vm801, %v927, %v928
        %v930 = vrot.slane %v648, 1
        %v931 = vsel %vm801, %v928, %v930
        %v932 = vrot.slane %v649, 1
        %v933 = vrot.slane %v650, 1
        %v934 = vsel %vm801, %v932, %v933
        %v935 = vrot.slane %v651, 1
        %v936 = vsel %vm801, %v933, %v935
        %v937 = vrot.slane %v652, 1
        %v938 = vrot.slane %v653, 1
        %v939 = vsel %vm801, %v937, %v938
        %v940 = vrot.slane %v654, 1
        %v941 = vsel %vm801, %v938, %v940
        %v942 = vrot.slane %v655, 1
        %v943 = vrot.slane %v656, 1
        %v944 = vsel %vm801, %v942, %v943
        %v945 = vrot.slane %v657, 1
        %v946 = vsel %vm801, %v943, %v945
        %v947 = vrot.slane %v658, 1
        %v948 = vrot.slane %v659, 1
        %v949 = vsel %vm801, %v947, %v948
        %v950 = vrot.slane %v660, 1
        %v951 = vsel %vm801, %v948, %v950
        %v952 = vrot.slane %v661, 1
        %v953 = vrot.slane %v662, 1
        %v954 = vsel %vm801, %v952, %v953
        %v955 = vrot.slane %v663, 1
        %v956 = vsel %vm801, %v953, %v955
        %v957 = vrot.slane %v664, 1
        %v958 = vrot.slane %v665, 1
        %v959 = vsel %vm801, %v957, %v958
        %v960 = vrot.slane %v666, 1
        %v961 = vsel %vm801, %v958, %v960
        %v1026 = vpack.c.bf16 %v806, %v804
        %v1027 = vpack.c.bf16 %v811, %v809
        %v1028 = vpack.c.bf16 %v816, %v814
        %v1029 = vpack.c.bf16 %v821, %v819
        %v1030 = vpack.c.bf16 %v826, %v824
        %v1031 = vpack.c.bf16 %v831, %v829
        %v1032 = vpack.c.bf16 %v836, %v834
        %v1033 = vpack.c.bf16 %v841, %v839
        %v1034 = vpack.c.bf16 %v846, %v844
        %v1035 = vpack.c.bf16 %v851, %v849
        %v1036 = vpack.c.bf16 %v856, %v854
        %v1037 = vpack.c.bf16 %v861, %v859
        %v1038 = vpack.c.bf16 %v866, %v864
        %v1039 = vpack.c.bf16 %v871, %v869
        %v1040 = vpack.c.bf16 %v876, %v874
        %v1041 = vpack.c.bf16 %v881, %v879
        %v1042 = vpack.c.bf16 %v886, %v884
        %v1043 = vpack.c.bf16 %v891, %v889
        %v1044 = vpack.c.bf16 %v896, %v894
        %v1045 = vpack.c.bf16 %v901, %v899
        %v1046 = vpack.c.bf16 %v906, %v904
        %v1047 = vpack.c.bf16 %v911, %v909
        %v1048 = vpack.c.bf16 %v916, %v914
        %v1049 = vpack.c.bf16 %v921, %v919
        %v1050 = vpack.c.bf16 %v926, %v924
        %v1051 = vpack.c.bf16 %v931, %v929
        %v1052 = vpack.c.bf16 %v936, %v934
        %v1053 = vpack.c.bf16 %v941, %v939
        %v1054 = vpack.c.bf16 %v946, %v944
        %v1055 = vpack.c.bf16 %v951, %v949
        %v1056 = vpack.c.bf16 %v956, %v954
        %v1057 = vpack.c.bf16 %v961, %v959
        %vm1058 = vcmask 1045504
        %v1059 = vrot.slane %v565, 2
        %v1060 = vrot.slane %v566, 2
        %v1061 = vsel %vm1058, %v1059, %v1060
        %v1062 = vrot.slane %v567, 2
        %v1063 = vsel %vm1058, %v1060, %v1062
        %v1064 = vrot.slane %v568, 2
        %v1065 = vrot.slane %v569, 2
        %v1066 = vsel %vm1058, %v1064, %v1065
        %v1067 = vrot.slane %v570, 2
        %v1068 = vsel %vm1058, %v1065, %v1067
        %v1069 = vrot.slane %v571, 2
        %v1070 = vrot.slane %v572, 2
        %v1071 = vsel %vm1058, %v1069, %v1070
        %v1072 = vrot.slane %v573, 2
        %v1073 = vsel %vm1058, %v1070, %v1072
        %v1074 = vrot.slane %v574, 2
        %v1075 = vrot.slane %v575, 2
        %v1076 = vsel %vm1058, %v1074, %v1075
        %v1077 = vrot.slane %v576, 2
        %v1078 = vsel %vm1058, %v1075, %v1077
        %v1079 = vrot.slane %v577, 2
        %v1080 = vrot.slane %v578, 2
        %v1081 = vsel %vm1058, %v1079, %v1080
        %v1082 = vrot.slane %v579, 2
        %v1083 = vsel %vm1058, %v1080, %v1082
        %v1084 = vrot.slane %v580, 2
        %v1085 = vrot.slane %v581, 2
        %v1086 = vsel %vm1058, %v1084, %v1085
        %v1087 = vrot.slane %v582, 2
        %v1088 = vsel %vm1058, %v1085, %v1087
        %v1089 = vrot.slane %v583, 2
        %v1090 = vrot.slane %v584, 2
        %v1091 = vsel %vm1058, %v1089, %v1090
        %v1092 = vrot.slane %v585, 2
        %v1093 = vsel %vm1058, %v1090, %v1092
        %v1094 = vrot.slane %v586, 2
        %v1095 = vrot.slane %v587, 2
        %v1096 = vsel %vm1058, %v1094, %v1095
        %v1097 = vrot.slane %v588, 2
        %v1098 = vsel %vm1058, %v1095, %v1097
        %v1099 = vrot.slane %v589, 2
        %v1100 = vrot.slane %v590, 2
        %v1101 = vsel %vm1058, %v1099, %v1100
        %v1102 = vrot.slane %v591, 2
        %v1103 = vsel %vm1058, %v1100, %v1102
        %v1104 = vrot.slane %v592, 2
        %v1105 = vrot.slane %v593, 2
        %v1106 = vsel %vm1058, %v1104, %v1105
        %v1107 = vrot.slane %v594, 2
        %v1108 = vsel %vm1058, %v1105, %v1107
        %v1109 = vrot.slane %v595, 2
        %v1110 = vrot.slane %v596, 2
        %v1111 = vsel %vm1058, %v1109, %v1110
        %v1112 = vrot.slane %v597, 2
        %v1113 = vsel %vm1058, %v1110, %v1112
        %v1114 = vrot.slane %v598, 2
        %v1115 = vrot.slane %v599, 2
        %v1116 = vsel %vm1058, %v1114, %v1115
        %v1117 = vrot.slane %v600, 2
        %v1118 = vsel %vm1058, %v1115, %v1117
        %v1119 = vrot.slane %v601, 2
        %v1120 = vrot.slane %v602, 2
        %v1121 = vsel %vm1058, %v1119, %v1120
        %v1122 = vrot.slane %v603, 2
        %v1123 = vsel %vm1058, %v1120, %v1122
        %v1124 = vrot.slane %v604, 2
        %v1125 = vrot.slane %v605, 2
        %v1126 = vsel %vm1058, %v1124, %v1125
        %v1127 = vrot.slane %v606, 2
        %v1128 = vsel %vm1058, %v1125, %v1127
        %v1129 = vrot.slane %v607, 2
        %v1130 = vrot.slane %v608, 2
        %v1131 = vsel %vm1058, %v1129, %v1130
        %v1132 = vrot.slane %v609, 2
        %v1133 = vsel %vm1058, %v1130, %v1132
        %v1134 = vrot.slane %v610, 2
        %v1135 = vrot.slane %v611, 2
        %v1136 = vsel %vm1058, %v1134, %v1135
        %v1137 = vrot.slane %v612, 2
        %v1138 = vsel %vm1058, %v1135, %v1137
        %v1139 = vrot.slane %v619, 2
        %v1140 = vrot.slane %v620, 2
        %v1141 = vsel %vm1058, %v1139, %v1140
        %v1142 = vrot.slane %v621, 2
        %v1143 = vsel %vm1058, %v1140, %v1142
        %v1144 = vrot.slane %v622, 2
        %v1145 = vrot.slane %v623, 2
        %v1146 = vsel %vm1058, %v1144, %v1145
        %v1147 = vrot.slane %v624, 2
        %v1148 = vsel %vm1058, %v1145, %v1147
        %v1149 = vrot.slane %v625, 2
        %v1150 = vrot.slane %v626, 2
        %v1151 = vsel %vm1058, %v1149, %v1150
        %v1152 = vrot.slane %v627, 2
        %v1153 = vsel %vm1058, %v1150, %v1152
        %v1154 = vrot.slane %v628, 2
        %v1155 = vrot.slane %v629, 2
        %v1156 = vsel %vm1058, %v1154, %v1155
        %v1157 = vrot.slane %v630, 2
        %v1158 = vsel %vm1058, %v1155, %v1157
        %v1159 = vrot.slane %v631, 2
        %v1160 = vrot.slane %v632, 2
        %v1161 = vsel %vm1058, %v1159, %v1160
        %v1162 = vrot.slane %v633, 2
        %v1163 = vsel %vm1058, %v1160, %v1162
        %v1164 = vrot.slane %v634, 2
        %v1165 = vrot.slane %v635, 2
        %v1166 = vsel %vm1058, %v1164, %v1165
        %v1167 = vrot.slane %v636, 2
        %v1168 = vsel %vm1058, %v1165, %v1167
        %v1169 = vrot.slane %v637, 2
        %v1170 = vrot.slane %v638, 2
        %v1171 = vsel %vm1058, %v1169, %v1170
        %v1172 = vrot.slane %v639, 2
        %v1173 = vsel %vm1058, %v1170, %v1172
        %v1174 = vrot.slane %v640, 2
        %v1175 = vrot.slane %v641, 2
        %v1176 = vsel %vm1058, %v1174, %v1175
        %v1177 = vrot.slane %v642, 2
        %v1178 = vsel %vm1058, %v1175, %v1177
        %v1179 = vrot.slane %v643, 2
        %v1180 = vrot.slane %v644, 2
        %v1181 = vsel %vm1058, %v1179, %v1180
        %v1182 = vrot.slane %v645, 2
        %v1183 = vsel %vm1058, %v1180, %v1182
        %v1184 = vrot.slane %v646, 2
        %v1185 = vrot.slane %v647, 2
        %v1186 = vsel %vm1058, %v1184, %v1185
        %v1187 = vrot.slane %v648, 2
        %v1188 = vsel %vm1058, %v1185, %v1187
        %v1189 = vrot.slane %v649, 2
        %v1190 = vrot.slane %v650, 2
        %v1191 = vsel %vm1058, %v1189, %v1190
        %v1192 = vrot.slane %v651, 2
        %v1193 = vsel %vm1058, %v1190, %v1192
        %v1194 = vrot.slane %v652, 2
        %v1195 = vrot.slane %v653, 2
        %v1196 = vsel %vm1058, %v1194, %v1195
        %v1197 = vrot.slane %v654, 2
        %v1198 = vsel %vm1058, %v1195, %v1197
        %v1199 = vrot.slane %v655, 2
        %v1200 = vrot.slane %v656, 2
        %v1201 = vsel %vm1058, %v1199, %v1200
        %v1202 = vrot.slane %v657, 2
        %v1203 = vsel %vm1058, %v1200, %v1202
        %v1204 = vrot.slane %v658, 2
        %v1205 = vrot.slane %v659, 2
        %v1206 = vsel %vm1058, %v1204, %v1205
        %v1207 = vrot.slane %v660, 2
        %v1208 = vsel %vm1058, %v1205, %v1207
        %v1209 = vrot.slane %v661, 2
        %v1210 = vrot.slane %v662, 2
        %v1211 = vsel %vm1058, %v1209, %v1210
        %v1212 = vrot.slane %v663, 2
        %v1213 = vsel %vm1058, %v1210, %v1212
        %v1214 = vrot.slane %v664, 2
        %v1215 = vrot.slane %v665, 2
        %v1216 = vsel %vm1058, %v1214, %v1215
        %v1217 = vrot.slane %v666, 2
        %v1218 = vsel %vm1058, %v1215, %v1217
        %v1283 = vpack.c.bf16 %v1063, %v1061
        %v1284 = vpack.c.bf16 %v1068, %v1066
        %v1285 = vpack.c.bf16 %v1073, %v1071
        %v1286 = vpack.c.bf16 %v1078, %v1076
        %v1287 = vpack.c.bf16 %v1083, %v1081
        %v1288 = vpack.c.bf16 %v1088, %v1086
        %v1289 = vpack.c.bf16 %v1093, %v1091
        %v1290 = vpack.c.bf16 %v1098, %v1096
        %v1291 = vpack.c.bf16 %v1103, %v1101
        %v1292 = vpack.c.bf16 %v1108, %v1106
        %v1293 = vpack.c.bf16 %v1113, %v1111
        %v1294 = vpack.c.bf16 %v1118, %v1116
        %v1295 = vpack.c.bf16 %v1123, %v1121
        %v1296 = vpack.c.bf16 %v1128, %v1126
        %v1297 = vpack.c.bf16 %v1133, %v1131
        %v1298 = vpack.c.bf16 %v1138, %v1136
        %v1299 = vpack.c.bf16 %v1143, %v1141
        %v1300 = vpack.c.bf16 %v1148, %v1146
        %v1301 = vpack.c.bf16 %v1153, %v1151
        %v1302 = vpack.c.bf16 %v1158, %v1156
        %v1303 = vpack.c.bf16 %v1163, %v1161
        %v1304 = vpack.c.bf16 %v1168, %v1166
        %v1305 = vpack.c.bf16 %v1173, %v1171
        %v1306 = vpack.c.bf16 %v1178, %v1176
        %v1307 = vpack.c.bf16 %v1183, %v1181
        %v1308 = vpack.c.bf16 %v1188, %v1186
        %v1309 = vpack.c.bf16 %v1193, %v1191
        %v1310 = vpack.c.bf16 %v1198, %v1196
        %v1311 = vpack.c.bf16 %v1203, %v1201
        %v1312 = vpack.c.bf16 %v1208, %v1206
        %v1313 = vpack.c.bf16 %v1213, %v1211
        %v1314 = vpack.c.bf16 %v1218, %v1216
        %v1315 = vpack.c.bf16 %v614, %v613
        %v1316 = vpack.c.bf16 %v668, %v667
        %v1323 = vrot.slane %v613, 1
        %v1324 = vrot.slane %v614, 1
        %v1325 = vsel %vm801, %v1323, %v1324
        %v1326 = vrot.slane %v615, 1
        %v1327 = vsel %vm801, %v1324, %v1326
        %v1328 = vrot.slane %v667, 1
        %v1329 = vrot.slane %v668, 1
        %v1330 = vsel %vm801, %v1328, %v1329
        %v1331 = vrot.slane %v669, 1
        %v1332 = vsel %vm801, %v1329, %v1331
        %v1337 = vpack.c.bf16 %v1327, %v1325
        %v1338 = vpack.c.bf16 %v1332, %v1330
        %v1339 = vrot.slane %v613, 2
        %v1340 = vrot.slane %v614, 2
        %v1341 = vsel %vm1058, %v1339, %v1340
        %v1342 = vrot.slane %v615, 2
        %v1343 = vsel %vm1058, %v1340, %v1342
        %v1344 = vrot.slane %v667, 2
        %v1345 = vrot.slane %v668, 2
        %v1346 = vsel %vm1058, %v1344, %v1345
        %v1347 = vrot.slane %v669, 2
        %v1348 = vsel %vm1058, %v1345, %v1347
        %v1353 = vpack.c.bf16 %v1343, %v1341
        %v1354 = vpack.c.bf16 %v1348, %v1346
        %v1355 = vpack.c.bf16 %v617, %v616
        %v1356 = vpack.c.bf16 %v671, %v670
        %v1363 = vrot.slane %v616, 1
        %v1364 = vrot.slane %v617, 1
        %v1365 = vsel %vm801, %v1363, %v1364
        %v1366 = vrot.slane %v618, 1
        %v1367 = vsel %vm801, %v1364, %v1366
        %v1368 = vrot.slane %v670, 1
        %v1369 = vrot.slane %v671, 1
        %v1370 = vsel %vm801, %v1368, %v1369
        %v1371 = vrot.slane %v672, 1
        %v1372 = vsel %vm801, %v1369, %v1371
        %v1377 = vpack.c.bf16 %v1367, %v1365
        %v1378 = vpack.c.bf16 %v1372, %v1370
        %v1379 = vrot.slane %v616, 2
        %v1380 = vrot.slane %v617, 2
        %v1381 = vsel %vm1058, %v1379, %v1380
        %v1382 = vrot.slane %v618, 2
        %v1383 = vsel %vm1058, %v1380, %v1382
        %v1384 = vrot.slane %v670, 2
        %v1385 = vrot.slane %v671, 2
        %v1386 = vsel %vm1058, %v1384, %v1385
        %v1387 = vrot.slane %v672, 2
        %v1388 = vsel %vm1058, %v1385, %v1387
        %v1393 = vpack.c.bf16 %v1383, %v1381
        %v1394 = vpack.c.bf16 %v1388, %v1386
        %v1395 = vld [vmem:[%s1] sm:$0x3]
        %s1396 = scalar_lea.vmem %s1, 2
        %v1397 = vld [vmem:[%s1396] sm:$0x3]
        %v1399 = vsel %vm284, %v1026, 0
        %v1402 = vsel %vm284, %v1027, 0
        %v1405 = vsel %vm284, %v1028, 0
        %v1408 = vsel %vm284, %v1029, 0
        %v1411 = vsel %vm284, %v1030, 0
        %v1414 = vsel %vm284, %v1031, 0
        %v1417 = vsel %vm284, %v1032, 0
        %v1420 = vsel %vm284, %v1033, 0
        %v1423 = vsel %vm284, %v1034, 0
        %v1426 = vsel %vm284, %v1035, 0
        %v1429 = vsel %vm284, %v1036, 0
        %v1432 = vsel %vm284, %v1037, 0
        %v1435 = vsel %vm284, %v1038, 0
        %v1438 = vsel %vm284, %v1039, 0
        %v1441 = vsel %vm284, %v1040, 0
        %v1444 = vsel %vm284, %v1041, 0
        %v1447 = vsel %vm284, %v1042, 0
        %v1450 = vsel %vm284, %v1043, 0
        %v1453 = vsel %vm284, %v1044, 0
        %v1456 = vsel %vm284, %v1045, 0
        %v1459 = vsel %vm284, %v1046, 0
        %v1462 = vsel %vm284, %v1047, 0
        %v1465 = vsel %vm284, %v1048, 0
        %v1468 = vsel %vm284, %v1049, 0
        %v1471 = vsel %vm284, %v1050, 0
        %v1474 = vsel %vm284, %v1051, 0
        %v1477 = vsel %vm284, %v1052, 0
        %v1480 = vsel %vm284, %v1053, 0
        %v1483 = vsel %vm284, %v1054, 0
        %v1486 = vsel %vm284, %v1055, 0
        %v1489 = vsel %vm284, %v1056, 0
        %v1492 = vsel %vm284, %v1057, 0
        %vm1494 = vcmask 1041408
        %v1496 = vsel %vm1494, %v1397, 0
        %1498 = vmatprep.subr.bf16.mxu0 0
        %1499 = vmatpush1.bf16.msra.mxu0 0
        %1500 = vmatprep.subr.bf16.mxu0 0
        %1501 = vmatpush1.bf16.msra.mxu0 0
        %1502 = vmatprep.subr.bf16.mxu0 0
        %1503 = vmatpush1.bf16.msra.mxu0 0
        %1504 = vmatprep.subr.bf16.mxu0 0
        %1505 = vmatpush1.bf16.msra.mxu0 0
        %1506 = vmatprep.subr.bf16.mxu0 0
        %1507 = vmatpush1.bf16.msra.mxu0 0
        %1508 = vmatprep.subr.bf16.mxu0 0
        %1509 = vmatpush1.bf16.msra.mxu0 0
        %1510 = vmatprep.subr.bf16.mxu0 0
        %1511 = vmatpush1.bf16.msra.mxu0 0
        %1512 = vmatprep.subr.bf16.mxu0 0
        %1513 = vmatpush1.bf16.msra.mxu0 %v1496
        %1514 = vmatprep.subr.bf16.mxu0 0
        %1515 = vmatpush2.bf16.msra.mxu0 0
        %1516 = vmatprep.subr.bf16.mxu0 0
        %1517 = vmatpush2.bf16.msra.mxu0 0
        %1518 = vmatprep.subr.bf16.mxu0 0
        %1519 = vmatpush2.bf16.msra.mxu0 0
        %1520 = vmatprep.subr.bf16.mxu0 0
        %1521 = vmatpush2.bf16.msra.mxu0 0
        %1522 = vmatprep.subr.bf16.mxu0 0
        %1523 = vmatpush2.bf16.msra.mxu0 0
        %1524 = vmatprep.subr.bf16.mxu0 0
        %1525 = vmatpush2.bf16.msra.mxu0 0
        %1526 = vmatprep.subr.bf16.mxu0 0
        %1527 = vmatpush2.bf16.msra.mxu0 0
        %1528 = vmatprep.subr.bf16.mxu0 0
        %1529 = vmatpush2.bf16.msra.mxu0 0
        %1530 = vmatprep.mubr.bf16.mxu0 0
        %1531 = vmatmul.mubr.bf16.gmra.mxu0 %v1399
        %v1532 = vpop.f32.mrf.mxu0
        %v1533 = vadd.f32 0.0, %v1532
        %v1534 = vpop.f32.mrf.mxu0
        %v1535 = vpop.f32.mrf.mxu0
        %v1536 = vadd.f32 0.0, %v1535
        %v1537 = vpop.f32.mrf.mxu0
        %1538 = vmatprep.mubr.bf16.mxu0 0
        %1539 = vmatmul.mubr.bf16.gmra.mxu0 %v1402
        %v1540 = vpop.f32.mrf.mxu0
        %v1541 = vadd.f32 0.0, %v1540
        %v1542 = vpop.f32.mrf.mxu0
        %v1543 = vpop.f32.mrf.mxu0
        %v1544 = vadd.f32 0.0, %v1543
        %v1545 = vpop.f32.mrf.mxu0
        %1546 = vmatprep.mubr.bf16.mxu0 0
        %1547 = vmatmul.mubr.bf16.gmra.mxu0 %v1405
        %v1548 = vpop.f32.mrf.mxu0
        %v1549 = vadd.f32 0.0, %v1548
        %v1550 = vpop.f32.mrf.mxu0
        %v1551 = vpop.f32.mrf.mxu0
        %v1552 = vadd.f32 0.0, %v1551
        %v1553 = vpop.f32.mrf.mxu0
        %1554 = vmatprep.mubr.bf16.mxu0 0
        %1555 = vmatmul.mubr.bf16.gmra.mxu0 %v1408
        %v1556 = vpop.f32.mrf.mxu0
        %v1557 = vadd.f32 0.0, %v1556
        %v1558 = vpop.f32.mrf.mxu0
        %v1559 = vpop.f32.mrf.mxu0
        %v1560 = vadd.f32 0.0, %v1559
        %v1561 = vpop.f32.mrf.mxu0
        %1562 = vmatprep.mubr.bf16.mxu0 0
        %1563 = vmatmul.mubr.bf16.gmra.mxu0 %v1411
        %v1564 = vpop.f32.mrf.mxu0
        %v1565 = vadd.f32 0.0, %v1564
        %v1566 = vpop.f32.mrf.mxu0
        %v1567 = vpop.f32.mrf.mxu0
        %v1568 = vadd.f32 0.0, %v1567
        %v1569 = vpop.f32.mrf.mxu0
        %1570 = vmatprep.mubr.bf16.mxu0 0
        %1571 = vmatmul.mubr.bf16.gmra.mxu0 %v1414
        %v1572 = vpop.f32.mrf.mxu0
        %v1573 = vadd.f32 0.0, %v1572
        %v1574 = vpop.f32.mrf.mxu0
        %v1575 = vpop.f32.mrf.mxu0
        %v1576 = vadd.f32 0.0, %v1575
        %v1577 = vpop.f32.mrf.mxu0
        %1578 = vmatprep.mubr.bf16.mxu0 0
        %1579 = vmatmul.mubr.bf16.gmra.mxu0 %v1417
        %v1580 = vpop.f32.mrf.mxu0
        %v1581 = vadd.f32 0.0, %v1580
        %v1582 = vpop.f32.mrf.mxu0
        %v1583 = vpop.f32.mrf.mxu0
        %v1584 = vadd.f32 0.0, %v1583
        %v1585 = vpop.f32.mrf.mxu0
        %1586 = vmatprep.mubr.bf16.mxu0 0
        %1587 = vmatmul.mubr.bf16.gmra.mxu0 %v1420
        %v1588 = vpop.f32.mrf.mxu0
        %v1589 = vadd.f32 0.0, %v1588
        %v1590 = vpop.f32.mrf.mxu0
        %v1591 = vpop.f32.mrf.mxu0
        %v1592 = vadd.f32 0.0, %v1591
        %v1593 = vpop.f32.mrf.mxu0
        %1594 = vmatprep.mubr.bf16.mxu0 0
        %1595 = vmatmul.mubr.bf16.gmra.mxu0 %v1423
        %v1596 = vpop.f32.mrf.mxu0
        %v1597 = vadd.f32 0.0, %v1596
        %v1598 = vpop.f32.mrf.mxu0
        %v1599 = vpop.f32.mrf.mxu0
        %v1600 = vadd.f32 0.0, %v1599
        %v1601 = vpop.f32.mrf.mxu0
        %1602 = vmatprep.mubr.bf16.mxu0 0
        %1603 = vmatmul.mubr.bf16.gmra.mxu0 %v1426
        %v1604 = vpop.f32.mrf.mxu0
        %v1605 = vadd.f32 0.0, %v1604
        %v1606 = vpop.f32.mrf.mxu0
        %v1607 = vpop.f32.mrf.mxu0
        %v1608 = vadd.f32 0.0, %v1607
        %v1609 = vpop.f32.mrf.mxu0
        %1610 = vmatprep.mubr.bf16.mxu0 0
        %1611 = vmatmul.mubr.bf16.gmra.mxu0 %v1429
        %v1612 = vpop.f32.mrf.mxu0
        %v1613 = vadd.f32 0.0, %v1612
        %v1614 = vpop.f32.mrf.mxu0
        %v1615 = vpop.f32.mrf.mxu0
        %v1616 = vadd.f32 0.0, %v1615
        %v1617 = vpop.f32.mrf.mxu0
        %1618 = vmatprep.mubr.bf16.mxu0 0
        %1619 = vmatmul.mubr.bf16.gmra.mxu0 %v1432
        %v1620 = vpop.f32.mrf.mxu0
        %v1621 = vadd.f32 0.0, %v1620
        %v1622 = vpop.f32.mrf.mxu0
        %v1623 = vpop.f32.mrf.mxu0
        %v1624 = vadd.f32 0.0, %v1623
        %v1625 = vpop.f32.mrf.mxu0
        %1626 = vmatprep.mubr.bf16.mxu0 0
        %1627 = vmatmul.mubr.bf16.gmra.mxu0 %v1435
        %v1628 = vpop.f32.mrf.mxu0
        %v1629 = vadd.f32 0.0, %v1628
        %v1630 = vpop.f32.mrf.mxu0
        %v1631 = vpop.f32.mrf.mxu0
        %v1632 = vadd.f32 0.0, %v1631
        %v1633 = vpop.f32.mrf.mxu0
        %1634 = vmatprep.mubr.bf16.mxu0 0
        %1635 = vmatmul.mubr.bf16.gmra.mxu0 %v1438
        %v1636 = vpop.f32.mrf.mxu0
        %v1637 = vadd.f32 0.0, %v1636
        %v1638 = vpop.f32.mrf.mxu0
        %v1639 = vpop.f32.mrf.mxu0
        %v1640 = vadd.f32 0.0, %v1639
        %v1641 = vpop.f32.mrf.mxu0
        %1642 = vmatprep.mubr.bf16.mxu0 0
        %1643 = vmatmul.mubr.bf16.gmra.mxu0 %v1441
        %v1644 = vpop.f32.mrf.mxu0
        %v1645 = vadd.f32 0.0, %v1644
        %v1646 = vpop.f32.mrf.mxu0
        %v1647 = vpop.f32.mrf.mxu0
        %v1648 = vadd.f32 0.0, %v1647
        %v1649 = vpop.f32.mrf.mxu0
        %1650 = vmatprep.mubr.bf16.mxu0 0
        %1651 = vmatmul.mubr.bf16.gmra.mxu0 %v1444
        %v1652 = vpop.f32.mrf.mxu0
        %v1653 = vadd.f32 0.0, %v1652
        %v1654 = vpop.f32.mrf.mxu0
        %v1655 = vpop.f32.mrf.mxu0
        %v1656 = vadd.f32 0.0, %v1655
        %v1657 = vpop.f32.mrf.mxu0
        %1658 = vmatprep.mubr.bf16.mxu0 0
        %1659 = vmatmul.mubr.bf16.gmra.mxu0 %v1447
        %v1660 = vpop.f32.mrf.mxu0
        %v1661 = vadd.f32 0.0, %v1660
        %v1662 = vpop.f32.mrf.mxu0
        %v1663 = vpop.f32.mrf.mxu0
        %v1664 = vadd.f32 0.0, %v1663
        %v1665 = vpop.f32.mrf.mxu0
        %1666 = vmatprep.mubr.bf16.mxu0 0
        %1667 = vmatmul.mubr.bf16.gmra.mxu0 %v1450
        %v1668 = vpop.f32.mrf.mxu0
        %v1669 = vadd.f32 0.0, %v1668
        %v1670 = vpop.f32.mrf.mxu0
        %v1671 = vpop.f32.mrf.mxu0
        %v1672 = vadd.f32 0.0, %v1671
        %v1673 = vpop.f32.mrf.mxu0
        %1674 = vmatprep.mubr.bf16.mxu0 0
        %1675 = vmatmul.mubr.bf16.gmra.mxu0 %v1453
        %v1676 = vpop.f32.mrf.mxu0
        %v1677 = vadd.f32 0.0, %v1676
        %v1678 = vpop.f32.mrf.mxu0
        %v1679 = vpop.f32.mrf.mxu0
        %v1680 = vadd.f32 0.0, %v1679
        %v1681 = vpop.f32.mrf.mxu0
        %1682 = vmatprep.mubr.bf16.mxu0 0
        %1683 = vmatmul.mubr.bf16.gmra.mxu0 %v1456
        %v1684 = vpop.f32.mrf.mxu0
        %v1685 = vadd.f32 0.0, %v1684
        %v1686 = vpop.f32.mrf.mxu0
        %v1687 = vpop.f32.mrf.mxu0
        %v1688 = vadd.f32 0.0, %v1687
        %v1689 = vpop.f32.mrf.mxu0
        %1690 = vmatprep.mubr.bf16.mxu0 0
        %1691 = vmatmul.mubr.bf16.gmra.mxu0 %v1459
        %v1692 = vpop.f32.mrf.mxu0
        %v1693 = vadd.f32 0.0, %v1692
        %v1694 = vpop.f32.mrf.mxu0
        %v1695 = vpop.f32.mrf.mxu0
        %v1696 = vadd.f32 0.0, %v1695
        %v1697 = vpop.f32.mrf.mxu0
        %1698 = vmatprep.mubr.bf16.mxu0 0
        %1699 = vmatmul.mubr.bf16.gmra.mxu0 %v1462
        %v1700 = vpop.f32.mrf.mxu0
        %v1701 = vadd.f32 0.0, %v1700
        %v1702 = vpop.f32.mrf.mxu0
        %v1703 = vpop.f32.mrf.mxu0
        %v1704 = vadd.f32 0.0, %v1703
        %v1705 = vpop.f32.mrf.mxu0
        %1706 = vmatprep.mubr.bf16.mxu0 0
        %1707 = vmatmul.mubr.bf16.gmra.mxu0 %v1465
        %v1708 = vpop.f32.mrf.mxu0
        %v1709 = vadd.f32 0.0, %v1708
        %v1710 = vpop.f32.mrf.mxu0
        %v1711 = vpop.f32.mrf.mxu0
        %v1712 = vadd.f32 0.0, %v1711
        %v1713 = vpop.f32.mrf.mxu0
        %1714 = vmatprep.mubr.bf16.mxu0 0
        %1715 = vmatmul.mubr.bf16.gmra.mxu0 %v1468
        %v1716 = vpop.f32.mrf.mxu0
        %v1717 = vadd.f32 0.0, %v1716
        %v1718 = vpop.f32.mrf.mxu0
        %v1719 = vpop.f32.mrf.mxu0
        %v1720 = vadd.f32 0.0, %v1719
        %v1721 = vpop.f32.mrf.mxu0
        %1722 = vmatprep.mubr.bf16.mxu0 0
        %1723 = vmatmul.mubr.bf16.gmra.mxu0 %v1471
        %v1724 = vpop.f32.mrf.mxu0
        %v1725 = vadd.f32 0.0, %v1724
        %v1726 = vpop.f32.mrf.mxu0
        %v1727 = vpop.f32.mrf.mxu0
        %v1728 = vadd.f32 0.0, %v1727
        %v1729 = vpop.f32.mrf.mxu0
        %1730 = vmatprep.mubr.bf16.mxu0 0
        %1731 = vmatmul.mubr.bf16.gmra.mxu0 %v1474
        %v1732 = vpop.f32.mrf.mxu0
        %v1733 = vadd.f32 0.0, %v1732
        %v1734 = vpop.f32.mrf.mxu0
        %v1735 = vpop.f32.mrf.mxu0
        %v1736 = vadd.f32 0.0, %v1735
        %v1737 = vpop.f32.mrf.mxu0
        %1738 = vmatprep.mubr.bf16.mxu0 0
        %1739 = vmatmul.mubr.bf16.gmra.mxu0 %v1477
        %v1740 = vpop.f32.mrf.mxu0
        %v1741 = vadd.f32 0.0, %v1740
        %v1742 = vpop.f32.mrf.mxu0
        %v1743 = vpop.f32.mrf.mxu0
        %v1744 = vadd.f32 0.0, %v1743
        %v1745 = vpop.f32.mrf.mxu0
        %1746 = vmatprep.mubr.bf16.mxu0 0
        %1747 = vmatmul.mubr.bf16.gmra.mxu0 %v1480
        %v1748 = vpop.f32.mrf.mxu0
        %v1749 = vadd.f32 0.0, %v1748
        %v1750 = vpop.f32.mrf.mxu0
        %v1751 = vpop.f32.mrf.mxu0
        %v1752 = vadd.f32 0.0, %v1751
        %v1753 = vpop.f32.mrf.mxu0
        %1754 = vmatprep.mubr.bf16.mxu0 0
        %1755 = vmatmul.mubr.bf16.gmra.mxu0 %v1483
        %v1756 = vpop.f32.mrf.mxu0
        %v1757 = vadd.f32 0.0, %v1756
        %v1758 = vpop.f32.mrf.mxu0
        %v1759 = vpop.f32.mrf.mxu0
        %v1760 = vadd.f32 0.0, %v1759
        %v1761 = vpop.f32.mrf.mxu0
        %1762 = vmatprep.mubr.bf16.mxu0 0
        %1763 = vmatmul.mubr.bf16.gmra.mxu0 %v1486
        %v1764 = vpop.f32.mrf.mxu0
        %v1765 = vadd.f32 0.0, %v1764
        %v1766 = vpop.f32.mrf.mxu0
        %v1767 = vpop.f32.mrf.mxu0
        %v1768 = vadd.f32 0.0, %v1767
        %v1769 = vpop.f32.mrf.mxu0
        %1770 = vmatprep.mubr.bf16.mxu0 0
        %1771 = vmatmul.mubr.bf16.gmra.mxu0 %v1489
        %v1772 = vpop.f32.mrf.mxu0
        %v1773 = vadd.f32 0.0, %v1772
        %v1774 = vpop.f32.mrf.mxu0
        %v1775 = vpop.f32.mrf.mxu0
        %v1776 = vadd.f32 0.0, %v1775
        %v1777 = vpop.f32.mrf.mxu0
        %1778 = vmatprep.mubr.bf16.mxu0 0
        %1779 = vmatmul.mubr.bf16.gmra.mxu0 %v1492
        %v1780 = vpop.f32.mrf.mxu0
        %v1781 = vadd.f32 0.0, %v1780
        %v1782 = vpop.f32.mrf.mxu0
        %v1783 = vpop.f32.mrf.mxu0
        %v1784 = vadd.f32 0.0, %v1783
        %v1785 = vpop.f32.mrf.mxu0
        %1786 = vdwg.mxu0
        %v1788 = vsel %vm284, %v673, 0
        %v1791 = vsel %vm284, %v674, 0
        %v1794 = vsel %vm284, %v675, 0
        %v1797 = vsel %vm284, %v676, 0
        %v1800 = vsel %vm284, %v677, 0
        %v1803 = vsel %vm284, %v678, 0
        %v1806 = vsel %vm284, %v679, 0
        %v1809 = vsel %vm284, %v680, 0
        %v1812 = vsel %vm284, %v681, 0
        %v1815 = vsel %vm284, %v682, 0
        %v1818 = vsel %vm284, %v683, 0
        %v1821 = vsel %vm284, %v684, 0
        %v1824 = vsel %vm284, %v685, 0
        %v1827 = vsel %vm284, %v686, 0
        %v1830 = vsel %vm284, %v687, 0
        %v1833 = vsel %vm284, %v688, 0
        %v1836 = vsel %vm284, %v689, 0
        %v1839 = vsel %vm284, %v690, 0
        %v1842 = vsel %vm284, %v691, 0
        %v1845 = vsel %vm284, %v692, 0
        %v1848 = vsel %vm284, %v693, 0
        %v1851 = vsel %vm284, %v694, 0
        %v1854 = vsel %vm284, %v695, 0
        %v1857 = vsel %vm284, %v696, 0
        %v1860 = vsel %vm284, %v697, 0
        %v1863 = vsel %vm284, %v698, 0
        %v1866 = vsel %vm284, %v699, 0
        %v1869 = vsel %vm284, %v700, 0
        %v1872 = vsel %vm284, %v701, 0
        %v1875 = vsel %vm284, %v702, 0
        %v1878 = vsel %vm284, %v703, 0
        %v1881 = vsel %vm284, %v704, 0
        %v1884 = vsel %vm1494, %v1395, 0
        %1886 = vmatprep.subr.bf16.mxu0 0
        %1887 = vmatpush1.bf16.msra.mxu0 0
        %1888 = vmatprep.subr.bf16.mxu0 0
        %1889 = vmatpush1.bf16.msra.mxu0 0
        %1890 = vmatprep.subr.bf16.mxu0 0
        %1891 = vmatpush1.bf16.msra.mxu0 0
        %1892 = vmatprep.subr.bf16.mxu0 0
        %1893 = vmatpush1.bf16.msra.mxu0 0
        %1894 = vmatprep.subr.bf16.mxu0 0
        %1895 = vmatpush1.bf16.msra.mxu0 0
        %1896 = vmatprep.subr.bf16.mxu0 0
        %1897 = vmatpush1.bf16.msra.mxu0 0
        %1898 = vmatprep.subr.bf16.mxu0 0
        %1899 = vmatpush1.bf16.msra.mxu0 0
        %1900 = vmatprep.subr.bf16.mxu0 0
        %1901 = vmatpush1.bf16.msra.mxu0 %v1884
        %1902 = vmatprep.subr.bf16.mxu0 0
        %1903 = vmatpush2.bf16.msra.mxu0 0
        %1904 = vmatprep.subr.bf16.mxu0 0
        %1905 = vmatpush2.bf16.msra.mxu0 0
        %1906 = vmatprep.subr.bf16.mxu0 0
        %1907 = vmatpush2.bf16.msra.mxu0 0
        %1908 = vmatprep.subr.bf16.mxu0 0
        %1909 = vmatpush2.bf16.msra.mxu0 0
        %1910 = vmatprep.subr.bf16.mxu0 0
        %1911 = vmatpush2.bf16.msra.mxu0 0
        %1912 = vmatprep.subr.bf16.mxu0 0
        %1913 = vmatpush2.bf16.msra.mxu0 0
        %1914 = vmatprep.subr.bf16.mxu0 0
        %1915 = vmatpush2.bf16.msra.mxu0 0
        %1916 = vmatprep.subr.bf16.mxu0 0
        %1917 = vmatpush2.bf16.msra.mxu0 0
        %1918 = vmatprep.mubr.bf16.mxu0 0
        %1919 = vmatmul.mubr.bf16.gmra.mxu0 %v1788
        %v1920 = vpop.f32.mrf.mxu0
        %v1921 = vadd.f32 %v1533, %v1920
        %v1922 = vpop.f32.mrf.mxu0
        %v1923 = vpop.f32.mrf.mxu0
        %v1924 = vadd.f32 %v1536, %v1923
        %v1925 = vpop.f32.mrf.mxu0
        %1926 = vmatprep.mubr.bf16.mxu0 0
        %1927 = vmatmul.mubr.bf16.gmra.mxu0 %v1791
        %v1928 = vpop.f32.mrf.mxu0
        %v1929 = vadd.f32 %v1541, %v1928
        %v1930 = vpop.f32.mrf.mxu0
        %v1931 = vpop.f32.mrf.mxu0
        %v1932 = vadd.f32 %v1544, %v1931
        %v1933 = vpop.f32.mrf.mxu0
        %1934 = vmatprep.mubr.bf16.mxu0 0
        %1935 = vmatmul.mubr.bf16.gmra.mxu0 %v1794
        %v1936 = vpop.f32.mrf.mxu0
        %v1937 = vadd.f32 %v1549, %v1936
        %v1938 = vpop.f32.mrf.mxu0
        %v1939 = vpop.f32.mrf.mxu0
        %v1940 = vadd.f32 %v1552, %v1939
        %v1941 = vpop.f32.mrf.mxu0
        %1942 = vmatprep.mubr.bf16.mxu0 0
        %1943 = vmatmul.mubr.bf16.gmra.mxu0 %v1797
        %v1944 = vpop.f32.mrf.mxu0
        %v1945 = vadd.f32 %v1557, %v1944
        %v1946 = vpop.f32.mrf.mxu0
        %v1947 = vpop.f32.mrf.mxu0
        %v1948 = vadd.f32 %v1560, %v1947
        %v1949 = vpop.f32.mrf.mxu0
        %1950 = vmatprep.mubr.bf16.mxu0 0
        %1951 = vmatmul.mubr.bf16.gmra.mxu0 %v1800
        %v1952 = vpop.f32.mrf.mxu0
        %v1953 = vadd.f32 %v1565, %v1952
        %v1954 = vpop.f32.mrf.mxu0
        %v1955 = vpop.f32.mrf.mxu0
        %v1956 = vadd.f32 %v1568, %v1955
        %v1957 = vpop.f32.mrf.mxu0
        %1958 = vmatprep.mubr.bf16.mxu0 0
        %1959 = vmatmul.mubr.bf16.gmra.mxu0 %v1803
        %v1960 = vpop.f32.mrf.mxu0
        %v1961 = vadd.f32 %v1573, %v1960
        %v1962 = vpop.f32.mrf.mxu0
        %v1963 = vpop.f32.mrf.mxu0
        %v1964 = vadd.f32 %v1576, %v1963
        %v1965 = vpop.f32.mrf.mxu0
        %1966 = vmatprep.mubr.bf16.mxu0 0
        %1967 = vmatmul.mubr.bf16.gmra.mxu0 %v1806
        %v1968 = vpop.f32.mrf.mxu0
        %v1969 = vadd.f32 %v1581, %v1968
        %v1970 = vpop.f32.mrf.mxu0
        %v1971 = vpop.f32.mrf.mxu0
        %v1972 = vadd.f32 %v1584, %v1971
        %v1973 = vpop.f32.mrf.mxu0
        %1974 = vmatprep.mubr.bf16.mxu0 0
        %1975 = vmatmul.mubr.bf16.gmra.mxu0 %v1809
        %v1976 = vpop.f32.mrf.mxu0
        %v1977 = vadd.f32 %v1589, %v1976
        %v1978 = vpop.f32.mrf.mxu0
        %v1979 = vpop.f32.mrf.mxu0
        %v1980 = vadd.f32 %v1592, %v1979
        %v1981 = vpop.f32.mrf.mxu0
        %1982 = vmatprep.mubr.bf16.mxu0 0
        %1983 = vmatmul.mubr.bf16.gmra.mxu0 %v1812
        %v1984 = vpop.f32.mrf.mxu0
        %v1985 = vadd.f32 %v1597, %v1984
        %v1986 = vpop.f32.mrf.mxu0
        %v1987 = vpop.f32.mrf.mxu0
        %v1988 = vadd.f32 %v1600, %v1987
        %v1989 = vpop.f32.mrf.mxu0
        %1990 = vmatprep.mubr.bf16.mxu0 0
        %1991 = vmatmul.mubr.bf16.gmra.mxu0 %v1815
        %v1992 = vpop.f32.mrf.mxu0
        %v1993 = vadd.f32 %v1605, %v1992
        %v1994 = vpop.f32.mrf.mxu0
        %v1995 = vpop.f32.mrf.mxu0
        %v1996 = vadd.f32 %v1608, %v1995
        %v1997 = vpop.f32.mrf.mxu0
        %1998 = vmatprep.mubr.bf16.mxu0 0
        %1999 = vmatmul.mubr.bf16.gmra.mxu0 %v1818
        %v2000 = vpop.f32.mrf.mxu0
        %v2001 = vadd.f32 %v1613, %v2000
        %v2002 = vpop.f32.mrf.mxu0
        %v2003 = vpop.f32.mrf.mxu0
        %v2004 = vadd.f32 %v1616, %v2003
        %v2005 = vpop.f32.mrf.mxu0
        %2006 = vmatprep.mubr.bf16.mxu0 0
        %2007 = vmatmul.mubr.bf16.gmra.mxu0 %v1821
        %v2008 = vpop.f32.mrf.mxu0
        %v2009 = vadd.f32 %v1621, %v2008
        %v2010 = vpop.f32.mrf.mxu0
        %v2011 = vpop.f32.mrf.mxu0
        %v2012 = vadd.f32 %v1624, %v2011
        %v2013 = vpop.f32.mrf.mxu0
        %2014 = vmatprep.mubr.bf16.mxu0 0
        %2015 = vmatmul.mubr.bf16.gmra.mxu0 %v1824
        %v2016 = vpop.f32.mrf.mxu0
        %v2017 = vadd.f32 %v1629, %v2016
        %v2018 = vpop.f32.mrf.mxu0
        %v2019 = vpop.f32.mrf.mxu0
        %v2020 = vadd.f32 %v1632, %v2019
        %v2021 = vpop.f32.mrf.mxu0
        %2022 = vmatprep.mubr.bf16.mxu0 0
        %2023 = vmatmul.mubr.bf16.gmra.mxu0 %v1827
        %v2024 = vpop.f32.mrf.mxu0
        %v2025 = vadd.f32 %v1637, %v2024
        %v2026 = vpop.f32.mrf.mxu0
        %v2027 = vpop.f32.mrf.mxu0
        %v2028 = vadd.f32 %v1640, %v2027
        %v2029 = vpop.f32.mrf.mxu0
        %2030 = vmatprep.mubr.bf16.mxu0 0
        %2031 = vmatmul.mubr.bf16.gmra.mxu0 %v1830
        %v2032 = vpop.f32.mrf.mxu0
        %v2033 = vadd.f32 %v1645, %v2032
        %v2034 = vpop.f32.mrf.mxu0
        %v2035 = vpop.f32.mrf.mxu0
        %v2036 = vadd.f32 %v1648, %v2035
        %v2037 = vpop.f32.mrf.mxu0
        %2038 = vmatprep.mubr.bf16.mxu0 0
        %2039 = vmatmul.mubr.bf16.gmra.mxu0 %v1833
        %v2040 = vpop.f32.mrf.mxu0
        %v2041 = vadd.f32 %v1653, %v2040
        %v2042 = vpop.f32.mrf.mxu0
        %v2043 = vpop.f32.mrf.mxu0
        %v2044 = vadd.f32 %v1656, %v2043
        %v2045 = vpop.f32.mrf.mxu0
        %2046 = vmatprep.mubr.bf16.mxu0 0
        %2047 = vmatmul.mubr.bf16.gmra.mxu0 %v1836
        %v2048 = vpop.f32.mrf.mxu0
        %v2049 = vadd.f32 %v1661, %v2048
        %v2050 = vpop.f32.mrf.mxu0
        %v2051 = vpop.f32.mrf.mxu0
        %v2052 = vadd.f32 %v1664, %v2051
        %v2053 = vpop.f32.mrf.mxu0
        %2054 = vmatprep.mubr.bf16.mxu0 0
        %2055 = vmatmul.mubr.bf16.gmra.mxu0 %v1839
        %v2056 = vpop.f32.mrf.mxu0
        %v2057 = vadd.f32 %v1669, %v2056
        %v2058 = vpop.f32.mrf.mxu0
        %v2059 = vpop.f32.mrf.mxu0
        %v2060 = vadd.f32 %v1672, %v2059
        %v2061 = vpop.f32.mrf.mxu0
        %2062 = vmatprep.mubr.bf16.mxu0 0
        %2063 = vmatmul.mubr.bf16.gmra.mxu0 %v1842
        %v2064 = vpop.f32.mrf.mxu0
        %v2065 = vadd.f32 %v1677, %v2064
        %v2066 = vpop.f32.mrf.mxu0
        %v2067 = vpop.f32.mrf.mxu0
        %v2068 = vadd.f32 %v1680, %v2067
        %v2069 = vpop.f32.mrf.mxu0
        %2070 = vmatprep.mubr.bf16.mxu0 0
        %2071 = vmatmul.mubr.bf16.gmra.mxu0 %v1845
        %v2072 = vpop.f32.mrf.mxu0
        %v2073 = vadd.f32 %v1685, %v2072
        %v2074 = vpop.f32.mrf.mxu0
        %v2075 = vpop.f32.mrf.mxu0
        %v2076 = vadd.f32 %v1688, %v2075
        %v2077 = vpop.f32.mrf.mxu0
        %2078 = vmatprep.mubr.bf16.mxu0 0
        %2079 = vmatmul.mubr.bf16.gmra.mxu0 %v1848
        %v2080 = vpop.f32.mrf.mxu0
        %v2081 = vadd.f32 %v1693, %v2080
        %v2082 = vpop.f32.mrf.mxu0
        %v2083 = vpop.f32.mrf.mxu0
        %v2084 = vadd.f32 %v1696, %v2083
        %v2085 = vpop.f32.mrf.mxu0
        %2086 = vmatprep.mubr.bf16.mxu0 0
        %2087 = vmatmul.mubr.bf16.gmra.mxu0 %v1851
        %v2088 = vpop.f32.mrf.mxu0
        %v2089 = vadd.f32 %v1701, %v2088
        %v2090 = vpop.f32.mrf.mxu0
        %v2091 = vpop.f32.mrf.mxu0
        %v2092 = vadd.f32 %v1704, %v2091
        %v2093 = vpop.f32.mrf.mxu0
        %2094 = vmatprep.mubr.bf16.mxu0 0
        %2095 = vmatmul.mubr.bf16.gmra.mxu0 %v1854
        %v2096 = vpop.f32.mrf.mxu0
        %v2097 = vadd.f32 %v1709, %v2096
        %v2098 = vpop.f32.mrf.mxu0
        %v2099 = vpop.f32.mrf.mxu0
        %v2100 = vadd.f32 %v1712, %v2099
        %v2101 = vpop.f32.mrf.mxu0
        %2102 = vmatprep.mubr.bf16.mxu0 0
        %2103 = vmatmul.mubr.bf16.gmra.mxu0 %v1857
        %v2104 = vpop.f32.mrf.mxu0
        %v2105 = vadd.f32 %v1717, %v2104
        %v2106 = vpop.f32.mrf.mxu0
        %v2107 = vpop.f32.mrf.mxu0
        %v2108 = vadd.f32 %v1720, %v2107
        %v2109 = vpop.f32.mrf.mxu0
        %2110 = vmatprep.mubr.bf16.mxu0 0
        %2111 = vmatmul.mubr.bf16.gmra.mxu0 %v1860
        %v2112 = vpop.f32.mrf.mxu0
        %v2113 = vadd.f32 %v1725, %v2112
        %v2114 = vpop.f32.mrf.mxu0
        %v2115 = vpop.f32.mrf.mxu0
        %v2116 = vadd.f32 %v1728, %v2115
        %v2117 = vpop.f32.mrf.mxu0
        %2118 = vmatprep.mubr.bf16.mxu0 0
        %2119 = vmatmul.mubr.bf16.gmra.mxu0 %v1863
        %v2120 = vpop.f32.mrf.mxu0
        %v2121 = vadd.f32 %v1733, %v2120
        %v2122 = vpop.f32.mrf.mxu0
        %v2123 = vpop.f32.mrf.mxu0
        %v2124 = vadd.f32 %v1736, %v2123
        %v2125 = vpop.f32.mrf.mxu0
        %2126 = vmatprep.mubr.bf16.mxu0 0
        %2127 = vmatmul.mubr.bf16.gmra.mxu0 %v1866
        %v2128 = vpop.f32.mrf.mxu0
        %v2129 = vadd.f32 %v1741, %v2128
        %v2130 = vpop.f32.mrf.mxu0
        %v2131 = vpop.f32.mrf.mxu0
        %v2132 = vadd.f32 %v1744, %v2131
        %v2133 = vpop.f32.mrf.mxu0
        %2134 = vmatprep.mubr.bf16.mxu0 0
        %2135 = vmatmul.mubr.bf16.gmra.mxu0 %v1869
        %v2136 = vpop.f32.mrf.mxu0
        %v2137 = vadd.f32 %v1749, %v2136
        %v2138 = vpop.f32.mrf.mxu0
        %v2139 = vpop.f32.mrf.mxu0
        %v2140 = vadd.f32 %v1752, %v2139
        %v2141 = vpop.f32.mrf.mxu0
        %2142 = vmatprep.mubr.bf16.mxu0 0
        %2143 = vmatmul.mubr.bf16.gmra.mxu0 %v1872
        %v2144 = vpop.f32.mrf.mxu0
        %v2145 = vadd.f32 %v1757, %v2144
        %v2146 = vpop.f32.mrf.mxu0
        %v2147 = vpop.f32.mrf.mxu0
        %v2148 = vadd.f32 %v1760, %v2147
        %v2149 = vpop.f32.mrf.mxu0
        %2150 = vmatprep.mubr.bf16.mxu0 0
        %2151 = vmatmul.mubr.bf16.gmra.mxu0 %v1875
        %v2152 = vpop.f32.mrf.mxu0
        %v2153 = vadd.f32 %v1765, %v2152
        %v2154 = vpop.f32.mrf.mxu0
        %v2155 = vpop.f32.mrf.mxu0
        %v2156 = vadd.f32 %v1768, %v2155
        %v2157 = vpop.f32.mrf.mxu0
        %2158 = vmatprep.mubr.bf16.mxu0 0
        %2159 = vmatmul.mubr.bf16.gmra.mxu0 %v1878
        %v2160 = vpop.f32.mrf.mxu0
        %v2161 = vadd.f32 %v1773, %v2160
        %v2162 = vpop.f32.mrf.mxu0
        %v2163 = vpop.f32.mrf.mxu0
        %v2164 = vadd.f32 %v1776, %v2163
        %v2165 = vpop.f32.mrf.mxu0
        %2166 = vmatprep.mubr.bf16.mxu0 0
        %2167 = vmatmul.mubr.bf16.gmra.mxu0 %v1881
        %v2168 = vpop.f32.mrf.mxu0
        %v2169 = vadd.f32 %v1781, %v2168
        %v2170 = vpop.f32.mrf.mxu0
        %v2171 = vpop.f32.mrf.mxu0
        %v2172 = vadd.f32 %v1784, %v2171
        %v2173 = vpop.f32.mrf.mxu0
        %2174 = vdwg.mxu0
        %s2175 = scalar_lea.vmem %s1, 4
        %v2176 = vld [vmem:[%s2175] sm:$0x3]
        %v2178 = vsel %vm284, %v1283, 0
        %v2181 = vsel %vm284, %v1284, 0
        %v2184 = vsel %vm284, %v1285, 0
        %v2187 = vsel %vm284, %v1286, 0
        %v2190 = vsel %vm284, %v1287, 0
        %v2193 = vsel %vm284, %v1288, 0
        %v2196 = vsel %vm284, %v1289, 0
        %v2199 = vsel %vm284, %v1290, 0
        %v2202 = vsel %vm284, %v1291, 0
        %v2205 = vsel %vm284, %v1292, 0
        %v2208 = vsel %vm284, %v1293, 0
        %v2211 = vsel %vm284, %v1294, 0
        %v2214 = vsel %vm284, %v1295, 0
        %v2217 = vsel %vm284, %v1296, 0
        %v2220 = vsel %vm284, %v1297, 0
        %v2223 = vsel %vm284, %v1298, 0
        %v2226 = vsel %vm284, %v1299, 0
        %v2229 = vsel %vm284, %v1300, 0
        %v2232 = vsel %vm284, %v1301, 0
        %v2235 = vsel %vm284, %v1302, 0
        %v2238 = vsel %vm284, %v1303, 0
        %v2241 = vsel %vm284, %v1304, 0
        %v2244 = vsel %vm284, %v1305, 0
        %v2247 = vsel %vm284, %v1306, 0
        %v2250 = vsel %vm284, %v1307, 0
        %v2253 = vsel %vm284, %v1308, 0
        %v2256 = vsel %vm284, %v1309, 0
        %v2259 = vsel %vm284, %v1310, 0
        %v2262 = vsel %vm284, %v1311, 0
        %v2265 = vsel %vm284, %v1312, 0
        %v2268 = vsel %vm284, %v1313, 0
        %v2271 = vsel %vm284, %v1314, 0
        %v2274 = vsel %vm1494, %v2176, 0
        %2276 = vmatprep.subr.bf16.mxu0 0
        %2277 = vmatpush1.bf16.msra.mxu0 0
        %2278 = vmatprep.subr.bf16.mxu0 0
        %2279 = vmatpush1.bf16.msra.mxu0 0
        %2280 = vmatprep.subr.bf16.mxu0 0
        %2281 = vmatpush1.bf16.msra.mxu0 0
        %2282 = vmatprep.subr.bf16.mxu0 0
        %2283 = vmatpush1.bf16.msra.mxu0 0
        %2284 = vmatprep.subr.bf16.mxu0 0
        %2285 = vmatpush1.bf16.msra.mxu0 0
        %2286 = vmatprep.subr.bf16.mxu0 0
        %2287 = vmatpush1.bf16.msra.mxu0 0
        %2288 = vmatprep.subr.bf16.mxu0 0
        %2289 = vmatpush1.bf16.msra.mxu0 0
        %2290 = vmatprep.subr.bf16.mxu0 0
        %2291 = vmatpush1.bf16.msra.mxu0 %v2274
        %2292 = vmatprep.subr.bf16.mxu0 0
        %2293 = vmatpush2.bf16.msra.mxu0 0
        %2294 = vmatprep.subr.bf16.mxu0 0
        %2295 = vmatpush2.bf16.msra.mxu0 0
        %2296 = vmatprep.subr.bf16.mxu0 0
        %2297 = vmatpush2.bf16.msra.mxu0 0
        %2298 = vmatprep.subr.bf16.mxu0 0
        %2299 = vmatpush2.bf16.msra.mxu0 0
        %2300 = vmatprep.subr.bf16.mxu0 0
        %2301 = vmatpush2.bf16.msra.mxu0 0
        %2302 = vmatprep.subr.bf16.mxu0 0
        %2303 = vmatpush2.bf16.msra.mxu0 0
        %2304 = vmatprep.subr.bf16.mxu0 0
        %2305 = vmatpush2.bf16.msra.mxu0 0
        %2306 = vmatprep.subr.bf16.mxu0 0
        %2307 = vmatpush2.bf16.msra.mxu0 0
        %2308 = vmatprep.mubr.bf16.mxu0 0
        %2309 = vmatmul.mubr.bf16.gmra.mxu0 %v2178
        %v2310 = vpop.f32.mrf.mxu0
        %v2311 = vadd.f32 0.0, %v2310
        %v2312 = vpop.f32.mrf.mxu0
        %v2313 = vpop.f32.mrf.mxu0
        %v2314 = vadd.f32 0.0, %v2313
        %v2315 = vpop.f32.mrf.mxu0
        %2316 = vmatprep.mubr.bf16.mxu0 0
        %2317 = vmatmul.mubr.bf16.gmra.mxu0 %v2181
        %v2318 = vpop.f32.mrf.mxu0
        %v2319 = vadd.f32 0.0, %v2318
        %v2320 = vpop.f32.mrf.mxu0
        %v2321 = vpop.f32.mrf.mxu0
        %v2322 = vadd.f32 0.0, %v2321
        %v2323 = vpop.f32.mrf.mxu0
        %2324 = vmatprep.mubr.bf16.mxu0 0
        %2325 = vmatmul.mubr.bf16.gmra.mxu0 %v2184
        %v2326 = vpop.f32.mrf.mxu0
        %v2327 = vadd.f32 0.0, %v2326
        %v2328 = vpop.f32.mrf.mxu0
        %v2329 = vpop.f32.mrf.mxu0
        %v2330 = vadd.f32 0.0, %v2329
        %v2331 = vpop.f32.mrf.mxu0
        %2332 = vmatprep.mubr.bf16.mxu0 0
        %2333 = vmatmul.mubr.bf16.gmra.mxu0 %v2187
        %v2334 = vpop.f32.mrf.mxu0
        %v2335 = vadd.f32 0.0, %v2334
        %v2336 = vpop.f32.mrf.mxu0
        %v2337 = vpop.f32.mrf.mxu0
        %v2338 = vadd.f32 0.0, %v2337
        %v2339 = vpop.f32.mrf.mxu0
        %2340 = vmatprep.mubr.bf16.mxu0 0
        %2341 = vmatmul.mubr.bf16.gmra.mxu0 %v2190
        %v2342 = vpop.f32.mrf.mxu0
        %v2343 = vadd.f32 0.0, %v2342
        %v2344 = vpop.f32.mrf.mxu0
        %v2345 = vpop.f32.mrf.mxu0
        %v2346 = vadd.f32 0.0, %v2345
        %v2347 = vpop.f32.mrf.mxu0
        %2348 = vmatprep.mubr.bf16.mxu0 0
        %2349 = vmatmul.mubr.bf16.gmra.mxu0 %v2193
        %v2350 = vpop.f32.mrf.mxu0
        %v2351 = vadd.f32 0.0, %v2350
        %v2352 = vpop.f32.mrf.mxu0
        %v2353 = vpop.f32.mrf.mxu0
        %v2354 = vadd.f32 0.0, %v2353
        %v2355 = vpop.f32.mrf.mxu0
        %2356 = vmatprep.mubr.bf16.mxu0 0
        %2357 = vmatmul.mubr.bf16.gmra.mxu0 %v2196
        %v2358 = vpop.f32.mrf.mxu0
        %v2359 = vadd.f32 0.0, %v2358
        %v2360 = vpop.f32.mrf.mxu0
        %v2361 = vpop.f32.mrf.mxu0
        %v2362 = vadd.f32 0.0, %v2361
        %v2363 = vpop.f32.mrf.mxu0
        %2364 = vmatprep.mubr.bf16.mxu0 0
        %2365 = vmatmul.mubr.bf16.gmra.mxu0 %v2199
        %v2366 = vpop.f32.mrf.mxu0
        %v2367 = vadd.f32 0.0, %v2366
        %v2368 = vpop.f32.mrf.mxu0
        %v2369 = vpop.f32.mrf.mxu0
        %v2370 = vadd.f32 0.0, %v2369
        %v2371 = vpop.f32.mrf.mxu0
        %2372 = vmatprep.mubr.bf16.mxu0 0
        %2373 = vmatmul.mubr.bf16.gmra.mxu0 %v2202
        %v2374 = vpop.f32.mrf.mxu0
        %v2375 = vadd.f32 0.0, %v2374
        %v2376 = vpop.f32.mrf.mxu0
        %v2377 = vpop.f32.mrf.mxu0
        %v2378 = vadd.f32 0.0, %v2377
        %v2379 = vpop.f32.mrf.mxu0
        %2380 = vmatprep.mubr.bf16.mxu0 0
        %2381 = vmatmul.mubr.bf16.gmra.mxu0 %v2205
        %v2382 = vpop.f32.mrf.mxu0
        %v2383 = vadd.f32 0.0, %v2382
        %v2384 = vpop.f32.mrf.mxu0
        %v2385 = vpop.f32.mrf.mxu0
        %v2386 = vadd.f32 0.0, %v2385
        %v2387 = vpop.f32.mrf.mxu0
        %2388 = vmatprep.mubr.bf16.mxu0 0
        %2389 = vmatmul.mubr.bf16.gmra.mxu0 %v2208
        %v2390 = vpop.f32.mrf.mxu0
        %v2391 = vadd.f32 0.0, %v2390
        %v2392 = vpop.f32.mrf.mxu0
        %v2393 = vpop.f32.mrf.mxu0
        %v2394 = vadd.f32 0.0, %v2393
        %v2395 = vpop.f32.mrf.mxu0
        %2396 = vmatprep.mubr.bf16.mxu0 0
        %2397 = vmatmul.mubr.bf16.gmra.mxu0 %v2211
        %v2398 = vpop.f32.mrf.mxu0
        %v2399 = vadd.f32 0.0, %v2398
        %v2400 = vpop.f32.mrf.mxu0
        %v2401 = vpop.f32.mrf.mxu0
        %v2402 = vadd.f32 0.0, %v2401
        %v2403 = vpop.f32.mrf.mxu0
        %2404 = vmatprep.mubr.bf16.mxu0 0
        %2405 = vmatmul.mubr.bf16.gmra.mxu0 %v2214
        %v2406 = vpop.f32.mrf.mxu0
        %v2407 = vadd.f32 0.0, %v2406
        %v2408 = vpop.f32.mrf.mxu0
        %v2409 = vpop.f32.mrf.mxu0
        %v2410 = vadd.f32 0.0, %v2409
        %v2411 = vpop.f32.mrf.mxu0
        %2412 = vmatprep.mubr.bf16.mxu0 0
        %2413 = vmatmul.mubr.bf16.gmra.mxu0 %v2217
        %v2414 = vpop.f32.mrf.mxu0
        %v2415 = vadd.f32 0.0, %v2414
        %v2416 = vpop.f32.mrf.mxu0
        %v2417 = vpop.f32.mrf.mxu0
        %v2418 = vadd.f32 0.0, %v2417
        %v2419 = vpop.f32.mrf.mxu0
        %2420 = vmatprep.mubr.bf16.mxu0 0
        %2421 = vmatmul.mubr.bf16.gmra.mxu0 %v2220
        %v2422 = vpop.f32.mrf.mxu0
        %v2423 = vadd.f32 0.0, %v2422
        %v2424 = vpop.f32.mrf.mxu0
        %v2425 = vpop.f32.mrf.mxu0
        %v2426 = vadd.f32 0.0, %v2425
        %v2427 = vpop.f32.mrf.mxu0
        %2428 = vmatprep.mubr.bf16.mxu0 0
        %2429 = vmatmul.mubr.bf16.gmra.mxu0 %v2223
        %v2430 = vpop.f32.mrf.mxu0
        %v2431 = vadd.f32 0.0, %v2430
        %v2432 = vpop.f32.mrf.mxu0
        %v2433 = vpop.f32.mrf.mxu0
        %v2434 = vadd.f32 0.0, %v2433
        %v2435 = vpop.f32.mrf.mxu0
        %2436 = vmatprep.mubr.bf16.mxu0 0
        %2437 = vmatmul.mubr.bf16.gmra.mxu0 %v2226
        %v2438 = vpop.f32.mrf.mxu0
        %v2439 = vadd.f32 0.0, %v2438
        %v2440 = vpop.f32.mrf.mxu0
        %v2441 = vpop.f32.mrf.mxu0
        %v2442 = vadd.f32 0.0, %v2441
        %v2443 = vpop.f32.mrf.mxu0
        %2444 = vmatprep.mubr.bf16.mxu0 0
        %2445 = vmatmul.mubr.bf16.gmra.mxu0 %v2229
        %v2446 = vpop.f32.mrf.mxu0
        %v2447 = vadd.f32 0.0, %v2446
        %v2448 = vpop.f32.mrf.mxu0
        %v2449 = vpop.f32.mrf.mxu0
        %v2450 = vadd.f32 0.0, %v2449
        %v2451 = vpop.f32.mrf.mxu0
        %2452 = vmatprep.mubr.bf16.mxu0 0
        %2453 = vmatmul.mubr.bf16.gmra.mxu0 %v2232
        %v2454 = vpop.f32.mrf.mxu0
        %v2455 = vadd.f32 0.0, %v2454
        %v2456 = vpop.f32.mrf.mxu0
        %v2457 = vpop.f32.mrf.mxu0
        %v2458 = vadd.f32 0.0, %v2457
        %v2459 = vpop.f32.mrf.mxu0
        %2460 = vmatprep.mubr.bf16.mxu0 0
        %2461 = vmatmul.mubr.bf16.gmra.mxu0 %v2235
        %v2462 = vpop.f32.mrf.mxu0
        %v2463 = vadd.f32 0.0, %v2462
        %v2464 = vpop.f32.mrf.mxu0
        %v2465 = vpop.f32.mrf.mxu0
        %v2466 = vadd.f32 0.0, %v2465
        %v2467 = vpop.f32.mrf.mxu0
        %2468 = vmatprep.mubr.bf16.mxu0 0
        %2469 = vmatmul.mubr.bf16.gmra.mxu0 %v2238
        %v2470 = vpop.f32.mrf.mxu0
        %v2471 = vadd.f32 0.0, %v2470
        %v2472 = vpop.f32.mrf.mxu0
        %v2473 = vpop.f32.mrf.mxu0
        %v2474 = vadd.f32 0.0, %v2473
        %v2475 = vpop.f32.mrf.mxu0
        %2476 = vmatprep.mubr.bf16.mxu0 0
        %2477 = vmatmul.mubr.bf16.gmra.mxu0 %v2241
        %v2478 = vpop.f32.mrf.mxu0
        %v2479 = vadd.f32 0.0, %v2478
        %v2480 = vpop.f32.mrf.mxu0
        %v2481 = vpop.f32.mrf.mxu0
        %v2482 = vadd.f32 0.0, %v2481
        %v2483 = vpop.f32.mrf.mxu0
        %2484 = vmatprep.mubr.bf16.mxu0 0
        %2485 = vmatmul.mubr.bf16.gmra.mxu0 %v2244
        %v2486 = vpop.f32.mrf.mxu0
        %v2487 = vadd.f32 0.0, %v2486
        %v2488 = vpop.f32.mrf.mxu0
        %v2489 = vpop.f32.mrf.mxu0
        %v2490 = vadd.f32 0.0, %v2489
        %v2491 = vpop.f32.mrf.mxu0
        %2492 = vmatprep.mubr.bf16.mxu0 0
        %2493 = vmatmul.mubr.bf16.gmra.mxu0 %v2247
        %v2494 = vpop.f32.mrf.mxu0
        %v2495 = vadd.f32 0.0, %v2494
        %v2496 = vpop.f32.mrf.mxu0
        %v2497 = vpop.f32.mrf.mxu0
        %v2498 = vadd.f32 0.0, %v2497
        %v2499 = vpop.f32.mrf.mxu0
        %2500 = vmatprep.mubr.bf16.mxu0 0
        %2501 = vmatmul.mubr.bf16.gmra.mxu0 %v2250
        %v2502 = vpop.f32.mrf.mxu0
        %v2503 = vadd.f32 0.0, %v2502
        %v2504 = vpop.f32.mrf.mxu0
        %v2505 = vpop.f32.mrf.mxu0
        %v2506 = vadd.f32 0.0, %v2505
        %v2507 = vpop.f32.mrf.mxu0
        %2508 = vmatprep.mubr.bf16.mxu0 0
        %2509 = vmatmul.mubr.bf16.gmra.mxu0 %v2253
        %v2510 = vpop.f32.mrf.mxu0
        %v2511 = vadd.f32 0.0, %v2510
        %v2512 = vpop.f32.mrf.mxu0
        %v2513 = vpop.f32.mrf.mxu0
        %v2514 = vadd.f32 0.0, %v2513
        %v2515 = vpop.f32.mrf.mxu0
        %2516 = vmatprep.mubr.bf16.mxu0 0
        %2517 = vmatmul.mubr.bf16.gmra.mxu0 %v2256
        %v2518 = vpop.f32.mrf.mxu0
        %v2519 = vadd.f32 0.0, %v2518
        %v2520 = vpop.f32.mrf.mxu0
        %v2521 = vpop.f32.mrf.mxu0
        %v2522 = vadd.f32 0.0, %v2521
        %v2523 = vpop.f32.mrf.mxu0
        %2524 = vmatprep.mubr.bf16.mxu0 0
        %2525 = vmatmul.mubr.bf16.gmra.mxu0 %v2259
        %v2526 = vpop.f32.mrf.mxu0
        %v2527 = vadd.f32 0.0, %v2526
        %v2528 = vpop.f32.mrf.mxu0
        %v2529 = vpop.f32.mrf.mxu0
        %v2530 = vadd.f32 0.0, %v2529
        %v2531 = vpop.f32.mrf.mxu0
        %2532 = vmatprep.mubr.bf16.mxu0 0
        %2533 = vmatmul.mubr.bf16.gmra.mxu0 %v2262
        %v2534 = vpop.f32.mrf.mxu0
        %v2535 = vadd.f32 0.0, %v2534
        %v2536 = vpop.f32.mrf.mxu0
        %v2537 = vpop.f32.mrf.mxu0
        %v2538 = vadd.f32 0.0, %v2537
        %v2539 = vpop.f32.mrf.mxu0
        %2540 = vmatprep.mubr.bf16.mxu0 0
        %2541 = vmatmul.mubr.bf16.gmra.mxu0 %v2265
        %v2542 = vpop.f32.mrf.mxu0
        %v2543 = vadd.f32 0.0, %v2542
        %v2544 = vpop.f32.mrf.mxu0
        %v2545 = vpop.f32.mrf.mxu0
        %v2546 = vadd.f32 0.0, %v2545
        %v2547 = vpop.f32.mrf.mxu0
        %2548 = vmatprep.mubr.bf16.mxu0 0
        %2549 = vmatmul.mubr.bf16.gmra.mxu0 %v2268
        %v2550 = vpop.f32.mrf.mxu0
        %v2551 = vadd.f32 0.0, %v2550
        %v2552 = vpop.f32.mrf.mxu0
        %v2553 = vpop.f32.mrf.mxu0
        %v2554 = vadd.f32 0.0, %v2553
        %v2555 = vpop.f32.mrf.mxu0
        %2556 = vmatprep.mubr.bf16.mxu0 0
        %2557 = vmatmul.mubr.bf16.gmra.mxu0 %v2271
        %v2558 = vpop.f32.mrf.mxu0
        %v2559 = vadd.f32 0.0, %v2558
        %v2560 = vpop.f32.mrf.mxu0
        %v2561 = vpop.f32.mrf.mxu0
        %v2562 = vadd.f32 0.0, %v2561
        %v2563 = vpop.f32.mrf.mxu0
        %2564 = vdwg.mxu0
        %v2565 = vadd.f32 %v1921, %v2311
        %v2566 = vadd.f32 %v1924, %v2314
        %v2567 = vadd.f32 %v1929, %v2319
        %v2568 = vadd.f32 %v1932, %v2322
        %v2569 = vadd.f32 %v1937, %v2327
        %v2570 = vadd.f32 %v1940, %v2330
        %v2571 = vadd.f32 %v1945, %v2335
        %v2572 = vadd.f32 %v1948, %v2338
        %v2573 = vadd.f32 %v1953, %v2343
        %v2574 = vadd.f32 %v1956, %v2346
        %v2575 = vadd.f32 %v1961, %v2351
        %v2576 = vadd.f32 %v1964, %v2354
        %v2577 = vadd.f32 %v1969, %v2359
        %v2578 = vadd.f32 %v1972, %v2362
        %v2579 = vadd.f32 %v1977, %v2367
        %v2580 = vadd.f32 %v1980, %v2370
        %v2581 = vadd.f32 %v1985, %v2375
        %v2582 = vadd.f32 %v1988, %v2378
        %v2583 = vadd.f32 %v1993, %v2383
        %v2584 = vadd.f32 %v1996, %v2386
        %v2585 = vadd.f32 %v2001, %v2391
        %v2586 = vadd.f32 %v2004, %v2394
        %v2587 = vadd.f32 %v2009, %v2399
        %v2588 = vadd.f32 %v2012, %v2402
        %v2589 = vadd.f32 %v2017, %v2407
        %v2590 = vadd.f32 %v2020, %v2410
        %v2591 = vadd.f32 %v2025, %v2415
        %v2592 = vadd.f32 %v2028, %v2418
        %v2593 = vadd.f32 %v2033, %v2423
        %v2594 = vadd.f32 %v2036, %v2426
        %v2595 = vadd.f32 %v2041, %v2431
        %v2596 = vadd.f32 %v2044, %v2434
        %v2597 = vadd.f32 %v2049, %v2439
        %v2598 = vadd.f32 %v2052, %v2442
        %v2599 = vadd.f32 %v2057, %v2447
        %v2600 = vadd.f32 %v2060, %v2450
        %v2601 = vadd.f32 %v2065, %v2455
        %v2602 = vadd.f32 %v2068, %v2458
        %v2603 = vadd.f32 %v2073, %v2463
        %v2604 = vadd.f32 %v2076, %v2466
        %v2605 = vadd.f32 %v2081, %v2471
        %v2606 = vadd.f32 %v2084, %v2474
        %v2607 = vadd.f32 %v2089, %v2479
        %v2608 = vadd.f32 %v2092, %v2482
        %v2609 = vadd.f32 %v2097, %v2487
        %v2610 = vadd.f32 %v2100, %v2490
        %v2611 = vadd.f32 %v2105, %v2495
        %v2612 = vadd.f32 %v2108, %v2498
        %v2613 = vadd.f32 %v2113, %v2503
        %v2614 = vadd.f32 %v2116, %v2506
        %v2615 = vadd.f32 %v2121, %v2511
        %v2616 = vadd.f32 %v2124, %v2514
        %v2617 = vadd.f32 %v2129, %v2519
        %v2618 = vadd.f32 %v2132, %v2522
        %v2619 = vadd.f32 %v2137, %v2527
        %v2620 = vadd.f32 %v2140, %v2530
        %v2621 = vadd.f32 %v2145, %v2535
        %v2622 = vadd.f32 %v2148, %v2538
        %v2623 = vadd.f32 %v2153, %v2543
        %v2624 = vadd.f32 %v2156, %v2546
        %v2625 = vadd.f32 %v2161, %v2551
        %v2626 = vadd.f32 %v2164, %v2554
        %v2627 = vadd.f32 %v2169, %v2559
        %v2628 = vadd.f32 %v2172, %v2562
        %s2629 = scalar_lea.vmem %s1, 6
        %v2630 = vld [vmem:[%s2629] sm:$0x3]
        %v2632 = vsel %vm284, %v1315, 0
        %v2635 = vsel %vm284, %v1316, 0
        %v2638 = vsel %vm1494, %v2630, 0
        %2640 = vmatprep.subr.bf16.mxu0 0
        %2641 = vmatpush1.bf16.msra.mxu0 0
        %2642 = vmatprep.subr.bf16.mxu0 0
        %2643 = vmatpush1.bf16.msra.mxu0 0
        %2644 = vmatprep.subr.bf16.mxu0 0
        %2645 = vmatpush1.bf16.msra.mxu0 0
        %2646 = vmatprep.subr.bf16.mxu0 0
        %2647 = vmatpush1.bf16.msra.mxu0 0
        %2648 = vmatprep.subr.bf16.mxu0 0
        %2649 = vmatpush1.bf16.msra.mxu0 0
        %2650 = vmatprep.subr.bf16.mxu0 0
        %2651 = vmatpush1.bf16.msra.mxu0 0
        %2652 = vmatprep.subr.bf16.mxu0 0
        %2653 = vmatpush1.bf16.msra.mxu0 0
        %2654 = vmatprep.subr.bf16.mxu0 0
        %2655 = vmatpush1.bf16.msra.mxu0 %v2638
        %2656 = vmatprep.subr.bf16.mxu0 0
        %2657 = vmatpush2.bf16.msra.mxu0 0
        %2658 = vmatprep.subr.bf16.mxu0 0
        %2659 = vmatpush2.bf16.msra.mxu0 0
        %2660 = vmatprep.subr.bf16.mxu0 0
        %2661 = vmatpush2.bf16.msra.mxu0 0
        %2662 = vmatprep.subr.bf16.mxu0 0
        %2663 = vmatpush2.bf16.msra.mxu0 0
        %2664 = vmatprep.subr.bf16.mxu0 0
        %2665 = vmatpush2.bf16.msra.mxu0 0
        %2666 = vmatprep.subr.bf16.mxu0 0
        %2667 = vmatpush2.bf16.msra.mxu0 0
        %2668 = vmatprep.subr.bf16.mxu0 0
        %2669 = vmatpush2.bf16.msra.mxu0 0
        %2670 = vmatprep.subr.bf16.mxu0 0
        %2671 = vmatpush2.bf16.msra.mxu0 0
        %2672 = vmatprep.mubr.bf16.mxu0 0
        %2673 = vmatmul.mubr.bf16.gmra.mxu0 %v1791
        %v2674 = vpop.f32.mrf.mxu0
        %v2675 = vadd.f32 0.0, %v2674
        %v2676 = vpop.f32.mrf.mxu0
        %v2677 = vpop.f32.mrf.mxu0
        %v2678 = vadd.f32 0.0, %v2677
        %v2679 = vpop.f32.mrf.mxu0
        %2680 = vmatprep.mubr.bf16.mxu0 0
        %2681 = vmatmul.mubr.bf16.gmra.mxu0 %v1794
        %v2682 = vpop.f32.mrf.mxu0
        %v2683 = vadd.f32 0.0, %v2682
        %v2684 = vpop.f32.mrf.mxu0
        %v2685 = vpop.f32.mrf.mxu0
        %v2686 = vadd.f32 0.0, %v2685
        %v2687 = vpop.f32.mrf.mxu0
        %2688 = vmatprep.mubr.bf16.mxu0 0
        %2689 = vmatmul.mubr.bf16.gmra.mxu0 %v1797
        %v2690 = vpop.f32.mrf.mxu0
        %v2691 = vadd.f32 0.0, %v2690
        %v2692 = vpop.f32.mrf.mxu0
        %v2693 = vpop.f32.mrf.mxu0
        %v2694 = vadd.f32 0.0, %v2693
        %v2695 = vpop.f32.mrf.mxu0
        %2696 = vmatprep.mubr.bf16.mxu0 0
        %2697 = vmatmul.mubr.bf16.gmra.mxu0 %v1800
        %v2698 = vpop.f32.mrf.mxu0
        %v2699 = vadd.f32 0.0, %v2698
        %v2700 = vpop.f32.mrf.mxu0
        %v2701 = vpop.f32.mrf.mxu0
        %v2702 = vadd.f32 0.0, %v2701
        %v2703 = vpop.f32.mrf.mxu0
        %2704 = vmatprep.mubr.bf16.mxu0 0
        %2705 = vmatmul.mubr.bf16.gmra.mxu0 %v1803
        %v2706 = vpop.f32.mrf.mxu0
        %v2707 = vadd.f32 0.0, %v2706
        %v2708 = vpop.f32.mrf.mxu0
        %v2709 = vpop.f32.mrf.mxu0
        %v2710 = vadd.f32 0.0, %v2709
        %v2711 = vpop.f32.mrf.mxu0
        %2712 = vmatprep.mubr.bf16.mxu0 0
        %2713 = vmatmul.mubr.bf16.gmra.mxu0 %v1806
        %v2714 = vpop.f32.mrf.mxu0
        %v2715 = vadd.f32 0.0, %v2714
        %v2716 = vpop.f32.mrf.mxu0
        %v2717 = vpop.f32.mrf.mxu0
        %v2718 = vadd.f32 0.0, %v2717
        %v2719 = vpop.f32.mrf.mxu0
        %2720 = vmatprep.mubr.bf16.mxu0 0
        %2721 = vmatmul.mubr.bf16.gmra.mxu0 %v1809
        %v2722 = vpop.f32.mrf.mxu0
        %v2723 = vadd.f32 0.0, %v2722
        %v2724 = vpop.f32.mrf.mxu0
        %v2725 = vpop.f32.mrf.mxu0
        %v2726 = vadd.f32 0.0, %v2725
        %v2727 = vpop.f32.mrf.mxu0
        %2728 = vmatprep.mubr.bf16.mxu0 0
        %2729 = vmatmul.mubr.bf16.gmra.mxu0 %v1812
        %v2730 = vpop.f32.mrf.mxu0
        %v2731 = vadd.f32 0.0, %v2730
        %v2732 = vpop.f32.mrf.mxu0
        %v2733 = vpop.f32.mrf.mxu0
        %v2734 = vadd.f32 0.0, %v2733
        %v2735 = vpop.f32.mrf.mxu0
        %2736 = vmatprep.mubr.bf16.mxu0 0
        %2737 = vmatmul.mubr.bf16.gmra.mxu0 %v1815
        %v2738 = vpop.f32.mrf.mxu0
        %v2739 = vadd.f32 0.0, %v2738
        %v2740 = vpop.f32.mrf.mxu0
        %v2741 = vpop.f32.mrf.mxu0
        %v2742 = vadd.f32 0.0, %v2741
        %v2743 = vpop.f32.mrf.mxu0
        %2744 = vmatprep.mubr.bf16.mxu0 0
        %2745 = vmatmul.mubr.bf16.gmra.mxu0 %v1818
        %v2746 = vpop.f32.mrf.mxu0
        %v2747 = vadd.f32 0.0, %v2746
        %v2748 = vpop.f32.mrf.mxu0
        %v2749 = vpop.f32.mrf.mxu0
        %v2750 = vadd.f32 0.0, %v2749
        %v2751 = vpop.f32.mrf.mxu0
        %2752 = vmatprep.mubr.bf16.mxu0 0
        %2753 = vmatmul.mubr.bf16.gmra.mxu0 %v1821
        %v2754 = vpop.f32.mrf.mxu0
        %v2755 = vadd.f32 0.0, %v2754
        %v2756 = vpop.f32.mrf.mxu0
        %v2757 = vpop.f32.mrf.mxu0
        %v2758 = vadd.f32 0.0, %v2757
        %v2759 = vpop.f32.mrf.mxu0
        %2760 = vmatprep.mubr.bf16.mxu0 0
        %2761 = vmatmul.mubr.bf16.gmra.mxu0 %v1824
        %v2762 = vpop.f32.mrf.mxu0
        %v2763 = vadd.f32 0.0, %v2762
        %v2764 = vpop.f32.mrf.mxu0
        %v2765 = vpop.f32.mrf.mxu0
        %v2766 = vadd.f32 0.0, %v2765
        %v2767 = vpop.f32.mrf.mxu0
        %2768 = vmatprep.mubr.bf16.mxu0 0
        %2769 = vmatmul.mubr.bf16.gmra.mxu0 %v1827
        %v2770 = vpop.f32.mrf.mxu0
        %v2771 = vadd.f32 0.0, %v2770
        %v2772 = vpop.f32.mrf.mxu0
        %v2773 = vpop.f32.mrf.mxu0
        %v2774 = vadd.f32 0.0, %v2773
        %v2775 = vpop.f32.mrf.mxu0
        %2776 = vmatprep.mubr.bf16.mxu0 0
        %2777 = vmatmul.mubr.bf16.gmra.mxu0 %v1830
        %v2778 = vpop.f32.mrf.mxu0
        %v2779 = vadd.f32 0.0, %v2778
        %v2780 = vpop.f32.mrf.mxu0
        %v2781 = vpop.f32.mrf.mxu0
        %v2782 = vadd.f32 0.0, %v2781
        %v2783 = vpop.f32.mrf.mxu0
        %2784 = vmatprep.mubr.bf16.mxu0 0
        %2785 = vmatmul.mubr.bf16.gmra.mxu0 %v1833
        %v2786 = vpop.f32.mrf.mxu0
        %v2787 = vadd.f32 0.0, %v2786
        %v2788 = vpop.f32.mrf.mxu0
        %v2789 = vpop.f32.mrf.mxu0
        %v2790 = vadd.f32 0.0, %v2789
        %v2791 = vpop.f32.mrf.mxu0
        %2792 = vmatprep.mubr.bf16.mxu0 0
        %2793 = vmatmul.mubr.bf16.gmra.mxu0 %v2632
        %v2794 = vpop.f32.mrf.mxu0
        %v2795 = vadd.f32 0.0, %v2794
        %v2796 = vpop.f32.mrf.mxu0
        %v2797 = vpop.f32.mrf.mxu0
        %v2798 = vadd.f32 0.0, %v2797
        %v2799 = vpop.f32.mrf.mxu0
        %2800 = vmatprep.mubr.bf16.mxu0 0
        %2801 = vmatmul.mubr.bf16.gmra.mxu0 %v1839
        %v2802 = vpop.f32.mrf.mxu0
        %v2803 = vadd.f32 0.0, %v2802
        %v2804 = vpop.f32.mrf.mxu0
        %v2805 = vpop.f32.mrf.mxu0
        %v2806 = vadd.f32 0.0, %v2805
        %v2807 = vpop.f32.mrf.mxu0
        %2808 = vmatprep.mubr.bf16.mxu0 0
        %2809 = vmatmul.mubr.bf16.gmra.mxu0 %v1842
        %v2810 = vpop.f32.mrf.mxu0
        %v2811 = vadd.f32 0.0, %v2810
        %v2812 = vpop.f32.mrf.mxu0
        %v2813 = vpop.f32.mrf.mxu0
        %v2814 = vadd.f32 0.0, %v2813
        %v2815 = vpop.f32.mrf.mxu0
        %2816 = vmatprep.mubr.bf16.mxu0 0
        %2817 = vmatmul.mubr.bf16.gmra.mxu0 %v1845
        %v2818 = vpop.f32.mrf.mxu0
        %v2819 = vadd.f32 0.0, %v2818
        %v2820 = vpop.f32.mrf.mxu0
        %v2821 = vpop.f32.mrf.mxu0
        %v2822 = vadd.f32 0.0, %v2821
        %v2823 = vpop.f32.mrf.mxu0
        %2824 = vmatprep.mubr.bf16.mxu0 0
        %2825 = vmatmul.mubr.bf16.gmra.mxu0 %v1848
        %v2826 = vpop.f32.mrf.mxu0
        %v2827 = vadd.f32 0.0, %v2826
        %v2828 = vpop.f32.mrf.mxu0
        %v2829 = vpop.f32.mrf.mxu0
        %v2830 = vadd.f32 0.0, %v2829
        %v2831 = vpop.f32.mrf.mxu0
        %2832 = vmatprep.mubr.bf16.mxu0 0
        %2833 = vmatmul.mubr.bf16.gmra.mxu0 %v1851
        %v2834 = vpop.f32.mrf.mxu0
        %v2835 = vadd.f32 0.0, %v2834
        %v2836 = vpop.f32.mrf.mxu0
        %v2837 = vpop.f32.mrf.mxu0
        %v2838 = vadd.f32 0.0, %v2837
        %v2839 = vpop.f32.mrf.mxu0
        %2840 = vmatprep.mubr.bf16.mxu0 0
        %2841 = vmatmul.mubr.bf16.gmra.mxu0 %v1854
        %v2842 = vpop.f32.mrf.mxu0
        %v2843 = vadd.f32 0.0, %v2842
        %v2844 = vpop.f32.mrf.mxu0
        %v2845 = vpop.f32.mrf.mxu0
        %v2846 = vadd.f32 0.0, %v2845
        %v2847 = vpop.f32.mrf.mxu0
        %2848 = vmatprep.mubr.bf16.mxu0 0
        %2849 = vmatmul.mubr.bf16.gmra.mxu0 %v1857
        %v2850 = vpop.f32.mrf.mxu0
        %v2851 = vadd.f32 0.0, %v2850
        %v2852 = vpop.f32.mrf.mxu0
        %v2853 = vpop.f32.mrf.mxu0
        %v2854 = vadd.f32 0.0, %v2853
        %v2855 = vpop.f32.mrf.mxu0
        %2856 = vmatprep.mubr.bf16.mxu0 0
        %2857 = vmatmul.mubr.bf16.gmra.mxu0 %v1860
        %v2858 = vpop.f32.mrf.mxu0
        %v2859 = vadd.f32 0.0, %v2858
        %v2860 = vpop.f32.mrf.mxu0
        %v2861 = vpop.f32.mrf.mxu0
        %v2862 = vadd.f32 0.0, %v2861
        %v2863 = vpop.f32.mrf.mxu0
        %2864 = vmatprep.mubr.bf16.mxu0 0
        %2865 = vmatmul.mubr.bf16.gmra.mxu0 %v1863
        %v2866 = vpop.f32.mrf.mxu0
        %v2867 = vadd.f32 0.0, %v2866
        %v2868 = vpop.f32.mrf.mxu0
        %v2869 = vpop.f32.mrf.mxu0
        %v2870 = vadd.f32 0.0, %v2869
        %v2871 = vpop.f32.mrf.mxu0
        %2872 = vmatprep.mubr.bf16.mxu0 0
        %2873 = vmatmul.mubr.bf16.gmra.mxu0 %v1866
        %v2874 = vpop.f32.mrf.mxu0
        %v2875 = vadd.f32 0.0, %v2874
        %v2876 = vpop.f32.mrf.mxu0
        %v2877 = vpop.f32.mrf.mxu0
        %v2878 = vadd.f32 0.0, %v2877
        %v2879 = vpop.f32.mrf.mxu0
        %2880 = vmatprep.mubr.bf16.mxu0 0
        %2881 = vmatmul.mubr.bf16.gmra.mxu0 %v1869
        %v2882 = vpop.f32.mrf.mxu0
        %v2883 = vadd.f32 0.0, %v2882
        %v2884 = vpop.f32.mrf.mxu0
        %v2885 = vpop.f32.mrf.mxu0
        %v2886 = vadd.f32 0.0, %v2885
        %v2887 = vpop.f32.mrf.mxu0
        %2888 = vmatprep.mubr.bf16.mxu0 0
        %2889 = vmatmul.mubr.bf16.gmra.mxu0 %v1872
        %v2890 = vpop.f32.mrf.mxu0
        %v2891 = vadd.f32 0.0, %v2890
        %v2892 = vpop.f32.mrf.mxu0
        %v2893 = vpop.f32.mrf.mxu0
        %v2894 = vadd.f32 0.0, %v2893
        %v2895 = vpop.f32.mrf.mxu0
        %2896 = vmatprep.mubr.bf16.mxu0 0
        %2897 = vmatmul.mubr.bf16.gmra.mxu0 %v1875
        %v2898 = vpop.f32.mrf.mxu0
        %v2899 = vadd.f32 0.0, %v2898
        %v2900 = vpop.f32.mrf.mxu0
        %v2901 = vpop.f32.mrf.mxu0
        %v2902 = vadd.f32 0.0, %v2901
        %v2903 = vpop.f32.mrf.mxu0
        %2904 = vmatprep.mubr.bf16.mxu0 0
        %2905 = vmatmul.mubr.bf16.gmra.mxu0 %v1878
        %v2906 = vpop.f32.mrf.mxu0
        %v2907 = vadd.f32 0.0, %v2906
        %v2908 = vpop.f32.mrf.mxu0
        %v2909 = vpop.f32.mrf.mxu0
        %v2910 = vadd.f32 0.0, %v2909
        %v2911 = vpop.f32.mrf.mxu0
        %2912 = vmatprep.mubr.bf16.mxu0 0
        %2913 = vmatmul.mubr.bf16.gmra.mxu0 %v1881
        %v2914 = vpop.f32.mrf.mxu0
        %v2915 = vadd.f32 0.0, %v2914
        %v2916 = vpop.f32.mrf.mxu0
        %v2917 = vpop.f32.mrf.mxu0
        %v2918 = vadd.f32 0.0, %v2917
        %v2919 = vpop.f32.mrf.mxu0
        %2920 = vmatprep.mubr.bf16.mxu0 0
        %2921 = vmatmul.mubr.bf16.gmra.mxu0 %v2635
        %v2922 = vpop.f32.mrf.mxu0
        %v2923 = vadd.f32 0.0, %v2922
        %v2924 = vpop.f32.mrf.mxu0
        %v2925 = vpop.f32.mrf.mxu0
        %v2926 = vadd.f32 0.0, %v2925
        %v2927 = vpop.f32.mrf.mxu0
        %2928 = vdwg.mxu0
        %v2929 = vadd.f32 %v2565, %v2675
        %v2930 = vadd.f32 %v2566, %v2678
        %v2931 = vadd.f32 %v2567, %v2683
        %v2932 = vadd.f32 %v2568, %v2686
        %v2933 = vadd.f32 %v2569, %v2691
        %v2934 = vadd.f32 %v2570, %v2694
        %v2935 = vadd.f32 %v2571, %v2699
        %v2936 = vadd.f32 %v2572, %v2702
        %v2937 = vadd.f32 %v2573, %v2707
        %v2938 = vadd.f32 %v2574, %v2710
        %v2939 = vadd.f32 %v2575, %v2715
        %v2940 = vadd.f32 %v2576, %v2718
        %v2941 = vadd.f32 %v2577, %v2723
        %v2942 = vadd.f32 %v2578, %v2726
        %v2943 = vadd.f32 %v2579, %v2731
        %v2944 = vadd.f32 %v2580, %v2734
        %v2945 = vadd.f32 %v2581, %v2739
        %v2946 = vadd.f32 %v2582, %v2742
        %v2947 = vadd.f32 %v2583, %v2747
        %v2948 = vadd.f32 %v2584, %v2750
        %v2949 = vadd.f32 %v2585, %v2755
        %v2950 = vadd.f32 %v2586, %v2758
        %v2951 = vadd.f32 %v2587, %v2763
        %v2952 = vadd.f32 %v2588, %v2766
        %v2953 = vadd.f32 %v2589, %v2771
        %v2954 = vadd.f32 %v2590, %v2774
        %v2955 = vadd.f32 %v2591, %v2779
        %v2956 = vadd.f32 %v2592, %v2782
        %v2957 = vadd.f32 %v2593, %v2787
        %v2958 = vadd.f32 %v2594, %v2790
        %v2959 = vadd.f32 %v2595, %v2795
        %v2960 = vadd.f32 %v2596, %v2798
        %v2961 = vadd.f32 %v2597, %v2803
        %v2962 = vadd.f32 %v2598, %v2806
        %v2963 = vadd.f32 %v2599, %v2811
        %v2964 = vadd.f32 %v2600, %v2814
        %v2965 = vadd.f32 %v2601, %v2819
        %v2966 = vadd.f32 %v2602, %v2822
        %v2967 = vadd.f32 %v2603, %v2827
        %v2968 = vadd.f32 %v2604, %v2830
        %v2969 = vadd.f32 %v2605, %v2835
        %v2970 = vadd.f32 %v2606, %v2838
        %v2971 = vadd.f32 %v2607, %v2843
        %v2972 = vadd.f32 %v2608, %v2846
        %v2973 = vadd.f32 %v2609, %v2851
        %v2974 = vadd.f32 %v2610, %v2854
        %v2975 = vadd.f32 %v2611, %v2859
        %v2976 = vadd.f32 %v2612, %v2862
        %v2977 = vadd.f32 %v2613, %v2867
        %v2978 = vadd.f32 %v2614, %v2870
        %v2979 = vadd.f32 %v2615, %v2875
        %v2980 = vadd.f32 %v2616, %v2878
        %v2981 = vadd.f32 %v2617, %v2883
        %v2982 = vadd.f32 %v2618, %v2886
        %v2983 = vadd.f32 %v2619, %v2891
        %v2984 = vadd.f32 %v2620, %v2894
        %v2985 = vadd.f32 %v2621, %v2899
        %v2986 = vadd.f32 %v2622, %v2902
        %v2987 = vadd.f32 %v2623, %v2907
        %v2988 = vadd.f32 %v2624, %v2910
        %v2989 = vadd.f32 %v2625, %v2915
        %v2990 = vadd.f32 %v2626, %v2918
        %v2991 = vadd.f32 %v2627, %v2923
        %v2992 = vadd.f32 %v2628, %v2926
        %s2993 = scalar_lea.vmem %s1, 8
        %v2994 = vld [vmem:[%s2993] sm:$0x3]
        %v2996 = vsel %vm284, %v1337, 0
        %v2999 = vsel %vm284, %v1338, 0
        %v3002 = vsel %vm1494, %v2994, 0
        %3004 = vmatprep.subr.bf16.mxu0 0
        %3005 = vmatpush1.bf16.msra.mxu0 0
        %3006 = vmatprep.subr.bf16.mxu0 0
        %3007 = vmatpush1.bf16.msra.mxu0 0
        %3008 = vmatprep.subr.bf16.mxu0 0
        %3009 = vmatpush1.bf16.msra.mxu0 0
        %3010 = vmatprep.subr.bf16.mxu0 0
        %3011 = vmatpush1.bf16.msra.mxu0 0
        %3012 = vmatprep.subr.bf16.mxu0 0
        %3013 = vmatpush1.bf16.msra.mxu0 0
        %3014 = vmatprep.subr.bf16.mxu0 0
        %3015 = vmatpush1.bf16.msra.mxu0 0
        %3016 = vmatprep.subr.bf16.mxu0 0
        %3017 = vmatpush1.bf16.msra.mxu0 0
        %3018 = vmatprep.subr.bf16.mxu0 0
        %3019 = vmatpush1.bf16.msra.mxu0 %v3002
        %3020 = vmatprep.subr.bf16.mxu0 0
        %3021 = vmatpush2.bf16.msra.mxu0 0
        %3022 = vmatprep.subr.bf16.mxu0 0
        %3023 = vmatpush2.bf16.msra.mxu0 0
        %3024 = vmatprep.subr.bf16.mxu0 0
        %3025 = vmatpush2.bf16.msra.mxu0 0
        %3026 = vmatprep.subr.bf16.mxu0 0
        %3027 = vmatpush2.bf16.msra.mxu0 0
        %3028 = vmatprep.subr.bf16.mxu0 0
        %3029 = vmatpush2.bf16.msra.mxu0 0
        %3030 = vmatprep.subr.bf16.mxu0 0
        %3031 = vmatpush2.bf16.msra.mxu0 0
        %3032 = vmatprep.subr.bf16.mxu0 0
        %3033 = vmatpush2.bf16.msra.mxu0 0
        %3034 = vmatprep.subr.bf16.mxu0 0
        %3035 = vmatpush2.bf16.msra.mxu0 0
        %3036 = vmatprep.mubr.bf16.mxu0 0
        %3037 = vmatmul.mubr.bf16.gmra.mxu0 %v1402
        %v3038 = vpop.f32.mrf.mxu0
        %v3039 = vadd.f32 0.0, %v3038
        %v3040 = vpop.f32.mrf.mxu0
        %v3041 = vpop.f32.mrf.mxu0
        %v3042 = vadd.f32 0.0, %v3041
        %v3043 = vpop.f32.mrf.mxu0
        %3044 = vmatprep.mubr.bf16.mxu0 0
        %3045 = vmatmul.mubr.bf16.gmra.mxu0 %v1405
        %v3046 = vpop.f32.mrf.mxu0
        %v3047 = vadd.f32 0.0, %v3046
        %v3048 = vpop.f32.mrf.mxu0
        %v3049 = vpop.f32.mrf.mxu0
        %v3050 = vadd.f32 0.0, %v3049
        %v3051 = vpop.f32.mrf.mxu0
        %3052 = vmatprep.mubr.bf16.mxu0 0
        %3053 = vmatmul.mubr.bf16.gmra.mxu0 %v1408
        %v3054 = vpop.f32.mrf.mxu0
        %v3055 = vadd.f32 0.0, %v3054
        %v3056 = vpop.f32.mrf.mxu0
        %v3057 = vpop.f32.mrf.mxu0
        %v3058 = vadd.f32 0.0, %v3057
        %v3059 = vpop.f32.mrf.mxu0
        %3060 = vmatprep.mubr.bf16.mxu0 0
        %3061 = vmatmul.mubr.bf16.gmra.mxu0 %v1411
        %v3062 = vpop.f32.mrf.mxu0
        %v3063 = vadd.f32 0.0, %v3062
        %v3064 = vpop.f32.mrf.mxu0
        %v3065 = vpop.f32.mrf.mxu0
        %v3066 = vadd.f32 0.0, %v3065
        %v3067 = vpop.f32.mrf.mxu0
        %3068 = vmatprep.mubr.bf16.mxu0 0
        %3069 = vmatmul.mubr.bf16.gmra.mxu0 %v1414
        %v3070 = vpop.f32.mrf.mxu0
        %v3071 = vadd.f32 0.0, %v3070
        %v3072 = vpop.f32.mrf.mxu0
        %v3073 = vpop.f32.mrf.mxu0
        %v3074 = vadd.f32 0.0, %v3073
        %v3075 = vpop.f32.mrf.mxu0
        %3076 = vmatprep.mubr.bf16.mxu0 0
        %3077 = vmatmul.mubr.bf16.gmra.mxu0 %v1417
        %v3078 = vpop.f32.mrf.mxu0
        %v3079 = vadd.f32 0.0, %v3078
        %v3080 = vpop.f32.mrf.mxu0
        %v3081 = vpop.f32.mrf.mxu0
        %v3082 = vadd.f32 0.0, %v3081
        %v3083 = vpop.f32.mrf.mxu0
        %3084 = vmatprep.mubr.bf16.mxu0 0
        %3085 = vmatmul.mubr.bf16.gmra.mxu0 %v1420
        %v3086 = vpop.f32.mrf.mxu0
        %v3087 = vadd.f32 0.0, %v3086
        %v3088 = vpop.f32.mrf.mxu0
        %v3089 = vpop.f32.mrf.mxu0
        %v3090 = vadd.f32 0.0, %v3089
        %v3091 = vpop.f32.mrf.mxu0
        %3092 = vmatprep.mubr.bf16.mxu0 0
        %3093 = vmatmul.mubr.bf16.gmra.mxu0 %v1423
        %v3094 = vpop.f32.mrf.mxu0
        %v3095 = vadd.f32 0.0, %v3094
        %v3096 = vpop.f32.mrf.mxu0
        %v3097 = vpop.f32.mrf.mxu0
        %v3098 = vadd.f32 0.0, %v3097
        %v3099 = vpop.f32.mrf.mxu0
        %3100 = vmatprep.mubr.bf16.mxu0 0
        %3101 = vmatmul.mubr.bf16.gmra.mxu0 %v1426
        %v3102 = vpop.f32.mrf.mxu0
        %v3103 = vadd.f32 0.0, %v3102
        %v3104 = vpop.f32.mrf.mxu0
        %v3105 = vpop.f32.mrf.mxu0
        %v3106 = vadd.f32 0.0, %v3105
        %v3107 = vpop.f32.mrf.mxu0
        %3108 = vmatprep.mubr.bf16.mxu0 0
        %3109 = vmatmul.mubr.bf16.gmra.mxu0 %v1429
        %v3110 = vpop.f32.mrf.mxu0
        %v3111 = vadd.f32 0.0, %v3110
        %v3112 = vpop.f32.mrf.mxu0
        %v3113 = vpop.f32.mrf.mxu0
        %v3114 = vadd.f32 0.0, %v3113
        %v3115 = vpop.f32.mrf.mxu0
        %3116 = vmatprep.mubr.bf16.mxu0 0
        %3117 = vmatmul.mubr.bf16.gmra.mxu0 %v1432
        %v3118 = vpop.f32.mrf.mxu0
        %v3119 = vadd.f32 0.0, %v3118
        %v3120 = vpop.f32.mrf.mxu0
        %v3121 = vpop.f32.mrf.mxu0
        %v3122 = vadd.f32 0.0, %v3121
        %v3123 = vpop.f32.mrf.mxu0
        %3124 = vmatprep.mubr.bf16.mxu0 0
        %3125 = vmatmul.mubr.bf16.gmra.mxu0 %v1435
        %v3126 = vpop.f32.mrf.mxu0
        %v3127 = vadd.f32 0.0, %v3126
        %v3128 = vpop.f32.mrf.mxu0
        %v3129 = vpop.f32.mrf.mxu0
        %v3130 = vadd.f32 0.0, %v3129
        %v3131 = vpop.f32.mrf.mxu0
        %3132 = vmatprep.mubr.bf16.mxu0 0
        %3133 = vmatmul.mubr.bf16.gmra.mxu0 %v1438
        %v3134 = vpop.f32.mrf.mxu0
        %v3135 = vadd.f32 0.0, %v3134
        %v3136 = vpop.f32.mrf.mxu0
        %v3137 = vpop.f32.mrf.mxu0
        %v3138 = vadd.f32 0.0, %v3137
        %v3139 = vpop.f32.mrf.mxu0
        %3140 = vmatprep.mubr.bf16.mxu0 0
        %3141 = vmatmul.mubr.bf16.gmra.mxu0 %v1441
        %v3142 = vpop.f32.mrf.mxu0
        %v3143 = vadd.f32 0.0, %v3142
        %v3144 = vpop.f32.mrf.mxu0
        %v3145 = vpop.f32.mrf.mxu0
        %v3146 = vadd.f32 0.0, %v3145
        %v3147 = vpop.f32.mrf.mxu0
        %3148 = vmatprep.mubr.bf16.mxu0 0
        %3149 = vmatmul.mubr.bf16.gmra.mxu0 %v1444
        %v3150 = vpop.f32.mrf.mxu0
        %v3151 = vadd.f32 0.0, %v3150
        %v3152 = vpop.f32.mrf.mxu0
        %v3153 = vpop.f32.mrf.mxu0
        %v3154 = vadd.f32 0.0, %v3153
        %v3155 = vpop.f32.mrf.mxu0
        %3156 = vmatprep.mubr.bf16.mxu0 0
        %3157 = vmatmul.mubr.bf16.gmra.mxu0 %v2996
        %v3158 = vpop.f32.mrf.mxu0
        %v3159 = vadd.f32 0.0, %v3158
        %v3160 = vpop.f32.mrf.mxu0
        %v3161 = vpop.f32.mrf.mxu0
        %v3162 = vadd.f32 0.0, %v3161
        %v3163 = vpop.f32.mrf.mxu0
        %3164 = vmatprep.mubr.bf16.mxu0 0
        %3165 = vmatmul.mubr.bf16.gmra.mxu0 %v1450
        %v3166 = vpop.f32.mrf.mxu0
        %v3167 = vadd.f32 0.0, %v3166
        %v3168 = vpop.f32.mrf.mxu0
        %v3169 = vpop.f32.mrf.mxu0
        %v3170 = vadd.f32 0.0, %v3169
        %v3171 = vpop.f32.mrf.mxu0
        %3172 = vmatprep.mubr.bf16.mxu0 0
        %3173 = vmatmul.mubr.bf16.gmra.mxu0 %v1453
        %v3174 = vpop.f32.mrf.mxu0
        %v3175 = vadd.f32 0.0, %v3174
        %v3176 = vpop.f32.mrf.mxu0
        %v3177 = vpop.f32.mrf.mxu0
        %v3178 = vadd.f32 0.0, %v3177
        %v3179 = vpop.f32.mrf.mxu0
        %3180 = vmatprep.mubr.bf16.mxu0 0
        %3181 = vmatmul.mubr.bf16.gmra.mxu0 %v1456
        %v3182 = vpop.f32.mrf.mxu0
        %v3183 = vadd.f32 0.0, %v3182
        %v3184 = vpop.f32.mrf.mxu0
        %v3185 = vpop.f32.mrf.mxu0
        %v3186 = vadd.f32 0.0, %v3185
        %v3187 = vpop.f32.mrf.mxu0
        %3188 = vmatprep.mubr.bf16.mxu0 0
        %3189 = vmatmul.mubr.bf16.gmra.mxu0 %v1459
        %v3190 = vpop.f32.mrf.mxu0
        %v3191 = vadd.f32 0.0, %v3190
        %v3192 = vpop.f32.mrf.mxu0
        %v3193 = vpop.f32.mrf.mxu0
        %v3194 = vadd.f32 0.0, %v3193
        %v3195 = vpop.f32.mrf.mxu0
        %3196 = vmatprep.mubr.bf16.mxu0 0
        %3197 = vmatmul.mubr.bf16.gmra.mxu0 %v1462
        %v3198 = vpop.f32.mrf.mxu0
        %v3199 = vadd.f32 0.0, %v3198
        %v3200 = vpop.f32.mrf.mxu0
        %v3201 = vpop.f32.mrf.mxu0
        %v3202 = vadd.f32 0.0, %v3201
        %v3203 = vpop.f32.mrf.mxu0
        %3204 = vmatprep.mubr.bf16.mxu0 0
        %3205 = vmatmul.mubr.bf16.gmra.mxu0 %v1465
        %v3206 = vpop.f32.mrf.mxu0
        %v3207 = vadd.f32 0.0, %v3206
        %v3208 = vpop.f32.mrf.mxu0
        %v3209 = vpop.f32.mrf.mxu0
        %v3210 = vadd.f32 0.0, %v3209
        %v3211 = vpop.f32.mrf.mxu0
        %3212 = vmatprep.mubr.bf16.mxu0 0
        %3213 = vmatmul.mubr.bf16.gmra.mxu0 %v1468
        %v3214 = vpop.f32.mrf.mxu0
        %v3215 = vadd.f32 0.0, %v3214
        %v3216 = vpop.f32.mrf.mxu0
        %v3217 = vpop.f32.mrf.mxu0
        %v3218 = vadd.f32 0.0, %v3217
        %v3219 = vpop.f32.mrf.mxu0
        %3220 = vmatprep.mubr.bf16.mxu0 0
        %3221 = vmatmul.mubr.bf16.gmra.mxu0 %v1471
        %v3222 = vpop.f32.mrf.mxu0
        %v3223 = vadd.f32 0.0, %v3222
        %v3224 = vpop.f32.mrf.mxu0
        %v3225 = vpop.f32.mrf.mxu0
        %v3226 = vadd.f32 0.0, %v3225
        %v3227 = vpop.f32.mrf.mxu0
        %3228 = vmatprep.mubr.bf16.mxu0 0
        %3229 = vmatmul.mubr.bf16.gmra.mxu0 %v1474
        %v3230 = vpop.f32.mrf.mxu0
        %v3231 = vadd.f32 0.0, %v3230
        %v3232 = vpop.f32.mrf.mxu0
        %v3233 = vpop.f32.mrf.mxu0
        %v3234 = vadd.f32 0.0, %v3233
        %v3235 = vpop.f32.mrf.mxu0
        %3236 = vmatprep.mubr.bf16.mxu0 0
        %3237 = vmatmul.mubr.bf16.gmra.mxu0 %v1477
        %v3238 = vpop.f32.mrf.mxu0
        %v3239 = vadd.f32 0.0, %v3238
        %v3240 = vpop.f32.mrf.mxu0
        %v3241 = vpop.f32.mrf.mxu0
        %v3242 = vadd.f32 0.0, %v3241
        %v3243 = vpop.f32.mrf.mxu0
        %3244 = vmatprep.mubr.bf16.mxu0 0
        %3245 = vmatmul.mubr.bf16.gmra.mxu0 %v1480
        %v3246 = vpop.f32.mrf.mxu0
        %v3247 = vadd.f32 0.0, %v3246
        %v3248 = vpop.f32.mrf.mxu0
        %v3249 = vpop.f32.mrf.mxu0
        %v3250 = vadd.f32 0.0, %v3249
        %v3251 = vpop.f32.mrf.mxu0
        %3252 = vmatprep.mubr.bf16.mxu0 0
        %3253 = vmatmul.mubr.bf16.gmra.mxu0 %v1483
        %v3254 = vpop.f32.mrf.mxu0
        %v3255 = vadd.f32 0.0, %v3254
        %v3256 = vpop.f32.mrf.mxu0
        %v3257 = vpop.f32.mrf.mxu0
        %v3258 = vadd.f32 0.0, %v3257
        %v3259 = vpop.f32.mrf.mxu0
        %3260 = vmatprep.mubr.bf16.mxu0 0
        %3261 = vmatmul.mubr.bf16.gmra.mxu0 %v1486
        %v3262 = vpop.f32.mrf.mxu0
        %v3263 = vadd.f32 0.0, %v3262
        %v3264 = vpop.f32.mrf.mxu0
        %v3265 = vpop.f32.mrf.mxu0
        %v3266 = vadd.f32 0.0, %v3265
        %v3267 = vpop.f32.mrf.mxu0
        %3268 = vmatprep.mubr.bf16.mxu0 0
        %3269 = vmatmul.mubr.bf16.gmra.mxu0 %v1489
        %v3270 = vpop.f32.mrf.mxu0
        %v3271 = vadd.f32 0.0, %v3270
        %v3272 = vpop.f32.mrf.mxu0
        %v3273 = vpop.f32.mrf.mxu0
        %v3274 = vadd.f32 0.0, %v3273
        %v3275 = vpop.f32.mrf.mxu0
        %3276 = vmatprep.mubr.bf16.mxu0 0
        %3277 = vmatmul.mubr.bf16.gmra.mxu0 %v1492
        %v3278 = vpop.f32.mrf.mxu0
        %v3279 = vadd.f32 0.0, %v3278
        %v3280 = vpop.f32.mrf.mxu0
        %v3281 = vpop.f32.mrf.mxu0
        %v3282 = vadd.f32 0.0, %v3281
        %v3283 = vpop.f32.mrf.mxu0
        %3284 = vmatprep.mubr.bf16.mxu0 0
        %3285 = vmatmul.mubr.bf16.gmra.mxu0 %v2999
        %v3286 = vpop.f32.mrf.mxu0
        %v3287 = vadd.f32 0.0, %v3286
        %v3288 = vpop.f32.mrf.mxu0
        %v3289 = vpop.f32.mrf.mxu0
        %v3290 = vadd.f32 0.0, %v3289
        %v3291 = vpop.f32.mrf.mxu0
        %3292 = vdwg.mxu0
        %v3293 = vadd.f32 %v2929, %v3039
        %v3294 = vadd.f32 %v2930, %v3042
        %v3295 = vadd.f32 %v2931, %v3047
        %v3296 = vadd.f32 %v2932, %v3050
        %v3297 = vadd.f32 %v2933, %v3055
        %v3298 = vadd.f32 %v2934, %v3058
        %v3299 = vadd.f32 %v2935, %v3063
        %v3300 = vadd.f32 %v2936, %v3066
        %v3301 = vadd.f32 %v2937, %v3071
        %v3302 = vadd.f32 %v2938, %v3074
        %v3303 = vadd.f32 %v2939, %v3079
        %v3304 = vadd.f32 %v2940, %v3082
        %v3305 = vadd.f32 %v2941, %v3087
        %v3306 = vadd.f32 %v2942, %v3090
        %v3307 = vadd.f32 %v2943, %v3095
        %v3308 = vadd.f32 %v2944, %v3098
        %v3309 = vadd.f32 %v2945, %v3103
        %v3310 = vadd.f32 %v2946, %v3106
        %v3311 = vadd.f32 %v2947, %v3111
        %v3312 = vadd.f32 %v2948, %v3114
        %v3313 = vadd.f32 %v2949, %v3119
        %v3314 = vadd.f32 %v2950, %v3122
        %v3315 = vadd.f32 %v2951, %v3127
        %v3316 = vadd.f32 %v2952, %v3130
        %v3317 = vadd.f32 %v2953, %v3135
        %v3318 = vadd.f32 %v2954, %v3138
        %v3319 = vadd.f32 %v2955, %v3143
        %v3320 = vadd.f32 %v2956, %v3146
        %v3321 = vadd.f32 %v2957, %v3151
        %v3322 = vadd.f32 %v2958, %v3154
        %v3323 = vadd.f32 %v2959, %v3159
        %v3324 = vadd.f32 %v2960, %v3162
        %v3325 = vadd.f32 %v2961, %v3167
        %v3326 = vadd.f32 %v2962, %v3170
        %v3327 = vadd.f32 %v2963, %v3175
        %v3328 = vadd.f32 %v2964, %v3178
        %v3329 = vadd.f32 %v2965, %v3183
        %v3330 = vadd.f32 %v2966, %v3186
        %v3331 = vadd.f32 %v2967, %v3191
        %v3332 = vadd.f32 %v2968, %v3194
        %v3333 = vadd.f32 %v2969, %v3199
        %v3334 = vadd.f32 %v2970, %v3202
        %v3335 = vadd.f32 %v2971, %v3207
        %v3336 = vadd.f32 %v2972, %v3210
        %v3337 = vadd.f32 %v2973, %v3215
        %v3338 = vadd.f32 %v2974, %v3218
        %v3339 = vadd.f32 %v2975, %v3223
        %v3340 = vadd.f32 %v2976, %v3226
        %v3341 = vadd.f32 %v2977, %v3231
        %v3342 = vadd.f32 %v2978, %v3234
        %v3343 = vadd.f32 %v2979, %v3239
        %v3344 = vadd.f32 %v2980, %v3242
        %v3345 = vadd.f32 %v2981, %v3247
        %v3346 = vadd.f32 %v2982, %v3250
        %v3347 = vadd.f32 %v2983, %v3255
        %v3348 = vadd.f32 %v2984, %v3258
        %v3349 = vadd.f32 %v2985, %v3263
        %v3350 = vadd.f32 %v2986, %v3266
        %v3351 = vadd.f32 %v2987, %v3271
        %v3352 = vadd.f32 %v2988, %v3274
        %v3353 = vadd.f32 %v2989, %v3279
        %v3354 = vadd.f32 %v2990, %v3282
        %v3355 = vadd.f32 %v2991, %v3287
        %v3356 = vadd.f32 %v2992, %v3290
        %s3357 = scalar_lea.vmem %s1, 10
        %v3358 = vld [vmem:[%s3357] sm:$0x3]
        %v3360 = vsel %vm284, %v1353, 0
        %v3363 = vsel %vm284, %v1354, 0
        %v3366 = vsel %vm1494, %v3358, 0
        %3368 = vmatprep.subr.bf16.mxu0 0
        %3369 = vmatpush1.bf16.msra.mxu0 0
        %3370 = vmatprep.subr.bf16.mxu0 0
        %3371 = vmatpush1.bf16.msra.mxu0 0
        %3372 = vmatprep.subr.bf16.mxu0 0
        %3373 = vmatpush1.bf16.msra.mxu0 0
        %3374 = vmatprep.subr.bf16.mxu0 0
        %3375 = vmatpush1.bf16.msra.mxu0 0
        %3376 = vmatprep.subr.bf16.mxu0 0
        %3377 = vmatpush1.bf16.msra.mxu0 0
        %3378 = vmatprep.subr.bf16.mxu0 0
        %3379 = vmatpush1.bf16.msra.mxu0 0
        %3380 = vmatprep.subr.bf16.mxu0 0
        %3381 = vmatpush1.bf16.msra.mxu0 0
        %3382 = vmatprep.subr.bf16.mxu0 0
        %3383 = vmatpush1.bf16.msra.mxu0 %v3366
        %3384 = vmatprep.subr.bf16.mxu0 0
        %3385 = vmatpush2.bf16.msra.mxu0 0
        %3386 = vmatprep.subr.bf16.mxu0 0
        %3387 = vmatpush2.bf16.msra.mxu0 0
        %3388 = vmatprep.subr.bf16.mxu0 0
        %3389 = vmatpush2.bf16.msra.mxu0 0
        %3390 = vmatprep.subr.bf16.mxu0 0
        %3391 = vmatpush2.bf16.msra.mxu0 0
        %3392 = vmatprep.subr.bf16.mxu0 0
        %3393 = vmatpush2.bf16.msra.mxu0 0
        %3394 = vmatprep.subr.bf16.mxu0 0
        %3395 = vmatpush2.bf16.msra.mxu0 0
        %3396 = vmatprep.subr.bf16.mxu0 0
        %3397 = vmatpush2.bf16.msra.mxu0 0
        %3398 = vmatprep.subr.bf16.mxu0 0
        %3399 = vmatpush2.bf16.msra.mxu0 0
        %3400 = vmatprep.mubr.bf16.mxu0 0
        %3401 = vmatmul.mubr.bf16.gmra.mxu0 %v2181
        %v3402 = vpop.f32.mrf.mxu0
        %v3403 = vadd.f32 0.0, %v3402
        %v3404 = vpop.f32.mrf.mxu0
        %v3405 = vpop.f32.mrf.mxu0
        %v3406 = vadd.f32 0.0, %v3405
        %v3407 = vpop.f32.mrf.mxu0
        %3408 = vmatprep.mubr.bf16.mxu0 0
        %3409 = vmatmul.mubr.bf16.gmra.mxu0 %v2184
        %v3410 = vpop.f32.mrf.mxu0
        %v3411 = vadd.f32 0.0, %v3410
        %v3412 = vpop.f32.mrf.mxu0
        %v3413 = vpop.f32.mrf.mxu0
        %v3414 = vadd.f32 0.0, %v3413
        %v3415 = vpop.f32.mrf.mxu0
        %3416 = vmatprep.mubr.bf16.mxu0 0
        %3417 = vmatmul.mubr.bf16.gmra.mxu0 %v2187
        %v3418 = vpop.f32.mrf.mxu0
        %v3419 = vadd.f32 0.0, %v3418
        %v3420 = vpop.f32.mrf.mxu0
        %v3421 = vpop.f32.mrf.mxu0
        %v3422 = vadd.f32 0.0, %v3421
        %v3423 = vpop.f32.mrf.mxu0
        %3424 = vmatprep.mubr.bf16.mxu0 0
        %3425 = vmatmul.mubr.bf16.gmra.mxu0 %v2190
        %v3426 = vpop.f32.mrf.mxu0
        %v3427 = vadd.f32 0.0, %v3426
        %v3428 = vpop.f32.mrf.mxu0
        %v3429 = vpop.f32.mrf.mxu0
        %v3430 = vadd.f32 0.0, %v3429
        %v3431 = vpop.f32.mrf.mxu0
        %3432 = vmatprep.mubr.bf16.mxu0 0
        %3433 = vmatmul.mubr.bf16.gmra.mxu0 %v2193
        %v3434 = vpop.f32.mrf.mxu0
        %v3435 = vadd.f32 0.0, %v3434
        %v3436 = vpop.f32.mrf.mxu0
        %v3437 = vpop.f32.mrf.mxu0
        %v3438 = vadd.f32 0.0, %v3437
        %v3439 = vpop.f32.mrf.mxu0
        %3440 = vmatprep.mubr.bf16.mxu0 0
        %3441 = vmatmul.mubr.bf16.gmra.mxu0 %v2196
        %v3442 = vpop.f32.mrf.mxu0
        %v3443 = vadd.f32 0.0, %v3442
        %v3444 = vpop.f32.mrf.mxu0
        %v3445 = vpop.f32.mrf.mxu0
        %v3446 = vadd.f32 0.0, %v3445
        %v3447 = vpop.f32.mrf.mxu0
        %3448 = vmatprep.mubr.bf16.mxu0 0
        %3449 = vmatmul.mubr.bf16.gmra.mxu0 %v2199
        %v3450 = vpop.f32.mrf.mxu0
        %v3451 = vadd.f32 0.0, %v3450
        %v3452 = vpop.f32.mrf.mxu0
        %v3453 = vpop.f32.mrf.mxu0
        %v3454 = vadd.f32 0.0, %v3453
        %v3455 = vpop.f32.mrf.mxu0
        %3456 = vmatprep.mubr.bf16.mxu0 0
        %3457 = vmatmul.mubr.bf16.gmra.mxu0 %v2202
        %v3458 = vpop.f32.mrf.mxu0
        %v3459 = vadd.f32 0.0, %v3458
        %v3460 = vpop.f32.mrf.mxu0
        %v3461 = vpop.f32.mrf.mxu0
        %v3462 = vadd.f32 0.0, %v3461
        %v3463 = vpop.f32.mrf.mxu0
        %3464 = vmatprep.mubr.bf16.mxu0 0
        %3465 = vmatmul.mubr.bf16.gmra.mxu0 %v2205
        %v3466 = vpop.f32.mrf.mxu0
        %v3467 = vadd.f32 0.0, %v3466
        %v3468 = vpop.f32.mrf.mxu0
        %v3469 = vpop.f32.mrf.mxu0
        %v3470 = vadd.f32 0.0, %v3469
        %v3471 = vpop.f32.mrf.mxu0
        %3472 = vmatprep.mubr.bf16.mxu0 0
        %3473 = vmatmul.mubr.bf16.gmra.mxu0 %v2208
        %v3474 = vpop.f32.mrf.mxu0
        %v3475 = vadd.f32 0.0, %v3474
        %v3476 = vpop.f32.mrf.mxu0
        %v3477 = vpop.f32.mrf.mxu0
        %v3478 = vadd.f32 0.0, %v3477
        %v3479 = vpop.f32.mrf.mxu0
        %3480 = vmatprep.mubr.bf16.mxu0 0
        %3481 = vmatmul.mubr.bf16.gmra.mxu0 %v2211
        %v3482 = vpop.f32.mrf.mxu0
        %v3483 = vadd.f32 0.0, %v3482
        %v3484 = vpop.f32.mrf.mxu0
        %v3485 = vpop.f32.mrf.mxu0
        %v3486 = vadd.f32 0.0, %v3485
        %v3487 = vpop.f32.mrf.mxu0
        %3488 = vmatprep.mubr.bf16.mxu0 0
        %3489 = vmatmul.mubr.bf16.gmra.mxu0 %v2214
        %v3490 = vpop.f32.mrf.mxu0
        %v3491 = vadd.f32 0.0, %v3490
        %v3492 = vpop.f32.mrf.mxu0
        %v3493 = vpop.f32.mrf.mxu0
        %v3494 = vadd.f32 0.0, %v3493
        %v3495 = vpop.f32.mrf.mxu0
        %3496 = vmatprep.mubr.bf16.mxu0 0
        %3497 = vmatmul.mubr.bf16.gmra.mxu0 %v2217
        %v3498 = vpop.f32.mrf.mxu0
        %v3499 = vadd.f32 0.0, %v3498
        %v3500 = vpop.f32.mrf.mxu0
        %v3501 = vpop.f32.mrf.mxu0
        %v3502 = vadd.f32 0.0, %v3501
        %v3503 = vpop.f32.mrf.mxu0
        %3504 = vmatprep.mubr.bf16.mxu0 0
        %3505 = vmatmul.mubr.bf16.gmra.mxu0 %v2220
        %v3506 = vpop.f32.mrf.mxu0
        %v3507 = vadd.f32 0.0, %v3506
        %v3508 = vpop.f32.mrf.mxu0
        %v3509 = vpop.f32.mrf.mxu0
        %v3510 = vadd.f32 0.0, %v3509
        %v3511 = vpop.f32.mrf.mxu0
        %3512 = vmatprep.mubr.bf16.mxu0 0
        %3513 = vmatmul.mubr.bf16.gmra.mxu0 %v2223
        %v3514 = vpop.f32.mrf.mxu0
        %v3515 = vadd.f32 0.0, %v3514
        %v3516 = vpop.f32.mrf.mxu0
        %v3517 = vpop.f32.mrf.mxu0
        %v3518 = vadd.f32 0.0, %v3517
        %v3519 = vpop.f32.mrf.mxu0
        %3520 = vmatprep.mubr.bf16.mxu0 0
        %3521 = vmatmul.mubr.bf16.gmra.mxu0 %v3360
        %v3522 = vpop.f32.mrf.mxu0
        %v3523 = vadd.f32 0.0, %v3522
        %v3524 = vpop.f32.mrf.mxu0
        %v3525 = vpop.f32.mrf.mxu0
        %v3526 = vadd.f32 0.0, %v3525
        %v3527 = vpop.f32.mrf.mxu0
        %3528 = vmatprep.mubr.bf16.mxu0 0
        %3529 = vmatmul.mubr.bf16.gmra.mxu0 %v2229
        %v3530 = vpop.f32.mrf.mxu0
        %v3531 = vadd.f32 0.0, %v3530
        %v3532 = vpop.f32.mrf.mxu0
        %v3533 = vpop.f32.mrf.mxu0
        %v3534 = vadd.f32 0.0, %v3533
        %v3535 = vpop.f32.mrf.mxu0
        %3536 = vmatprep.mubr.bf16.mxu0 0
        %3537 = vmatmul.mubr.bf16.gmra.mxu0 %v2232
        %v3538 = vpop.f32.mrf.mxu0
        %v3539 = vadd.f32 0.0, %v3538
        %v3540 = vpop.f32.mrf.mxu0
        %v3541 = vpop.f32.mrf.mxu0
        %v3542 = vadd.f32 0.0, %v3541
        %v3543 = vpop.f32.mrf.mxu0
        %3544 = vmatprep.mubr.bf16.mxu0 0
        %3545 = vmatmul.mubr.bf16.gmra.mxu0 %v2235
        %v3546 = vpop.f32.mrf.mxu0
        %v3547 = vadd.f32 0.0, %v3546
        %v3548 = vpop.f32.mrf.mxu0
        %v3549 = vpop.f32.mrf.mxu0
        %v3550 = vadd.f32 0.0, %v3549
        %v3551 = vpop.f32.mrf.mxu0
        %3552 = vmatprep.mubr.bf16.mxu0 0
        %3553 = vmatmul.mubr.bf16.gmra.mxu0 %v2238
        %v3554 = vpop.f32.mrf.mxu0
        %v3555 = vadd.f32 0.0, %v3554
        %v3556 = vpop.f32.mrf.mxu0
        %v3557 = vpop.f32.mrf.mxu0
        %v3558 = vadd.f32 0.0, %v3557
        %v3559 = vpop.f32.mrf.mxu0
        %3560 = vmatprep.mubr.bf16.mxu0 0
        %3561 = vmatmul.mubr.bf16.gmra.mxu0 %v2241
        %v3562 = vpop.f32.mrf.mxu0
        %v3563 = vadd.f32 0.0, %v3562
        %v3564 = vpop.f32.mrf.mxu0
        %v3565 = vpop.f32.mrf.mxu0
        %v3566 = vadd.f32 0.0, %v3565
        %v3567 = vpop.f32.mrf.mxu0
        %3568 = vmatprep.mubr.bf16.mxu0 0
        %3569 = vmatmul.mubr.bf16.gmra.mxu0 %v2244
        %v3570 = vpop.f32.mrf.mxu0
        %v3571 = vadd.f32 0.0, %v3570
        %v3572 = vpop.f32.mrf.mxu0
        %v3573 = vpop.f32.mrf.mxu0
        %v3574 = vadd.f32 0.0, %v3573
        %v3575 = vpop.f32.mrf.mxu0
        %3576 = vmatprep.mubr.bf16.mxu0 0
        %3577 = vmatmul.mubr.bf16.gmra.mxu0 %v2247
        %v3578 = vpop.f32.mrf.mxu0
        %v3579 = vadd.f32 0.0, %v3578
        %v3580 = vpop.f32.mrf.mxu0
        %v3581 = vpop.f32.mrf.mxu0
        %v3582 = vadd.f32 0.0, %v3581
        %v3583 = vpop.f32.mrf.mxu0
        %3584 = vmatprep.mubr.bf16.mxu0 0
        %3585 = vmatmul.mubr.bf16.gmra.mxu0 %v2250
        %v3586 = vpop.f32.mrf.mxu0
        %v3587 = vadd.f32 0.0, %v3586
        %v3588 = vpop.f32.mrf.mxu0
        %v3589 = vpop.f32.mrf.mxu0
        %v3590 = vadd.f32 0.0, %v3589
        %v3591 = vpop.f32.mrf.mxu0
        %3592 = vmatprep.mubr.bf16.mxu0 0
        %3593 = vmatmul.mubr.bf16.gmra.mxu0 %v2253
        %v3594 = vpop.f32.mrf.mxu0
        %v3595 = vadd.f32 0.0, %v3594
        %v3596 = vpop.f32.mrf.mxu0
        %v3597 = vpop.f32.mrf.mxu0
        %v3598 = vadd.f32 0.0, %v3597
        %v3599 = vpop.f32.mrf.mxu0
        %3600 = vmatprep.mubr.bf16.mxu0 0
        %3601 = vmatmul.mubr.bf16.gmra.mxu0 %v2256
        %v3602 = vpop.f32.mrf.mxu0
        %v3603 = vadd.f32 0.0, %v3602
        %v3604 = vpop.f32.mrf.mxu0
        %v3605 = vpop.f32.mrf.mxu0
        %v3606 = vadd.f32 0.0, %v3605
        %v3607 = vpop.f32.mrf.mxu0
        %3608 = vmatprep.mubr.bf16.mxu0 0
        %3609 = vmatmul.mubr.bf16.gmra.mxu0 %v2259
        %v3610 = vpop.f32.mrf.mxu0
        %v3611 = vadd.f32 0.0, %v3610
        %v3612 = vpop.f32.mrf.mxu0
        %v3613 = vpop.f32.mrf.mxu0
        %v3614 = vadd.f32 0.0, %v3613
        %v3615 = vpop.f32.mrf.mxu0
        %3616 = vmatprep.mubr.bf16.mxu0 0
        %3617 = vmatmul.mubr.bf16.gmra.mxu0 %v2262
        %v3618 = vpop.f32.mrf.mxu0
        %v3619 = vadd.f32 0.0, %v3618
        %v3620 = vpop.f32.mrf.mxu0
        %v3621 = vpop.f32.mrf.mxu0
        %v3622 = vadd.f32 0.0, %v3621
        %v3623 = vpop.f32.mrf.mxu0
        %3624 = vmatprep.mubr.bf16.mxu0 0
        %3625 = vmatmul.mubr.bf16.gmra.mxu0 %v2265
        %v3626 = vpop.f32.mrf.mxu0
        %v3627 = vadd.f32 0.0, %v3626
        %v3628 = vpop.f32.mrf.mxu0
        %v3629 = vpop.f32.mrf.mxu0
        %v3630 = vadd.f32 0.0, %v3629
        %v3631 = vpop.f32.mrf.mxu0
        %3632 = vmatprep.mubr.bf16.mxu0 0
        %3633 = vmatmul.mubr.bf16.gmra.mxu0 %v2268
        %v3634 = vpop.f32.mrf.mxu0
        %v3635 = vadd.f32 0.0, %v3634
        %v3636 = vpop.f32.mrf.mxu0
        %v3637 = vpop.f32.mrf.mxu0
        %v3638 = vadd.f32 0.0, %v3637
        %v3639 = vpop.f32.mrf.mxu0
        %3640 = vmatprep.mubr.bf16.mxu0 0
        %3641 = vmatmul.mubr.bf16.gmra.mxu0 %v2271
        %v3642 = vpop.f32.mrf.mxu0
        %v3643 = vadd.f32 0.0, %v3642
        %v3644 = vpop.f32.mrf.mxu0
        %v3645 = vpop.f32.mrf.mxu0
        %v3646 = vadd.f32 0.0, %v3645
        %v3647 = vpop.f32.mrf.mxu0
        %3648 = vmatprep.mubr.bf16.mxu0 0
        %3649 = vmatmul.mubr.bf16.gmra.mxu0 %v3363
        %v3650 = vpop.f32.mrf.mxu0
        %v3651 = vadd.f32 0.0, %v3650
        %v3652 = vpop.f32.mrf.mxu0
        %v3653 = vpop.f32.mrf.mxu0
        %v3654 = vadd.f32 0.0, %v3653
        %v3655 = vpop.f32.mrf.mxu0
        %3656 = vdwg.mxu0
        %v3657 = vadd.f32 %v3293, %v3403
        %v3658 = vadd.f32 %v3294, %v3406
        %v3659 = vadd.f32 %v3295, %v3411
        %v3660 = vadd.f32 %v3296, %v3414
        %v3661 = vadd.f32 %v3297, %v3419
        %v3662 = vadd.f32 %v3298, %v3422
        %v3663 = vadd.f32 %v3299, %v3427
        %v3664 = vadd.f32 %v3300, %v3430
        %v3665 = vadd.f32 %v3301, %v3435
        %v3666 = vadd.f32 %v3302, %v3438
        %v3667 = vadd.f32 %v3303, %v3443
        %v3668 = vadd.f32 %v3304, %v3446
        %v3669 = vadd.f32 %v3305, %v3451
        %v3670 = vadd.f32 %v3306, %v3454
        %v3671 = vadd.f32 %v3307, %v3459
        %v3672 = vadd.f32 %v3308, %v3462
        %v3673 = vadd.f32 %v3309, %v3467
        %v3674 = vadd.f32 %v3310, %v3470
        %v3675 = vadd.f32 %v3311, %v3475
        %v3676 = vadd.f32 %v3312, %v3478
        %v3677 = vadd.f32 %v3313, %v3483
        %v3678 = vadd.f32 %v3314, %v3486
        %v3679 = vadd.f32 %v3315, %v3491
        %v3680 = vadd.f32 %v3316, %v3494
        %v3681 = vadd.f32 %v3317, %v3499
        %v3682 = vadd.f32 %v3318, %v3502
        %v3683 = vadd.f32 %v3319, %v3507
        %v3684 = vadd.f32 %v3320, %v3510
        %v3685 = vadd.f32 %v3321, %v3515
        %v3686 = vadd.f32 %v3322, %v3518
        %v3687 = vadd.f32 %v3323, %v3523
        %v3688 = vadd.f32 %v3324, %v3526
        %v3689 = vadd.f32 %v3325, %v3531
        %v3690 = vadd.f32 %v3326, %v3534
        %v3691 = vadd.f32 %v3327, %v3539
        %v3692 = vadd.f32 %v3328, %v3542
        %v3693 = vadd.f32 %v3329, %v3547
        %v3694 = vadd.f32 %v3330, %v3550
        %v3695 = vadd.f32 %v3331, %v3555
        %v3696 = vadd.f32 %v3332, %v3558
        %v3697 = vadd.f32 %v3333, %v3563
        %v3698 = vadd.f32 %v3334, %v3566
        %v3699 = vadd.f32 %v3335, %v3571
        %v3700 = vadd.f32 %v3336, %v3574
        %v3701 = vadd.f32 %v3337, %v3579
        %v3702 = vadd.f32 %v3338, %v3582
        %v3703 = vadd.f32 %v3339, %v3587
        %v3704 = vadd.f32 %v3340, %v3590
        %v3705 = vadd.f32 %v3341, %v3595
        %v3706 = vadd.f32 %v3342, %v3598
        %v3707 = vadd.f32 %v3343, %v3603
        %v3708 = vadd.f32 %v3344, %v3606
        %v3709 = vadd.f32 %v3345, %v3611
        %v3710 = vadd.f32 %v3346, %v3614
        %v3711 = vadd.f32 %v3347, %v3619
        %v3712 = vadd.f32 %v3348, %v3622
        %v3713 = vadd.f32 %v3349, %v3627
        %v3714 = vadd.f32 %v3350, %v3630
        %v3715 = vadd.f32 %v3351, %v3635
        %v3716 = vadd.f32 %v3352, %v3638
        %v3717 = vadd.f32 %v3353, %v3643
        %v3718 = vadd.f32 %v3354, %v3646
        %v3719 = vadd.f32 %v3355, %v3651
        %v3720 = vadd.f32 %v3356, %v3654
        %s3721 = scalar_lea.vmem %s1, 12
        %v3722 = vld [vmem:[%s3721] sm:$0x3]
        %v3724 = vsel %vm284, %v1355, 0
        %v3727 = vsel %vm284, %v1356, 0
        %v3730 = vsel %vm1494, %v3722, 0
        %3732 = vmatprep.subr.bf16.mxu0 0
        %3733 = vmatpush1.bf16.msra.mxu0 0
        %3734 = vmatprep.subr.bf16.mxu0 0
        %3735 = vmatpush1.bf16.msra.mxu0 0
        %3736 = vmatprep.subr.bf16.mxu0 0
        %3737 = vmatpush1.bf16.msra.mxu0 0
        %3738 = vmatprep.subr.bf16.mxu0 0
        %3739 = vmatpush1.bf16.msra.mxu0 0
        %3740 = vmatprep.subr.bf16.mxu0 0
        %3741 = vmatpush1.bf16.msra.mxu0 0
        %3742 = vmatprep.subr.bf16.mxu0 0
        %3743 = vmatpush1.bf16.msra.mxu0 0
        %3744 = vmatprep.subr.bf16.mxu0 0
        %3745 = vmatpush1.bf16.msra.mxu0 0
        %3746 = vmatprep.subr.bf16.mxu0 0
        %3747 = vmatpush1.bf16.msra.mxu0 %v3730
        %3748 = vmatprep.subr.bf16.mxu0 0
        %3749 = vmatpush2.bf16.msra.mxu0 0
        %3750 = vmatprep.subr.bf16.mxu0 0
        %3751 = vmatpush2.bf16.msra.mxu0 0
        %3752 = vmatprep.subr.bf16.mxu0 0
        %3753 = vmatpush2.bf16.msra.mxu0 0
        %3754 = vmatprep.subr.bf16.mxu0 0
        %3755 = vmatpush2.bf16.msra.mxu0 0
        %3756 = vmatprep.subr.bf16.mxu0 0
        %3757 = vmatpush2.bf16.msra.mxu0 0
        %3758 = vmatprep.subr.bf16.mxu0 0
        %3759 = vmatpush2.bf16.msra.mxu0 0
        %3760 = vmatprep.subr.bf16.mxu0 0
        %3761 = vmatpush2.bf16.msra.mxu0 0
        %3762 = vmatprep.subr.bf16.mxu0 0
        %3763 = vmatpush2.bf16.msra.mxu0 0
        %3764 = vmatprep.mubr.bf16.mxu0 0
        %3765 = vmatmul.mubr.bf16.gmra.mxu0 %v1794
        %v3766 = vpop.f32.mrf.mxu0
        %v3767 = vadd.f32 0.0, %v3766
        %v3768 = vpop.f32.mrf.mxu0
        %v3769 = vpop.f32.mrf.mxu0
        %v3770 = vadd.f32 0.0, %v3769
        %v3771 = vpop.f32.mrf.mxu0
        %3772 = vmatprep.mubr.bf16.mxu0 0
        %3773 = vmatmul.mubr.bf16.gmra.mxu0 %v1797
        %v3774 = vpop.f32.mrf.mxu0
        %v3775 = vadd.f32 0.0, %v3774
        %v3776 = vpop.f32.mrf.mxu0
        %v3777 = vpop.f32.mrf.mxu0
        %v3778 = vadd.f32 0.0, %v3777
        %v3779 = vpop.f32.mrf.mxu0
        %3780 = vmatprep.mubr.bf16.mxu0 0
        %3781 = vmatmul.mubr.bf16.gmra.mxu0 %v1800
        %v3782 = vpop.f32.mrf.mxu0
        %v3783 = vadd.f32 0.0, %v3782
        %v3784 = vpop.f32.mrf.mxu0
        %v3785 = vpop.f32.mrf.mxu0
        %v3786 = vadd.f32 0.0, %v3785
        %v3787 = vpop.f32.mrf.mxu0
        %3788 = vmatprep.mubr.bf16.mxu0 0
        %3789 = vmatmul.mubr.bf16.gmra.mxu0 %v1803
        %v3790 = vpop.f32.mrf.mxu0
        %v3791 = vadd.f32 0.0, %v3790
        %v3792 = vpop.f32.mrf.mxu0
        %v3793 = vpop.f32.mrf.mxu0
        %v3794 = vadd.f32 0.0, %v3793
        %v3795 = vpop.f32.mrf.mxu0
        %3796 = vmatprep.mubr.bf16.mxu0 0
        %3797 = vmatmul.mubr.bf16.gmra.mxu0 %v1806
        %v3798 = vpop.f32.mrf.mxu0
        %v3799 = vadd.f32 0.0, %v3798
        %v3800 = vpop.f32.mrf.mxu0
        %v3801 = vpop.f32.mrf.mxu0
        %v3802 = vadd.f32 0.0, %v3801
        %v3803 = vpop.f32.mrf.mxu0
        %3804 = vmatprep.mubr.bf16.mxu0 0
        %3805 = vmatmul.mubr.bf16.gmra.mxu0 %v1809
        %v3806 = vpop.f32.mrf.mxu0
        %v3807 = vadd.f32 0.0, %v3806
        %v3808 = vpop.f32.mrf.mxu0
        %v3809 = vpop.f32.mrf.mxu0
        %v3810 = vadd.f32 0.0, %v3809
        %v3811 = vpop.f32.mrf.mxu0
        %3812 = vmatprep.mubr.bf16.mxu0 0
        %3813 = vmatmul.mubr.bf16.gmra.mxu0 %v1812
        %v3814 = vpop.f32.mrf.mxu0
        %v3815 = vadd.f32 0.0, %v3814
        %v3816 = vpop.f32.mrf.mxu0
        %v3817 = vpop.f32.mrf.mxu0
        %v3818 = vadd.f32 0.0, %v3817
        %v3819 = vpop.f32.mrf.mxu0
        %3820 = vmatprep.mubr.bf16.mxu0 0
        %3821 = vmatmul.mubr.bf16.gmra.mxu0 %v1815
        %v3822 = vpop.f32.mrf.mxu0
        %v3823 = vadd.f32 0.0, %v3822
        %v3824 = vpop.f32.mrf.mxu0
        %v3825 = vpop.f32.mrf.mxu0
        %v3826 = vadd.f32 0.0, %v3825
        %v3827 = vpop.f32.mrf.mxu0
        %3828 = vmatprep.mubr.bf16.mxu0 0
        %3829 = vmatmul.mubr.bf16.gmra.mxu0 %v1818
        %v3830 = vpop.f32.mrf.mxu0
        %v3831 = vadd.f32 0.0, %v3830
        %v3832 = vpop.f32.mrf.mxu0
        %v3833 = vpop.f32.mrf.mxu0
        %v3834 = vadd.f32 0.0, %v3833
        %v3835 = vpop.f32.mrf.mxu0
        %3836 = vmatprep.mubr.bf16.mxu0 0
        %3837 = vmatmul.mubr.bf16.gmra.mxu0 %v1821
        %v3838 = vpop.f32.mrf.mxu0
        %v3839 = vadd.f32 0.0, %v3838
        %v3840 = vpop.f32.mrf.mxu0
        %v3841 = vpop.f32.mrf.mxu0
        %v3842 = vadd.f32 0.0, %v3841
        %v3843 = vpop.f32.mrf.mxu0
        %3844 = vmatprep.mubr.bf16.mxu0 0
        %3845 = vmatmul.mubr.bf16.gmra.mxu0 %v1824
        %v3846 = vpop.f32.mrf.mxu0
        %v3847 = vadd.f32 0.0, %v3846
        %v3848 = vpop.f32.mrf.mxu0
        %v3849 = vpop.f32.mrf.mxu0
        %v3850 = vadd.f32 0.0, %v3849
        %v3851 = vpop.f32.mrf.mxu0
        %3852 = vmatprep.mubr.bf16.mxu0 0
        %3853 = vmatmul.mubr.bf16.gmra.mxu0 %v1827
        %v3854 = vpop.f32.mrf.mxu0
        %v3855 = vadd.f32 0.0, %v3854
        %v3856 = vpop.f32.mrf.mxu0
        %v3857 = vpop.f32.mrf.mxu0
        %v3858 = vadd.f32 0.0, %v3857
        %v3859 = vpop.f32.mrf.mxu0
        %3860 = vmatprep.mubr.bf16.mxu0 0
        %3861 = vmatmul.mubr.bf16.gmra.mxu0 %v1830
        %v3862 = vpop.f32.mrf.mxu0
        %v3863 = vadd.f32 0.0, %v3862
        %v3864 = vpop.f32.mrf.mxu0
        %v3865 = vpop.f32.mrf.mxu0
        %v3866 = vadd.f32 0.0, %v3865
        %v3867 = vpop.f32.mrf.mxu0
        %3868 = vmatprep.mubr.bf16.mxu0 0
        %3869 = vmatmul.mubr.bf16.gmra.mxu0 %v1833
        %v3870 = vpop.f32.mrf.mxu0
        %v3871 = vadd.f32 0.0, %v3870
        %v3872 = vpop.f32.mrf.mxu0
        %v3873 = vpop.f32.mrf.mxu0
        %v3874 = vadd.f32 0.0, %v3873
        %v3875 = vpop.f32.mrf.mxu0
        %3876 = vmatprep.mubr.bf16.mxu0 0
        %3877 = vmatmul.mubr.bf16.gmra.mxu0 %v2632
        %v3878 = vpop.f32.mrf.mxu0
        %v3879 = vadd.f32 0.0, %v3878
        %v3880 = vpop.f32.mrf.mxu0
        %v3881 = vpop.f32.mrf.mxu0
        %v3882 = vadd.f32 0.0, %v3881
        %v3883 = vpop.f32.mrf.mxu0
        %3884 = vmatprep.mubr.bf16.mxu0 0
        %3885 = vmatmul.mubr.bf16.gmra.mxu0 %v3724
        %v3886 = vpop.f32.mrf.mxu0
        %v3887 = vadd.f32 0.0, %v3886
        %v3888 = vpop.f32.mrf.mxu0
        %v3889 = vpop.f32.mrf.mxu0
        %v3890 = vadd.f32 0.0, %v3889
        %v3891 = vpop.f32.mrf.mxu0
        %3892 = vmatprep.mubr.bf16.mxu0 0
        %3893 = vmatmul.mubr.bf16.gmra.mxu0 %v1842
        %v3894 = vpop.f32.mrf.mxu0
        %v3895 = vadd.f32 0.0, %v3894
        %v3896 = vpop.f32.mrf.mxu0
        %v3897 = vpop.f32.mrf.mxu0
        %v3898 = vadd.f32 0.0, %v3897
        %v3899 = vpop.f32.mrf.mxu0
        %3900 = vmatprep.mubr.bf16.mxu0 0
        %3901 = vmatmul.mubr.bf16.gmra.mxu0 %v1845
        %v3902 = vpop.f32.mrf.mxu0
        %v3903 = vadd.f32 0.0, %v3902
        %v3904 = vpop.f32.mrf.mxu0
        %v3905 = vpop.f32.mrf.mxu0
        %v3906 = vadd.f32 0.0, %v3905
        %v3907 = vpop.f32.mrf.mxu0
        %3908 = vmatprep.mubr.bf16.mxu0 0
        %3909 = vmatmul.mubr.bf16.gmra.mxu0 %v1848
        %v3910 = vpop.f32.mrf.mxu0
        %v3911 = vadd.f32 0.0, %v3910
        %v3912 = vpop.f32.mrf.mxu0
        %v3913 = vpop.f32.mrf.mxu0
        %v3914 = vadd.f32 0.0, %v3913
        %v3915 = vpop.f32.mrf.mxu0
        %3916 = vmatprep.mubr.bf16.mxu0 0
        %3917 = vmatmul.mubr.bf16.gmra.mxu0 %v1851
        %v3918 = vpop.f32.mrf.mxu0
        %v3919 = vadd.f32 0.0, %v3918
        %v3920 = vpop.f32.mrf.mxu0
        %v3921 = vpop.f32.mrf.mxu0
        %v3922 = vadd.f32 0.0, %v3921
        %v3923 = vpop.f32.mrf.mxu0
        %3924 = vmatprep.mubr.bf16.mxu0 0
        %3925 = vmatmul.mubr.bf16.gmra.mxu0 %v1854
        %v3926 = vpop.f32.mrf.mxu0
        %v3927 = vadd.f32 0.0, %v3926
        %v3928 = vpop.f32.mrf.mxu0
        %v3929 = vpop.f32.mrf.mxu0
        %v3930 = vadd.f32 0.0, %v3929
        %v3931 = vpop.f32.mrf.mxu0
        %3932 = vmatprep.mubr.bf16.mxu0 0
        %3933 = vmatmul.mubr.bf16.gmra.mxu0 %v1857
        %v3934 = vpop.f32.mrf.mxu0
        %v3935 = vadd.f32 0.0, %v3934
        %v3936 = vpop.f32.mrf.mxu0
        %v3937 = vpop.f32.mrf.mxu0
        %v3938 = vadd.f32 0.0, %v3937
        %v3939 = vpop.f32.mrf.mxu0
        %3940 = vmatprep.mubr.bf16.mxu0 0
        %3941 = vmatmul.mubr.bf16.gmra.mxu0 %v1860
        %v3942 = vpop.f32.mrf.mxu0
        %v3943 = vadd.f32 0.0, %v3942
        %v3944 = vpop.f32.mrf.mxu0
        %v3945 = vpop.f32.mrf.mxu0
        %v3946 = vadd.f32 0.0, %v3945
        %v3947 = vpop.f32.mrf.mxu0
        %3948 = vmatprep.mubr.bf16.mxu0 0
        %3949 = vmatmul.mubr.bf16.gmra.mxu0 %v1863
        %v3950 = vpop.f32.mrf.mxu0
        %v3951 = vadd.f32 0.0, %v3950
        %v3952 = vpop.f32.mrf.mxu0
        %v3953 = vpop.f32.mrf.mxu0
        %v3954 = vadd.f32 0.0, %v3953
        %v3955 = vpop.f32.mrf.mxu0
        %3956 = vmatprep.mubr.bf16.mxu0 0
        %3957 = vmatmul.mubr.bf16.gmra.mxu0 %v1866
        %v3958 = vpop.f32.mrf.mxu0
        %v3959 = vadd.f32 0.0, %v3958
        %v3960 = vpop.f32.mrf.mxu0
        %v3961 = vpop.f32.mrf.mxu0
        %v3962 = vadd.f32 0.0, %v3961
        %v3963 = vpop.f32.mrf.mxu0
        %3964 = vmatprep.mubr.bf16.mxu0 0
        %3965 = vmatmul.mubr.bf16.gmra.mxu0 %v1869
        %v3966 = vpop.f32.mrf.mxu0
        %v3967 = vadd.f32 0.0, %v3966
        %v3968 = vpop.f32.mrf.mxu0
        %v3969 = vpop.f32.mrf.mxu0
        %v3970 = vadd.f32 0.0, %v3969
        %v3971 = vpop.f32.mrf.mxu0
        %3972 = vmatprep.mubr.bf16.mxu0 0
        %3973 = vmatmul.mubr.bf16.gmra.mxu0 %v1872
        %v3974 = vpop.f32.mrf.mxu0
        %v3975 = vadd.f32 0.0, %v3974
        %v3976 = vpop.f32.mrf.mxu0
        %v3977 = vpop.f32.mrf.mxu0
        %v3978 = vadd.f32 0.0, %v3977
        %v3979 = vpop.f32.mrf.mxu0
        %3980 = vmatprep.mubr.bf16.mxu0 0
        %3981 = vmatmul.mubr.bf16.gmra.mxu0 %v1875
        %v3982 = vpop.f32.mrf.mxu0
        %v3983 = vadd.f32 0.0, %v3982
        %v3984 = vpop.f32.mrf.mxu0
        %v3985 = vpop.f32.mrf.mxu0
        %v3986 = vadd.f32 0.0, %v3985
        %v3987 = vpop.f32.mrf.mxu0
        %3988 = vmatprep.mubr.bf16.mxu0 0
        %3989 = vmatmul.mubr.bf16.gmra.mxu0 %v1878
        %v3990 = vpop.f32.mrf.mxu0
        %v3991 = vadd.f32 0.0, %v3990
        %v3992 = vpop.f32.mrf.mxu0
        %v3993 = vpop.f32.mrf.mxu0
        %v3994 = vadd.f32 0.0, %v3993
        %v3995 = vpop.f32.mrf.mxu0
        %3996 = vmatprep.mubr.bf16.mxu0 0
        %3997 = vmatmul.mubr.bf16.gmra.mxu0 %v1881
        %v3998 = vpop.f32.mrf.mxu0
        %v3999 = vadd.f32 0.0, %v3998
        %v4000 = vpop.f32.mrf.mxu0
        %v4001 = vpop.f32.mrf.mxu0
        %v4002 = vadd.f32 0.0, %v4001
        %v4003 = vpop.f32.mrf.mxu0
        %4004 = vmatprep.mubr.bf16.mxu0 0
        %4005 = vmatmul.mubr.bf16.gmra.mxu0 %v2635
        %v4006 = vpop.f32.mrf.mxu0
        %v4007 = vadd.f32 0.0, %v4006
        %v4008 = vpop.f32.mrf.mxu0
        %v4009 = vpop.f32.mrf.mxu0
        %v4010 = vadd.f32 0.0, %v4009
        %v4011 = vpop.f32.mrf.mxu0
        %4012 = vmatprep.mubr.bf16.mxu0 0
        %4013 = vmatmul.mubr.bf16.gmra.mxu0 %v3727
        %v4014 = vpop.f32.mrf.mxu0
        %v4015 = vadd.f32 0.0, %v4014
        %v4016 = vpop.f32.mrf.mxu0
        %v4017 = vpop.f32.mrf.mxu0
        %v4018 = vadd.f32 0.0, %v4017
        %v4019 = vpop.f32.mrf.mxu0
        %4020 = vdwg.mxu0
        %v4021 = vadd.f32 %v3657, %v3767
        %v4022 = vadd.f32 %v3658, %v3770
        %v4023 = vadd.f32 %v3659, %v3775
        %v4024 = vadd.f32 %v3660, %v3778
        %v4025 = vadd.f32 %v3661, %v3783
        %v4026 = vadd.f32 %v3662, %v3786
        %v4027 = vadd.f32 %v3663, %v3791
        %v4028 = vadd.f32 %v3664, %v3794
        %v4029 = vadd.f32 %v3665, %v3799
        %v4030 = vadd.f32 %v3666, %v3802
        %v4031 = vadd.f32 %v3667, %v3807
        %v4032 = vadd.f32 %v3668, %v3810
        %v4033 = vadd.f32 %v3669, %v3815
        %v4034 = vadd.f32 %v3670, %v3818
        %v4035 = vadd.f32 %v3671, %v3823
        %v4036 = vadd.f32 %v3672, %v3826
        %v4037 = vadd.f32 %v3673, %v3831
        %v4038 = vadd.f32 %v3674, %v3834
        %v4039 = vadd.f32 %v3675, %v3839
        %v4040 = vadd.f32 %v3676, %v3842
        %v4041 = vadd.f32 %v3677, %v3847
        %v4042 = vadd.f32 %v3678, %v3850
        %v4043 = vadd.f32 %v3679, %v3855
        %v4044 = vadd.f32 %v3680, %v3858
        %v4045 = vadd.f32 %v3681, %v3863
        %v4046 = vadd.f32 %v3682, %v3866
        %v4047 = vadd.f32 %v3683, %v3871
        %v4048 = vadd.f32 %v3684, %v3874
        %v4049 = vadd.f32 %v3685, %v3879
        %v4050 = vadd.f32 %v3686, %v3882
        %v4051 = vadd.f32 %v3687, %v3887
        %v4052 = vadd.f32 %v3688, %v3890
        %v4053 = vadd.f32 %v3689, %v3895
        %v4054 = vadd.f32 %v3690, %v3898
        %v4055 = vadd.f32 %v3691, %v3903
        %v4056 = vadd.f32 %v3692, %v3906
        %v4057 = vadd.f32 %v3693, %v3911
        %v4058 = vadd.f32 %v3694, %v3914
        %v4059 = vadd.f32 %v3695, %v3919
        %v4060 = vadd.f32 %v3696, %v3922
        %v4061 = vadd.f32 %v3697, %v3927
        %v4062 = vadd.f32 %v3698, %v3930
        %v4063 = vadd.f32 %v3699, %v3935
        %v4064 = vadd.f32 %v3700, %v3938
        %v4065 = vadd.f32 %v3701, %v3943
        %v4066 = vadd.f32 %v3702, %v3946
        %v4067 = vadd.f32 %v3703, %v3951
        %v4068 = vadd.f32 %v3704, %v3954
        %v4069 = vadd.f32 %v3705, %v3959
        %v4070 = vadd.f32 %v3706, %v3962
        %v4071 = vadd.f32 %v3707, %v3967
        %v4072 = vadd.f32 %v3708, %v3970
        %v4073 = vadd.f32 %v3709, %v3975
        %v4074 = vadd.f32 %v3710, %v3978
        %v4075 = vadd.f32 %v3711, %v3983
        %v4076 = vadd.f32 %v3712, %v3986
        %v4077 = vadd.f32 %v3713, %v3991
        %v4078 = vadd.f32 %v3714, %v3994
        %v4079 = vadd.f32 %v3715, %v3999
        %v4080 = vadd.f32 %v3716, %v4002
        %v4081 = vadd.f32 %v3717, %v4007
        %v4082 = vadd.f32 %v3718, %v4010
        %v4083 = vadd.f32 %v3719, %v4015
        %v4084 = vadd.f32 %v3720, %v4018
        %s4085 = scalar_lea.vmem %s1, 14
        %v4086 = vld [vmem:[%s4085] sm:$0x3]
        %v4088 = vsel %vm284, %v1377, 0
        %v4091 = vsel %vm284, %v1378, 0
        %v4094 = vsel %vm1494, %v4086, 0
        %4096 = vmatprep.subr.bf16.mxu0 0
        %4097 = vmatpush1.bf16.msra.mxu0 0
        %4098 = vmatprep.subr.bf16.mxu0 0
        %4099 = vmatpush1.bf16.msra.mxu0 0
        %4100 = vmatprep.subr.bf16.mxu0 0
        %4101 = vmatpush1.bf16.msra.mxu0 0
        %4102 = vmatprep.subr.bf16.mxu0 0
        %4103 = vmatpush1.bf16.msra.mxu0 0
        %4104 = vmatprep.subr.bf16.mxu0 0
        %4105 = vmatpush1.bf16.msra.mxu0 0
        %4106 = vmatprep.subr.bf16.mxu0 0
        %4107 = vmatpush1.bf16.msra.mxu0 0
        %4108 = vmatprep.subr.bf16.mxu0 0
        %4109 = vmatpush1.bf16.msra.mxu0 0
        %4110 = vmatprep.subr.bf16.mxu0 0
        %4111 = vmatpush1.bf16.msra.mxu0 %v4094
        %4112 = vmatprep.subr.bf16.mxu0 0
        %4113 = vmatpush2.bf16.msra.mxu0 0
        %4114 = vmatprep.subr.bf16.mxu0 0
        %4115 = vmatpush2.bf16.msra.mxu0 0
        %4116 = vmatprep.subr.bf16.mxu0 0
        %4117 = vmatpush2.bf16.msra.mxu0 0
        %4118 = vmatprep.subr.bf16.mxu0 0
        %4119 = vmatpush2.bf16.msra.mxu0 0
        %4120 = vmatprep.subr.bf16.mxu0 0
        %4121 = vmatpush2.bf16.msra.mxu0 0
        %4122 = vmatprep.subr.bf16.mxu0 0
        %4123 = vmatpush2.bf16.msra.mxu0 0
        %4124 = vmatprep.subr.bf16.mxu0 0
        %4125 = vmatpush2.bf16.msra.mxu0 0
        %4126 = vmatprep.subr.bf16.mxu0 0
        %4127 = vmatpush2.bf16.msra.mxu0 0
        %4128 = vmatprep.mubr.bf16.mxu0 0
        %4129 = vmatmul.mubr.bf16.gmra.mxu0 %v1405
        %v4130 = vpop.f32.mrf.mxu0
        %v4131 = vadd.f32 0.0, %v4130
        %v4132 = vpop.f32.mrf.mxu0
        %v4133 = vpop.f32.mrf.mxu0
        %v4134 = vadd.f32 0.0, %v4133
        %v4135 = vpop.f32.mrf.mxu0
        %4136 = vmatprep.mubr.bf16.mxu0 0
        %4137 = vmatmul.mubr.bf16.gmra.mxu0 %v1408
        %v4138 = vpop.f32.mrf.mxu0
        %v4139 = vadd.f32 0.0, %v4138
        %v4140 = vpop.f32.mrf.mxu0
        %v4141 = vpop.f32.mrf.mxu0
        %v4142 = vadd.f32 0.0, %v4141
        %v4143 = vpop.f32.mrf.mxu0
        %4144 = vmatprep.mubr.bf16.mxu0 0
        %4145 = vmatmul.mubr.bf16.gmra.mxu0 %v1411
        %v4146 = vpop.f32.mrf.mxu0
        %v4147 = vadd.f32 0.0, %v4146
        %v4148 = vpop.f32.mrf.mxu0
        %v4149 = vpop.f32.mrf.mxu0
        %v4150 = vadd.f32 0.0, %v4149
        %v4151 = vpop.f32.mrf.mxu0
        %4152 = vmatprep.mubr.bf16.mxu0 0
        %4153 = vmatmul.mubr.bf16.gmra.mxu0 %v1414
        %v4154 = vpop.f32.mrf.mxu0
        %v4155 = vadd.f32 0.0, %v4154
        %v4156 = vpop.f32.mrf.mxu0
        %v4157 = vpop.f32.mrf.mxu0
        %v4158 = vadd.f32 0.0, %v4157
        %v4159 = vpop.f32.mrf.mxu0
        %4160 = vmatprep.mubr.bf16.mxu0 0
        %4161 = vmatmul.mubr.bf16.gmra.mxu0 %v1417
        %v4162 = vpop.f32.mrf.mxu0
        %v4163 = vadd.f32 0.0, %v4162
        %v4164 = vpop.f32.mrf.mxu0
        %v4165 = vpop.f32.mrf.mxu0
        %v4166 = vadd.f32 0.0, %v4165
        %v4167 = vpop.f32.mrf.mxu0
        %4168 = vmatprep.mubr.bf16.mxu0 0
        %4169 = vmatmul.mubr.bf16.gmra.mxu0 %v1420
        %v4170 = vpop.f32.mrf.mxu0
        %v4171 = vadd.f32 0.0, %v4170
        %v4172 = vpop.f32.mrf.mxu0
        %v4173 = vpop.f32.mrf.mxu0
        %v4174 = vadd.f32 0.0, %v4173
        %v4175 = vpop.f32.mrf.mxu0
        %4176 = vmatprep.mubr.bf16.mxu0 0
        %4177 = vmatmul.mubr.bf16.gmra.mxu0 %v1423
        %v4178 = vpop.f32.mrf.mxu0
        %v4179 = vadd.f32 0.0, %v4178
        %v4180 = vpop.f32.mrf.mxu0
        %v4181 = vpop.f32.mrf.mxu0
        %v4182 = vadd.f32 0.0, %v4181
        %v4183 = vpop.f32.mrf.mxu0
        %4184 = vmatprep.mubr.bf16.mxu0 0
        %4185 = vmatmul.mubr.bf16.gmra.mxu0 %v1426
        %v4186 = vpop.f32.mrf.mxu0
        %v4187 = vadd.f32 0.0, %v4186
        %v4188 = vpop.f32.mrf.mxu0
        %v4189 = vpop.f32.mrf.mxu0
        %v4190 = vadd.f32 0.0, %v4189
        %v4191 = vpop.f32.mrf.mxu0
        %4192 = vmatprep.mubr.bf16.mxu0 0
        %4193 = vmatmul.mubr.bf16.gmra.mxu0 %v1429
        %v4194 = vpop.f32.mrf.mxu0
        %v4195 = vadd.f32 0.0, %v4194
        %v4196 = vpop.f32.mrf.mxu0
        %v4197 = vpop.f32.mrf.mxu0
        %v4198 = vadd.f32 0.0, %v4197
        %v4199 = vpop.f32.mrf.mxu0
        %4200 = vmatprep.mubr.bf16.mxu0 0
        %4201 = vmatmul.mubr.bf16.gmra.mxu0 %v1432
        %v4202 = vpop.f32.mrf.mxu0
        %v4203 = vadd.f32 0.0, %v4202
        %v4204 = vpop.f32.mrf.mxu0
        %v4205 = vpop.f32.mrf.mxu0
        %v4206 = vadd.f32 0.0, %v4205
        %v4207 = vpop.f32.mrf.mxu0
        %4208 = vmatprep.mubr.bf16.mxu0 0
        %4209 = vmatmul.mubr.bf16.gmra.mxu0 %v1435
        %v4210 = vpop.f32.mrf.mxu0
        %v4211 = vadd.f32 0.0, %v4210
        %v4212 = vpop.f32.mrf.mxu0
        %v4213 = vpop.f32.mrf.mxu0
        %v4214 = vadd.f32 0.0, %v4213
        %v4215 = vpop.f32.mrf.mxu0
        %4216 = vmatprep.mubr.bf16.mxu0 0
        %4217 = vmatmul.mubr.bf16.gmra.mxu0 %v1438
        %v4218 = vpop.f32.mrf.mxu0
        %v4219 = vadd.f32 0.0, %v4218
        %v4220 = vpop.f32.mrf.mxu0
        %v4221 = vpop.f32.mrf.mxu0
        %v4222 = vadd.f32 0.0, %v4221
        %v4223 = vpop.f32.mrf.mxu0
        %4224 = vmatprep.mubr.bf16.mxu0 0
        %4225 = vmatmul.mubr.bf16.gmra.mxu0 %v1441
        %v4226 = vpop.f32.mrf.mxu0
        %v4227 = vadd.f32 0.0, %v4226
        %v4228 = vpop.f32.mrf.mxu0
        %v4229 = vpop.f32.mrf.mxu0
        %v4230 = vadd.f32 0.0, %v4229
        %v4231 = vpop.f32.mrf.mxu0
        %4232 = vmatprep.mubr.bf16.mxu0 0
        %4233 = vmatmul.mubr.bf16.gmra.mxu0 %v1444
        %v4234 = vpop.f32.mrf.mxu0
        %v4235 = vadd.f32 0.0, %v4234
        %v4236 = vpop.f32.mrf.mxu0
        %v4237 = vpop.f32.mrf.mxu0
        %v4238 = vadd.f32 0.0, %v4237
        %v4239 = vpop.f32.mrf.mxu0
        %4240 = vmatprep.mubr.bf16.mxu0 0
        %4241 = vmatmul.mubr.bf16.gmra.mxu0 %v2996
        %v4242 = vpop.f32.mrf.mxu0
        %v4243 = vadd.f32 0.0, %v4242
        %v4244 = vpop.f32.mrf.mxu0
        %v4245 = vpop.f32.mrf.mxu0
        %v4246 = vadd.f32 0.0, %v4245
        %v4247 = vpop.f32.mrf.mxu0
        %4248 = vmatprep.mubr.bf16.mxu0 0
        %4249 = vmatmul.mubr.bf16.gmra.mxu0 %v4088
        %v4250 = vpop.f32.mrf.mxu0
        %v4251 = vadd.f32 0.0, %v4250
        %v4252 = vpop.f32.mrf.mxu0
        %v4253 = vpop.f32.mrf.mxu0
        %v4254 = vadd.f32 0.0, %v4253
        %v4255 = vpop.f32.mrf.mxu0
        %4256 = vmatprep.mubr.bf16.mxu0 0
        %4257 = vmatmul.mubr.bf16.gmra.mxu0 %v1453
        %v4258 = vpop.f32.mrf.mxu0
        %v4259 = vadd.f32 0.0, %v4258
        %v4260 = vpop.f32.mrf.mxu0
        %v4261 = vpop.f32.mrf.mxu0
        %v4262 = vadd.f32 0.0, %v4261
        %v4263 = vpop.f32.mrf.mxu0
        %4264 = vmatprep.mubr.bf16.mxu0 0
        %4265 = vmatmul.mubr.bf16.gmra.mxu0 %v1456
        %v4266 = vpop.f32.mrf.mxu0
        %v4267 = vadd.f32 0.0, %v4266
        %v4268 = vpop.f32.mrf.mxu0
        %v4269 = vpop.f32.mrf.mxu0
        %v4270 = vadd.f32 0.0, %v4269
        %v4271 = vpop.f32.mrf.mxu0
        %4272 = vmatprep.mubr.bf16.mxu0 0
        %4273 = vmatmul.mubr.bf16.gmra.mxu0 %v1459
        %v4274 = vpop.f32.mrf.mxu0
        %v4275 = vadd.f32 0.0, %v4274
        %v4276 = vpop.f32.mrf.mxu0
        %v4277 = vpop.f32.mrf.mxu0
        %v4278 = vadd.f32 0.0, %v4277
        %v4279 = vpop.f32.mrf.mxu0
        %4280 = vmatprep.mubr.bf16.mxu0 0
        %4281 = vmatmul.mubr.bf16.gmra.mxu0 %v1462
        %v4282 = vpop.f32.mrf.mxu0
        %v4283 = vadd.f32 0.0, %v4282
        %v4284 = vpop.f32.mrf.mxu0
        %v4285 = vpop.f32.mrf.mxu0
        %v4286 = vadd.f32 0.0, %v4285
        %v4287 = vpop.f32.mrf.mxu0
        %4288 = vmatprep.mubr.bf16.mxu0 0
        %4289 = vmatmul.mubr.bf16.gmra.mxu0 %v1465
        %v4290 = vpop.f32.mrf.mxu0
        %v4291 = vadd.f32 0.0, %v4290
        %v4292 = vpop.f32.mrf.mxu0
        %v4293 = vpop.f32.mrf.mxu0
        %v4294 = vadd.f32 0.0, %v4293
        %v4295 = vpop.f32.mrf.mxu0
        %4296 = vmatprep.mubr.bf16.mxu0 0
        %4297 = vmatmul.mubr.bf16.gmra.mxu0 %v1468
        %v4298 = vpop.f32.mrf.mxu0
        %v4299 = vadd.f32 0.0, %v4298
        %v4300 = vpop.f32.mrf.mxu0
        %v4301 = vpop.f32.mrf.mxu0
        %v4302 = vadd.f32 0.0, %v4301
        %v4303 = vpop.f32.mrf.mxu0
        %4304 = vmatprep.mubr.bf16.mxu0 0
        %4305 = vmatmul.mubr.bf16.gmra.mxu0 %v1471
        %v4306 = vpop.f32.mrf.mxu0
        %v4307 = vadd.f32 0.0, %v4306
        %v4308 = vpop.f32.mrf.mxu0
        %v4309 = vpop.f32.mrf.mxu0
        %v4310 = vadd.f32 0.0, %v4309
        %v4311 = vpop.f32.mrf.mxu0
        %4312 = vmatprep.mubr.bf16.mxu0 0
        %4313 = vmatmul.mubr.bf16.gmra.mxu0 %v1474
        %v4314 = vpop.f32.mrf.mxu0
        %v4315 = vadd.f32 0.0, %v4314
        %v4316 = vpop.f32.mrf.mxu0
        %v4317 = vpop.f32.mrf.mxu0
        %v4318 = vadd.f32 0.0, %v4317
        %v4319 = vpop.f32.mrf.mxu0
        %4320 = vmatprep.mubr.bf16.mxu0 0
        %4321 = vmatmul.mubr.bf16.gmra.mxu0 %v1477
        %v4322 = vpop.f32.mrf.mxu0
        %v4323 = vadd.f32 0.0, %v4322
        %v4324 = vpop.f32.mrf.mxu0
        %v4325 = vpop.f32.mrf.mxu0
        %v4326 = vadd.f32 0.0, %v4325
        %v4327 = vpop.f32.mrf.mxu0
        %4328 = vmatprep.mubr.bf16.mxu0 0
        %4329 = vmatmul.mubr.bf16.gmra.mxu0 %v1480
        %v4330 = vpop.f32.mrf.mxu0
        %v4331 = vadd.f32 0.0, %v4330
        %v4332 = vpop.f32.mrf.mxu0
        %v4333 = vpop.f32.mrf.mxu0
        %v4334 = vadd.f32 0.0, %v4333
        %v4335 = vpop.f32.mrf.mxu0
        %4336 = vmatprep.mubr.bf16.mxu0 0
        %4337 = vmatmul.mubr.bf16.gmra.mxu0 %v1483
        %v4338 = vpop.f32.mrf.mxu0
        %v4339 = vadd.f32 0.0, %v4338
        %v4340 = vpop.f32.mrf.mxu0
        %v4341 = vpop.f32.mrf.mxu0
        %v4342 = vadd.f32 0.0, %v4341
        %v4343 = vpop.f32.mrf.mxu0
        %4344 = vmatprep.mubr.bf16.mxu0 0
        %4345 = vmatmul.mubr.bf16.gmra.mxu0 %v1486
        %v4346 = vpop.f32.mrf.mxu0
        %v4347 = vadd.f32 0.0, %v4346
        %v4348 = vpop.f32.mrf.mxu0
        %v4349 = vpop.f32.mrf.mxu0
        %v4350 = vadd.f32 0.0, %v4349
        %v4351 = vpop.f32.mrf.mxu0
        %4352 = vmatprep.mubr.bf16.mxu0 0
        %4353 = vmatmul.mubr.bf16.gmra.mxu0 %v1489
        %v4354 = vpop.f32.mrf.mxu0
        %v4355 = vadd.f32 0.0, %v4354
        %v4356 = vpop.f32.mrf.mxu0
        %v4357 = vpop.f32.mrf.mxu0
        %v4358 = vadd.f32 0.0, %v4357
        %v4359 = vpop.f32.mrf.mxu0
        %4360 = vmatprep.mubr.bf16.mxu0 0
        %4361 = vmatmul.mubr.bf16.gmra.mxu0 %v1492
        %v4362 = vpop.f32.mrf.mxu0
        %v4363 = vadd.f32 0.0, %v4362
        %v4364 = vpop.f32.mrf.mxu0
        %v4365 = vpop.f32.mrf.mxu0
        %v4366 = vadd.f32 0.0, %v4365
        %v4367 = vpop.f32.mrf.mxu0
        %4368 = vmatprep.mubr.bf16.mxu0 0
        %4369 = vmatmul.mubr.bf16.gmra.mxu0 %v2999
        %v4370 = vpop.f32.mrf.mxu0
        %v4371 = vadd.f32 0.0, %v4370
        %v4372 = vpop.f32.mrf.mxu0
        %v4373 = vpop.f32.mrf.mxu0
        %v4374 = vadd.f32 0.0, %v4373
        %v4375 = vpop.f32.mrf.mxu0
        %4376 = vmatprep.mubr.bf16.mxu0 0
        %4377 = vmatmul.mubr.bf16.gmra.mxu0 %v4091
        %v4378 = vpop.f32.mrf.mxu0
        %v4379 = vadd.f32 0.0, %v4378
        %v4380 = vpop.f32.mrf.mxu0
        %v4381 = vpop.f32.mrf.mxu0
        %v4382 = vadd.f32 0.0, %v4381
        %v4383 = vpop.f32.mrf.mxu0
        %4384 = vdwg.mxu0
        %v4385 = vadd.f32 %v4021, %v4131
        %v4386 = vadd.f32 %v4022, %v4134
        %v4387 = vadd.f32 %v4023, %v4139
        %v4388 = vadd.f32 %v4024, %v4142
        %v4389 = vadd.f32 %v4025, %v4147
        %v4390 = vadd.f32 %v4026, %v4150
        %v4391 = vadd.f32 %v4027, %v4155
        %v4392 = vadd.f32 %v4028, %v4158
        %v4393 = vadd.f32 %v4029, %v4163
        %v4394 = vadd.f32 %v4030, %v4166
        %v4395 = vadd.f32 %v4031, %v4171
        %v4396 = vadd.f32 %v4032, %v4174
        %v4397 = vadd.f32 %v4033, %v4179
        %v4398 = vadd.f32 %v4034, %v4182
        %v4399 = vadd.f32 %v4035, %v4187
        %v4400 = vadd.f32 %v4036, %v4190
        %v4401 = vadd.f32 %v4037, %v4195
        %v4402 = vadd.f32 %v4038, %v4198
        %v4403 = vadd.f32 %v4039, %v4203
        %v4404 = vadd.f32 %v4040, %v4206
        %v4405 = vadd.f32 %v4041, %v4211
        %v4406 = vadd.f32 %v4042, %v4214
        %v4407 = vadd.f32 %v4043, %v4219
        %v4408 = vadd.f32 %v4044, %v4222
        %v4409 = vadd.f32 %v4045, %v4227
        %v4410 = vadd.f32 %v4046, %v4230
        %v4411 = vadd.f32 %v4047, %v4235
        %v4412 = vadd.f32 %v4048, %v4238
        %v4413 = vadd.f32 %v4049, %v4243
        %v4414 = vadd.f32 %v4050, %v4246
        %v4415 = vadd.f32 %v4051, %v4251
        %v4416 = vadd.f32 %v4052, %v4254
        %v4417 = vadd.f32 %v4053, %v4259
        %v4418 = vadd.f32 %v4054, %v4262
        %v4419 = vadd.f32 %v4055, %v4267
        %v4420 = vadd.f32 %v4056, %v4270
        %v4421 = vadd.f32 %v4057, %v4275
        %v4422 = vadd.f32 %v4058, %v4278
        %v4423 = vadd.f32 %v4059, %v4283
        %v4424 = vadd.f32 %v4060, %v4286
        %v4425 = vadd.f32 %v4061, %v4291
        %v4426 = vadd.f32 %v4062, %v4294
        %v4427 = vadd.f32 %v4063, %v4299
        %v4428 = vadd.f32 %v4064, %v4302
        %v4429 = vadd.f32 %v4065, %v4307
        %v4430 = vadd.f32 %v4066, %v4310
        %v4431 = vadd.f32 %v4067, %v4315
        %v4432 = vadd.f32 %v4068, %v4318
        %v4433 = vadd.f32 %v4069, %v4323
        %v4434 = vadd.f32 %v4070, %v4326
        %v4435 = vadd.f32 %v4071, %v4331
        %v4436 = vadd.f32 %v4072, %v4334
        %v4437 = vadd.f32 %v4073, %v4339
        %v4438 = vadd.f32 %v4074, %v4342
        %v4439 = vadd.f32 %v4075, %v4347
        %v4440 = vadd.f32 %v4076, %v4350
        %v4441 = vadd.f32 %v4077, %v4355
        %v4442 = vadd.f32 %v4078, %v4358
        %v4443 = vadd.f32 %v4079, %v4363
        %v4444 = vadd.f32 %v4080, %v4366
        %v4445 = vadd.f32 %v4081, %v4371
        %v4446 = vadd.f32 %v4082, %v4374
        %v4447 = vadd.f32 %v4083, %v4379
        %v4448 = vadd.f32 %v4084, %v4382
        %s4449 = scalar_lea.vmem %s1, 16
        %v4450 = vld [vmem:[%s4449] sm:$0x3]
        %v4452 = vsel %vm284, %v1393, 0
        %v4455 = vsel %vm284, %v1394, 0
        %v4458 = vsel %vm1494, %v4450, 0
        %4460 = vmatprep.subr.bf16.mxu0 0
        %4461 = vmatpush1.bf16.msra.mxu0 0
        %4462 = vmatprep.subr.bf16.mxu0 0
        %4463 = vmatpush1.bf16.msra.mxu0 0
        %4464 = vmatprep.subr.bf16.mxu0 0
        %4465 = vmatpush1.bf16.msra.mxu0 0
        %4466 = vmatprep.subr.bf16.mxu0 0
        %4467 = vmatpush1.bf16.msra.mxu0 0
        %4468 = vmatprep.subr.bf16.mxu0 0
        %4469 = vmatpush1.bf16.msra.mxu0 0
        %4470 = vmatprep.subr.bf16.mxu0 0
        %4471 = vmatpush1.bf16.msra.mxu0 0
        %4472 = vmatprep.subr.bf16.mxu0 0
        %4473 = vmatpush1.bf16.msra.mxu0 0
        %4474 = vmatprep.subr.bf16.mxu0 0
        %4475 = vmatpush1.bf16.msra.mxu0 %v4458
        %4476 = vmatprep.subr.bf16.mxu0 0
        %4477 = vmatpush2.bf16.msra.mxu0 0
        %4478 = vmatprep.subr.bf16.mxu0 0
        %4479 = vmatpush2.bf16.msra.mxu0 0
        %4480 = vmatprep.subr.bf16.mxu0 0
        %4481 = vmatpush2.bf16.msra.mxu0 0
        %4482 = vmatprep.subr.bf16.mxu0 0
        %4483 = vmatpush2.bf16.msra.mxu0 0
        %4484 = vmatprep.subr.bf16.mxu0 0
        %4485 = vmatpush2.bf16.msra.mxu0 0
        %4486 = vmatprep.subr.bf16.mxu0 0
        %4487 = vmatpush2.bf16.msra.mxu0 0
        %4488 = vmatprep.subr.bf16.mxu0 0
        %4489 = vmatpush2.bf16.msra.mxu0 0
        %4490 = vmatprep.subr.bf16.mxu0 0
        %4491 = vmatpush2.bf16.msra.mxu0 0
        %4492 = vmatprep.mubr.bf16.mxu0 0
        %4493 = vmatmul.mubr.bf16.gmra.mxu0 %v2184
        %v4494 = vpop.f32.mrf.mxu0
        %v4495 = vadd.f32 0.0, %v4494
        %v4496 = vpop.f32.mrf.mxu0
        %v4497 = vpop.f32.mrf.mxu0
        %v4498 = vadd.f32 0.0, %v4497
        %v4499 = vpop.f32.mrf.mxu0
        %4500 = vmatprep.mubr.bf16.mxu0 0
        %4501 = vmatmul.mubr.bf16.gmra.mxu0 %v2187
        %v4502 = vpop.f32.mrf.mxu0
        %v4503 = vadd.f32 0.0, %v4502
        %v4504 = vpop.f32.mrf.mxu0
        %v4505 = vpop.f32.mrf.mxu0
        %v4506 = vadd.f32 0.0, %v4505
        %v4507 = vpop.f32.mrf.mxu0
        %4508 = vmatprep.mubr.bf16.mxu0 0
        %4509 = vmatmul.mubr.bf16.gmra.mxu0 %v2190
        %v4510 = vpop.f32.mrf.mxu0
        %v4511 = vadd.f32 0.0, %v4510
        %v4512 = vpop.f32.mrf.mxu0
        %v4513 = vpop.f32.mrf.mxu0
        %v4514 = vadd.f32 0.0, %v4513
        %v4515 = vpop.f32.mrf.mxu0
        %4516 = vmatprep.mubr.bf16.mxu0 0
        %4517 = vmatmul.mubr.bf16.gmra.mxu0 %v2193
        %v4518 = vpop.f32.mrf.mxu0
        %v4519 = vadd.f32 0.0, %v4518
        %v4520 = vpop.f32.mrf.mxu0
        %v4521 = vpop.f32.mrf.mxu0
        %v4522 = vadd.f32 0.0, %v4521
        %v4523 = vpop.f32.mrf.mxu0
        %4524 = vmatprep.mubr.bf16.mxu0 0
        %4525 = vmatmul.mubr.bf16.gmra.mxu0 %v2196
        %v4526 = vpop.f32.mrf.mxu0
        %v4527 = vadd.f32 0.0, %v4526
        %v4528 = vpop.f32.mrf.mxu0
        %v4529 = vpop.f32.mrf.mxu0
        %v4530 = vadd.f32 0.0, %v4529
        %v4531 = vpop.f32.mrf.mxu0
        %4532 = vmatprep.mubr.bf16.mxu0 0
        %4533 = vmatmul.mubr.bf16.gmra.mxu0 %v2199
        %v4534 = vpop.f32.mrf.mxu0
        %v4535 = vadd.f32 0.0, %v4534
        %v4536 = vpop.f32.mrf.mxu0
        %v4537 = vpop.f32.mrf.mxu0
        %v4538 = vadd.f32 0.0, %v4537
        %v4539 = vpop.f32.mrf.mxu0
        %4540 = vmatprep.mubr.bf16.mxu0 0
        %4541 = vmatmul.mubr.bf16.gmra.mxu0 %v2202
        %v4542 = vpop.f32.mrf.mxu0
        %v4543 = vadd.f32 0.0, %v4542
        %v4544 = vpop.f32.mrf.mxu0
        %v4545 = vpop.f32.mrf.mxu0
        %v4546 = vadd.f32 0.0, %v4545
        %v4547 = vpop.f32.mrf.mxu0
        %4548 = vmatprep.mubr.bf16.mxu0 0
        %4549 = vmatmul.mubr.bf16.gmra.mxu0 %v2205
        %v4550 = vpop.f32.mrf.mxu0
        %v4551 = vadd.f32 0.0, %v4550
        %v4552 = vpop.f32.mrf.mxu0
        %v4553 = vpop.f32.mrf.mxu0
        %v4554 = vadd.f32 0.0, %v4553
        %v4555 = vpop.f32.mrf.mxu0
        %4556 = vmatprep.mubr.bf16.mxu0 0
        %4557 = vmatmul.mubr.bf16.gmra.mxu0 %v2208
        %v4558 = vpop.f32.mrf.mxu0
        %v4559 = vadd.f32 0.0, %v4558
        %v4560 = vpop.f32.mrf.mxu0
        %v4561 = vpop.f32.mrf.mxu0
        %v4562 = vadd.f32 0.0, %v4561
        %v4563 = vpop.f32.mrf.mxu0
        %4564 = vmatprep.mubr.bf16.mxu0 0
        %4565 = vmatmul.mubr.bf16.gmra.mxu0 %v2211
        %v4566 = vpop.f32.mrf.mxu0
        %v4567 = vadd.f32 0.0, %v4566
        %v4568 = vpop.f32.mrf.mxu0
        %v4569 = vpop.f32.mrf.mxu0
        %v4570 = vadd.f32 0.0, %v4569
        %v4571 = vpop.f32.mrf.mxu0
        %4572 = vmatprep.mubr.bf16.mxu0 0
        %4573 = vmatmul.mubr.bf16.gmra.mxu0 %v2214
        %v4574 = vpop.f32.mrf.mxu0
        %v4575 = vadd.f32 0.0, %v4574
        %v4576 = vpop.f32.mrf.mxu0
        %v4577 = vpop.f32.mrf.mxu0
        %v4578 = vadd.f32 0.0, %v4577
        %v4579 = vpop.f32.mrf.mxu0
        %4580 = vmatprep.mubr.bf16.mxu0 0
        %4581 = vmatmul.mubr.bf16.gmra.mxu0 %v2217
        %v4582 = vpop.f32.mrf.mxu0
        %v4583 = vadd.f32 0.0, %v4582
        %v4584 = vpop.f32.mrf.mxu0
        %v4585 = vpop.f32.mrf.mxu0
        %v4586 = vadd.f32 0.0, %v4585
        %v4587 = vpop.f32.mrf.mxu0
        %4588 = vmatprep.mubr.bf16.mxu0 0
        %4589 = vmatmul.mubr.bf16.gmra.mxu0 %v2220
        %v4590 = vpop.f32.mrf.mxu0
        %v4591 = vadd.f32 0.0, %v4590
        %v4592 = vpop.f32.mrf.mxu0
        %v4593 = vpop.f32.mrf.mxu0
        %v4594 = vadd.f32 0.0, %v4593
        %v4595 = vpop.f32.mrf.mxu0
        %4596 = vmatprep.mubr.bf16.mxu0 0
        %4597 = vmatmul.mubr.bf16.gmra.mxu0 %v2223
        %v4598 = vpop.f32.mrf.mxu0
        %v4599 = vadd.f32 0.0, %v4598
        %v4600 = vpop.f32.mrf.mxu0
        %v4601 = vpop.f32.mrf.mxu0
        %v4602 = vadd.f32 0.0, %v4601
        %v4603 = vpop.f32.mrf.mxu0
        %4604 = vmatprep.mubr.bf16.mxu0 0
        %4605 = vmatmul.mubr.bf16.gmra.mxu0 %v3360
        %v4606 = vpop.f32.mrf.mxu0
        %v4607 = vadd.f32 0.0, %v4606
        %v4608 = vpop.f32.mrf.mxu0
        %v4609 = vpop.f32.mrf.mxu0
        %v4610 = vadd.f32 0.0, %v4609
        %v4611 = vpop.f32.mrf.mxu0
        %4612 = vmatprep.mubr.bf16.mxu0 0
        %4613 = vmatmul.mubr.bf16.gmra.mxu0 %v4452
        %v4614 = vpop.f32.mrf.mxu0
        %v4615 = vadd.f32 0.0, %v4614
        %v4616 = vpop.f32.mrf.mxu0
        %v4617 = vpop.f32.mrf.mxu0
        %v4618 = vadd.f32 0.0, %v4617
        %v4619 = vpop.f32.mrf.mxu0
        %4620 = vmatprep.mubr.bf16.mxu0 0
        %4621 = vmatmul.mubr.bf16.gmra.mxu0 %v2232
        %v4622 = vpop.f32.mrf.mxu0
        %v4623 = vadd.f32 0.0, %v4622
        %v4624 = vpop.f32.mrf.mxu0
        %v4625 = vpop.f32.mrf.mxu0
        %v4626 = vadd.f32 0.0, %v4625
        %v4627 = vpop.f32.mrf.mxu0
        %4628 = vmatprep.mubr.bf16.mxu0 0
        %4629 = vmatmul.mubr.bf16.gmra.mxu0 %v2235
        %v4630 = vpop.f32.mrf.mxu0
        %v4631 = vadd.f32 0.0, %v4630
        %v4632 = vpop.f32.mrf.mxu0
        %v4633 = vpop.f32.mrf.mxu0
        %v4634 = vadd.f32 0.0, %v4633
        %v4635 = vpop.f32.mrf.mxu0
        %4636 = vmatprep.mubr.bf16.mxu0 0
        %4637 = vmatmul.mubr.bf16.gmra.mxu0 %v2238
        %v4638 = vpop.f32.mrf.mxu0
        %v4639 = vadd.f32 0.0, %v4638
        %v4640 = vpop.f32.mrf.mxu0
        %v4641 = vpop.f32.mrf.mxu0
        %v4642 = vadd.f32 0.0, %v4641
        %v4643 = vpop.f32.mrf.mxu0
        %4644 = vmatprep.mubr.bf16.mxu0 0
        %4645 = vmatmul.mubr.bf16.gmra.mxu0 %v2241
        %v4646 = vpop.f32.mrf.mxu0
        %v4647 = vadd.f32 0.0, %v4646
        %v4648 = vpop.f32.mrf.mxu0
        %v4649 = vpop.f32.mrf.mxu0
        %v4650 = vadd.f32 0.0, %v4649
        %v4651 = vpop.f32.mrf.mxu0
        %4652 = vmatprep.mubr.bf16.mxu0 0
        %4653 = vmatmul.mubr.bf16.gmra.mxu0 %v2244
        %v4654 = vpop.f32.mrf.mxu0
        %v4655 = vadd.f32 0.0, %v4654
        %v4656 = vpop.f32.mrf.mxu0
        %v4657 = vpop.f32.mrf.mxu0
        %v4658 = vadd.f32 0.0, %v4657
        %v4659 = vpop.f32.mrf.mxu0
        %4660 = vmatprep.mubr.bf16.mxu0 0
        %4661 = vmatmul.mubr.bf16.gmra.mxu0 %v2247
        %v4662 = vpop.f32.mrf.mxu0
        %v4663 = vadd.f32 0.0, %v4662
        %v4664 = vpop.f32.mrf.mxu0
        %v4665 = vpop.f32.mrf.mxu0
        %v4666 = vadd.f32 0.0, %v4665
        %v4667 = vpop.f32.mrf.mxu0
        %4668 = vmatprep.mubr.bf16.mxu0 0
        %4669 = vmatmul.mubr.bf16.gmra.mxu0 %v2250
        %v4670 = vpop.f32.mrf.mxu0
        %v4671 = vadd.f32 0.0, %v4670
        %v4672 = vpop.f32.mrf.mxu0
        %v4673 = vpop.f32.mrf.mxu0
        %v4674 = vadd.f32 0.0, %v4673
        %v4675 = vpop.f32.mrf.mxu0
        %4676 = vmatprep.mubr.bf16.mxu0 0
        %4677 = vmatmul.mubr.bf16.gmra.mxu0 %v2253
        %v4678 = vpop.f32.mrf.mxu0
        %v4679 = vadd.f32 0.0, %v4678
        %v4680 = vpop.f32.mrf.mxu0
        %v4681 = vpop.f32.mrf.mxu0
        %v4682 = vadd.f32 0.0, %v4681
        %v4683 = vpop.f32.mrf.mxu0
        %4684 = vmatprep.mubr.bf16.mxu0 0
        %4685 = vmatmul.mubr.bf16.gmra.mxu0 %v2256
        %v4686 = vpop.f32.mrf.mxu0
        %v4687 = vadd.f32 0.0, %v4686
        %v4688 = vpop.f32.mrf.mxu0
        %v4689 = vpop.f32.mrf.mxu0
        %v4690 = vadd.f32 0.0, %v4689
        %v4691 = vpop.f32.mrf.mxu0
        %4692 = vmatprep.mubr.bf16.mxu0 0
        %4693 = vmatmul.mubr.bf16.gmra.mxu0 %v2259
        %v4694 = vpop.f32.mrf.mxu0
        %v4695 = vadd.f32 0.0, %v4694
        %v4696 = vpop.f32.mrf.mxu0
        %v4697 = vpop.f32.mrf.mxu0
        %v4698 = vadd.f32 0.0, %v4697
        %v4699 = vpop.f32.mrf.mxu0
        %4700 = vmatprep.mubr.bf16.mxu0 0
        %4701 = vmatmul.mubr.bf16.gmra.mxu0 %v2262
        %v4702 = vpop.f32.mrf.mxu0
        %v4703 = vadd.f32 0.0, %v4702
        %v4704 = vpop.f32.mrf.mxu0
        %v4705 = vpop.f32.mrf.mxu0
        %v4706 = vadd.f32 0.0, %v4705
        %v4707 = vpop.f32.mrf.mxu0
        %4708 = vmatprep.mubr.bf16.mxu0 0
        %4709 = vmatmul.mubr.bf16.gmra.mxu0 %v2265
        %v4710 = vpop.f32.mrf.mxu0
        %v4711 = vadd.f32 0.0, %v4710
        %v4712 = vpop.f32.mrf.mxu0
        %v4713 = vpop.f32.mrf.mxu0
        %v4714 = vadd.f32 0.0, %v4713
        %v4715 = vpop.f32.mrf.mxu0
        %4716 = vmatprep.mubr.bf16.mxu0 0
        %4717 = vmatmul.mubr.bf16.gmra.mxu0 %v2268
        %v4718 = vpop.f32.mrf.mxu0
        %v4719 = vadd.f32 0.0, %v4718
        %v4720 = vpop.f32.mrf.mxu0
        %v4721 = vpop.f32.mrf.mxu0
        %v4722 = vadd.f32 0.0, %v4721
        %v4723 = vpop.f32.mrf.mxu0
        %4724 = vmatprep.mubr.bf16.mxu0 0
        %4725 = vmatmul.mubr.bf16.gmra.mxu0 %v2271
        %v4726 = vpop.f32.mrf.mxu0
        %v4727 = vadd.f32 0.0, %v4726
        %v4728 = vpop.f32.mrf.mxu0
        %v4729 = vpop.f32.mrf.mxu0
        %v4730 = vadd.f32 0.0, %v4729
        %v4731 = vpop.f32.mrf.mxu0
        %4732 = vmatprep.mubr.bf16.mxu0 0
        %4733 = vmatmul.mubr.bf16.gmra.mxu0 %v3363
        %v4734 = vpop.f32.mrf.mxu0
        %v4735 = vadd.f32 0.0, %v4734
        %v4736 = vpop.f32.mrf.mxu0
        %v4737 = vpop.f32.mrf.mxu0
        %v4738 = vadd.f32 0.0, %v4737
        %v4739 = vpop.f32.mrf.mxu0
        %4740 = vmatprep.mubr.bf16.mxu0 0
        %4741 = vmatmul.mubr.bf16.gmra.mxu0 %v4455
        %v4742 = vpop.f32.mrf.mxu0
        %v4743 = vadd.f32 0.0, %v4742
        %v4744 = vpop.f32.mrf.mxu0
        %v4745 = vpop.f32.mrf.mxu0
        %v4746 = vadd.f32 0.0, %v4745
        %v4747 = vpop.f32.mrf.mxu0
        %4748 = vdwg.mxu0
        %v4749 = vadd.f32 %v4385, %v4495
        %v4750 = vadd.f32 %v4386, %v4498
        %v4751 = vadd.f32 %v4387, %v4503
        %v4752 = vadd.f32 %v4388, %v4506
        %v4753 = vadd.f32 %v4389, %v4511
        %v4754 = vadd.f32 %v4390, %v4514
        %v4755 = vadd.f32 %v4391, %v4519
        %v4756 = vadd.f32 %v4392, %v4522
        %v4757 = vadd.f32 %v4393, %v4527
        %v4758 = vadd.f32 %v4394, %v4530
        %v4759 = vadd.f32 %v4395, %v4535
        %v4760 = vadd.f32 %v4396, %v4538
        %v4761 = vadd.f32 %v4397, %v4543
        %v4762 = vadd.f32 %v4398, %v4546
        %v4763 = vadd.f32 %v4399, %v4551
        %v4764 = vadd.f32 %v4400, %v4554
        %v4765 = vadd.f32 %v4401, %v4559
        %v4766 = vadd.f32 %v4402, %v4562
        %v4767 = vadd.f32 %v4403, %v4567
        %v4768 = vadd.f32 %v4404, %v4570
        %v4769 = vadd.f32 %v4405, %v4575
        %v4770 = vadd.f32 %v4406, %v4578
        %v4771 = vadd.f32 %v4407, %v4583
        %v4772 = vadd.f32 %v4408, %v4586
        %v4773 = vadd.f32 %v4409, %v4591
        %v4774 = vadd.f32 %v4410, %v4594
        %v4775 = vadd.f32 %v4411, %v4599
        %v4776 = vadd.f32 %v4412, %v4602
        %v4777 = vadd.f32 %v4413, %v4607
        %v4778 = vadd.f32 %v4414, %v4610
        %v4779 = vadd.f32 %v4415, %v4615
        %v4780 = vadd.f32 %v4416, %v4618
        %v4781 = vadd.f32 %v4417, %v4623
        %v4782 = vadd.f32 %v4418, %v4626
        %v4783 = vadd.f32 %v4419, %v4631
        %v4784 = vadd.f32 %v4420, %v4634
        %v4785 = vadd.f32 %v4421, %v4639
        %v4786 = vadd.f32 %v4422, %v4642
        %v4787 = vadd.f32 %v4423, %v4647
        %v4788 = vadd.f32 %v4424, %v4650
        %v4789 = vadd.f32 %v4425, %v4655
        %v4790 = vadd.f32 %v4426, %v4658
        %v4791 = vadd.f32 %v4427, %v4663
        %v4792 = vadd.f32 %v4428, %v4666
        %v4793 = vadd.f32 %v4429, %v4671
        %v4794 = vadd.f32 %v4430, %v4674
        %v4795 = vadd.f32 %v4431, %v4679
        %v4796 = vadd.f32 %v4432, %v4682
        %v4797 = vadd.f32 %v4433, %v4687
        %v4798 = vadd.f32 %v4434, %v4690
        %v4799 = vadd.f32 %v4435, %v4695
        %v4800 = vadd.f32 %v4436, %v4698
        %v4801 = vadd.f32 %v4437, %v4703
        %v4802 = vadd.f32 %v4438, %v4706
        %v4803 = vadd.f32 %v4439, %v4711
        %v4804 = vadd.f32 %v4440, %v4714
        %v4805 = vadd.f32 %v4441, %v4719
        %v4806 = vadd.f32 %v4442, %v4722
        %v4807 = vadd.f32 %v4443, %v4727
        %v4808 = vadd.f32 %v4444, %v4730
        %v4809 = vadd.f32 %v4445, %v4735
        %v4810 = vadd.f32 %v4446, %v4738
        %v4811 = vadd.f32 %v4447, %v4743
        %v4812 = vadd.f32 %v4448, %v4746
        %v4813 = vld [vmem:[%s2] sm:$0x1]
        %v4815 = vlaneseq
        %v4816 = vshrl.u32 %v4815, 7
        %v4817 = vsub.s32 0, %v4816
        %v4818 = vrot.slane %v4813, %v4817
        %v4820 = vadd.f32 %v4749, %v4818
        %v4821 = vadd.f32 %v4750, %v4818
        %v4822 = vadd.f32 %v4751, %v4818
        %v4823 = vadd.f32 %v4752, %v4818
        %v4824 = vadd.f32 %v4753, %v4818
        %v4825 = vadd.f32 %v4754, %v4818
        %v4826 = vadd.f32 %v4755, %v4818
        %v4827 = vadd.f32 %v4756, %v4818
        %v4828 = vadd.f32 %v4757, %v4818
        %v4829 = vadd.f32 %v4758, %v4818
        %v4830 = vadd.f32 %v4759, %v4818
        %v4831 = vadd.f32 %v4760, %v4818
        %v4832 = vadd.f32 %v4761, %v4818
        %v4833 = vadd.f32 %v4762, %v4818
        %v4834 = vadd.f32 %v4763, %v4818
        %v4835 = vadd.f32 %v4764, %v4818
        %v4836 = vadd.f32 %v4765, %v4818
        %v4837 = vadd.f32 %v4766, %v4818
        %v4838 = vadd.f32 %v4767, %v4818
        %v4839 = vadd.f32 %v4768, %v4818
        %v4840 = vadd.f32 %v4769, %v4818
        %v4841 = vadd.f32 %v4770, %v4818
        %v4842 = vadd.f32 %v4771, %v4818
        %v4843 = vadd.f32 %v4772, %v4818
        %v4844 = vadd.f32 %v4773, %v4818
        %v4845 = vadd.f32 %v4774, %v4818
        %v4846 = vadd.f32 %v4775, %v4818
        %v4847 = vadd.f32 %v4776, %v4818
        %v4848 = vadd.f32 %v4777, %v4818
        %v4849 = vadd.f32 %v4778, %v4818
        %v4850 = vadd.f32 %v4779, %v4818
        %v4851 = vadd.f32 %v4780, %v4818
        %v4852 = vadd.f32 %v4781, %v4818
        %v4853 = vadd.f32 %v4782, %v4818
        %v4854 = vadd.f32 %v4783, %v4818
        %v4855 = vadd.f32 %v4784, %v4818
        %v4856 = vadd.f32 %v4785, %v4818
        %v4857 = vadd.f32 %v4786, %v4818
        %v4858 = vadd.f32 %v4787, %v4818
        %v4859 = vadd.f32 %v4788, %v4818
        %v4860 = vadd.f32 %v4789, %v4818
        %v4861 = vadd.f32 %v4790, %v4818
        %v4862 = vadd.f32 %v4791, %v4818
        %v4863 = vadd.f32 %v4792, %v4818
        %v4864 = vadd.f32 %v4793, %v4818
        %v4865 = vadd.f32 %v4794, %v4818
        %v4866 = vadd.f32 %v4795, %v4818
        %v4867 = vadd.f32 %v4796, %v4818
        %v4868 = vadd.f32 %v4797, %v4818
        %v4869 = vadd.f32 %v4798, %v4818
        %v4870 = vadd.f32 %v4799, %v4818
        %v4871 = vadd.f32 %v4800, %v4818
        %v4872 = vadd.f32 %v4801, %v4818
        %v4873 = vadd.f32 %v4802, %v4818
        %v4874 = vadd.f32 %v4803, %v4818
        %v4875 = vadd.f32 %v4804, %v4818
        %v4876 = vadd.f32 %v4805, %v4818
        %v4877 = vadd.f32 %v4806, %v4818
        %v4878 = vadd.f32 %v4807, %v4818
        %v4879 = vadd.f32 %v4808, %v4818
        %v4880 = vadd.f32 %v4809, %v4818
        %v4881 = vadd.f32 %v4810, %v4818
        %v4882 = vadd.f32 %v4811, %v4818
        %v4883 = vadd.f32 %v4812, %v4818
        %v4884 = vmax.f32 %v4820, 0.0
        %v4885 = vmax.f32 %v4821, 0.0
        %v4886 = vmax.f32 %v4822, 0.0
        %v4887 = vmax.f32 %v4823, 0.0
        %v4888 = vmax.f32 %v4824, 0.0
        %v4889 = vmax.f32 %v4825, 0.0
        %v4890 = vmax.f32 %v4826, 0.0
        %v4891 = vmax.f32 %v4827, 0.0
        %v4892 = vmax.f32 %v4828, 0.0
        %v4893 = vmax.f32 %v4829, 0.0
        %v4894 = vmax.f32 %v4830, 0.0
        %v4895 = vmax.f32 %v4831, 0.0
        %v4896 = vmax.f32 %v4832, 0.0
        %v4897 = vmax.f32 %v4833, 0.0
        %v4898 = vmax.f32 %v4834, 0.0
        %v4899 = vmax.f32 %v4835, 0.0
        %v4900 = vmax.f32 %v4836, 0.0
        %v4901 = vmax.f32 %v4837, 0.0
        %v4902 = vmax.f32 %v4838, 0.0
        %v4903 = vmax.f32 %v4839, 0.0
        %v4904 = vmax.f32 %v4840, 0.0
        %v4905 = vmax.f32 %v4841, 0.0
        %v4906 = vmax.f32 %v4842, 0.0
        %v4907 = vmax.f32 %v4843, 0.0
        %v4908 = vmax.f32 %v4844, 0.0
        %v4909 = vmax.f32 %v4845, 0.0
        %v4910 = vmax.f32 %v4846, 0.0
        %v4911 = vmax.f32 %v4847, 0.0
        %v4912 = vmax.f32 %v4848, 0.0
        %v4913 = vmax.f32 %v4849, 0.0
        %v4914 = vmax.f32 %v4850, 0.0
        %v4915 = vmax.f32 %v4851, 0.0
        %v4916 = vmax.f32 %v4852, 0.0
        %v4917 = vmax.f32 %v4853, 0.0
        %v4918 = vmax.f32 %v4854, 0.0
        %v4919 = vmax.f32 %v4855, 0.0
        %v4920 = vmax.f32 %v4856, 0.0
        %v4921 = vmax.f32 %v4857, 0.0
        %v4922 = vmax.f32 %v4858, 0.0
        %v4923 = vmax.f32 %v4859, 0.0
        %v4924 = vmax.f32 %v4860, 0.0
        %v4925 = vmax.f32 %v4861, 0.0
        %v4926 = vmax.f32 %v4862, 0.0
        %v4927 = vmax.f32 %v4863, 0.0
        %v4928 = vmax.f32 %v4864, 0.0
        %v4929 = vmax.f32 %v4865, 0.0
        %v4930 = vmax.f32 %v4866, 0.0
        %v4931 = vmax.f32 %v4867, 0.0
        %v4932 = vmax.f32 %v4868, 0.0
        %v4933 = vmax.f32 %v4869, 0.0
        %v4934 = vmax.f32 %v4870, 0.0
        %v4935 = vmax.f32 %v4871, 0.0
        %v4936 = vmax.f32 %v4872, 0.0
        %v4937 = vmax.f32 %v4873, 0.0
        %v4938 = vmax.f32 %v4874, 0.0
        %v4939 = vmax.f32 %v4875, 0.0
        %v4940 = vmax.f32 %v4876, 0.0
        %v4941 = vmax.f32 %v4877, 0.0
        %v4942 = vmax.f32 %v4878, 0.0
        %v4943 = vmax.f32 %v4879, 0.0
        %v4944 = vmax.f32 %v4880, 0.0
        %v4945 = vmax.f32 %v4881, 0.0
        %v4946 = vmax.f32 %v4882, 0.0
        %v4947 = vmax.f32 %v4883, 0.0
        %v4948 = vld [vmem:[%s5] sm:$0x3]
        %v4949 = vld [vmem:[%s6] sm:$0x1]
        %v4951 = vlaneseq
        %v4952 = vshrl.u32 %v4951, 7
        %v4953 = vsub.s32 0, %v4952
        %v4954 = vrot.slane %v4949, %v4953
        %v4957 = vsel %vm1494, %v4948, 0
        %4959 = vmatprep.subr.bf16.mxu0 0
        %4960 = vmatpush1.bf16.msra.mxu0 0
        %4961 = vmatprep.subr.bf16.mxu0 0
        %4962 = vmatpush1.bf16.msra.mxu0 0
        %4963 = vmatprep.subr.bf16.mxu0 0
        %4964 = vmatpush1.bf16.msra.mxu0 0
        %4965 = vmatprep.subr.bf16.mxu0 0
        %4966 = vmatpush1.bf16.msra.mxu0 0
        %4967 = vmatprep.subr.bf16.mxu0 0
        %4968 = vmatpush1.bf16.msra.mxu0 0
        %4969 = vmatprep.subr.bf16.mxu0 0
        %4970 = vmatpush1.bf16.msra.mxu0 0
        %4971 = vmatprep.subr.bf16.mxu0 0
        %4972 = vmatpush1.bf16.msra.mxu0 0
        %4973 = vmatprep.subr.bf16.mxu0 0
        %4974 = vmatpush1.bf16.msra.mxu0 %v4957
        %4975 = vmatprep.subr.bf16.mxu0 0
        %4976 = vmatpush2.bf16.msra.mxu0 0
        %4977 = vmatprep.subr.bf16.mxu0 0
        %4978 = vmatpush2.bf16.msra.mxu0 0
        %4979 = vmatprep.subr.bf16.mxu0 0
        %4980 = vmatpush2.bf16.msra.mxu0 0
        %4981 = vmatprep.subr.bf16.mxu0 0
        %4982 = vmatpush2.bf16.msra.mxu0 0
        %4983 = vmatprep.subr.bf16.mxu0 0
        %4984 = vmatpush2.bf16.msra.mxu0 0
        %4985 = vmatprep.subr.bf16.mxu0 0
        %4986 = vmatpush2.bf16.msra.mxu0 0
        %4987 = vmatprep.subr.bf16.mxu0 0
        %4988 = vmatpush2.bf16.msra.mxu0 0
        %4989 = vmatprep.subr.bf16.mxu0 0
        %4990 = vmatpush2.bf16.msra.mxu0 0
        %4991 = vmatprep.mubr.bf16.mxu0 0
        %4992 = vmatmul.mubr.bf16.gmra.mxu0 %v1402
        %v4993 = vpop.f32.mrf.mxu0
        %v4994 = vadd.f32 %v4954, %v4993
        %v4995 = vpop.f32.mrf.mxu0
        %v4996 = vpop.f32.mrf.mxu0
        %v4997 = vadd.f32 %v4954, %v4996
        %v4998 = vpop.f32.mrf.mxu0
        %4999 = vmatprep.mubr.bf16.mxu0 0
        %5000 = vmatmul.mubr.bf16.gmra.mxu0 %v1405
        %v5001 = vpop.f32.mrf.mxu0
        %v5002 = vadd.f32 %v4954, %v5001
        %v5003 = vpop.f32.mrf.mxu0
        %v5004 = vpop.f32.mrf.mxu0
        %v5005 = vadd.f32 %v4954, %v5004
        %v5006 = vpop.f32.mrf.mxu0
        %5007 = vmatprep.mubr.bf16.mxu0 0
        %5008 = vmatmul.mubr.bf16.gmra.mxu0 %v1408
        %v5009 = vpop.f32.mrf.mxu0
        %v5010 = vadd.f32 %v4954, %v5009
        %v5011 = vpop.f32.mrf.mxu0
        %v5012 = vpop.f32.mrf.mxu0
        %v5013 = vadd.f32 %v4954, %v5012
        %v5014 = vpop.f32.mrf.mxu0
        %5015 = vmatprep.mubr.bf16.mxu0 0
        %5016 = vmatmul.mubr.bf16.gmra.mxu0 %v1411
        %v5017 = vpop.f32.mrf.mxu0
        %v5018 = vadd.f32 %v4954, %v5017
        %v5019 = vpop.f32.mrf.mxu0
        %v5020 = vpop.f32.mrf.mxu0
        %v5021 = vadd.f32 %v4954, %v5020
        %v5022 = vpop.f32.mrf.mxu0
        %5023 = vmatprep.mubr.bf16.mxu0 0
        %5024 = vmatmul.mubr.bf16.gmra.mxu0 %v1414
        %v5025 = vpop.f32.mrf.mxu0
        %v5026 = vadd.f32 %v4954, %v5025
        %v5027 = vpop.f32.mrf.mxu0
        %v5028 = vpop.f32.mrf.mxu0
        %v5029 = vadd.f32 %v4954, %v5028
        %v5030 = vpop.f32.mrf.mxu0
        %5031 = vmatprep.mubr.bf16.mxu0 0
        %5032 = vmatmul.mubr.bf16.gmra.mxu0 %v1417
        %v5033 = vpop.f32.mrf.mxu0
        %v5034 = vadd.f32 %v4954, %v5033
        %v5035 = vpop.f32.mrf.mxu0
        %v5036 = vpop.f32.mrf.mxu0
        %v5037 = vadd.f32 %v4954, %v5036
        %v5038 = vpop.f32.mrf.mxu0
        %5039 = vmatprep.mubr.bf16.mxu0 0
        %5040 = vmatmul.mubr.bf16.gmra.mxu0 %v1420
        %v5041 = vpop.f32.mrf.mxu0
        %v5042 = vadd.f32 %v4954, %v5041
        %v5043 = vpop.f32.mrf.mxu0
        %v5044 = vpop.f32.mrf.mxu0
        %v5045 = vadd.f32 %v4954, %v5044
        %v5046 = vpop.f32.mrf.mxu0
        %5047 = vmatprep.mubr.bf16.mxu0 0
        %5048 = vmatmul.mubr.bf16.gmra.mxu0 %v1423
        %v5049 = vpop.f32.mrf.mxu0
        %v5050 = vadd.f32 %v4954, %v5049
        %v5051 = vpop.f32.mrf.mxu0
        %v5052 = vpop.f32.mrf.mxu0
        %v5053 = vadd.f32 %v4954, %v5052
        %v5054 = vpop.f32.mrf.mxu0
        %5055 = vmatprep.mubr.bf16.mxu0 0
        %5056 = vmatmul.mubr.bf16.gmra.mxu0 %v1426
        %v5057 = vpop.f32.mrf.mxu0
        %v5058 = vadd.f32 %v4954, %v5057
        %v5059 = vpop.f32.mrf.mxu0
        %v5060 = vpop.f32.mrf.mxu0
        %v5061 = vadd.f32 %v4954, %v5060
        %v5062 = vpop.f32.mrf.mxu0
        %5063 = vmatprep.mubr.bf16.mxu0 0
        %5064 = vmatmul.mubr.bf16.gmra.mxu0 %v1429
        %v5065 = vpop.f32.mrf.mxu0
        %v5066 = vadd.f32 %v4954, %v5065
        %v5067 = vpop.f32.mrf.mxu0
        %v5068 = vpop.f32.mrf.mxu0
        %v5069 = vadd.f32 %v4954, %v5068
        %v5070 = vpop.f32.mrf.mxu0
        %5071 = vmatprep.mubr.bf16.mxu0 0
        %5072 = vmatmul.mubr.bf16.gmra.mxu0 %v1432
        %v5073 = vpop.f32.mrf.mxu0
        %v5074 = vadd.f32 %v4954, %v5073
        %v5075 = vpop.f32.mrf.mxu0
        %v5076 = vpop.f32.mrf.mxu0
        %v5077 = vadd.f32 %v4954, %v5076
        %v5078 = vpop.f32.mrf.mxu0
        %5079 = vmatprep.mubr.bf16.mxu0 0
        %5080 = vmatmul.mubr.bf16.gmra.mxu0 %v1435
        %v5081 = vpop.f32.mrf.mxu0
        %v5082 = vadd.f32 %v4954, %v5081
        %v5083 = vpop.f32.mrf.mxu0
        %v5084 = vpop.f32.mrf.mxu0
        %v5085 = vadd.f32 %v4954, %v5084
        %v5086 = vpop.f32.mrf.mxu0
        %5087 = vmatprep.mubr.bf16.mxu0 0
        %5088 = vmatmul.mubr.bf16.gmra.mxu0 %v1438
        %v5089 = vpop.f32.mrf.mxu0
        %v5090 = vadd.f32 %v4954, %v5089
        %v5091 = vpop.f32.mrf.mxu0
        %v5092 = vpop.f32.mrf.mxu0
        %v5093 = vadd.f32 %v4954, %v5092
        %v5094 = vpop.f32.mrf.mxu0
        %5095 = vmatprep.mubr.bf16.mxu0 0
        %5096 = vmatmul.mubr.bf16.gmra.mxu0 %v1441
        %v5097 = vpop.f32.mrf.mxu0
        %v5098 = vadd.f32 %v4954, %v5097
        %v5099 = vpop.f32.mrf.mxu0
        %v5100 = vpop.f32.mrf.mxu0
        %v5101 = vadd.f32 %v4954, %v5100
        %v5102 = vpop.f32.mrf.mxu0
        %5103 = vmatprep.mubr.bf16.mxu0 0
        %5104 = vmatmul.mubr.bf16.gmra.mxu0 %v1444
        %v5105 = vpop.f32.mrf.mxu0
        %v5106 = vadd.f32 %v4954, %v5105
        %v5107 = vpop.f32.mrf.mxu0
        %v5108 = vpop.f32.mrf.mxu0
        %v5109 = vadd.f32 %v4954, %v5108
        %v5110 = vpop.f32.mrf.mxu0
        %5111 = vmatprep.mubr.bf16.mxu0 0
        %5112 = vmatmul.mubr.bf16.gmra.mxu0 %v2996
        %v5113 = vpop.f32.mrf.mxu0
        %v5114 = vadd.f32 %v4954, %v5113
        %v5115 = vpop.f32.mrf.mxu0
        %v5116 = vpop.f32.mrf.mxu0
        %v5117 = vadd.f32 %v4954, %v5116
        %v5118 = vpop.f32.mrf.mxu0
        %5119 = vmatprep.mubr.bf16.mxu0 0
        %5120 = vmatmul.mubr.bf16.gmra.mxu0 %v1450
        %v5121 = vpop.f32.mrf.mxu0
        %v5122 = vadd.f32 %v4954, %v5121
        %v5123 = vpop.f32.mrf.mxu0
        %v5124 = vpop.f32.mrf.mxu0
        %v5125 = vadd.f32 %v4954, %v5124
        %v5126 = vpop.f32.mrf.mxu0
        %5127 = vmatprep.mubr.bf16.mxu0 0
        %5128 = vmatmul.mubr.bf16.gmra.mxu0 %v1453
        %v5129 = vpop.f32.mrf.mxu0
        %v5130 = vadd.f32 %v4954, %v5129
        %v5131 = vpop.f32.mrf.mxu0
        %v5132 = vpop.f32.mrf.mxu0
        %v5133 = vadd.f32 %v4954, %v5132
        %v5134 = vpop.f32.mrf.mxu0
        %5135 = vmatprep.mubr.bf16.mxu0 0
        %5136 = vmatmul.mubr.bf16.gmra.mxu0 %v1456
        %v5137 = vpop.f32.mrf.mxu0
        %v5138 = vadd.f32 %v4954, %v5137
        %v5139 = vpop.f32.mrf.mxu0
        %v5140 = vpop.f32.mrf.mxu0
        %v5141 = vadd.f32 %v4954, %v5140
        %v5142 = vpop.f32.mrf.mxu0
        %5143 = vmatprep.mubr.bf16.mxu0 0
        %5144 = vmatmul.mubr.bf16.gmra.mxu0 %v1459
        %v5145 = vpop.f32.mrf.mxu0
        %v5146 = vadd.f32 %v4954, %v5145
        %v5147 = vpop.f32.mrf.mxu0
        %v5148 = vpop.f32.mrf.mxu0
        %v5149 = vadd.f32 %v4954, %v5148
        %v5150 = vpop.f32.mrf.mxu0
        %5151 = vmatprep.mubr.bf16.mxu0 0
        %5152 = vmatmul.mubr.bf16.gmra.mxu0 %v1462
        %v5153 = vpop.f32.mrf.mxu0
        %v5154 = vadd.f32 %v4954, %v5153
        %v5155 = vpop.f32.mrf.mxu0
        %v5156 = vpop.f32.mrf.mxu0
        %v5157 = vadd.f32 %v4954, %v5156
        %v5158 = vpop.f32.mrf.mxu0
        %5159 = vmatprep.mubr.bf16.mxu0 0
        %5160 = vmatmul.mubr.bf16.gmra.mxu0 %v1465
        %v5161 = vpop.f32.mrf.mxu0
        %v5162 = vadd.f32 %v4954, %v5161
        %v5163 = vpop.f32.mrf.mxu0
        %v5164 = vpop.f32.mrf.mxu0
        %v5165 = vadd.f32 %v4954, %v5164
        %v5166 = vpop.f32.mrf.mxu0
        %5167 = vmatprep.mubr.bf16.mxu0 0
        %5168 = vmatmul.mubr.bf16.gmra.mxu0 %v1468
        %v5169 = vpop.f32.mrf.mxu0
        %v5170 = vadd.f32 %v4954, %v5169
        %v5171 = vpop.f32.mrf.mxu0
        %v5172 = vpop.f32.mrf.mxu0
        %v5173 = vadd.f32 %v4954, %v5172
        %v5174 = vpop.f32.mrf.mxu0
        %5175 = vmatprep.mubr.bf16.mxu0 0
        %5176 = vmatmul.mubr.bf16.gmra.mxu0 %v1471
        %v5177 = vpop.f32.mrf.mxu0
        %v5178 = vadd.f32 %v4954, %v5177
        %v5179 = vpop.f32.mrf.mxu0
        %v5180 = vpop.f32.mrf.mxu0
        %v5181 = vadd.f32 %v4954, %v5180
        %v5182 = vpop.f32.mrf.mxu0
        %5183 = vmatprep.mubr.bf16.mxu0 0
        %5184 = vmatmul.mubr.bf16.gmra.mxu0 %v1474
        %v5185 = vpop.f32.mrf.mxu0
        %v5186 = vadd.f32 %v4954, %v5185
        %v5187 = vpop.f32.mrf.mxu0
        %v5188 = vpop.f32.mrf.mxu0
        %v5189 = vadd.f32 %v4954, %v5188
        %v5190 = vpop.f32.mrf.mxu0
        %5191 = vmatprep.mubr.bf16.mxu0 0
        %5192 = vmatmul.mubr.bf16.gmra.mxu0 %v1477
        %v5193 = vpop.f32.mrf.mxu0
        %v5194 = vadd.f32 %v4954, %v5193
        %v5195 = vpop.f32.mrf.mxu0
        %v5196 = vpop.f32.mrf.mxu0
        %v5197 = vadd.f32 %v4954, %v5196
        %v5198 = vpop.f32.mrf.mxu0
        %5199 = vmatprep.mubr.bf16.mxu0 0
        %5200 = vmatmul.mubr.bf16.gmra.mxu0 %v1480
        %v5201 = vpop.f32.mrf.mxu0
        %v5202 = vadd.f32 %v4954, %v5201
        %v5203 = vpop.f32.mrf.mxu0
        %v5204 = vpop.f32.mrf.mxu0
        %v5205 = vadd.f32 %v4954, %v5204
        %v5206 = vpop.f32.mrf.mxu0
        %5207 = vmatprep.mubr.bf16.mxu0 0
        %5208 = vmatmul.mubr.bf16.gmra.mxu0 %v1483
        %v5209 = vpop.f32.mrf.mxu0
        %v5210 = vadd.f32 %v4954, %v5209
        %v5211 = vpop.f32.mrf.mxu0
        %v5212 = vpop.f32.mrf.mxu0
        %v5213 = vadd.f32 %v4954, %v5212
        %v5214 = vpop.f32.mrf.mxu0
        %5215 = vmatprep.mubr.bf16.mxu0 0
        %5216 = vmatmul.mubr.bf16.gmra.mxu0 %v1486
        %v5217 = vpop.f32.mrf.mxu0
        %v5218 = vadd.f32 %v4954, %v5217
        %v5219 = vpop.f32.mrf.mxu0
        %v5220 = vpop.f32.mrf.mxu0
        %v5221 = vadd.f32 %v4954, %v5220
        %v5222 = vpop.f32.mrf.mxu0
        %5223 = vmatprep.mubr.bf16.mxu0 0
        %5224 = vmatmul.mubr.bf16.gmra.mxu0 %v1489
        %v5225 = vpop.f32.mrf.mxu0
        %v5226 = vadd.f32 %v4954, %v5225
        %v5227 = vpop.f32.mrf.mxu0
        %v5228 = vpop.f32.mrf.mxu0
        %v5229 = vadd.f32 %v4954, %v5228
        %v5230 = vpop.f32.mrf.mxu0
        %5231 = vmatprep.mubr.bf16.mxu0 0
        %5232 = vmatmul.mubr.bf16.gmra.mxu0 %v1492
        %v5233 = vpop.f32.mrf.mxu0
        %v5234 = vadd.f32 %v4954, %v5233
        %v5235 = vpop.f32.mrf.mxu0
        %v5236 = vpop.f32.mrf.mxu0
        %v5237 = vadd.f32 %v4954, %v5236
        %v5238 = vpop.f32.mrf.mxu0
        %5239 = vmatprep.mubr.bf16.mxu0 0
        %5240 = vmatmul.mubr.bf16.gmra.mxu0 %v2999
        %v5241 = vpop.f32.mrf.mxu0
        %v5242 = vadd.f32 %v4954, %v5241
        %v5243 = vpop.f32.mrf.mxu0
        %v5244 = vpop.f32.mrf.mxu0
        %v5245 = vadd.f32 %v4954, %v5244
        %v5246 = vpop.f32.mrf.mxu0
        %5247 = vdwg.mxu0
        %vm5248 = vcmask 64512
        %5249 = vst.msk [vmem:[#allocation3] sm:$0xff] %vm5248, 0.0
        %5250 = vst.msk [vmem:[#allocation3 + $0x8] sm:$0xff] %vm5248, 0.0
        %vm5251 = vcmask 58368
        %5252 = vst.msk [vmem:[#allocation3 + $0x10] sm:$0x3] %vm5251, 0.0
        %5253 = vst.msk [vmem:[#allocation3 + $0x1b0] sm:$0xff] %vm5248, 0.0
        %5254 = vst.msk [vmem:[#allocation3 + $0x1b8] sm:$0xff] %vm5248, 0.0
        %5255 = vst.msk [vmem:[#allocation3 + $0x1c0] sm:$0x3] %vm5251, 0.0
        %s5256 = scalar_lea.vmem [#allocation3], 408
        %5257 = vst.msk [vmem:[%s5256] sm:$0xff] %vm5248, 0.0
        %5258 = vst.msk [vmem:[%s5256 + $0x8] sm:$0xff] %vm5248, 0.0
        %5259 = vst.msk [vmem:[%s5256 + $0x10] sm:$0x3] %vm5251, 0.0
        %5260 = vst.msk [vmem:[%s5256 + $0x1b0] sm:$0xff] %vm5248, 0.0
        %5261 = vst.msk [vmem:[%s5256 + $0x1b8] sm:$0xff] %vm5248, 0.0
        %5262 = vst.msk [vmem:[%s5256 + $0x1c0] sm:$0x3] %vm5251, 0.0
        %vm5263 = vcmask 57344
        %5264 = vst.msk [vmem:[#allocation3] sm:$0x1] %vm5263, 0.0
        %5265 = vst.msk [vmem:[#allocation3 + $0x18] sm:$0x1] %vm5263, 0.0
        %5266 = vst.msk [vmem:[#allocation3 + $0x30] sm:$0x1] %vm5263, 0.0
        %5267 = vst.msk [vmem:[#allocation3 + $0x48] sm:$0x1] %vm5263, 0.0
        %5268 = vst.msk [vmem:[#allocation3 + $0x60] sm:$0x1] %vm5263, 0.0
        %5269 = vst.msk [vmem:[#allocation3 + $0x78] sm:$0x1] %vm5263, 0.0
        %5270 = vst.msk [vmem:[#allocation3 + $0x90] sm:$0x1] %vm5263, 0.0
        %5271 = vst.msk [vmem:[#allocation3 + $0xa8] sm:$0x1] %vm5263, 0.0
        %5272 = vst.msk [vmem:[#allocation3 + $0xc0] sm:$0x1] %vm5263, 0.0
        %5273 = vst.msk [vmem:[#allocation3 + $0xd8] sm:$0x1] %vm5263, 0.0
        %5274 = vst.msk [vmem:[#allocation3 + $0xf0] sm:$0x1] %vm5263, 0.0
        %5275 = vst.msk [vmem:[#allocation3 + $0x108] sm:$0x1] %vm5263, 0.0
        %5276 = vst.msk [vmem:[#allocation3 + $0x120] sm:$0x1] %vm5263, 0.0
        %5277 = vst.msk [vmem:[#allocation3 + $0x138] sm:$0x1] %vm5263, 0.0
        %5278 = vst.msk [vmem:[#allocation3 + $0x150] sm:$0x1] %vm5263, 0.0
        %5279 = vst.msk [vmem:[#allocation3 + $0x168] sm:$0x1] %vm5263, 0.0
        %5280 = vst.msk [vmem:[#allocation3 + $0x180] sm:$0x1] %vm5263, 0.0
        %5281 = vst.msk [vmem:[#allocation3 + $0x198] sm:$0x1] %vm5263, 0.0
        %5282 = vst.msk [vmem:[#allocation3 + $0x1b0] sm:$0x1] %vm5263, 0.0
        %5283 = vst.msk [vmem:[#allocation3 + $0x1c8] sm:$0x1] %vm5263, 0.0
        %5284 = vst.msk [vmem:[#allocation3 + $0x1e0] sm:$0x1] %vm5263, 0.0
        %5285 = vst.msk [vmem:[#allocation3 + $0x1f8] sm:$0x1] %vm5263, 0.0
        %5286 = vst.msk [vmem:[#allocation3 + $0x210] sm:$0x1] %vm5263, 0.0
        %5287 = vst.msk [vmem:[#allocation3 + $0x228] sm:$0x1] %vm5263, 0.0
        %5288 = vst.msk [vmem:[#allocation3 + $0x240] sm:$0x1] %vm5263, 0.0
        %5289 = vst.msk [vmem:[#allocation3 + $0x258] sm:$0x1] %vm5263, 0.0
        %5290 = vst.msk [vmem:[#allocation3 + $0x270] sm:$0x1] %vm5263, 0.0
        %5291 = vst.msk [vmem:[#allocation3 + $0x288] sm:$0x1] %vm5263, 0.0
        %5292 = vst.msk [vmem:[#allocation3 + $0x2a0] sm:$0x1] %vm5263, 0.0
        %5293 = vst.msk [vmem:[#allocation3 + $0x2b8] sm:$0x1] %vm5263, 0.0
        %5294 = vst.msk [vmem:[#allocation3 + $0x2d0] sm:$0x1] %vm5263, 0.0
        %5295 = vst.msk [vmem:[#allocation3 + $0x2e8] sm:$0x1] %vm5263, 0.0
        %5296 = vst.msk [vmem:[#allocation3 + $0x300] sm:$0x1] %vm5263, 0.0
        %5297 = vst.msk [vmem:[#allocation3 + $0x318] sm:$0x1] %vm5263, 0.0
        %5298 = vst.msk [vmem:[#allocation3 + $0x330] sm:$0x1] %vm5263, 0.0
        %5299 = vst.msk [vmem:[#allocation3 + $0x348] sm:$0x1] %vm5263, 0.0
        %5300 = vst.msk [vmem:[#allocation3 + $0x11] sm:$0x1] %vm5263, 0.0
        %5301 = vst.msk [vmem:[#allocation3 + $0x29] sm:$0x1] %vm5263, 0.0
        %5302 = vst.msk [vmem:[#allocation3 + $0x41] sm:$0x1] %vm5263, 0.0
        %5303 = vst.msk [vmem:[#allocation3 + $0x59] sm:$0x1] %vm5263, 0.0
        %5304 = vst.msk [vmem:[#allocation3 + $0x71] sm:$0x1] %vm5263, 0.0
        %5305 = vst.msk [vmem:[#allocation3 + $0x89] sm:$0x1] %vm5263, 0.0
        %5306 = vst.msk [vmem:[#allocation3 + $0xa1] sm:$0x1] %vm5263, 0.0
        %5307 = vst.msk [vmem:[#allocation3 + $0xb9] sm:$0x1] %vm5263, 0.0
        %5308 = vst.msk [vmem:[#allocation3 + $0xd1] sm:$0x1] %vm5263, 0.0
        %5309 = vst.msk [vmem:[#allocation3 + $0xe9] sm:$0x1] %vm5263, 0.0
        %5310 = vst.msk [vmem:[#allocation3 + $0x101] sm:$0x1] %vm5263, 0.0
        %5311 = vst.msk [vmem:[#allocation3 + $0x119] sm:$0x1] %vm5263, 0.0
        %5312 = vst.msk [vmem:[#allocation3 + $0x131] sm:$0x1] %vm5263, 0.0
        %5313 = vst.msk [vmem:[#allocation3 + $0x149] sm:$0x1] %vm5263, 0.0
        %5314 = vst.msk [vmem:[#allocation3 + $0x161] sm:$0x1] %vm5263, 0.0
        %5315 = vst.msk [vmem:[#allocation3 + $0x179] sm:$0x1] %vm5263, 0.0
        %5316 = vst.msk [vmem:[#allocation3 + $0x191] sm:$0x1] %vm5263, 0.0
        %5317 = vst.msk [vmem:[#allocation3 + $0x1a9] sm:$0x1] %vm5263, 0.0
        %5318 = vst.msk [vmem:[#allocation3 + $0x1c1] sm:$0x1] %vm5263, 0.0
        %5319 = vst.msk [vmem:[#allocation3 + $0x1d9] sm:$0x1] %vm5263, 0.0
        %5320 = vst.msk [vmem:[#allocation3 + $0x1f1] sm:$0x1] %vm5263, 0.0
        %5321 = vst.msk [vmem:[#allocation3 + $0x209] sm:$0x1] %vm5263, 0.0
        %5322 = vst.msk [vmem:[#allocation3 + $0x221] sm:$0x1] %vm5263, 0.0
        %5323 = vst.msk [vmem:[#allocation3 + $0x239] sm:$0x1] %vm5263, 0.0
        %5324 = vst.msk [vmem:[#allocation3 + $0x251] sm:$0x1] %vm5263, 0.0
        %5325 = vst.msk [vmem:[#allocation3 + $0x269] sm:$0x1] %vm5263, 0.0
        %5326 = vst.msk [vmem:[#allocation3 + $0x281] sm:$0x1] %vm5263, 0.0
        %5327 = vst.msk [vmem:[#allocation3 + $0x299] sm:$0x1] %vm5263, 0.0
        %5328 = vst.msk [vmem:[#allocation3 + $0x2b1] sm:$0x1] %vm5263, 0.0
        %5329 = vst.msk [vmem:[#allocation3 + $0x2c9] sm:$0x1] %vm5263, 0.0
        %5330 = vst.msk [vmem:[#allocation3 + $0x2e1] sm:$0x1] %vm5263, 0.0
        %5331 = vst.msk [vmem:[#allocation3 + $0x2f9] sm:$0x1] %vm5263, 0.0
        %5332 = vst.msk [vmem:[#allocation3 + $0x311] sm:$0x1] %vm5263, 0.0
        %5333 = vst.msk [vmem:[#allocation3 + $0x329] sm:$0x1] %vm5263, 0.0
        %5334 = vst.msk [vmem:[#allocation3 + $0x341] sm:$0x1] %vm5263, 0.0
        %5335 = vst.msk [vmem:[#allocation3 + $0x359] sm:$0x1] %vm5263, 0.0
        %s5336 = scalar_lea.vmem [#allocation3], 24
        %5337 = vst.msk [vmem:[%s5336 + $0x1] sm:$0xff] %vm5248, %v4884
        %5338 = vst.msk [vmem:[%s5336 + $0x9] sm:$0xff] %vm5248, %v4885
        %5339 = vst.msk [vmem:[%s5336 + $0x19] sm:$0xff] %vm5248, %v4886
        %5340 = vst.msk [vmem:[%s5336 + $0x21] sm:$0xff] %vm5248, %v4887
        %5341 = vst.msk [vmem:[%s5336 + $0x31] sm:$0xff] %vm5248, %v4888
        %5342 = vst.msk [vmem:[%s5336 + $0x39] sm:$0xff] %vm5248, %v4889
        %5343 = vst.msk [vmem:[%s5336 + $0x49] sm:$0xff] %vm5248, %v4890
        %5344 = vst.msk [vmem:[%s5336 + $0x51] sm:$0xff] %vm5248, %v4891
        %5345 = vst.msk [vmem:[%s5336 + $0x61] sm:$0xff] %vm5248, %v4892
        %5346 = vst.msk [vmem:[%s5336 + $0x69] sm:$0xff] %vm5248, %v4893
        %5347 = vst.msk [vmem:[%s5336 + $0x79] sm:$0xff] %vm5248, %v4894
        %5348 = vst.msk [vmem:[%s5336 + $0x81] sm:$0xff] %vm5248, %v4895
        %5349 = vst.msk [vmem:[%s5336 + $0x91] sm:$0xff] %vm5248, %v4896
        %5350 = vst.msk [vmem:[%s5336 + $0x99] sm:$0xff] %vm5248, %v4897
        %5351 = vst.msk [vmem:[%s5336 + $0xa9] sm:$0xff] %vm5248, %v4898
        %5352 = vst.msk [vmem:[%s5336 + $0xb1] sm:$0xff] %vm5248, %v4899
        %5353 = vst.msk [vmem:[%s5336 + $0xc1] sm:$0xff] %vm5248, %v4900
        %5354 = vst.msk [vmem:[%s5336 + $0xc9] sm:$0xff] %vm5248, %v4901
        %5355 = vst.msk [vmem:[%s5336 + $0xd9] sm:$0xff] %vm5248, %v4902
        %5356 = vst.msk [vmem:[%s5336 + $0xe1] sm:$0xff] %vm5248, %v4903
        %5357 = vst.msk [vmem:[%s5336 + $0xf1] sm:$0xff] %vm5248, %v4904
        %5358 = vst.msk [vmem:[%s5336 + $0xf9] sm:$0xff] %vm5248, %v4905
        %5359 = vst.msk [vmem:[%s5336 + $0x109] sm:$0xff] %vm5248, %v4906
        %5360 = vst.msk [vmem:[%s5336 + $0x111] sm:$0xff] %vm5248, %v4907
        %5361 = vst.msk [vmem:[%s5336 + $0x121] sm:$0xff] %vm5248, %v4908
        %5362 = vst.msk [vmem:[%s5336 + $0x129] sm:$0xff] %vm5248, %v4909
        %5363 = vst.msk [vmem:[%s5336 + $0x139] sm:$0xff] %vm5248, %v4910
        %5364 = vst.msk [vmem:[%s5336 + $0x141] sm:$0xff] %vm5248, %v4911
        %5365 = vst.msk [vmem:[%s5336 + $0x151] sm:$0xff] %vm5248, %v4912
        %5366 = vst.msk [vmem:[%s5336 + $0x159] sm:$0xff] %vm5248, %v4913
        %5367 = vst.msk [vmem:[%s5336 + $0x169] sm:$0xff] %vm5248, %v4914
        %5368 = vst.msk [vmem:[%s5336 + $0x171] sm:$0xff] %vm5248, %v4915
        %5369 = vst.msk [vmem:[%s5336 + $0x1b1] sm:$0xff] %vm5248, %v4916
        %5370 = vst.msk [vmem:[%s5336 + $0x1b9] sm:$0xff] %vm5248, %v4917
        %5371 = vst.msk [vmem:[%s5336 + $0x1c9] sm:$0xff] %vm5248, %v4918
        %5372 = vst.msk [vmem:[%s5336 + $0x1d1] sm:$0xff] %vm5248, %v4919
        %5373 = vst.msk [vmem:[%s5336 + $0x1e1] sm:$0xff] %vm5248, %v4920
        %5374 = vst.msk [vmem:[%s5336 + $0x1e9] sm:$0xff] %vm5248, %v4921
        %5375 = vst.msk [vmem:[%s5336 + $0x1f9] sm:$0xff] %vm5248, %v4922
        %5376 = vst.msk [vmem:[%s5336 + $0x201] sm:$0xff] %vm5248, %v4923
        %5377 = vst.msk [vmem:[%s5336 + $0x211] sm:$0xff] %vm5248, %v4924
        %5378 = vst.msk [vmem:[%s5336 + $0x219] sm:$0xff] %vm5248, %v4925
        %5379 = vst.msk [vmem:[%s5336 + $0x229] sm:$0xff] %vm5248, %v4926
        %5380 = vst.msk [vmem:[%s5336 + $0x231] sm:$0xff] %vm5248, %v4927
        %5381 = vst.msk [vmem:[%s5336 + $0x241] sm:$0xff] %vm5248, %v4928
        %5382 = vst.msk [vmem:[%s5336 + $0x249] sm:$0xff] %vm5248, %v4929
        %5383 = vst.msk [vmem:[%s5336 + $0x259] sm:$0xff] %vm5248, %v4930
        %5384 = vst.msk [vmem:[%s5336 + $0x261] sm:$0xff] %vm5248, %v4931
        %5385 = vst.msk [vmem:[%s5336 + $0x271] sm:$0xff] %vm5248, %v4932
        %5386 = vst.msk [vmem:[%s5336 + $0x279] sm:$0xff] %vm5248, %v4933
        %5387 = vst.msk [vmem:[%s5336 + $0x289] sm:$0xff] %vm5248, %v4934
        %5388 = vst.msk [vmem:[%s5336 + $0x291] sm:$0xff] %vm5248, %v4935
        %5389 = vst.msk [vmem:[%s5336 + $0x2a1] sm:$0xff] %vm5248, %v4936
        %5390 = vst.msk [vmem:[%s5336 + $0x2a9] sm:$0xff] %vm5248, %v4937
        %5391 = vst.msk [vmem:[%s5336 + $0x2b9] sm:$0xff] %vm5248, %v4938
        %5392 = vst.msk [vmem:[%s5336 + $0x2c1] sm:$0xff] %vm5248, %v4939
        %5393 = vst.msk [vmem:[%s5336 + $0x2d1] sm:$0xff] %vm5248, %v4940
        %5394 = vst.msk [vmem:[%s5336 + $0x2d9] sm:$0xff] %vm5248, %v4941
        %5395 = vst.msk [vmem:[%s5336 + $0x2e9] sm:$0xff] %vm5248, %v4942
        %5396 = vst.msk [vmem:[%s5336 + $0x2f1] sm:$0xff] %vm5248, %v4943
        %5397 = vst.msk [vmem:[%s5336 + $0x301] sm:$0xff] %vm5248, %v4944
        %5398 = vst.msk [vmem:[%s5336 + $0x309] sm:$0xff] %vm5248, %v4945
        %5399 = vst.msk [vmem:[%s5336 + $0x319] sm:$0xff] %vm5248, %v4946
        %5400 = vst.msk [vmem:[%s5336 + $0x321] sm:$0xff] %vm5248, %v4947
        %v5401 = vld [vmem:[#allocation3] sm:$0xff]
        %v5402 = vld [vmem:[#allocation3 + $0x8] sm:$0xff]
        %v5403 = vld [vmem:[#allocation3 + $0x10] sm:$0x3]
        %v5404 = vld [vmem:[#allocation3 + $0x18] sm:$0xff]
        %v5405 = vld [vmem:[#allocation3 + $0x20] sm:$0xff]
        %v5406 = vld [vmem:[#allocation3 + $0x28] sm:$0x3]
        %v5407 = vld [vmem:[#allocation3 + $0x30] sm:$0xff]
        %v5408 = vld [vmem:[#allocation3 + $0x38] sm:$0xff]
        %v5409 = vld [vmem:[#allocation3 + $0x40] sm:$0x3]
        %v5410 = vld [vmem:[#allocation3 + $0x48] sm:$0xff]
        %v5411 = vld [vmem:[#allocation3 + $0x50] sm:$0xff]
        %v5412 = vld [vmem:[#allocation3 + $0x58] sm:$0x3]
        %v5413 = vld [vmem:[#allocation3 + $0x60] sm:$0xff]
        %v5414 = vld [vmem:[#allocation3 + $0x68] sm:$0xff]
        %v5415 = vld [vmem:[#allocation3 + $0x70] sm:$0x3]
        %v5416 = vld [vmem:[#allocation3 + $0x78] sm:$0xff]
        %v5417 = vld [vmem:[#allocation3 + $0x80] sm:$0xff]
        %v5418 = vld [vmem:[#allocation3 + $0x88] sm:$0x3]
        %v5419 = vld [vmem:[#allocation3 + $0x90] sm:$0xff]
        %v5420 = vld [vmem:[#allocation3 + $0x98] sm:$0xff]
        %v5421 = vld [vmem:[#allocation3 + $0xa0] sm:$0x3]
        %v5422 = vld [vmem:[#allocation3 + $0xa8] sm:$0xff]
        %v5423 = vld [vmem:[#allocation3 + $0xb0] sm:$0xff]
        %v5424 = vld [vmem:[#allocation3 + $0xb8] sm:$0x3]
        %v5425 = vld [vmem:[#allocation3 + $0xc0] sm:$0xff]
        %v5426 = vld [vmem:[#allocation3 + $0xc8] sm:$0xff]
        %v5427 = vld [vmem:[#allocation3 + $0xd0] sm:$0x3]
        %v5428 = vld [vmem:[#allocation3 + $0xd8] sm:$0xff]
        %v5429 = vld [vmem:[#allocation3 + $0xe0] sm:$0xff]
        %v5430 = vld [vmem:[#allocation3 + $0xe8] sm:$0x3]
        %v5431 = vld [vmem:[#allocation3 + $0xf0] sm:$0xff]
        %v5432 = vld [vmem:[#allocation3 + $0xf8] sm:$0xff]
        %v5433 = vld [vmem:[#allocation3 + $0x100] sm:$0x3]
        %v5434 = vld [vmem:[#allocation3 + $0x108] sm:$0xff]
        %v5435 = vld [vmem:[#allocation3 + $0x110] sm:$0xff]
        %v5436 = vld [vmem:[#allocation3 + $0x118] sm:$0x3]
        %v5437 = vld [vmem:[#allocation3 + $0x120] sm:$0xff]
        %v5438 = vld [vmem:[#allocation3 + $0x128] sm:$0xff]
        %v5439 = vld [vmem:[#allocation3 + $0x130] sm:$0x3]
        %v5440 = vld [vmem:[#allocation3 + $0x138] sm:$0xff]
        %v5441 = vld [vmem:[#allocation3 + $0x140] sm:$0xff]
        %v5442 = vld [vmem:[#allocation3 + $0x148] sm:$0x3]
        %v5443 = vld [vmem:[#allocation3 + $0x150] sm:$0xff]
        %v5444 = vld [vmem:[#allocation3 + $0x158] sm:$0xff]
        %v5445 = vld [vmem:[#allocation3 + $0x160] sm:$0x3]
        %v5446 = vld [vmem:[#allocation3 + $0x168] sm:$0xff]
        %v5447 = vld [vmem:[#allocation3 + $0x170] sm:$0xff]
        %v5448 = vld [vmem:[#allocation3 + $0x178] sm:$0x3]
        %v5449 = vld [vmem:[#allocation3 + $0x180] sm:$0xff]
        %v5450 = vld [vmem:[#allocation3 + $0x188] sm:$0xff]
        %v5451 = vld [vmem:[#allocation3 + $0x190] sm:$0x3]
        %v5452 = vld [vmem:[#allocation3 + $0x198] sm:$0xff]
        %v5453 = vld [vmem:[#allocation3 + $0x1a0] sm:$0xff]
        %v5454 = vld [vmem:[#allocation3 + $0x1a8] sm:$0x3]
        %v5455 = vld [vmem:[#allocation3 + $0x1b0] sm:$0xff]
        %v5456 = vld [vmem:[#allocation3 + $0x1b8] sm:$0xff]
        %v5457 = vld [vmem:[#allocation3 + $0x1c0] sm:$0x3]
        %v5458 = vld [vmem:[#allocation3 + $0x1c8] sm:$0xff]
        %v5459 = vld [vmem:[#allocation3 + $0x1d0] sm:$0xff]
        %v5460 = vld [vmem:[#allocation3 + $0x1d8] sm:$0x3]
        %v5461 = vld [vmem:[#allocation3 + $0x1e0] sm:$0xff]
        %v5462 = vld [vmem:[#allocation3 + $0x1e8] sm:$0xff]
        %v5463 = vld [vmem:[#allocation3 + $0x1f0] sm:$0x3]
        %v5464 = vld [vmem:[#allocation3 + $0x1f8] sm:$0xff]
        %v5465 = vld [vmem:[#allocation3 + $0x200] sm:$0xff]
        %v5466 = vld [vmem:[#allocation3 + $0x208] sm:$0x3]
        %v5467 = vld [vmem:[#allocation3 + $0x210] sm:$0xff]
        %v5468 = vld [vmem:[#allocation3 + $0x218] sm:$0xff]
        %v5469 = vld [vmem:[#allocation3 + $0x220] sm:$0x3]
        %v5470 = vld [vmem:[#allocation3 + $0x228] sm:$0xff]
        %v5471 = vld [vmem:[#allocation3 + $0x230] sm:$0xff]
        %v5472 = vld [vmem:[#allocation3 + $0x238] sm:$0x3]
        %v5473 = vld [vmem:[#allocation3 + $0x240] sm:$0xff]
        %v5474 = vld [vmem:[#allocation3 + $0x248] sm:$0xff]
        %v5475 = vld [vmem:[#allocation3 + $0x250] sm:$0x3]
        %v5476 = vld [vmem:[#allocation3 + $0x258] sm:$0xff]
        %v5477 = vld [vmem:[#allocation3 + $0x260] sm:$0xff]
        %v5478 = vld [vmem:[#allocation3 + $0x268] sm:$0x3]
        %v5479 = vld [vmem:[#allocation3 + $0x270] sm:$0xff]
        %v5480 = vld [vmem:[#allocation3 + $0x278] sm:$0xff]
        %v5481 = vld [vmem:[#allocation3 + $0x280] sm:$0x3]
        %v5482 = vld [vmem:[#allocation3 + $0x288] sm:$0xff]
        %v5483 = vld [vmem:[#allocation3 + $0x290] sm:$0xff]
        %v5484 = vld [vmem:[#allocation3 + $0x298] sm:$0x3]
        %v5485 = vld [vmem:[#allocation3 + $0x2a0] sm:$0xff]
        %v5486 = vld [vmem:[#allocation3 + $0x2a8] sm:$0xff]
        %v5487 = vld [vmem:[#allocation3 + $0x2b0] sm:$0x3]
        %v5488 = vld [vmem:[#allocation3 + $0x2b8] sm:$0xff]
        %v5489 = vld [vmem:[#allocation3 + $0x2c0] sm:$0xff]
        %v5490 = vld [vmem:[#allocation3 + $0x2c8] sm:$0x3]
        %v5491 = vld [vmem:[#allocation3 + $0x2d0] sm:$0xff]
        %v5492 = vld [vmem:[#allocation3 + $0x2d8] sm:$0xff]
        %v5493 = vld [vmem:[#allocation3 + $0x2e0] sm:$0x3]
        %v5494 = vld [vmem:[#allocation3 + $0x2e8] sm:$0xff]
        %v5495 = vld [vmem:[#allocation3 + $0x2f0] sm:$0xff]
        %v5496 = vld [vmem:[#allocation3 + $0x2f8] sm:$0x3]
        %v5497 = vld [vmem:[#allocation3 + $0x300] sm:$0xff]
        %v5498 = vld [vmem:[#allocation3 + $0x308] sm:$0xff]
        %v5499 = vld [vmem:[#allocation3 + $0x310] sm:$0x3]
        %v5500 = vld [vmem:[#allocation3 + $0x318] sm:$0xff]
        %v5501 = vld [vmem:[#allocation3 + $0x320] sm:$0xff]
        %v5502 = vld [vmem:[#allocation3 + $0x328] sm:$0x3]
        %v5503 = vld [vmem:[#allocation3 + $0x330] sm:$0xff]
        %v5504 = vld [vmem:[#allocation3 + $0x338] sm:$0xff]
        %v5505 = vld [vmem:[#allocation3 + $0x340] sm:$0x3]
        %v5506 = vld [vmem:[#allocation3 + $0x348] sm:$0xff]
        %v5507 = vld [vmem:[#allocation3 + $0x350] sm:$0xff]
        %v5508 = vld [vmem:[#allocation3 + $0x358] sm:$0x3]
        %v5509 = vpack.c.bf16 %v5402, %v5401
        %v5510 = vpack.c.bf16 %v5405, %v5404
        %v5511 = vpack.c.bf16 %v5408, %v5407
        %v5512 = vpack.c.bf16 %v5411, %v5410
        %v5513 = vpack.c.bf16 %v5414, %v5413
        %v5514 = vpack.c.bf16 %v5417, %v5416
        %v5515 = vpack.c.bf16 %v5420, %v5419
        %v5516 = vpack.c.bf16 %v5423, %v5422
        %v5517 = vpack.c.bf16 %v5426, %v5425
        %v5518 = vpack.c.bf16 %v5429, %v5428
        %v5519 = vpack.c.bf16 %v5432, %v5431
        %v5520 = vpack.c.bf16 %v5435, %v5434
        %v5521 = vpack.c.bf16 %v5438, %v5437
        %v5522 = vpack.c.bf16 %v5441, %v5440
        %v5523 = vpack.c.bf16 %v5444, %v5443
        %v5524 = vpack.c.bf16 %v5447, %v5446
        %v5525 = vpack.c.bf16 %v5456, %v5455
        %v5526 = vpack.c.bf16 %v5459, %v5458
        %v5527 = vpack.c.bf16 %v5462, %v5461
        %v5528 = vpack.c.bf16 %v5465, %v5464
        %v5529 = vpack.c.bf16 %v5468, %v5467
        %v5530 = vpack.c.bf16 %v5471, %v5470
        %v5531 = vpack.c.bf16 %v5474, %v5473
        %v5532 = vpack.c.bf16 %v5477, %v5476
        %v5533 = vpack.c.bf16 %v5480, %v5479
        %v5534 = vpack.c.bf16 %v5483, %v5482
        %v5535 = vpack.c.bf16 %v5486, %v5485
        %v5536 = vpack.c.bf16 %v5489, %v5488
        %v5537 = vpack.c.bf16 %v5492, %v5491
        %v5538 = vpack.c.bf16 %v5495, %v5494
        %v5539 = vpack.c.bf16 %v5498, %v5497
        %v5540 = vpack.c.bf16 %v5501, %v5500
        %v5637 = vrot.slane %v5401, 1
        %v5638 = vrot.slane %v5402, 1
        %v5639 = vsel %vm801, %v5637, %v5638
        %v5640 = vrot.slane %v5403, 1
        %v5641 = vsel %vm801, %v5638, %v5640
        %v5642 = vrot.slane %v5404, 1
        %v5643 = vrot.slane %v5405, 1
        %v5644 = vsel %vm801, %v5642, %v5643
        %v5645 = vrot.slane %v5406, 1
        %v5646 = vsel %vm801, %v5643, %v5645
        %v5647 = vrot.slane %v5407, 1
        %v5648 = vrot.slane %v5408, 1
        %v5649 = vsel %vm801, %v5647, %v5648
        %v5650 = vrot.slane %v5409, 1
        %v5651 = vsel %vm801, %v5648, %v5650
        %v5652 = vrot.slane %v5410, 1
        %v5653 = vrot.slane %v5411, 1
        %v5654 = vsel %vm801, %v5652, %v5653
        %v5655 = vrot.slane %v5412, 1
        %v5656 = vsel %vm801, %v5653, %v5655
        %v5657 = vrot.slane %v5413, 1
        %v5658 = vrot.slane %v5414, 1
        %v5659 = vsel %vm801, %v5657, %v5658
        %v5660 = vrot.slane %v5415, 1
        %v5661 = vsel %vm801, %v5658, %v5660
        %v5662 = vrot.slane %v5416, 1
        %v5663 = vrot.slane %v5417, 1
        %v5664 = vsel %vm801, %v5662, %v5663
        %v5665 = vrot.slane %v5418, 1
        %v5666 = vsel %vm801, %v5663, %v5665
        %v5667 = vrot.slane %v5419, 1
        %v5668 = vrot.slane %v5420, 1
        %v5669 = vsel %vm801, %v5667, %v5668
        %v5670 = vrot.slane %v5421, 1
        %v5671 = vsel %vm801, %v5668, %v5670
        %v5672 = vrot.slane %v5422, 1
        %v5673 = vrot.slane %v5423, 1
        %v5674 = vsel %vm801, %v5672, %v5673
        %v5675 = vrot.slane %v5424, 1
        %v5676 = vsel %vm801, %v5673, %v5675
        %v5677 = vrot.slane %v5425, 1
        %v5678 = vrot.slane %v5426, 1
        %v5679 = vsel %vm801, %v5677, %v5678
        %v5680 = vrot.slane %v5427, 1
        %v5681 = vsel %vm801, %v5678, %v5680
        %v5682 = vrot.slane %v5428, 1
        %v5683 = vrot.slane %v5429, 1
        %v5684 = vsel %vm801, %v5682, %v5683
        %v5685 = vrot.slane %v5430, 1
        %v5686 = vsel %vm801, %v5683, %v5685
        %v5687 = vrot.slane %v5431, 1
        %v5688 = vrot.slane %v5432, 1
        %v5689 = vsel %vm801, %v5687, %v5688
        %v5690 = vrot.slane %v5433, 1
        %v5691 = vsel %vm801, %v5688, %v5690
        %v5692 = vrot.slane %v5434, 1
        %v5693 = vrot.slane %v5435, 1
        %v5694 = vsel %vm801, %v5692, %v5693
        %v5695 = vrot.slane %v5436, 1
        %v5696 = vsel %vm801, %v5693, %v5695
        %v5697 = vrot.slane %v5437, 1
        %v5698 = vrot.slane %v5438, 1
        %v5699 = vsel %vm801, %v5697, %v5698
        %v5700 = vrot.slane %v5439, 1
        %v5701 = vsel %vm801, %v5698, %v5700
        %v5702 = vrot.slane %v5440, 1
        %v5703 = vrot.slane %v5441, 1
        %v5704 = vsel %vm801, %v5702, %v5703
        %v5705 = vrot.slane %v5442, 1
        %v5706 = vsel %vm801, %v5703, %v5705
        %v5707 = vrot.slane %v5443, 1
        %v5708 = vrot.slane %v5444, 1
        %v5709 = vsel %vm801, %v5707, %v5708
        %v5710 = vrot.slane %v5445, 1
        %v5711 = vsel %vm801, %v5708, %v5710
        %v5712 = vrot.slane %v5446, 1
        %v5713 = vrot.slane %v5447, 1
        %v5714 = vsel %vm801, %v5712, %v5713
        %v5715 = vrot.slane %v5448, 1
        %v5716 = vsel %vm801, %v5713, %v5715
        %v5717 = vrot.slane %v5455, 1
        %v5718 = vrot.slane %v5456, 1
        %v5719 = vsel %vm801, %v5717, %v5718
        %v5720 = vrot.slane %v5457, 1
        %v5721 = vsel %vm801, %v5718, %v5720
        %v5722 = vrot.slane %v5458, 1
        %v5723 = vrot.slane %v5459, 1
        %v5724 = vsel %vm801, %v5722, %v5723
        %v5725 = vrot.slane %v5460, 1
        %v5726 = vsel %vm801, %v5723, %v5725
        %v5727 = vrot.slane %v5461, 1
        %v5728 = vrot.slane %v5462, 1
        %v5729 = vsel %vm801, %v5727, %v5728
        %v5730 = vrot.slane %v5463, 1
        %v5731 = vsel %vm801, %v5728, %v5730
        %v5732 = vrot.slane %v5464, 1
        %v5733 = vrot.slane %v5465, 1
        %v5734 = vsel %vm801, %v5732, %v5733
        %v5735 = vrot.slane %v5466, 1
        %v5736 = vsel %vm801, %v5733, %v5735
        %v5737 = vrot.slane %v5467, 1
        %v5738 = vrot.slane %v5468, 1
        %v5739 = vsel %vm801, %v5737, %v5738
        %v5740 = vrot.slane %v5469, 1
        %v5741 = vsel %vm801, %v5738, %v5740
        %v5742 = vrot.slane %v5470, 1
        %v5743 = vrot.slane %v5471, 1
        %v5744 = vsel %vm801, %v5742, %v5743
        %v5745 = vrot.slane %v5472, 1
        %v5746 = vsel %vm801, %v5743, %v5745
        %v5747 = vrot.slane %v5473, 1
        %v5748 = vrot.slane %v5474, 1
        %v5749 = vsel %vm801, %v5747, %v5748
        %v5750 = vrot.slane %v5475, 1
        %v5751 = vsel %vm801, %v5748, %v5750
        %v5752 = vrot.slane %v5476, 1
        %v5753 = vrot.slane %v5477, 1
        %v5754 = vsel %vm801, %v5752, %v5753
        %v5755 = vrot.slane %v5478, 1
        %v5756 = vsel %vm801, %v5753, %v5755
        %v5757 = vrot.slane %v5479, 1
        %v5758 = vrot.slane %v5480, 1
        %v5759 = vsel %vm801, %v5757, %v5758
        %v5760 = vrot.slane %v5481, 1
        %v5761 = vsel %vm801, %v5758, %v5760
        %v5762 = vrot.slane %v5482, 1
        %v5763 = vrot.slane %v5483, 1
        %v5764 = vsel %vm801, %v5762, %v5763
        %v5765 = vrot.slane %v5484, 1
        %v5766 = vsel %vm801, %v5763, %v5765
        %v5767 = vrot.slane %v5485, 1
        %v5768 = vrot.slane %v5486, 1
        %v5769 = vsel %vm801, %v5767, %v5768
        %v5770 = vrot.slane %v5487, 1
        %v5771 = vsel %vm801, %v5768, %v5770
        %v5772 = vrot.slane %v5488, 1
        %v5773 = vrot.slane %v5489, 1
        %v5774 = vsel %vm801, %v5772, %v5773
        %v5775 = vrot.slane %v5490, 1
        %v5776 = vsel %vm801, %v5773, %v5775
        %v5777 = vrot.slane %v5491, 1
        %v5778 = vrot.slane %v5492, 1
        %v5779 = vsel %vm801, %v5777, %v5778
        %v5780 = vrot.slane %v5493, 1
        %v5781 = vsel %vm801, %v5778, %v5780
        %v5782 = vrot.slane %v5494, 1
        %v5783 = vrot.slane %v5495, 1
        %v5784 = vsel %vm801, %v5782, %v5783
        %v5785 = vrot.slane %v5496, 1
        %v5786 = vsel %vm801, %v5783, %v5785
        %v5787 = vrot.slane %v5497, 1
        %v5788 = vrot.slane %v5498, 1
        %v5789 = vsel %vm801, %v5787, %v5788
        %v5790 = vrot.slane %v5499, 1
        %v5791 = vsel %vm801, %v5788, %v5790
        %v5792 = vrot.slane %v5500, 1
        %v5793 = vrot.slane %v5501, 1
        %v5794 = vsel %vm801, %v5792, %v5793
        %v5795 = vrot.slane %v5502, 1
        %v5796 = vsel %vm801, %v5793, %v5795
        %v5861 = vpack.c.bf16 %v5641, %v5639
        %v5862 = vpack.c.bf16 %v5646, %v5644
        %v5863 = vpack.c.bf16 %v5651, %v5649
        %v5864 = vpack.c.bf16 %v5656, %v5654
        %v5865 = vpack.c.bf16 %v5661, %v5659
        %v5866 = vpack.c.bf16 %v5666, %v5664
        %v5867 = vpack.c.bf16 %v5671, %v5669
        %v5868 = vpack.c.bf16 %v5676, %v5674
        %v5869 = vpack.c.bf16 %v5681, %v5679
        %v5870 = vpack.c.bf16 %v5686, %v5684
        %v5871 = vpack.c.bf16 %v5691, %v5689
        %v5872 = vpack.c.bf16 %v5696, %v5694
        %v5873 = vpack.c.bf16 %v5701, %v5699
        %v5874 = vpack.c.bf16 %v5706, %v5704
        %v5875 = vpack.c.bf16 %v5711, %v5709
        %v5876 = vpack.c.bf16 %v5716, %v5714
        %v5877 = vpack.c.bf16 %v5721, %v5719
        %v5878 = vpack.c.bf16 %v5726, %v5724
        %v5879 = vpack.c.bf16 %v5731, %v5729
        %v5880 = vpack.c.bf16 %v5736, %v5734
        %v5881 = vpack.c.bf16 %v5741, %v5739
        %v5882 = vpack.c.bf16 %v5746, %v5744
        %v5883 = vpack.c.bf16 %v5751, %v5749
        %v5884 = vpack.c.bf16 %v5756, %v5754
        %v5885 = vpack.c.bf16 %v5761, %v5759
        %v5886 = vpack.c.bf16 %v5766, %v5764
        %v5887 = vpack.c.bf16 %v5771, %v5769
        %v5888 = vpack.c.bf16 %v5776, %v5774
        %v5889 = vpack.c.bf16 %v5781, %v5779
        %v5890 = vpack.c.bf16 %v5786, %v5784
        %v5891 = vpack.c.bf16 %v5791, %v5789
        %v5892 = vpack.c.bf16 %v5796, %v5794
        %v5893 = vrot.slane %v5401, 2
        %v5894 = vrot.slane %v5402, 2
        %v5895 = vsel %vm1058, %v5893, %v5894
        %v5896 = vrot.slane %v5403, 2
        %v5897 = vsel %vm1058, %v5894, %v5896
        %v5898 = vrot.slane %v5404, 2
        %v5899 = vrot.slane %v5405, 2
        %v5900 = vsel %vm1058, %v5898, %v5899
        %v5901 = vrot.slane %v5406, 2
        %v5902 = vsel %vm1058, %v5899, %v5901
        %v5903 = vrot.slane %v5407, 2
        %v5904 = vrot.slane %v5408, 2
        %v5905 = vsel %vm1058, %v5903, %v5904
        %v5906 = vrot.slane %v5409, 2
        %v5907 = vsel %vm1058, %v5904, %v5906
        %v5908 = vrot.slane %v5410, 2
        %v5909 = vrot.slane %v5411, 2
        %v5910 = vsel %vm1058, %v5908, %v5909
        %v5911 = vrot.slane %v5412, 2
        %v5912 = vsel %vm1058, %v5909, %v5911
        %v5913 = vrot.slane %v5413, 2
        %v5914 = vrot.slane %v5414, 2
        %v5915 = vsel %vm1058, %v5913, %v5914
        %v5916 = vrot.slane %v5415, 2
        %v5917 = vsel %vm1058, %v5914, %v5916
        %v5918 = vrot.slane %v5416, 2
        %v5919 = vrot.slane %v5417, 2
        %v5920 = vsel %vm1058, %v5918, %v5919
        %v5921 = vrot.slane %v5418, 2
        %v5922 = vsel %vm1058, %v5919, %v5921
        %v5923 = vrot.slane %v5419, 2
        %v5924 = vrot.slane %v5420, 2
        %v5925 = vsel %vm1058, %v5923, %v5924
        %v5926 = vrot.slane %v5421, 2
        %v5927 = vsel %vm1058, %v5924, %v5926
        %v5928 = vrot.slane %v5422, 2
        %v5929 = vrot.slane %v5423, 2
        %v5930 = vsel %vm1058, %v5928, %v5929
        %v5931 = vrot.slane %v5424, 2
        %v5932 = vsel %vm1058, %v5929, %v5931
        %v5933 = vrot.slane %v5425, 2
        %v5934 = vrot.slane %v5426, 2
        %v5935 = vsel %vm1058, %v5933, %v5934
        %v5936 = vrot.slane %v5427, 2
        %v5937 = vsel %vm1058, %v5934, %v5936
        %v5938 = vrot.slane %v5428, 2
        %v5939 = vrot.slane %v5429, 2
        %v5940 = vsel %vm1058, %v5938, %v5939
        %v5941 = vrot.slane %v5430, 2
        %v5942 = vsel %vm1058, %v5939, %v5941
        %v5943 = vrot.slane %v5431, 2
        %v5944 = vrot.slane %v5432, 2
        %v5945 = vsel %vm1058, %v5943, %v5944
        %v5946 = vrot.slane %v5433, 2
        %v5947 = vsel %vm1058, %v5944, %v5946
        %v5948 = vrot.slane %v5434, 2
        %v5949 = vrot.slane %v5435, 2
        %v5950 = vsel %vm1058, %v5948, %v5949
        %v5951 = vrot.slane %v5436, 2
        %v5952 = vsel %vm1058, %v5949, %v5951
        %v5953 = vrot.slane %v5437, 2
        %v5954 = vrot.slane %v5438, 2
        %v5955 = vsel %vm1058, %v5953, %v5954
        %v5956 = vrot.slane %v5439, 2
        %v5957 = vsel %vm1058, %v5954, %v5956
        %v5958 = vrot.slane %v5440, 2
        %v5959 = vrot.slane %v5441, 2
        %v5960 = vsel %vm1058, %v5958, %v5959
        %v5961 = vrot.slane %v5442, 2
        %v5962 = vsel %vm1058, %v5959, %v5961
        %v5963 = vrot.slane %v5443, 2
        %v5964 = vrot.slane %v5444, 2
        %v5965 = vsel %vm1058, %v5963, %v5964
        %v5966 = vrot.slane %v5445, 2
        %v5967 = vsel %vm1058, %v5964, %v5966
        %v5968 = vrot.slane %v5446, 2
        %v5969 = vrot.slane %v5447, 2
        %v5970 = vsel %vm1058, %v5968, %v5969
        %v5971 = vrot.slane %v5448, 2
        %v5972 = vsel %vm1058, %v5969, %v5971
        %v5973 = vrot.slane %v5455, 2
        %v5974 = vrot.slane %v5456, 2
        %v5975 = vsel %vm1058, %v5973, %v5974
        %v5976 = vrot.slane %v5457, 2
        %v5977 = vsel %vm1058, %v5974, %v5976
        %v5978 = vrot.slane %v5458, 2
        %v5979 = vrot.slane %v5459, 2
        %v5980 = vsel %vm1058, %v5978, %v5979
        %v5981 = vrot.slane %v5460, 2
        %v5982 = vsel %vm1058, %v5979, %v5981
        %v5983 = vrot.slane %v5461, 2
        %v5984 = vrot.slane %v5462, 2
        %v5985 = vsel %vm1058, %v5983, %v5984
        %v5986 = vrot.slane %v5463, 2
        %v5987 = vsel %vm1058, %v5984, %v5986
        %v5988 = vrot.slane %v5464, 2
        %v5989 = vrot.slane %v5465, 2
        %v5990 = vsel %vm1058, %v5988, %v5989
        %v5991 = vrot.slane %v5466, 2
        %v5992 = vsel %vm1058, %v5989, %v5991
        %v5993 = vrot.slane %v5467, 2
        %v5994 = vrot.slane %v5468, 2
        %v5995 = vsel %vm1058, %v5993, %v5994
        %v5996 = vrot.slane %v5469, 2
        %v5997 = vsel %vm1058, %v5994, %v5996
        %v5998 = vrot.slane %v5470, 2
        %v5999 = vrot.slane %v5471, 2
        %v6000 = vsel %vm1058, %v5998, %v5999
        %v6001 = vrot.slane %v5472, 2
        %v6002 = vsel %vm1058, %v5999, %v6001
        %v6003 = vrot.slane %v5473, 2
        %v6004 = vrot.slane %v5474, 2
        %v6005 = vsel %vm1058, %v6003, %v6004
        %v6006 = vrot.slane %v5475, 2
        %v6007 = vsel %vm1058, %v6004, %v6006
        %v6008 = vrot.slane %v5476, 2
        %v6009 = vrot.slane %v5477, 2
        %v6010 = vsel %vm1058, %v6008, %v6009
        %v6011 = vrot.slane %v5478, 2
        %v6012 = vsel %vm1058, %v6009, %v6011
        %v6013 = vrot.slane %v5479, 2
        %v6014 = vrot.slane %v5480, 2
        %v6015 = vsel %vm1058, %v6013, %v6014
        %v6016 = vrot.slane %v5481, 2
        %v6017 = vsel %vm1058, %v6014, %v6016
        %v6018 = vrot.slane %v5482, 2
        %v6019 = vrot.slane %v5483, 2
        %v6020 = vsel %vm1058, %v6018, %v6019
        %v6021 = vrot.slane %v5484, 2
        %v6022 = vsel %vm1058, %v6019, %v6021
        %v6023 = vrot.slane %v5485, 2
        %v6024 = vrot.slane %v5486, 2
        %v6025 = vsel %vm1058, %v6023, %v6024
        %v6026 = vrot.slane %v5487, 2
        %v6027 = vsel %vm1058, %v6024, %v6026
        %v6028 = vrot.slane %v5488, 2
        %v6029 = vrot.slane %v5489, 2
        %v6030 = vsel %vm1058, %v6028, %v6029
        %v6031 = vrot.slane %v5490, 2
        %v6032 = vsel %vm1058, %v6029, %v6031
        %v6033 = vrot.slane %v5491, 2
        %v6034 = vrot.slane %v5492, 2
        %v6035 = vsel %vm1058, %v6033, %v6034
        %v6036 = vrot.slane %v5493, 2
        %v6037 = vsel %vm1058, %v6034, %v6036
        %v6038 = vrot.slane %v5494, 2
        %v6039 = vrot.slane %v5495, 2
        %v6040 = vsel %vm1058, %v6038, %v6039
        %v6041 = vrot.slane %v5496, 2
        %v6042 = vsel %vm1058, %v6039, %v6041
        %v6043 = vrot.slane %v5497, 2
        %v6044 = vrot.slane %v5498, 2
        %v6045 = vsel %vm1058, %v6043, %v6044
        %v6046 = vrot.slane %v5499, 2
        %v6047 = vsel %vm1058, %v6044, %v6046
        %v6048 = vrot.slane %v5500, 2
        %v6049 = vrot.slane %v5501, 2
        %v6050 = vsel %vm1058, %v6048, %v6049
        %v6051 = vrot.slane %v5502, 2
        %v6052 = vsel %vm1058, %v6049, %v6051
        %v6117 = vpack.c.bf16 %v5897, %v5895
        %v6118 = vpack.c.bf16 %v5902, %v5900
        %v6119 = vpack.c.bf16 %v5907, %v5905
        %v6120 = vpack.c.bf16 %v5912, %v5910
        %v6121 = vpack.c.bf16 %v5917, %v5915
        %v6122 = vpack.c.bf16 %v5922, %v5920
        %v6123 = vpack.c.bf16 %v5927, %v5925
        %v6124 = vpack.c.bf16 %v5932, %v5930
        %v6125 = vpack.c.bf16 %v5937, %v5935
        %v6126 = vpack.c.bf16 %v5942, %v5940
        %v6127 = vpack.c.bf16 %v5947, %v5945
        %v6128 = vpack.c.bf16 %v5952, %v5950
        %v6129 = vpack.c.bf16 %v5957, %v5955
        %v6130 = vpack.c.bf16 %v5962, %v5960
        %v6131 = vpack.c.bf16 %v5967, %v5965
        %v6132 = vpack.c.bf16 %v5972, %v5970
        %v6133 = vpack.c.bf16 %v5977, %v5975
        %v6134 = vpack.c.bf16 %v5982, %v5980
        %v6135 = vpack.c.bf16 %v5987, %v5985
        %v6136 = vpack.c.bf16 %v5992, %v5990
        %v6137 = vpack.c.bf16 %v5997, %v5995
        %v6138 = vpack.c.bf16 %v6002, %v6000
        %v6139 = vpack.c.bf16 %v6007, %v6005
        %v6140 = vpack.c.bf16 %v6012, %v6010
        %v6141 = vpack.c.bf16 %v6017, %v6015
        %v6142 = vpack.c.bf16 %v6022, %v6020
        %v6143 = vpack.c.bf16 %v6027, %v6025
        %v6144 = vpack.c.bf16 %v6032, %v6030
        %v6145 = vpack.c.bf16 %v6037, %v6035
        %v6146 = vpack.c.bf16 %v6042, %v6040
        %v6147 = vpack.c.bf16 %v6047, %v6045
        %v6148 = vpack.c.bf16 %v6052, %v6050
        %v6149 = vpack.c.bf16 %v5450, %v5449
        %v6150 = vpack.c.bf16 %v5504, %v5503
        %v6157 = vrot.slane %v5449, 1
        %v6158 = vrot.slane %v5450, 1
        %v6159 = vsel %vm801, %v6157, %v6158
        %v6160 = vrot.slane %v5451, 1
        %v6161 = vsel %vm801, %v6158, %v6160
        %v6162 = vrot.slane %v5503, 1
        %v6163 = vrot.slane %v5504, 1
        %v6164 = vsel %vm801, %v6162, %v6163
        %v6165 = vrot.slane %v5505, 1
        %v6166 = vsel %vm801, %v6163, %v6165
        %v6171 = vpack.c.bf16 %v6161, %v6159
        %v6172 = vpack.c.bf16 %v6166, %v6164
        %v6173 = vrot.slane %v5449, 2
        %v6174 = vrot.slane %v5450, 2
        %v6175 = vsel %vm1058, %v6173, %v6174
        %v6176 = vrot.slane %v5451, 2
        %v6177 = vsel %vm1058, %v6174, %v6176
        %v6178 = vrot.slane %v5503, 2
        %v6179 = vrot.slane %v5504, 2
        %v6180 = vsel %vm1058, %v6178, %v6179
        %v6181 = vrot.slane %v5505, 2
        %v6182 = vsel %vm1058, %v6179, %v6181
        %v6187 = vpack.c.bf16 %v6177, %v6175
        %v6188 = vpack.c.bf16 %v6182, %v6180
        %v6189 = vpack.c.bf16 %v5453, %v5452
        %v6190 = vpack.c.bf16 %v5507, %v5506
        %v6197 = vrot.slane %v5452, 1
        %v6198 = vrot.slane %v5453, 1
        %v6199 = vsel %vm801, %v6197, %v6198
        %v6200 = vrot.slane %v5454, 1
        %v6201 = vsel %vm801, %v6198, %v6200
        %v6202 = vrot.slane %v5506, 1
        %v6203 = vrot.slane %v5507, 1
        %v6204 = vsel %vm801, %v6202, %v6203
        %v6205 = vrot.slane %v5508, 1
        %v6206 = vsel %vm801, %v6203, %v6205
        %v6211 = vpack.c.bf16 %v6201, %v6199
        %v6212 = vpack.c.bf16 %v6206, %v6204
        %v6213 = vrot.slane %v5452, 2
        %v6214 = vrot.slane %v5453, 2
        %v6215 = vsel %vm1058, %v6213, %v6214
        %v6216 = vrot.slane %v5454, 2
        %v6217 = vsel %vm1058, %v6214, %v6216
        %v6218 = vrot.slane %v5506, 2
        %v6219 = vrot.slane %v5507, 2
        %v6220 = vsel %vm1058, %v6218, %v6219
        %v6221 = vrot.slane %v5508, 2
        %v6222 = vsel %vm1058, %v6219, %v6221
        %v6227 = vpack.c.bf16 %v6217, %v6215
        %v6228 = vpack.c.bf16 %v6222, %v6220
        %v6229 = vld [vmem:[%s3] sm:$0xf]
        %s6230 = scalar_lea.vmem %s3, 4
        %v6231 = vld [vmem:[%s6230] sm:$0xf]
        %v6233 = vsel %vm5248, %v5861, 0
        %v6236 = vsel %vm5248, %v5862, 0
        %v6239 = vsel %vm5248, %v5863, 0
        %v6242 = vsel %vm5248, %v5864, 0
        %v6245 = vsel %vm5248, %v5865, 0
        %v6248 = vsel %vm5248, %v5866, 0
        %v6251 = vsel %vm5248, %v5867, 0
        %v6254 = vsel %vm5248, %v5868, 0
        %v6257 = vsel %vm5248, %v5869, 0
        %v6260 = vsel %vm5248, %v5870, 0
        %v6263 = vsel %vm5248, %v5871, 0
        %v6266 = vsel %vm5248, %v5872, 0
        %v6269 = vsel %vm5248, %v5873, 0
        %v6272 = vsel %vm5248, %v5874, 0
        %v6275 = vsel %vm5248, %v5875, 0
        %v6278 = vsel %vm5248, %v5876, 0
        %v6281 = vsel %vm5248, %v5877, 0
        %v6284 = vsel %vm5248, %v5878, 0
        %v6287 = vsel %vm5248, %v5879, 0
        %v6290 = vsel %vm5248, %v5880, 0
        %v6293 = vsel %vm5248, %v5881, 0
        %v6296 = vsel %vm5248, %v5882, 0
        %v6299 = vsel %vm5248, %v5883, 0
        %v6302 = vsel %vm5248, %v5884, 0
        %v6305 = vsel %vm5248, %v5885, 0
        %v6308 = vsel %vm5248, %v5886, 0
        %v6311 = vsel %vm5248, %v5887, 0
        %v6314 = vsel %vm5248, %v5888, 0
        %v6317 = vsel %vm5248, %v5889, 0
        %v6320 = vsel %vm5248, %v5890, 0
        %v6323 = vsel %vm5248, %v5891, 0
        %v6326 = vsel %vm5248, %v5892, 0
        %vm6328 = vcmask 1043456
        %v6330 = vsel %vm6328, %v6231, 0
        %6332 = vmatprep.subr.bf16.mxu0 0
        %6333 = vmatpush1.bf16.msra.mxu0 0
        %6334 = vmatprep.subr.bf16.mxu0 0
        %6335 = vmatpush1.bf16.msra.mxu0 0
        %6336 = vmatprep.subr.bf16.mxu0 0
        %6337 = vmatpush1.bf16.msra.mxu0 0
        %6338 = vmatprep.subr.bf16.mxu0 0
        %6339 = vmatpush1.bf16.msra.mxu0 0
        %6340 = vmatprep.subr.bf16.mxu0 0
        %6341 = vmatpush1.bf16.msra.mxu0 0
        %6342 = vmatprep.subr.bf16.mxu0 0
        %6343 = vmatpush1.bf16.msra.mxu0 0
        %6344 = vmatprep.subr.bf16.mxu0 0
        %6345 = vmatpush1.bf16.msra.mxu0 0
        %6346 = vmatprep.subr.bf16.mxu0 0
        %6347 = vmatpush1.bf16.msra.mxu0 %v6330
        %6348 = vmatprep.subr.bf16.mxu0 0
        %6349 = vmatpush2.bf16.msra.mxu0 0
        %6350 = vmatprep.subr.bf16.mxu0 0
        %6351 = vmatpush2.bf16.msra.mxu0 0
        %6352 = vmatprep.subr.bf16.mxu0 0
        %6353 = vmatpush2.bf16.msra.mxu0 0
        %6354 = vmatprep.subr.bf16.mxu0 0
        %6355 = vmatpush2.bf16.msra.mxu0 0
        %6356 = vmatprep.subr.bf16.mxu0 0
        %6357 = vmatpush2.bf16.msra.mxu0 0
        %6358 = vmatprep.subr.bf16.mxu0 0
        %6359 = vmatpush2.bf16.msra.mxu0 0
        %6360 = vmatprep.subr.bf16.mxu0 0
        %6361 = vmatpush2.bf16.msra.mxu0 0
        %6362 = vmatprep.subr.bf16.mxu0 0
        %6363 = vmatpush2.bf16.msra.mxu0 0
        %6364 = vmatprep.mubr.bf16.mxu0 0
        %6365 = vmatmul.mubr.bf16.gmra.mxu0 %v6233
        %v6366 = vpop.f32.mrf.mxu0
        %v6367 = vadd.f32 0.0, %v6366
        %v6368 = vpop.f32.mrf.mxu0
        %v6369 = vpop.f32.mrf.mxu0
        %v6370 = vadd.f32 0.0, %v6369
        %v6371 = vpop.f32.mrf.mxu0
        %6372 = vmatprep.mubr.bf16.mxu0 0
        %6373 = vmatmul.mubr.bf16.gmra.mxu0 %v6236
        %v6374 = vpop.f32.mrf.mxu0
        %v6375 = vadd.f32 0.0, %v6374
        %v6376 = vpop.f32.mrf.mxu0
        %v6377 = vpop.f32.mrf.mxu0
        %v6378 = vadd.f32 0.0, %v6377
        %v6379 = vpop.f32.mrf.mxu0
        %6380 = vmatprep.mubr.bf16.mxu0 0
        %6381 = vmatmul.mubr.bf16.gmra.mxu0 %v6239
        %v6382 = vpop.f32.mrf.mxu0
        %v6383 = vadd.f32 0.0, %v6382
        %v6384 = vpop.f32.mrf.mxu0
        %v6385 = vpop.f32.mrf.mxu0
        %v6386 = vadd.f32 0.0, %v6385
        %v6387 = vpop.f32.mrf.mxu0
        %6388 = vmatprep.mubr.bf16.mxu0 0
        %6389 = vmatmul.mubr.bf16.gmra.mxu0 %v6242
        %v6390 = vpop.f32.mrf.mxu0
        %v6391 = vadd.f32 0.0, %v6390
        %v6392 = vpop.f32.mrf.mxu0
        %v6393 = vpop.f32.mrf.mxu0
        %v6394 = vadd.f32 0.0, %v6393
        %v6395 = vpop.f32.mrf.mxu0
        %6396 = vmatprep.mubr.bf16.mxu0 0
        %6397 = vmatmul.mubr.bf16.gmra.mxu0 %v6245
        %v6398 = vpop.f32.mrf.mxu0
        %v6399 = vadd.f32 0.0, %v6398
        %v6400 = vpop.f32.mrf.mxu0
        %v6401 = vpop.f32.mrf.mxu0
        %v6402 = vadd.f32 0.0, %v6401
        %v6403 = vpop.f32.mrf.mxu0
        %6404 = vmatprep.mubr.bf16.mxu0 0
        %6405 = vmatmul.mubr.bf16.gmra.mxu0 %v6248
        %v6406 = vpop.f32.mrf.mxu0
        %v6407 = vadd.f32 0.0, %v6406
        %v6408 = vpop.f32.mrf.mxu0
        %v6409 = vpop.f32.mrf.mxu0
        %v6410 = vadd.f32 0.0, %v6409
        %v6411 = vpop.f32.mrf.mxu0
        %6412 = vmatprep.mubr.bf16.mxu0 0
        %6413 = vmatmul.mubr.bf16.gmra.mxu0 %v6251
        %v6414 = vpop.f32.mrf.mxu0
        %v6415 = vadd.f32 0.0, %v6414
        %v6416 = vpop.f32.mrf.mxu0
        %v6417 = vpop.f32.mrf.mxu0
        %v6418 = vadd.f32 0.0, %v6417
        %v6419 = vpop.f32.mrf.mxu0
        %6420 = vmatprep.mubr.bf16.mxu0 0
        %6421 = vmatmul.mubr.bf16.gmra.mxu0 %v6254
        %v6422 = vpop.f32.mrf.mxu0
        %v6423 = vadd.f32 0.0, %v6422
        %v6424 = vpop.f32.mrf.mxu0
        %v6425 = vpop.f32.mrf.mxu0
        %v6426 = vadd.f32 0.0, %v6425
        %v6427 = vpop.f32.mrf.mxu0
        %6428 = vmatprep.mubr.bf16.mxu0 0
        %6429 = vmatmul.mubr.bf16.gmra.mxu0 %v6257
        %v6430 = vpop.f32.mrf.mxu0
        %v6431 = vadd.f32 0.0, %v6430
        %v6432 = vpop.f32.mrf.mxu0
        %v6433 = vpop.f32.mrf.mxu0
        %v6434 = vadd.f32 0.0, %v6433
        %v6435 = vpop.f32.mrf.mxu0
        %6436 = vmatprep.mubr.bf16.mxu0 0
        %6437 = vmatmul.mubr.bf16.gmra.mxu0 %v6260
        %v6438 = vpop.f32.mrf.mxu0
        %v6439 = vadd.f32 0.0, %v6438
        %v6440 = vpop.f32.mrf.mxu0
        %v6441 = vpop.f32.mrf.mxu0
        %v6442 = vadd.f32 0.0, %v6441
        %v6443 = vpop.f32.mrf.mxu0
        %6444 = vmatprep.mubr.bf16.mxu0 0
        %6445 = vmatmul.mubr.bf16.gmra.mxu0 %v6263
        %v6446 = vpop.f32.mrf.mxu0
        %v6447 = vadd.f32 0.0, %v6446
        %v6448 = vpop.f32.mrf.mxu0
        %v6449 = vpop.f32.mrf.mxu0
        %v6450 = vadd.f32 0.0, %v6449
        %v6451 = vpop.f32.mrf.mxu0
        %6452 = vmatprep.mubr.bf16.mxu0 0
        %6453 = vmatmul.mubr.bf16.gmra.mxu0 %v6266
        %v6454 = vpop.f32.mrf.mxu0
        %v6455 = vadd.f32 0.0, %v6454
        %v6456 = vpop.f32.mrf.mxu0
        %v6457 = vpop.f32.mrf.mxu0
        %v6458 = vadd.f32 0.0, %v6457
        %v6459 = vpop.f32.mrf.mxu0
        %6460 = vmatprep.mubr.bf16.mxu0 0
        %6461 = vmatmul.mubr.bf16.gmra.mxu0 %v6269
        %v6462 = vpop.f32.mrf.mxu0
        %v6463 = vadd.f32 0.0, %v6462
        %v6464 = vpop.f32.mrf.mxu0
        %v6465 = vpop.f32.mrf.mxu0
        %v6466 = vadd.f32 0.0, %v6465
        %v6467 = vpop.f32.mrf.mxu0
        %6468 = vmatprep.mubr.bf16.mxu0 0
        %6469 = vmatmul.mubr.bf16.gmra.mxu0 %v6272
        %v6470 = vpop.f32.mrf.mxu0
        %v6471 = vadd.f32 0.0, %v6470
        %v6472 = vpop.f32.mrf.mxu0
        %v6473 = vpop.f32.mrf.mxu0
        %v6474 = vadd.f32 0.0, %v6473
        %v6475 = vpop.f32.mrf.mxu0
        %6476 = vmatprep.mubr.bf16.mxu0 0
        %6477 = vmatmul.mubr.bf16.gmra.mxu0 %v6275
        %v6478 = vpop.f32.mrf.mxu0
        %v6479 = vadd.f32 0.0, %v6478
        %v6480 = vpop.f32.mrf.mxu0
        %v6481 = vpop.f32.mrf.mxu0
        %v6482 = vadd.f32 0.0, %v6481
        %v6483 = vpop.f32.mrf.mxu0
        %6484 = vmatprep.mubr.bf16.mxu0 0
        %6485 = vmatmul.mubr.bf16.gmra.mxu0 %v6278
        %v6486 = vpop.f32.mrf.mxu0
        %v6487 = vadd.f32 0.0, %v6486
        %v6488 = vpop.f32.mrf.mxu0
        %v6489 = vpop.f32.mrf.mxu0
        %v6490 = vadd.f32 0.0, %v6489
        %v6491 = vpop.f32.mrf.mxu0
        %6492 = vmatprep.mubr.bf16.mxu0 0
        %6493 = vmatmul.mubr.bf16.gmra.mxu0 %v6281
        %v6494 = vpop.f32.mrf.mxu0
        %v6495 = vadd.f32 0.0, %v6494
        %v6496 = vpop.f32.mrf.mxu0
        %v6497 = vpop.f32.mrf.mxu0
        %v6498 = vadd.f32 0.0, %v6497
        %v6499 = vpop.f32.mrf.mxu0
        %6500 = vmatprep.mubr.bf16.mxu0 0
        %6501 = vmatmul.mubr.bf16.gmra.mxu0 %v6284
        %v6502 = vpop.f32.mrf.mxu0
        %v6503 = vadd.f32 0.0, %v6502
        %v6504 = vpop.f32.mrf.mxu0
        %v6505 = vpop.f32.mrf.mxu0
        %v6506 = vadd.f32 0.0, %v6505
        %v6507 = vpop.f32.mrf.mxu0
        %6508 = vmatprep.mubr.bf16.mxu0 0
        %6509 = vmatmul.mubr.bf16.gmra.mxu0 %v6287
        %v6510 = vpop.f32.mrf.mxu0
        %v6511 = vadd.f32 0.0, %v6510
        %v6512 = vpop.f32.mrf.mxu0
        %v6513 = vpop.f32.mrf.mxu0
        %v6514 = vadd.f32 0.0, %v6513
        %v6515 = vpop.f32.mrf.mxu0
        %6516 = vmatprep.mubr.bf16.mxu0 0
        %6517 = vmatmul.mubr.bf16.gmra.mxu0 %v6290
        %v6518 = vpop.f32.mrf.mxu0
        %v6519 = vadd.f32 0.0, %v6518
        %v6520 = vpop.f32.mrf.mxu0
        %v6521 = vpop.f32.mrf.mxu0
        %v6522 = vadd.f32 0.0, %v6521
        %v6523 = vpop.f32.mrf.mxu0
        %6524 = vmatprep.mubr.bf16.mxu0 0
        %6525 = vmatmul.mubr.bf16.gmra.mxu0 %v6293
        %v6526 = vpop.f32.mrf.mxu0
        %v6527 = vadd.f32 0.0, %v6526
        %v6528 = vpop.f32.mrf.mxu0
        %v6529 = vpop.f32.mrf.mxu0
        %v6530 = vadd.f32 0.0, %v6529
        %v6531 = vpop.f32.mrf.mxu0
        %6532 = vmatprep.mubr.bf16.mxu0 0
        %6533 = vmatmul.mubr.bf16.gmra.mxu0 %v6296
        %v6534 = vpop.f32.mrf.mxu0
        %v6535 = vadd.f32 0.0, %v6534
        %v6536 = vpop.f32.mrf.mxu0
        %v6537 = vpop.f32.mrf.mxu0
        %v6538 = vadd.f32 0.0, %v6537
        %v6539 = vpop.f32.mrf.mxu0
        %6540 = vmatprep.mubr.bf16.mxu0 0
        %6541 = vmatmul.mubr.bf16.gmra.mxu0 %v6299
        %v6542 = vpop.f32.mrf.mxu0
        %v6543 = vadd.f32 0.0, %v6542
        %v6544 = vpop.f32.mrf.mxu0
        %v6545 = vpop.f32.mrf.mxu0
        %v6546 = vadd.f32 0.0, %v6545
        %v6547 = vpop.f32.mrf.mxu0
        %6548 = vmatprep.mubr.bf16.mxu0 0
        %6549 = vmatmul.mubr.bf16.gmra.mxu0 %v6302
        %v6550 = vpop.f32.mrf.mxu0
        %v6551 = vadd.f32 0.0, %v6550
        %v6552 = vpop.f32.mrf.mxu0
        %v6553 = vpop.f32.mrf.mxu0
        %v6554 = vadd.f32 0.0, %v6553
        %v6555 = vpop.f32.mrf.mxu0
        %6556 = vmatprep.mubr.bf16.mxu0 0
        %6557 = vmatmul.mubr.bf16.gmra.mxu0 %v6305
        %v6558 = vpop.f32.mrf.mxu0
        %v6559 = vadd.f32 0.0, %v6558
        %v6560 = vpop.f32.mrf.mxu0
        %v6561 = vpop.f32.mrf.mxu0
        %v6562 = vadd.f32 0.0, %v6561
        %v6563 = vpop.f32.mrf.mxu0
        %6564 = vmatprep.mubr.bf16.mxu0 0
        %6565 = vmatmul.mubr.bf16.gmra.mxu0 %v6308
        %v6566 = vpop.f32.mrf.mxu0
        %v6567 = vadd.f32 0.0, %v6566
        %v6568 = vpop.f32.mrf.mxu0
        %v6569 = vpop.f32.mrf.mxu0
        %v6570 = vadd.f32 0.0, %v6569
        %v6571 = vpop.f32.mrf.mxu0
        %6572 = vmatprep.mubr.bf16.mxu0 0
        %6573 = vmatmul.mubr.bf16.gmra.mxu0 %v6311
        %v6574 = vpop.f32.mrf.mxu0
        %v6575 = vadd.f32 0.0, %v6574
        %v6576 = vpop.f32.mrf.mxu0
        %v6577 = vpop.f32.mrf.mxu0
        %v6578 = vadd.f32 0.0, %v6577
        %v6579 = vpop.f32.mrf.mxu0
        %6580 = vmatprep.mubr.bf16.mxu0 0
        %6581 = vmatmul.mubr.bf16.gmra.mxu0 %v6314
        %v6582 = vpop.f32.mrf.mxu0
        %v6583 = vadd.f32 0.0, %v6582
        %v6584 = vpop.f32.mrf.mxu0
        %v6585 = vpop.f32.mrf.mxu0
        %v6586 = vadd.f32 0.0, %v6585
        %v6587 = vpop.f32.mrf.mxu0
        %6588 = vmatprep.mubr.bf16.mxu0 0
        %6589 = vmatmul.mubr.bf16.gmra.mxu0 %v6317
        %v6590 = vpop.f32.mrf.mxu0
        %v6591 = vadd.f32 0.0, %v6590
        %v6592 = vpop.f32.mrf.mxu0
        %v6593 = vpop.f32.mrf.mxu0
        %v6594 = vadd.f32 0.0, %v6593
        %v6595 = vpop.f32.mrf.mxu0
        %6596 = vmatprep.mubr.bf16.mxu0 0
        %6597 = vmatmul.mubr.bf16.gmra.mxu0 %v6320
        %v6598 = vpop.f32.mrf.mxu0
        %v6599 = vadd.f32 0.0, %v6598
        %v6600 = vpop.f32.mrf.mxu0
        %v6601 = vpop.f32.mrf.mxu0
        %v6602 = vadd.f32 0.0, %v6601
        %v6603 = vpop.f32.mrf.mxu0
        %6604 = vmatprep.mubr.bf16.mxu0 0
        %6605 = vmatmul.mubr.bf16.gmra.mxu0 %v6323
        %v6606 = vpop.f32.mrf.mxu0
        %v6607 = vadd.f32 0.0, %v6606
        %v6608 = vpop.f32.mrf.mxu0
        %v6609 = vpop.f32.mrf.mxu0
        %v6610 = vadd.f32 0.0, %v6609
        %v6611 = vpop.f32.mrf.mxu0
        %6612 = vmatprep.mubr.bf16.mxu0 0
        %6613 = vmatmul.mubr.bf16.gmra.mxu0 %v6326
        %v6614 = vpop.f32.mrf.mxu0
        %v6615 = vadd.f32 0.0, %v6614
        %v6616 = vpop.f32.mrf.mxu0
        %v6617 = vpop.f32.mrf.mxu0
        %v6618 = vadd.f32 0.0, %v6617
        %v6619 = vpop.f32.mrf.mxu0
        %6620 = vdwg.mxu0
        %v6622 = vsel %vm5248, %v5509, 0
        %v6625 = vsel %vm5248, %v5510, 0
        %v6628 = vsel %vm5248, %v5511, 0
        %v6631 = vsel %vm5248, %v5512, 0
        %v6634 = vsel %vm5248, %v5513, 0
        %v6637 = vsel %vm5248, %v5514, 0
        %v6640 = vsel %vm5248, %v5515, 0
        %v6643 = vsel %vm5248, %v5516, 0
        %v6646 = vsel %vm5248, %v5517, 0
        %v6649 = vsel %vm5248, %v5518, 0
        %v6652 = vsel %vm5248, %v5519, 0
        %v6655 = vsel %vm5248, %v5520, 0
        %v6658 = vsel %vm5248, %v5521, 0
        %v6661 = vsel %vm5248, %v5522, 0
        %v6664 = vsel %vm5248, %v5523, 0
        %v6667 = vsel %vm5248, %v5524, 0
        %v6670 = vsel %vm5248, %v5525, 0
        %v6673 = vsel %vm5248, %v5526, 0
        %v6676 = vsel %vm5248, %v5527, 0
        %v6679 = vsel %vm5248, %v5528, 0
        %v6682 = vsel %vm5248, %v5529, 0
        %v6685 = vsel %vm5248, %v5530, 0
        %v6688 = vsel %vm5248, %v5531, 0
        %v6691 = vsel %vm5248, %v5532, 0
        %v6694 = vsel %vm5248, %v5533, 0
        %v6697 = vsel %vm5248, %v5534, 0
        %v6700 = vsel %vm5248, %v5535, 0
        %v6703 = vsel %vm5248, %v5536, 0
        %v6706 = vsel %vm5248, %v5537, 0
        %v6709 = vsel %vm5248, %v5538, 0
        %v6712 = vsel %vm5248, %v5539, 0
        %v6715 = vsel %vm5248, %v5540, 0
        %v6718 = vsel %vm6328, %v6229, 0
        %6720 = vmatprep.subr.bf16.mxu0 0
        %6721 = vmatpush1.bf16.msra.mxu0 0
        %6722 = vmatprep.subr.bf16.mxu0 0
        %6723 = vmatpush1.bf16.msra.mxu0 0
        %6724 = vmatprep.subr.bf16.mxu0 0
        %6725 = vmatpush1.bf16.msra.mxu0 0
        %6726 = vmatprep.subr.bf16.mxu0 0
        %6727 = vmatpush1.bf16.msra.mxu0 0
        %6728 = vmatprep.subr.bf16.mxu0 0
        %6729 = vmatpush1.bf16.msra.mxu0 0
        %6730 = vmatprep.subr.bf16.mxu0 0
        %6731 = vmatpush1.bf16.msra.mxu0 0
        %6732 = vmatprep.subr.bf16.mxu0 0
        %6733 = vmatpush1.bf16.msra.mxu0 0
        %6734 = vmatprep.subr.bf16.mxu0 0
        %6735 = vmatpush1.bf16.msra.mxu0 %v6718
        %6736 = vmatprep.subr.bf16.mxu0 0
        %6737 = vmatpush2.bf16.msra.mxu0 0
        %6738 = vmatprep.subr.bf16.mxu0 0
        %6739 = vmatpush2.bf16.msra.mxu0 0
        %6740 = vmatprep.subr.bf16.mxu0 0
        %6741 = vmatpush2.bf16.msra.mxu0 0
        %6742 = vmatprep.subr.bf16.mxu0 0
        %6743 = vmatpush2.bf16.msra.mxu0 0
        %6744 = vmatprep.subr.bf16.mxu0 0
        %6745 = vmatpush2.bf16.msra.mxu0 0
        %6746 = vmatprep.subr.bf16.mxu0 0
        %6747 = vmatpush2.bf16.msra.mxu0 0
        %6748 = vmatprep.subr.bf16.mxu0 0
        %6749 = vmatpush2.bf16.msra.mxu0 0
        %6750 = vmatprep.subr.bf16.mxu0 0
        %6751 = vmatpush2.bf16.msra.mxu0 0
        %6752 = vmatprep.mubr.bf16.mxu0 0
        %6753 = vmatmul.mubr.bf16.gmra.mxu0 %v6622
        %v6754 = vpop.f32.mrf.mxu0
        %v6755 = vadd.f32 %v6367, %v6754
        %v6756 = vpop.f32.mrf.mxu0
        %v6757 = vpop.f32.mrf.mxu0
        %v6758 = vadd.f32 %v6370, %v6757
        %v6759 = vpop.f32.mrf.mxu0
        %6760 = vmatprep.mubr.bf16.mxu0 0
        %6761 = vmatmul.mubr.bf16.gmra.mxu0 %v6625
        %v6762 = vpop.f32.mrf.mxu0
        %v6763 = vadd.f32 %v6375, %v6762
        %v6764 = vpop.f32.mrf.mxu0
        %v6765 = vpop.f32.mrf.mxu0
        %v6766 = vadd.f32 %v6378, %v6765
        %v6767 = vpop.f32.mrf.mxu0
        %6768 = vmatprep.mubr.bf16.mxu0 0
        %6769 = vmatmul.mubr.bf16.gmra.mxu0 %v6628
        %v6770 = vpop.f32.mrf.mxu0
        %v6771 = vadd.f32 %v6383, %v6770
        %v6772 = vpop.f32.mrf.mxu0
        %v6773 = vpop.f32.mrf.mxu0
        %v6774 = vadd.f32 %v6386, %v6773
        %v6775 = vpop.f32.mrf.mxu0
        %6776 = vmatprep.mubr.bf16.mxu0 0
        %6777 = vmatmul.mubr.bf16.gmra.mxu0 %v6631
        %v6778 = vpop.f32.mrf.mxu0
        %v6779 = vadd.f32 %v6391, %v6778
        %v6780 = vpop.f32.mrf.mxu0
        %v6781 = vpop.f32.mrf.mxu0
        %v6782 = vadd.f32 %v6394, %v6781
        %v6783 = vpop.f32.mrf.mxu0
        %6784 = vmatprep.mubr.bf16.mxu0 0
        %6785 = vmatmul.mubr.bf16.gmra.mxu0 %v6634
        %v6786 = vpop.f32.mrf.mxu0
        %v6787 = vadd.f32 %v6399, %v6786
        %v6788 = vpop.f32.mrf.mxu0
        %v6789 = vpop.f32.mrf.mxu0
        %v6790 = vadd.f32 %v6402, %v6789
        %v6791 = vpop.f32.mrf.mxu0
        %6792 = vmatprep.mubr.bf16.mxu0 0
        %6793 = vmatmul.mubr.bf16.gmra.mxu0 %v6637
        %v6794 = vpop.f32.mrf.mxu0
        %v6795 = vadd.f32 %v6407, %v6794
        %v6796 = vpop.f32.mrf.mxu0
        %v6797 = vpop.f32.mrf.mxu0
        %v6798 = vadd.f32 %v6410, %v6797
        %v6799 = vpop.f32.mrf.mxu0
        %6800 = vmatprep.mubr.bf16.mxu0 0
        %6801 = vmatmul.mubr.bf16.gmra.mxu0 %v6640
        %v6802 = vpop.f32.mrf.mxu0
        %v6803 = vadd.f32 %v6415, %v6802
        %v6804 = vpop.f32.mrf.mxu0
        %v6805 = vpop.f32.mrf.mxu0
        %v6806 = vadd.f32 %v6418, %v6805
        %v6807 = vpop.f32.mrf.mxu0
        %6808 = vmatprep.mubr.bf16.mxu0 0
        %6809 = vmatmul.mubr.bf16.gmra.mxu0 %v6643
        %v6810 = vpop.f32.mrf.mxu0
        %v6811 = vadd.f32 %v6423, %v6810
        %v6812 = vpop.f32.mrf.mxu0
        %v6813 = vpop.f32.mrf.mxu0
        %v6814 = vadd.f32 %v6426, %v6813
        %v6815 = vpop.f32.mrf.mxu0
        %6816 = vmatprep.mubr.bf16.mxu0 0
        %6817 = vmatmul.mubr.bf16.gmra.mxu0 %v6646
        %v6818 = vpop.f32.mrf.mxu0
        %v6819 = vadd.f32 %v6431, %v6818
        %v6820 = vpop.f32.mrf.mxu0
        %v6821 = vpop.f32.mrf.mxu0
        %v6822 = vadd.f32 %v6434, %v6821
        %v6823 = vpop.f32.mrf.mxu0
        %6824 = vmatprep.mubr.bf16.mxu0 0
        %6825 = vmatmul.mubr.bf16.gmra.mxu0 %v6649
        %v6826 = vpop.f32.mrf.mxu0
        %v6827 = vadd.f32 %v6439, %v6826
        %v6828 = vpop.f32.mrf.mxu0
        %v6829 = vpop.f32.mrf.mxu0
        %v6830 = vadd.f32 %v6442, %v6829
        %v6831 = vpop.f32.mrf.mxu0
        %6832 = vmatprep.mubr.bf16.mxu0 0
        %6833 = vmatmul.mubr.bf16.gmra.mxu0 %v6652
        %v6834 = vpop.f32.mrf.mxu0
        %v6835 = vadd.f32 %v6447, %v6834
        %v6836 = vpop.f32.mrf.mxu0
        %v6837 = vpop.f32.mrf.mxu0
        %v6838 = vadd.f32 %v6450, %v6837
        %v6839 = vpop.f32.mrf.mxu0
        %6840 = vmatprep.mubr.bf16.mxu0 0
        %6841 = vmatmul.mubr.bf16.gmra.mxu0 %v6655
        %v6842 = vpop.f32.mrf.mxu0
        %v6843 = vadd.f32 %v6455, %v6842
        %v6844 = vpop.f32.mrf.mxu0
        %v6845 = vpop.f32.mrf.mxu0
        %v6846 = vadd.f32 %v6458, %v6845
        %v6847 = vpop.f32.mrf.mxu0
        %6848 = vmatprep.mubr.bf16.mxu0 0
        %6849 = vmatmul.mubr.bf16.gmra.mxu0 %v6658
        %v6850 = vpop.f32.mrf.mxu0
        %v6851 = vadd.f32 %v6463, %v6850
        %v6852 = vpop.f32.mrf.mxu0
        %v6853 = vpop.f32.mrf.mxu0
        %v6854 = vadd.f32 %v6466, %v6853
        %v6855 = vpop.f32.mrf.mxu0
        %6856 = vmatprep.mubr.bf16.mxu0 0
        %6857 = vmatmul.mubr.bf16.gmra.mxu0 %v6661
        %v6858 = vpop.f32.mrf.mxu0
        %v6859 = vadd.f32 %v6471, %v6858
        %v6860 = vpop.f32.mrf.mxu0
        %v6861 = vpop.f32.mrf.mxu0
        %v6862 = vadd.f32 %v6474, %v6861
        %v6863 = vpop.f32.mrf.mxu0
        %6864 = vmatprep.mubr.bf16.mxu0 0
        %6865 = vmatmul.mubr.bf16.gmra.mxu0 %v6664
        %v6866 = vpop.f32.mrf.mxu0
        %v6867 = vadd.f32 %v6479, %v6866
        %v6868 = vpop.f32.mrf.mxu0
        %v6869 = vpop.f32.mrf.mxu0
        %v6870 = vadd.f32 %v6482, %v6869
        %v6871 = vpop.f32.mrf.mxu0
        %6872 = vmatprep.mubr.bf16.mxu0 0
        %6873 = vmatmul.mubr.bf16.gmra.mxu0 %v6667
        %v6874 = vpop.f32.mrf.mxu0
        %v6875 = vadd.f32 %v6487, %v6874
        %v6876 = vpop.f32.mrf.mxu0
        %v6877 = vpop.f32.mrf.mxu0
        %v6878 = vadd.f32 %v6490, %v6877
        %v6879 = vpop.f32.mrf.mxu0
        %6880 = vmatprep.mubr.bf16.mxu0 0
        %6881 = vmatmul.mubr.bf16.gmra.mxu0 %v6670
        %v6882 = vpop.f32.mrf.mxu0
        %v6883 = vadd.f32 %v6495, %v6882
        %v6884 = vpop.f32.mrf.mxu0
        %v6885 = vpop.f32.mrf.mxu0
        %v6886 = vadd.f32 %v6498, %v6885
        %v6887 = vpop.f32.mrf.mxu0
        %6888 = vmatprep.mubr.bf16.mxu0 0
        %6889 = vmatmul.mubr.bf16.gmra.mxu0 %v6673
        %v6890 = vpop.f32.mrf.mxu0
        %v6891 = vadd.f32 %v6503, %v6890
        %v6892 = vpop.f32.mrf.mxu0
        %v6893 = vpop.f32.mrf.mxu0
        %v6894 = vadd.f32 %v6506, %v6893
        %v6895 = vpop.f32.mrf.mxu0
        %6896 = vmatprep.mubr.bf16.mxu0 0
        %6897 = vmatmul.mubr.bf16.gmra.mxu0 %v6676
        %v6898 = vpop.f32.mrf.mxu0
        %v6899 = vadd.f32 %v6511, %v6898
        %v6900 = vpop.f32.mrf.mxu0
        %v6901 = vpop.f32.mrf.mxu0
        %v6902 = vadd.f32 %v6514, %v6901
        %v6903 = vpop.f32.mrf.mxu0
        %6904 = vmatprep.mubr.bf16.mxu0 0
        %6905 = vmatmul.mubr.bf16.gmra.mxu0 %v6679
        %v6906 = vpop.f32.mrf.mxu0
        %v6907 = vadd.f32 %v6519, %v6906
        %v6908 = vpop.f32.mrf.mxu0
        %v6909 = vpop.f32.mrf.mxu0
        %v6910 = vadd.f32 %v6522, %v6909
        %v6911 = vpop.f32.mrf.mxu0
        %6912 = vmatprep.mubr.bf16.mxu0 0
        %6913 = vmatmul.mubr.bf16.gmra.mxu0 %v6682
        %v6914 = vpop.f32.mrf.mxu0
        %v6915 = vadd.f32 %v6527, %v6914
        %v6916 = vpop.f32.mrf.mxu0
        %v6917 = vpop.f32.mrf.mxu0
        %v6918 = vadd.f32 %v6530, %v6917
        %v6919 = vpop.f32.mrf.mxu0
        %6920 = vmatprep.mubr.bf16.mxu0 0
        %6921 = vmatmul.mubr.bf16.gmra.mxu0 %v6685
        %v6922 = vpop.f32.mrf.mxu0
        %v6923 = vadd.f32 %v6535, %v6922
        %v6924 = vpop.f32.mrf.mxu0
        %v6925 = vpop.f32.mrf.mxu0
        %v6926 = vadd.f32 %v6538, %v6925
        %v6927 = vpop.f32.mrf.mxu0
        %6928 = vmatprep.mubr.bf16.mxu0 0
        %6929 = vmatmul.mubr.bf16.gmra.mxu0 %v6688
        %v6930 = vpop.f32.mrf.mxu0
        %v6931 = vadd.f32 %v6543, %v6930
        %v6932 = vpop.f32.mrf.mxu0
        %v6933 = vpop.f32.mrf.mxu0
        %v6934 = vadd.f32 %v6546, %v6933
        %v6935 = vpop.f32.mrf.mxu0
        %6936 = vmatprep.mubr.bf16.mxu0 0
        %6937 = vmatmul.mubr.bf16.gmra.mxu0 %v6691
        %v6938 = vpop.f32.mrf.mxu0
        %v6939 = vadd.f32 %v6551, %v6938
        %v6940 = vpop.f32.mrf.mxu0
        %v6941 = vpop.f32.mrf.mxu0
        %v6942 = vadd.f32 %v6554, %v6941
        %v6943 = vpop.f32.mrf.mxu0
        %6944 = vmatprep.mubr.bf16.mxu0 0
        %6945 = vmatmul.mubr.bf16.gmra.mxu0 %v6694
        %v6946 = vpop.f32.mrf.mxu0
        %v6947 = vadd.f32 %v6559, %v6946
        %v6948 = vpop.f32.mrf.mxu0
        %v6949 = vpop.f32.mrf.mxu0
        %v6950 = vadd.f32 %v6562, %v6949
        %v6951 = vpop.f32.mrf.mxu0
        %6952 = vmatprep.mubr.bf16.mxu0 0
        %6953 = vmatmul.mubr.bf16.gmra.mxu0 %v6697
        %v6954 = vpop.f32.mrf.mxu0
        %v6955 = vadd.f32 %v6567, %v6954
        %v6956 = vpop.f32.mrf.mxu0
        %v6957 = vpop.f32.mrf.mxu0
        %v6958 = vadd.f32 %v6570, %v6957
        %v6959 = vpop.f32.mrf.mxu0
        %6960 = vmatprep.mubr.bf16.mxu0 0
        %6961 = vmatmul.mubr.bf16.gmra.mxu0 %v6700
        %v6962 = vpop.f32.mrf.mxu0
        %v6963 = vadd.f32 %v6575, %v6962
        %v6964 = vpop.f32.mrf.mxu0
        %v6965 = vpop.f32.mrf.mxu0
        %v6966 = vadd.f32 %v6578, %v6965
        %v6967 = vpop.f32.mrf.mxu0
        %6968 = vmatprep.mubr.bf16.mxu0 0
        %6969 = vmatmul.mubr.bf16.gmra.mxu0 %v6703
        %v6970 = vpop.f32.mrf.mxu0
        %v6971 = vadd.f32 %v6583, %v6970
        %v6972 = vpop.f32.mrf.mxu0
        %v6973 = vpop.f32.mrf.mxu0
        %v6974 = vadd.f32 %v6586, %v6973
        %v6975 = vpop.f32.mrf.mxu0
        %6976 = vmatprep.mubr.bf16.mxu0 0
        %6977 = vmatmul.mubr.bf16.gmra.mxu0 %v6706
        %v6978 = vpop.f32.mrf.mxu0
        %v6979 = vadd.f32 %v6591, %v6978
        %v6980 = vpop.f32.mrf.mxu0
        %v6981 = vpop.f32.mrf.mxu0
        %v6982 = vadd.f32 %v6594, %v6981
        %v6983 = vpop.f32.mrf.mxu0
        %6984 = vmatprep.mubr.bf16.mxu0 0
        %6985 = vmatmul.mubr.bf16.gmra.mxu0 %v6709
        %v6986 = vpop.f32.mrf.mxu0
        %v6987 = vadd.f32 %v6599, %v6986
        %v6988 = vpop.f32.mrf.mxu0
        %v6989 = vpop.f32.mrf.mxu0
        %v6990 = vadd.f32 %v6602, %v6989
        %v6991 = vpop.f32.mrf.mxu0
        %6992 = vmatprep.mubr.bf16.mxu0 0
        %6993 = vmatmul.mubr.bf16.gmra.mxu0 %v6712
        %v6994 = vpop.f32.mrf.mxu0
        %v6995 = vadd.f32 %v6607, %v6994
        %v6996 = vpop.f32.mrf.mxu0
        %v6997 = vpop.f32.mrf.mxu0
        %v6998 = vadd.f32 %v6610, %v6997
        %v6999 = vpop.f32.mrf.mxu0
        %7000 = vmatprep.mubr.bf16.mxu0 0
        %7001 = vmatmul.mubr.bf16.gmra.mxu0 %v6715
        %v7002 = vpop.f32.mrf.mxu0
        %v7003 = vadd.f32 %v6615, %v7002
        %v7004 = vpop.f32.mrf.mxu0
        %v7005 = vpop.f32.mrf.mxu0
        %v7006 = vadd.f32 %v6618, %v7005
        %v7007 = vpop.f32.mrf.mxu0
        %7008 = vdwg.mxu0
        %s7009 = scalar_lea.vmem %s3, 8
        %v7010 = vld [vmem:[%s7009] sm:$0xf]
        %v7012 = vsel %vm5248, %v6117, 0
        %v7015 = vsel %vm5248, %v6118, 0
        %v7018 = vsel %vm5248, %v6119, 0
        %v7021 = vsel %vm5248, %v6120, 0
        %v7024 = vsel %vm5248, %v6121, 0
        %v7027 = vsel %vm5248, %v6122, 0
        %v7030 = vsel %vm5248, %v6123, 0
        %v7033 = vsel %vm5248, %v6124, 0
        %v7036 = vsel %vm5248, %v6125, 0
        %v7039 = vsel %vm5248, %v6126, 0
        %v7042 = vsel %vm5248, %v6127, 0
        %v7045 = vsel %vm5248, %v6128, 0
        %v7048 = vsel %vm5248, %v6129, 0
        %v7051 = vsel %vm5248, %v6130, 0
        %v7054 = vsel %vm5248, %v6131, 0
        %v7057 = vsel %vm5248, %v6132, 0
        %v7060 = vsel %vm5248, %v6133, 0
        %v7063 = vsel %vm5248, %v6134, 0
        %v7066 = vsel %vm5248, %v6135, 0
        %v7069 = vsel %vm5248, %v6136, 0
        %v7072 = vsel %vm5248, %v6137, 0
        %v7075 = vsel %vm5248, %v6138, 0
        %v7078 = vsel %vm5248, %v6139, 0
        %v7081 = vsel %vm5248, %v6140, 0
        %v7084 = vsel %vm5248, %v6141, 0
        %v7087 = vsel %vm5248, %v6142, 0
        %v7090 = vsel %vm5248, %v6143, 0
        %v7093 = vsel %vm5248, %v6144, 0
        %v7096 = vsel %vm5248, %v6145, 0
        %v7099 = vsel %vm5248, %v6146, 0
        %v7102 = vsel %vm5248, %v6147, 0
        %v7105 = vsel %vm5248, %v6148, 0
        %v7108 = vsel %vm6328, %v7010, 0
        %7110 = vmatprep.subr.bf16.mxu0 0
        %7111 = vmatpush1.bf16.msra.mxu0 0
        %7112 = vmatprep.subr.bf16.mxu0 0
        %7113 = vmatpush1.bf16.msra.mxu0 0
        %7114 = vmatprep.subr.bf16.mxu0 0
        %7115 = vmatpush1.bf16.msra.mxu0 0
        %7116 = vmatprep.subr.bf16.mxu0 0
        %7117 = vmatpush1.bf16.msra.mxu0 0
        %7118 = vmatprep.subr.bf16.mxu0 0
        %7119 = vmatpush1.bf16.msra.mxu0 0
        %7120 = vmatprep.subr.bf16.mxu0 0
        %7121 = vmatpush1.bf16.msra.mxu0 0
        %7122 = vmatprep.subr.bf16.mxu0 0
        %7123 = vmatpush1.bf16.msra.mxu0 0
        %7124 = vmatprep.subr.bf16.mxu0 0
        %7125 = vmatpush1.bf16.msra.mxu0 %v7108
        %7126 = vmatprep.subr.bf16.mxu0 0
        %7127 = vmatpush2.bf16.msra.mxu0 0
        %7128 = vmatprep.subr.bf16.mxu0 0
        %7129 = vmatpush2.bf16.msra.mxu0 0
        %7130 = vmatprep.subr.bf16.mxu0 0
        %7131 = vmatpush2.bf16.msra.mxu0 0
        %7132 = vmatprep.subr.bf16.mxu0 0
        %7133 = vmatpush2.bf16.msra.mxu0 0
        %7134 = vmatprep.subr.bf16.mxu0 0
        %7135 = vmatpush2.bf16.msra.mxu0 0
        %7136 = vmatprep.subr.bf16.mxu0 0
        %7137 = vmatpush2.bf16.msra.mxu0 0
        %7138 = vmatprep.subr.bf16.mxu0 0
        %7139 = vmatpush2.bf16.msra.mxu0 0
        %7140 = vmatprep.subr.bf16.mxu0 0
        %7141 = vmatpush2.bf16.msra.mxu0 0
        %7142 = vmatprep.mubr.bf16.mxu0 0
        %7143 = vmatmul.mubr.bf16.gmra.mxu0 %v7012
        %v7144 = vpop.f32.mrf.mxu0
        %v7145 = vadd.f32 0.0, %v7144
        %v7146 = vpop.f32.mrf.mxu0
        %v7147 = vpop.f32.mrf.mxu0
        %v7148 = vadd.f32 0.0, %v7147
        %v7149 = vpop.f32.mrf.mxu0
        %7150 = vmatprep.mubr.bf16.mxu0 0
        %7151 = vmatmul.mubr.bf16.gmra.mxu0 %v7015
        %v7152 = vpop.f32.mrf.mxu0
        %v7153 = vadd.f32 0.0, %v7152
        %v7154 = vpop.f32.mrf.mxu0
        %v7155 = vpop.f32.mrf.mxu0
        %v7156 = vadd.f32 0.0, %v7155
        %v7157 = vpop.f32.mrf.mxu0
        %7158 = vmatprep.mubr.bf16.mxu0 0
        %7159 = vmatmul.mubr.bf16.gmra.mxu0 %v7018
        %v7160 = vpop.f32.mrf.mxu0
        %v7161 = vadd.f32 0.0, %v7160
        %v7162 = vpop.f32.mrf.mxu0
        %v7163 = vpop.f32.mrf.mxu0
        %v7164 = vadd.f32 0.0, %v7163
        %v7165 = vpop.f32.mrf.mxu0
        %7166 = vmatprep.mubr.bf16.mxu0 0
        %7167 = vmatmul.mubr.bf16.gmra.mxu0 %v7021
        %v7168 = vpop.f32.mrf.mxu0
        %v7169 = vadd.f32 0.0, %v7168
        %v7170 = vpop.f32.mrf.mxu0
        %v7171 = vpop.f32.mrf.mxu0
        %v7172 = vadd.f32 0.0, %v7171
        %v7173 = vpop.f32.mrf.mxu0
        %7174 = vmatprep.mubr.bf16.mxu0 0
        %7175 = vmatmul.mubr.bf16.gmra.mxu0 %v7024
        %v7176 = vpop.f32.mrf.mxu0
        %v7177 = vadd.f32 0.0, %v7176
        %v7178 = vpop.f32.mrf.mxu0
        %v7179 = vpop.f32.mrf.mxu0
        %v7180 = vadd.f32 0.0, %v7179
        %v7181 = vpop.f32.mrf.mxu0
        %7182 = vmatprep.mubr.bf16.mxu0 0
        %7183 = vmatmul.mubr.bf16.gmra.mxu0 %v7027
        %v7184 = vpop.f32.mrf.mxu0
        %v7185 = vadd.f32 0.0, %v7184
        %v7186 = vpop.f32.mrf.mxu0
        %v7187 = vpop.f32.mrf.mxu0
        %v7188 = vadd.f32 0.0, %v7187
        %v7189 = vpop.f32.mrf.mxu0
        %7190 = vmatprep.mubr.bf16.mxu0 0
        %7191 = vmatmul.mubr.bf16.gmra.mxu0 %v7030
        %v7192 = vpop.f32.mrf.mxu0
        %v7193 = vadd.f32 0.0, %v7192
        %v7194 = vpop.f32.mrf.mxu0
        %v7195 = vpop.f32.mrf.mxu0
        %v7196 = vadd.f32 0.0, %v7195
        %v7197 = vpop.f32.mrf.mxu0
        %7198 = vmatprep.mubr.bf16.mxu0 0
        %7199 = vmatmul.mubr.bf16.gmra.mxu0 %v7033
        %v7200 = vpop.f32.mrf.mxu0
        %v7201 = vadd.f32 0.0, %v7200
        %v7202 = vpop.f32.mrf.mxu0
        %v7203 = vpop.f32.mrf.mxu0
        %v7204 = vadd.f32 0.0, %v7203
        %v7205 = vpop.f32.mrf.mxu0
        %7206 = vmatprep.mubr.bf16.mxu0 0
        %7207 = vmatmul.mubr.bf16.gmra.mxu0 %v7036
        %v7208 = vpop.f32.mrf.mxu0
        %v7209 = vadd.f32 0.0, %v7208
        %v7210 = vpop.f32.mrf.mxu0
        %v7211 = vpop.f32.mrf.mxu0
        %v7212 = vadd.f32 0.0, %v7211
        %v7213 = vpop.f32.mrf.mxu0
        %7214 = vmatprep.mubr.bf16.mxu0 0
        %7215 = vmatmul.mubr.bf16.gmra.mxu0 %v7039
        %v7216 = vpop.f32.mrf.mxu0
        %v7217 = vadd.f32 0.0, %v7216
        %v7218 = vpop.f32.mrf.mxu0
        %v7219 = vpop.f32.mrf.mxu0
        %v7220 = vadd.f32 0.0, %v7219
        %v7221 = vpop.f32.mrf.mxu0
        %7222 = vmatprep.mubr.bf16.mxu0 0
        %7223 = vmatmul.mubr.bf16.gmra.mxu0 %v7042
        %v7224 = vpop.f32.mrf.mxu0
        %v7225 = vadd.f32 0.0, %v7224
        %v7226 = vpop.f32.mrf.mxu0
        %v7227 = vpop.f32.mrf.mxu0
        %v7228 = vadd.f32 0.0, %v7227
        %v7229 = vpop.f32.mrf.mxu0
        %7230 = vmatprep.mubr.bf16.mxu0 0
        %7231 = vmatmul.mubr.bf16.gmra.mxu0 %v7045
        %v7232 = vpop.f32.mrf.mxu0
        %v7233 = vadd.f32 0.0, %v7232
        %v7234 = vpop.f32.mrf.mxu0
        %v7235 = vpop.f32.mrf.mxu0
        %v7236 = vadd.f32 0.0, %v7235
        %v7237 = vpop.f32.mrf.mxu0
        %7238 = vmatprep.mubr.bf16.mxu0 0
        %7239 = vmatmul.mubr.bf16.gmra.mxu0 %v7048
        %v7240 = vpop.f32.mrf.mxu0
        %v7241 = vadd.f32 0.0, %v7240
        %v7242 = vpop.f32.mrf.mxu0
        %v7243 = vpop.f32.mrf.mxu0
        %v7244 = vadd.f32 0.0, %v7243
        %v7245 = vpop.f32.mrf.mxu0
        %7246 = vmatprep.mubr.bf16.mxu0 0
        %7247 = vmatmul.mubr.bf16.gmra.mxu0 %v7051
        %v7248 = vpop.f32.mrf.mxu0
        %v7249 = vadd.f32 0.0, %v7248
        %v7250 = vpop.f32.mrf.mxu0
        %v7251 = vpop.f32.mrf.mxu0
        %v7252 = vadd.f32 0.0, %v7251
        %v7253 = vpop.f32.mrf.mxu0
        %7254 = vmatprep.mubr.bf16.mxu0 0
        %7255 = vmatmul.mubr.bf16.gmra.mxu0 %v7054
        %v7256 = vpop.f32.mrf.mxu0
        %v7257 = vadd.f32 0.0, %v7256
        %v7258 = vpop.f32.mrf.mxu0
        %v7259 = vpop.f32.mrf.mxu0
        %v7260 = vadd.f32 0.0, %v7259
        %v7261 = vpop.f32.mrf.mxu0
        %7262 = vmatprep.mubr.bf16.mxu0 0
        %7263 = vmatmul.mubr.bf16.gmra.mxu0 %v7057
        %v7264 = vpop.f32.mrf.mxu0
        %v7265 = vadd.f32 0.0, %v7264
        %v7266 = vpop.f32.mrf.mxu0
        %v7267 = vpop.f32.mrf.mxu0
        %v7268 = vadd.f32 0.0, %v7267
        %v7269 = vpop.f32.mrf.mxu0
        %7270 = vmatprep.mubr.bf16.mxu0 0
        %7271 = vmatmul.mubr.bf16.gmra.mxu0 %v7060
        %v7272 = vpop.f32.mrf.mxu0
        %v7273 = vadd.f32 0.0, %v7272
        %v7274 = vpop.f32.mrf.mxu0
        %v7275 = vpop.f32.mrf.mxu0
        %v7276 = vadd.f32 0.0, %v7275
        %v7277 = vpop.f32.mrf.mxu0
        %7278 = vmatprep.mubr.bf16.mxu0 0
        %7279 = vmatmul.mubr.bf16.gmra.mxu0 %v7063
        %v7280 = vpop.f32.mrf.mxu0
        %v7281 = vadd.f32 0.0, %v7280
        %v7282 = vpop.f32.mrf.mxu0
        %v7283 = vpop.f32.mrf.mxu0
        %v7284 = vadd.f32 0.0, %v7283
        %v7285 = vpop.f32.mrf.mxu0
        %7286 = vmatprep.mubr.bf16.mxu0 0
        %7287 = vmatmul.mubr.bf16.gmra.mxu0 %v7066
        %v7288 = vpop.f32.mrf.mxu0
        %v7289 = vadd.f32 0.0, %v7288
        %v7290 = vpop.f32.mrf.mxu0
        %v7291 = vpop.f32.mrf.mxu0
        %v7292 = vadd.f32 0.0, %v7291
        %v7293 = vpop.f32.mrf.mxu0
        %7294 = vmatprep.mubr.bf16.mxu0 0
        %7295 = vmatmul.mubr.bf16.gmra.mxu0 %v7069
        %v7296 = vpop.f32.mrf.mxu0
        %v7297 = vadd.f32 0.0, %v7296
        %v7298 = vpop.f32.mrf.mxu0
        %v7299 = vpop.f32.mrf.mxu0
        %v7300 = vadd.f32 0.0, %v7299
        %v7301 = vpop.f32.mrf.mxu0
        %7302 = vmatprep.mubr.bf16.mxu0 0
        %7303 = vmatmul.mubr.bf16.gmra.mxu0 %v7072
        %v7304 = vpop.f32.mrf.mxu0
        %v7305 = vadd.f32 0.0, %v7304
        %v7306 = vpop.f32.mrf.mxu0
        %v7307 = vpop.f32.mrf.mxu0
        %v7308 = vadd.f32 0.0, %v7307
        %v7309 = vpop.f32.mrf.mxu0
        %7310 = vmatprep.mubr.bf16.mxu0 0
        %7311 = vmatmul.mubr.bf16.gmra.mxu0 %v7075
        %v7312 = vpop.f32.mrf.mxu0
        %v7313 = vadd.f32 0.0, %v7312
        %v7314 = vpop.f32.mrf.mxu0
        %v7315 = vpop.f32.mrf.mxu0
        %v7316 = vadd.f32 0.0, %v7315
        %v7317 = vpop.f32.mrf.mxu0
        %7318 = vmatprep.mubr.bf16.mxu0 0
        %7319 = vmatmul.mubr.bf16.gmra.mxu0 %v7078
        %v7320 = vpop.f32.mrf.mxu0
        %v7321 = vadd.f32 0.0, %v7320
        %v7322 = vpop.f32.mrf.mxu0
        %v7323 = vpop.f32.mrf.mxu0
        %v7324 = vadd.f32 0.0, %v7323
        %v7325 = vpop.f32.mrf.mxu0
        %7326 = vmatprep.mubr.bf16.mxu0 0
        %7327 = vmatmul.mubr.bf16.gmra.mxu0 %v7081
        %v7328 = vpop.f32.mrf.mxu0
        %v7329 = vadd.f32 0.0, %v7328
        %v7330 = vpop.f32.mrf.mxu0
        %v7331 = vpop.f32.mrf.mxu0
        %v7332 = vadd.f32 0.0, %v7331
        %v7333 = vpop.f32.mrf.mxu0
        %7334 = vmatprep.mubr.bf16.mxu0 0
        %7335 = vmatmul.mubr.bf16.gmra.mxu0 %v7084
        %v7336 = vpop.f32.mrf.mxu0
        %v7337 = vadd.f32 0.0, %v7336
        %v7338 = vpop.f32.mrf.mxu0
        %v7339 = vpop.f32.mrf.mxu0
        %v7340 = vadd.f32 0.0, %v7339
        %v7341 = vpop.f32.mrf.mxu0
        %7342 = vmatprep.mubr.bf16.mxu0 0
        %7343 = vmatmul.mubr.bf16.gmra.mxu0 %v7087
        %v7344 = vpop.f32.mrf.mxu0
        %v7345 = vadd.f32 0.0, %v7344
        %v7346 = vpop.f32.mrf.mxu0
        %v7347 = vpop.f32.mrf.mxu0
        %v7348 = vadd.f32 0.0, %v7347
        %v7349 = vpop.f32.mrf.mxu0
        %7350 = vmatprep.mubr.bf16.mxu0 0
        %7351 = vmatmul.mubr.bf16.gmra.mxu0 %v7090
        %v7352 = vpop.f32.mrf.mxu0
        %v7353 = vadd.f32 0.0, %v7352
        %v7354 = vpop.f32.mrf.mxu0
        %v7355 = vpop.f32.mrf.mxu0
        %v7356 = vadd.f32 0.0, %v7355
        %v7357 = vpop.f32.mrf.mxu0
        %7358 = vmatprep.mubr.bf16.mxu0 0
        %7359 = vmatmul.mubr.bf16.gmra.mxu0 %v7093
        %v7360 = vpop.f32.mrf.mxu0
        %v7361 = vadd.f32 0.0, %v7360
        %v7362 = vpop.f32.mrf.mxu0
        %v7363 = vpop.f32.mrf.mxu0
        %v7364 = vadd.f32 0.0, %v7363
        %v7365 = vpop.f32.mrf.mxu0
        %7366 = vmatprep.mubr.bf16.mxu0 0
        %7367 = vmatmul.mubr.bf16.gmra.mxu0 %v7096
        %v7368 = vpop.f32.mrf.mxu0
        %v7369 = vadd.f32 0.0, %v7368
        %v7370 = vpop.f32.mrf.mxu0
        %v7371 = vpop.f32.mrf.mxu0
        %v7372 = vadd.f32 0.0, %v7371
        %v7373 = vpop.f32.mrf.mxu0
        %7374 = vmatprep.mubr.bf16.mxu0 0
        %7375 = vmatmul.mubr.bf16.gmra.mxu0 %v7099
        %v7376 = vpop.f32.mrf.mxu0
        %v7377 = vadd.f32 0.0, %v7376
        %v7378 = vpop.f32.mrf.mxu0
        %v7379 = vpop.f32.mrf.mxu0
        %v7380 = vadd.f32 0.0, %v7379
        %v7381 = vpop.f32.mrf.mxu0
        %7382 = vmatprep.mubr.bf16.mxu0 0
        %7383 = vmatmul.mubr.bf16.gmra.mxu0 %v7102
        %v7384 = vpop.f32.mrf.mxu0
        %v7385 = vadd.f32 0.0, %v7384
        %v7386 = vpop.f32.mrf.mxu0
        %v7387 = vpop.f32.mrf.mxu0
        %v7388 = vadd.f32 0.0, %v7387
        %v7389 = vpop.f32.mrf.mxu0
        %7390 = vmatprep.mubr.bf16.mxu0 0
        %7391 = vmatmul.mubr.bf16.gmra.mxu0 %v7105
        %v7392 = vpop.f32.mrf.mxu0
        %v7393 = vadd.f32 0.0, %v7392
        %v7394 = vpop.f32.mrf.mxu0
        %v7395 = vpop.f32.mrf.mxu0
        %v7396 = vadd.f32 0.0, %v7395
        %v7397 = vpop.f32.mrf.mxu0
        %7398 = vdwg.mxu0
        %v7399 = vadd.f32 %v6755, %v7145
        %v7400 = vadd.f32 %v6758, %v7148
        %v7401 = vadd.f32 %v6763, %v7153
        %v7402 = vadd.f32 %v6766, %v7156
        %v7403 = vadd.f32 %v6771, %v7161
        %v7404 = vadd.f32 %v6774, %v7164
        %v7405 = vadd.f32 %v6779, %v7169
        %v7406 = vadd.f32 %v6782, %v7172
        %v7407 = vadd.f32 %v6787, %v7177
        %v7408 = vadd.f32 %v6790, %v7180
        %v7409 = vadd.f32 %v6795, %v7185
        %v7410 = vadd.f32 %v6798, %v7188
        %v7411 = vadd.f32 %v6803, %v7193
        %v7412 = vadd.f32 %v6806, %v7196
        %v7413 = vadd.f32 %v6811, %v7201
        %v7414 = vadd.f32 %v6814, %v7204
        %v7415 = vadd.f32 %v6819, %v7209
        %v7416 = vadd.f32 %v6822, %v7212
        %v7417 = vadd.f32 %v6827, %v7217
        %v7418 = vadd.f32 %v6830, %v7220
        %v7419 = vadd.f32 %v6835, %v7225
        %v7420 = vadd.f32 %v6838, %v7228
        %v7421 = vadd.f32 %v6843, %v7233
        %v7422 = vadd.f32 %v6846, %v7236
        %v7423 = vadd.f32 %v6851, %v7241
        %v7424 = vadd.f32 %v6854, %v7244
        %v7425 = vadd.f32 %v6859, %v7249
        %v7426 = vadd.f32 %v6862, %v7252
        %v7427 = vadd.f32 %v6867, %v7257
        %v7428 = vadd.f32 %v6870, %v7260
        %v7429 = vadd.f32 %v6875, %v7265
        %v7430 = vadd.f32 %v6878, %v7268
        %v7431 = vadd.f32 %v6883, %v7273
        %v7432 = vadd.f32 %v6886, %v7276
        %v7433 = vadd.f32 %v6891, %v7281
        %v7434 = vadd.f32 %v6894, %v7284
        %v7435 = vadd.f32 %v6899, %v7289
        %v7436 = vadd.f32 %v6902, %v7292
        %v7437 = vadd.f32 %v6907, %v7297
        %v7438 = vadd.f32 %v6910, %v7300
        %v7439 = vadd.f32 %v6915, %v7305
        %v7440 = vadd.f32 %v6918, %v7308
        %v7441 = vadd.f32 %v6923, %v7313
        %v7442 = vadd.f32 %v6926, %v7316
        %v7443 = vadd.f32 %v6931, %v7321
        %v7444 = vadd.f32 %v6934, %v7324
        %v7445 = vadd.f32 %v6939, %v7329
        %v7446 = vadd.f32 %v6942, %v7332
        %v7447 = vadd.f32 %v6947, %v7337
        %v7448 = vadd.f32 %v6950, %v7340
        %v7449 = vadd.f32 %v6955, %v7345
        %v7450 = vadd.f32 %v6958, %v7348
        %v7451 = vadd.f32 %v6963, %v7353
        %v7452 = vadd.f32 %v6966, %v7356
        %v7453 = vadd.f32 %v6971, %v7361
        %v7454 = vadd.f32 %v6974, %v7364
        %v7455 = vadd.f32 %v6979, %v7369
        %v7456 = vadd.f32 %v6982, %v7372
        %v7457 = vadd.f32 %v6987, %v7377
        %v7458 = vadd.f32 %v6990, %v7380
        %v7459 = vadd.f32 %v6995, %v7385
        %v7460 = vadd.f32 %v6998, %v7388
        %v7461 = vadd.f32 %v7003, %v7393
        %v7462 = vadd.f32 %v7006, %v7396
        %s7463 = scalar_lea.vmem %s3, 12
        %v7464 = vld [vmem:[%s7463] sm:$0xf]
        %v7466 = vsel %vm5248, %v6149, 0
        %v7469 = vsel %vm5248, %v6150, 0
        %v7472 = vsel %vm6328, %v7464, 0
        %7474 = vmatprep.subr.bf16.mxu0 0
        %7475 = vmatpush1.bf16.msra.mxu0 0
        %7476 = vmatprep.subr.bf16.mxu0 0
        %7477 = vmatpush1.bf16.msra.mxu0 0
        %7478 = vmatprep.subr.bf16.mxu0 0
        %7479 = vmatpush1.bf16.msra.mxu0 0
        %7480 = vmatprep.subr.bf16.mxu0 0
        %7481 = vmatpush1.bf16.msra.mxu0 0
        %7482 = vmatprep.subr.bf16.mxu0 0
        %7483 = vmatpush1.bf16.msra.mxu0 0
        %7484 = vmatprep.subr.bf16.mxu0 0
        %7485 = vmatpush1.bf16.msra.mxu0 0
        %7486 = vmatprep.subr.bf16.mxu0 0
        %7487 = vmatpush1.bf16.msra.mxu0 0
        %7488 = vmatprep.subr.bf16.mxu0 0
        %7489 = vmatpush1.bf16.msra.mxu0 %v7472
        %7490 = vmatprep.subr.bf16.mxu0 0
        %7491 = vmatpush2.bf16.msra.mxu0 0
        %7492 = vmatprep.subr.bf16.mxu0 0
        %7493 = vmatpush2.bf16.msra.mxu0 0
        %7494 = vmatprep.subr.bf16.mxu0 0
        %7495 = vmatpush2.bf16.msra.mxu0 0
        %7496 = vmatprep.subr.bf16.mxu0 0
        %7497 = vmatpush2.bf16.msra.mxu0 0
        %7498 = vmatprep.subr.bf16.mxu0 0
        %7499 = vmatpush2.bf16.msra.mxu0 0
        %7500 = vmatprep.subr.bf16.mxu0 0
        %7501 = vmatpush2.bf16.msra.mxu0 0
        %7502 = vmatprep.subr.bf16.mxu0 0
        %7503 = vmatpush2.bf16.msra.mxu0 0
        %7504 = vmatprep.subr.bf16.mxu0 0
        %7505 = vmatpush2.bf16.msra.mxu0 0
        %7506 = vmatprep.mubr.bf16.mxu0 0
        %7507 = vmatmul.mubr.bf16.gmra.mxu0 %v6625
        %v7508 = vpop.f32.mrf.mxu0
        %v7509 = vadd.f32 0.0, %v7508
        %v7510 = vpop.f32.mrf.mxu0
        %v7511 = vpop.f32.mrf.mxu0
        %v7512 = vadd.f32 0.0, %v7511
        %v7513 = vpop.f32.mrf.mxu0
        %7514 = vmatprep.mubr.bf16.mxu0 0
        %7515 = vmatmul.mubr.bf16.gmra.mxu0 %v6628
        %v7516 = vpop.f32.mrf.mxu0
        %v7517 = vadd.f32 0.0, %v7516
        %v7518 = vpop.f32.mrf.mxu0
        %v7519 = vpop.f32.mrf.mxu0
        %v7520 = vadd.f32 0.0, %v7519
        %v7521 = vpop.f32.mrf.mxu0
        %7522 = vmatprep.mubr.bf16.mxu0 0
        %7523 = vmatmul.mubr.bf16.gmra.mxu0 %v6631
        %v7524 = vpop.f32.mrf.mxu0
        %v7525 = vadd.f32 0.0, %v7524
        %v7526 = vpop.f32.mrf.mxu0
        %v7527 = vpop.f32.mrf.mxu0
        %v7528 = vadd.f32 0.0, %v7527
        %v7529 = vpop.f32.mrf.mxu0
        %7530 = vmatprep.mubr.bf16.mxu0 0
        %7531 = vmatmul.mubr.bf16.gmra.mxu0 %v6634
        %v7532 = vpop.f32.mrf.mxu0
        %v7533 = vadd.f32 0.0, %v7532
        %v7534 = vpop.f32.mrf.mxu0
        %v7535 = vpop.f32.mrf.mxu0
        %v7536 = vadd.f32 0.0, %v7535
        %v7537 = vpop.f32.mrf.mxu0
        %7538 = vmatprep.mubr.bf16.mxu0 0
        %7539 = vmatmul.mubr.bf16.gmra.mxu0 %v6637
        %v7540 = vpop.f32.mrf.mxu0
        %v7541 = vadd.f32 0.0, %v7540
        %v7542 = vpop.f32.mrf.mxu0
        %v7543 = vpop.f32.mrf.mxu0
        %v7544 = vadd.f32 0.0, %v7543
        %v7545 = vpop.f32.mrf.mxu0
        %7546 = vmatprep.mubr.bf16.mxu0 0
        %7547 = vmatmul.mubr.bf16.gmra.mxu0 %v6640
        %v7548 = vpop.f32.mrf.mxu0
        %v7549 = vadd.f32 0.0, %v7548
        %v7550 = vpop.f32.mrf.mxu0
        %v7551 = vpop.f32.mrf.mxu0
        %v7552 = vadd.f32 0.0, %v7551
        %v7553 = vpop.f32.mrf.mxu0
        %7554 = vmatprep.mubr.bf16.mxu0 0
        %7555 = vmatmul.mubr.bf16.gmra.mxu0 %v6643
        %v7556 = vpop.f32.mrf.mxu0
        %v7557 = vadd.f32 0.0, %v7556
        %v7558 = vpop.f32.mrf.mxu0
        %v7559 = vpop.f32.mrf.mxu0
        %v7560 = vadd.f32 0.0, %v7559
        %v7561 = vpop.f32.mrf.mxu0
        %7562 = vmatprep.mubr.bf16.mxu0 0
        %7563 = vmatmul.mubr.bf16.gmra.mxu0 %v6646
        %v7564 = vpop.f32.mrf.mxu0
        %v7565 = vadd.f32 0.0, %v7564
        %v7566 = vpop.f32.mrf.mxu0
        %v7567 = vpop.f32.mrf.mxu0
        %v7568 = vadd.f32 0.0, %v7567
        %v7569 = vpop.f32.mrf.mxu0
        %7570 = vmatprep.mubr.bf16.mxu0 0
        %7571 = vmatmul.mubr.bf16.gmra.mxu0 %v6649
        %v7572 = vpop.f32.mrf.mxu0
        %v7573 = vadd.f32 0.0, %v7572
        %v7574 = vpop.f32.mrf.mxu0
        %v7575 = vpop.f32.mrf.mxu0
        %v7576 = vadd.f32 0.0, %v7575
        %v7577 = vpop.f32.mrf.mxu0
        %7578 = vmatprep.mubr.bf16.mxu0 0
        %7579 = vmatmul.mubr.bf16.gmra.mxu0 %v6652
        %v7580 = vpop.f32.mrf.mxu0
        %v7581 = vadd.f32 0.0, %v7580
        %v7582 = vpop.f32.mrf.mxu0
        %v7583 = vpop.f32.mrf.mxu0
        %v7584 = vadd.f32 0.0, %v7583
        %v7585 = vpop.f32.mrf.mxu0
        %7586 = vmatprep.mubr.bf16.mxu0 0
        %7587 = vmatmul.mubr.bf16.gmra.mxu0 %v6655
        %v7588 = vpop.f32.mrf.mxu0
        %v7589 = vadd.f32 0.0, %v7588
        %v7590 = vpop.f32.mrf.mxu0
        %v7591 = vpop.f32.mrf.mxu0
        %v7592 = vadd.f32 0.0, %v7591
        %v7593 = vpop.f32.mrf.mxu0
        %7594 = vmatprep.mubr.bf16.mxu0 0
        %7595 = vmatmul.mubr.bf16.gmra.mxu0 %v6658
        %v7596 = vpop.f32.mrf.mxu0
        %v7597 = vadd.f32 0.0, %v7596
        %v7598 = vpop.f32.mrf.mxu0
        %v7599 = vpop.f32.mrf.mxu0
        %v7600 = vadd.f32 0.0, %v7599
        %v7601 = vpop.f32.mrf.mxu0
        %7602 = vmatprep.mubr.bf16.mxu0 0
        %7603 = vmatmul.mubr.bf16.gmra.mxu0 %v6661
        %v7604 = vpop.f32.mrf.mxu0
        %v7605 = vadd.f32 0.0, %v7604
        %v7606 = vpop.f32.mrf.mxu0
        %v7607 = vpop.f32.mrf.mxu0
        %v7608 = vadd.f32 0.0, %v7607
        %v7609 = vpop.f32.mrf.mxu0
        %7610 = vmatprep.mubr.bf16.mxu0 0
        %7611 = vmatmul.mubr.bf16.gmra.mxu0 %v6664
        %v7612 = vpop.f32.mrf.mxu0
        %v7613 = vadd.f32 0.0, %v7612
        %v7614 = vpop.f32.mrf.mxu0
        %v7615 = vpop.f32.mrf.mxu0
        %v7616 = vadd.f32 0.0, %v7615
        %v7617 = vpop.f32.mrf.mxu0
        %7618 = vmatprep.mubr.bf16.mxu0 0
        %7619 = vmatmul.mubr.bf16.gmra.mxu0 %v6667
        %v7620 = vpop.f32.mrf.mxu0
        %v7621 = vadd.f32 0.0, %v7620
        %v7622 = vpop.f32.mrf.mxu0
        %v7623 = vpop.f32.mrf.mxu0
        %v7624 = vadd.f32 0.0, %v7623
        %v7625 = vpop.f32.mrf.mxu0
        %7626 = vmatprep.mubr.bf16.mxu0 0
        %7627 = vmatmul.mubr.bf16.gmra.mxu0 %v7466
        %v7628 = vpop.f32.mrf.mxu0
        %v7629 = vadd.f32 0.0, %v7628
        %v7630 = vpop.f32.mrf.mxu0
        %v7631 = vpop.f32.mrf.mxu0
        %v7632 = vadd.f32 0.0, %v7631
        %v7633 = vpop.f32.mrf.mxu0
        %7634 = vmatprep.mubr.bf16.mxu0 0
        %7635 = vmatmul.mubr.bf16.gmra.mxu0 %v6673
        %v7636 = vpop.f32.mrf.mxu0
        %v7637 = vadd.f32 0.0, %v7636
        %v7638 = vpop.f32.mrf.mxu0
        %v7639 = vpop.f32.mrf.mxu0
        %v7640 = vadd.f32 0.0, %v7639
        %v7641 = vpop.f32.mrf.mxu0
        %7642 = vmatprep.mubr.bf16.mxu0 0
        %7643 = vmatmul.mubr.bf16.gmra.mxu0 %v6676
        %v7644 = vpop.f32.mrf.mxu0
        %v7645 = vadd.f32 0.0, %v7644
        %v7646 = vpop.f32.mrf.mxu0
        %v7647 = vpop.f32.mrf.mxu0
        %v7648 = vadd.f32 0.0, %v7647
        %v7649 = vpop.f32.mrf.mxu0
        %7650 = vmatprep.mubr.bf16.mxu0 0
        %7651 = vmatmul.mubr.bf16.gmra.mxu0 %v6679
        %v7652 = vpop.f32.mrf.mxu0
        %v7653 = vadd.f32 0.0, %v7652
        %v7654 = vpop.f32.mrf.mxu0
        %v7655 = vpop.f32.mrf.mxu0
        %v7656 = vadd.f32 0.0, %v7655
        %v7657 = vpop.f32.mrf.mxu0
        %7658 = vmatprep.mubr.bf16.mxu0 0
        %7659 = vmatmul.mubr.bf16.gmra.mxu0 %v6682
        %v7660 = vpop.f32.mrf.mxu0
        %v7661 = vadd.f32 0.0, %v7660
        %v7662 = vpop.f32.mrf.mxu0
        %v7663 = vpop.f32.mrf.mxu0
        %v7664 = vadd.f32 0.0, %v7663
        %v7665 = vpop.f32.mrf.mxu0
        %7666 = vmatprep.mubr.bf16.mxu0 0
        %7667 = vmatmul.mubr.bf16.gmra.mxu0 %v6685
        %v7668 = vpop.f32.mrf.mxu0
        %v7669 = vadd.f32 0.0, %v7668
        %v7670 = vpop.f32.mrf.mxu0
        %v7671 = vpop.f32.mrf.mxu0
        %v7672 = vadd.f32 0.0, %v7671
        %v7673 = vpop.f32.mrf.mxu0
        %7674 = vmatprep.mubr.bf16.mxu0 0
        %7675 = vmatmul.mubr.bf16.gmra.mxu0 %v6688
        %v7676 = vpop.f32.mrf.mxu0
        %v7677 = vadd.f32 0.0, %v7676
        %v7678 = vpop.f32.mrf.mxu0
        %v7679 = vpop.f32.mrf.mxu0
        %v7680 = vadd.f32 0.0, %v7679
        %v7681 = vpop.f32.mrf.mxu0
        %7682 = vmatprep.mubr.bf16.mxu0 0
        %7683 = vmatmul.mubr.bf16.gmra.mxu0 %v6691
        %v7684 = vpop.f32.mrf.mxu0
        %v7685 = vadd.f32 0.0, %v7684
        %v7686 = vpop.f32.mrf.mxu0
        %v7687 = vpop.f32.mrf.mxu0
        %v7688 = vadd.f32 0.0, %v7687
        %v7689 = vpop.f32.mrf.mxu0
        %7690 = vmatprep.mubr.bf16.mxu0 0
        %7691 = vmatmul.mubr.bf16.gmra.mxu0 %v6694
        %v7692 = vpop.f32.mrf.mxu0
        %v7693 = vadd.f32 0.0, %v7692
        %v7694 = vpop.f32.mrf.mxu0
        %v7695 = vpop.f32.mrf.mxu0
        %v7696 = vadd.f32 0.0, %v7695
        %v7697 = vpop.f32.mrf.mxu0
        %7698 = vmatprep.mubr.bf16.mxu0 0
        %7699 = vmatmul.mubr.bf16.gmra.mxu0 %v6697
        %v7700 = vpop.f32.mrf.mxu0
        %v7701 = vadd.f32 0.0, %v7700
        %v7702 = vpop.f32.mrf.mxu0
        %v7703 = vpop.f32.mrf.mxu0
        %v7704 = vadd.f32 0.0, %v7703
        %v7705 = vpop.f32.mrf.mxu0
        %7706 = vmatprep.mubr.bf16.mxu0 0
        %7707 = vmatmul.mubr.bf16.gmra.mxu0 %v6700
        %v7708 = vpop.f32.mrf.mxu0
        %v7709 = vadd.f32 0.0, %v7708
        %v7710 = vpop.f32.mrf.mxu0
        %v7711 = vpop.f32.mrf.mxu0
        %v7712 = vadd.f32 0.0, %v7711
        %v7713 = vpop.f32.mrf.mxu0
        %7714 = vmatprep.mubr.bf16.mxu0 0
        %7715 = vmatmul.mubr.bf16.gmra.mxu0 %v6703
        %v7716 = vpop.f32.mrf.mxu0
        %v7717 = vadd.f32 0.0, %v7716
        %v7718 = vpop.f32.mrf.mxu0
        %v7719 = vpop.f32.mrf.mxu0
        %v7720 = vadd.f32 0.0, %v7719
        %v7721 = vpop.f32.mrf.mxu0
        %7722 = vmatprep.mubr.bf16.mxu0 0
        %7723 = vmatmul.mubr.bf16.gmra.mxu0 %v6706
        %v7724 = vpop.f32.mrf.mxu0
        %v7725 = vadd.f32 0.0, %v7724
        %v7726 = vpop.f32.mrf.mxu0
        %v7727 = vpop.f32.mrf.mxu0
        %v7728 = vadd.f32 0.0, %v7727
        %v7729 = vpop.f32.mrf.mxu0
        %7730 = vmatprep.mubr.bf16.mxu0 0
        %7731 = vmatmul.mubr.bf16.gmra.mxu0 %v6709
        %v7732 = vpop.f32.mrf.mxu0
        %v7733 = vadd.f32 0.0, %v7732
        %v7734 = vpop.f32.mrf.mxu0
        %v7735 = vpop.f32.mrf.mxu0
        %v7736 = vadd.f32 0.0, %v7735
        %v7737 = vpop.f32.mrf.mxu0
        %7738 = vmatprep.mubr.bf16.mxu0 0
        %7739 = vmatmul.mubr.bf16.gmra.mxu0 %v6712
        %v7740 = vpop.f32.mrf.mxu0
        %v7741 = vadd.f32 0.0, %v7740
        %v7742 = vpop.f32.mrf.mxu0
        %v7743 = vpop.f32.mrf.mxu0
        %v7744 = vadd.f32 0.0, %v7743
        %v7745 = vpop.f32.mrf.mxu0
        %7746 = vmatprep.mubr.bf16.mxu0 0
        %7747 = vmatmul.mubr.bf16.gmra.mxu0 %v6715
        %v7748 = vpop.f32.mrf.mxu0
        %v7749 = vadd.f32 0.0, %v7748
        %v7750 = vpop.f32.mrf.mxu0
        %v7751 = vpop.f32.mrf.mxu0
        %v7752 = vadd.f32 0.0, %v7751
        %v7753 = vpop.f32.mrf.mxu0
        %7754 = vmatprep.mubr.bf16.mxu0 0
        %7755 = vmatmul.mubr.bf16.gmra.mxu0 %v7469
        %v7756 = vpop.f32.mrf.mxu0
        %v7757 = vadd.f32 0.0, %v7756
        %v7758 = vpop.f32.mrf.mxu0
        %v7759 = vpop.f32.mrf.mxu0
        %v7760 = vadd.f32 0.0, %v7759
        %v7761 = vpop.f32.mrf.mxu0
        %7762 = vdwg.mxu0
        %v7763 = vadd.f32 %v7399, %v7509
        %v7764 = vadd.f32 %v7400, %v7512
        %v7765 = vadd.f32 %v7401, %v7517
        %v7766 = vadd.f32 %v7402, %v7520
        %v7767 = vadd.f32 %v7403, %v7525
        %v7768 = vadd.f32 %v7404, %v7528
        %v7769 = vadd.f32 %v7405, %v7533
        %v7770 = vadd.f32 %v7406, %v7536
        %v7771 = vadd.f32 %v7407, %v7541
        %v7772 = vadd.f32 %v7408, %v7544
        %v7773 = vadd.f32 %v7409, %v7549
        %v7774 = vadd.f32 %v7410, %v7552
        %v7775 = vadd.f32 %v7411, %v7557
        %v7776 = vadd.f32 %v7412, %v7560
        %v7777 = vadd.f32 %v7413, %v7565
        %v7778 = vadd.f32 %v7414, %v7568
        %v7779 = vadd.f32 %v7415, %v7573
        %v7780 = vadd.f32 %v7416, %v7576
        %v7781 = vadd.f32 %v7417, %v7581
        %v7782 = vadd.f32 %v7418, %v7584
        %v7783 = vadd.f32 %v7419, %v7589
        %v7784 = vadd.f32 %v7420, %v7592
        %v7785 = vadd.f32 %v7421, %v7597
        %v7786 = vadd.f32 %v7422, %v7600
        %v7787 = vadd.f32 %v7423, %v7605
        %v7788 = vadd.f32 %v7424, %v7608
        %v7789 = vadd.f32 %v7425, %v7613
        %v7790 = vadd.f32 %v7426, %v7616
        %v7791 = vadd.f32 %v7427, %v7621
        %v7792 = vadd.f32 %v7428, %v7624
        %v7793 = vadd.f32 %v7429, %v7629
        %v7794 = vadd.f32 %v7430, %v7632
        %v7795 = vadd.f32 %v7431, %v7637
        %v7796 = vadd.f32 %v7432, %v7640
        %v7797 = vadd.f32 %v7433, %v7645
        %v7798 = vadd.f32 %v7434, %v7648
        %v7799 = vadd.f32 %v7435, %v7653
        %v7800 = vadd.f32 %v7436, %v7656
        %v7801 = vadd.f32 %v7437, %v7661
        %v7802 = vadd.f32 %v7438, %v7664
        %v7803 = vadd.f32 %v7439, %v7669
        %v7804 = vadd.f32 %v7440, %v7672
        %v7805 = vadd.f32 %v7441, %v7677
        %v7806 = vadd.f32 %v7442, %v7680
        %v7807 = vadd.f32 %v7443, %v7685
        %v7808 = vadd.f32 %v7444, %v7688
        %v7809 = vadd.f32 %v7445, %v7693
        %v7810 = vadd.f32 %v7446, %v7696
        %v7811 = vadd.f32 %v7447, %v7701
        %v7812 = vadd.f32 %v7448, %v7704
        %v7813 = vadd.f32 %v7449, %v7709
        %v7814 = vadd.f32 %v7450, %v7712
        %v7815 = vadd.f32 %v7451, %v7717
        %v7816 = vadd.f32 %v7452, %v7720
        %v7817 = vadd.f32 %v7453, %v7725
        %v7818 = vadd.f32 %v7454, %v7728
        %v7819 = vadd.f32 %v7455, %v7733
        %v7820 = vadd.f32 %v7456, %v7736
        %v7821 = vadd.f32 %v7457, %v7741
        %v7822 = vadd.f32 %v7458, %v7744
        %v7823 = vadd.f32 %v7459, %v7749
        %v7824 = vadd.f32 %v7460, %v7752
        %v7825 = vadd.f32 %v7461, %v7757
        %v7826 = vadd.f32 %v7462, %v7760
        %s7827 = scalar_lea.vmem %s3, 16
        %v7828 = vld [vmem:[%s7827] sm:$0xf]
        %v7830 = vsel %vm5248, %v6171, 0
        %v7833 = vsel %vm5248, %v6172, 0
        %v7836 = vsel %vm6328, %v7828, 0
        %7838 = vmatprep.subr.bf16.mxu0 0
        %7839 = vmatpush1.bf16.msra.mxu0 0
        %7840 = vmatprep.subr.bf16.mxu0 0
        %7841 = vmatpush1.bf16.msra.mxu0 0
        %7842 = vmatprep.subr.bf16.mxu0 0
        %7843 = vmatpush1.bf16.msra.mxu0 0
        %7844 = vmatprep.subr.bf16.mxu0 0
        %7845 = vmatpush1.bf16.msra.mxu0 0
        %7846 = vmatprep.subr.bf16.mxu0 0
        %7847 = vmatpush1.bf16.msra.mxu0 0
        %7848 = vmatprep.subr.bf16.mxu0 0
        %7849 = vmatpush1.bf16.msra.mxu0 0
        %7850 = vmatprep.subr.bf16.mxu0 0
        %7851 = vmatpush1.bf16.msra.mxu0 0
        %7852 = vmatprep.subr.bf16.mxu0 0
        %7853 = vmatpush1.bf16.msra.mxu0 %v7836
        %7854 = vmatprep.subr.bf16.mxu0 0
        %7855 = vmatpush2.bf16.msra.mxu0 0
        %7856 = vmatprep.subr.bf16.mxu0 0
        %7857 = vmatpush2.bf16.msra.mxu0 0
        %7858 = vmatprep.subr.bf16.mxu0 0
        %7859 = vmatpush2.bf16.msra.mxu0 0
        %7860 = vmatprep.subr.bf16.mxu0 0
        %7861 = vmatpush2.bf16.msra.mxu0 0
        %7862 = vmatprep.subr.bf16.mxu0 0
        %7863 = vmatpush2.bf16.msra.mxu0 0
        %7864 = vmatprep.subr.bf16.mxu0 0
        %7865 = vmatpush2.bf16.msra.mxu0 0
        %7866 = vmatprep.subr.bf16.mxu0 0
        %7867 = vmatpush2.bf16.msra.mxu0 0
        %7868 = vmatprep.subr.bf16.mxu0 0
        %7869 = vmatpush2.bf16.msra.mxu0 0
        %7870 = vmatprep.mubr.bf16.mxu0 0
        %7871 = vmatmul.mubr.bf16.gmra.mxu0 %v6236
        %v7872 = vpop.f32.mrf.mxu0
        %v7873 = vadd.f32 0.0, %v7872
        %v7874 = vpop.f32.mrf.mxu0
        %v7875 = vpop.f32.mrf.mxu0
        %v7876 = vadd.f32 0.0, %v7875
        %v7877 = vpop.f32.mrf.mxu0
        %7878 = vmatprep.mubr.bf16.mxu0 0
        %7879 = vmatmul.mubr.bf16.gmra.mxu0 %v6239
        %v7880 = vpop.f32.mrf.mxu0
        %v7881 = vadd.f32 0.0, %v7880
        %v7882 = vpop.f32.mrf.mxu0
        %v7883 = vpop.f32.mrf.mxu0
        %v7884 = vadd.f32 0.0, %v7883
        %v7885 = vpop.f32.mrf.mxu0
        %7886 = vmatprep.mubr.bf16.mxu0 0
        %7887 = vmatmul.mubr.bf16.gmra.mxu0 %v6242
        %v7888 = vpop.f32.mrf.mxu0
        %v7889 = vadd.f32 0.0, %v7888
        %v7890 = vpop.f32.mrf.mxu0
        %v7891 = vpop.f32.mrf.mxu0
        %v7892 = vadd.f32 0.0, %v7891
        %v7893 = vpop.f32.mrf.mxu0
        %7894 = vmatprep.mubr.bf16.mxu0 0
        %7895 = vmatmul.mubr.bf16.gmra.mxu0 %v6245
        %v7896 = vpop.f32.mrf.mxu0
        %v7897 = vadd.f32 0.0, %v7896
        %v7898 = vpop.f32.mrf.mxu0
        %v7899 = vpop.f32.mrf.mxu0
        %v7900 = vadd.f32 0.0, %v7899
        %v7901 = vpop.f32.mrf.mxu0
        %7902 = vmatprep.mubr.bf16.mxu0 0
        %7903 = vmatmul.mubr.bf16.gmra.mxu0 %v6248
        %v7904 = vpop.f32.mrf.mxu0
        %v7905 = vadd.f32 0.0, %v7904
        %v7906 = vpop.f32.mrf.mxu0
        %v7907 = vpop.f32.mrf.mxu0
        %v7908 = vadd.f32 0.0, %v7907
        %v7909 = vpop.f32.mrf.mxu0
        %7910 = vmatprep.mubr.bf16.mxu0 0
        %7911 = vmatmul.mubr.bf16.gmra.mxu0 %v6251
        %v7912 = vpop.f32.mrf.mxu0
        %v7913 = vadd.f32 0.0, %v7912
        %v7914 = vpop.f32.mrf.mxu0
        %v7915 = vpop.f32.mrf.mxu0
        %v7916 = vadd.f32 0.0, %v7915
        %v7917 = vpop.f32.mrf.mxu0
        %7918 = vmatprep.mubr.bf16.mxu0 0
        %7919 = vmatmul.mubr.bf16.gmra.mxu0 %v6254
        %v7920 = vpop.f32.mrf.mxu0
        %v7921 = vadd.f32 0.0, %v7920
        %v7922 = vpop.f32.mrf.mxu0
        %v7923 = vpop.f32.mrf.mxu0
        %v7924 = vadd.f32 0.0, %v7923
        %v7925 = vpop.f32.mrf.mxu0
        %7926 = vmatprep.mubr.bf16.mxu0 0
        %7927 = vmatmul.mubr.bf16.gmra.mxu0 %v6257
        %v7928 = vpop.f32.mrf.mxu0
        %v7929 = vadd.f32 0.0, %v7928
        %v7930 = vpop.f32.mrf.mxu0
        %v7931 = vpop.f32.mrf.mxu0
        %v7932 = vadd.f32 0.0, %v7931
        %v7933 = vpop.f32.mrf.mxu0
        %7934 = vmatprep.mubr.bf16.mxu0 0
        %7935 = vmatmul.mubr.bf16.gmra.mxu0 %v6260
        %v7936 = vpop.f32.mrf.mxu0
        %v7937 = vadd.f32 0.0, %v7936
        %v7938 = vpop.f32.mrf.mxu0
        %v7939 = vpop.f32.mrf.mxu0
        %v7940 = vadd.f32 0.0, %v7939
        %v7941 = vpop.f32.mrf.mxu0
        %7942 = vmatprep.mubr.bf16.mxu0 0
        %7943 = vmatmul.mubr.bf16.gmra.mxu0 %v6263
        %v7944 = vpop.f32.mrf.mxu0
        %v7945 = vadd.f32 0.0, %v7944
        %v7946 = vpop.f32.mrf.mxu0
        %v7947 = vpop.f32.mrf.mxu0
        %v7948 = vadd.f32 0.0, %v7947
        %v7949 = vpop.f32.mrf.mxu0
        %7950 = vmatprep.mubr.bf16.mxu0 0
        %7951 = vmatmul.mubr.bf16.gmra.mxu0 %v6266
        %v7952 = vpop.f32.mrf.mxu0
        %v7953 = vadd.f32 0.0, %v7952
        %v7954 = vpop.f32.mrf.mxu0
        %v7955 = vpop.f32.mrf.mxu0
        %v7956 = vadd.f32 0.0, %v7955
        %v7957 = vpop.f32.mrf.mxu0
        %7958 = vmatprep.mubr.bf16.mxu0 0
        %7959 = vmatmul.mubr.bf16.gmra.mxu0 %v6269
        %v7960 = vpop.f32.mrf.mxu0
        %v7961 = vadd.f32 0.0, %v7960
        %v7962 = vpop.f32.mrf.mxu0
        %v7963 = vpop.f32.mrf.mxu0
        %v7964 = vadd.f32 0.0, %v7963
        %v7965 = vpop.f32.mrf.mxu0
        %7966 = vmatprep.mubr.bf16.mxu0 0
        %7967 = vmatmul.mubr.bf16.gmra.mxu0 %v6272
        %v7968 = vpop.f32.mrf.mxu0
        %v7969 = vadd.f32 0.0, %v7968
        %v7970 = vpop.f32.mrf.mxu0
        %v7971 = vpop.f32.mrf.mxu0
        %v7972 = vadd.f32 0.0, %v7971
        %v7973 = vpop.f32.mrf.mxu0
        %7974 = vmatprep.mubr.bf16.mxu0 0
        %7975 = vmatmul.mubr.bf16.gmra.mxu0 %v6275
        %v7976 = vpop.f32.mrf.mxu0
        %v7977 = vadd.f32 0.0, %v7976
        %v7978 = vpop.f32.mrf.mxu0
        %v7979 = vpop.f32.mrf.mxu0
        %v7980 = vadd.f32 0.0, %v7979
        %v7981 = vpop.f32.mrf.mxu0
        %7982 = vmatprep.mubr.bf16.mxu0 0
        %7983 = vmatmul.mubr.bf16.gmra.mxu0 %v6278
        %v7984 = vpop.f32.mrf.mxu0
        %v7985 = vadd.f32 0.0, %v7984
        %v7986 = vpop.f32.mrf.mxu0
        %v7987 = vpop.f32.mrf.mxu0
        %v7988 = vadd.f32 0.0, %v7987
        %v7989 = vpop.f32.mrf.mxu0
        %7990 = vmatprep.mubr.bf16.mxu0 0
        %7991 = vmatmul.mubr.bf16.gmra.mxu0 %v7830
        %v7992 = vpop.f32.mrf.mxu0
        %v7993 = vadd.f32 0.0, %v7992
        %v7994 = vpop.f32.mrf.mxu0
        %v7995 = vpop.f32.mrf.mxu0
        %v7996 = vadd.f32 0.0, %v7995
        %v7997 = vpop.f32.mrf.mxu0
        %7998 = vmatprep.mubr.bf16.mxu0 0
        %7999 = vmatmul.mubr.bf16.gmra.mxu0 %v6284
        %v8000 = vpop.f32.mrf.mxu0
        %v8001 = vadd.f32 0.0, %v8000
        %v8002 = vpop.f32.mrf.mxu0
        %v8003 = vpop.f32.mrf.mxu0
        %v8004 = vadd.f32 0.0, %v8003
        %v8005 = vpop.f32.mrf.mxu0
        %8006 = vmatprep.mubr.bf16.mxu0 0
        %8007 = vmatmul.mubr.bf16.gmra.mxu0 %v6287
        %v8008 = vpop.f32.mrf.mxu0
        %v8009 = vadd.f32 0.0, %v8008
        %v8010 = vpop.f32.mrf.mxu0
        %v8011 = vpop.f32.mrf.mxu0
        %v8012 = vadd.f32 0.0, %v8011
        %v8013 = vpop.f32.mrf.mxu0
        %8014 = vmatprep.mubr.bf16.mxu0 0
        %8015 = vmatmul.mubr.bf16.gmra.mxu0 %v6290
        %v8016 = vpop.f32.mrf.mxu0
        %v8017 = vadd.f32 0.0, %v8016
        %v8018 = vpop.f32.mrf.mxu0
        %v8019 = vpop.f32.mrf.mxu0
        %v8020 = vadd.f32 0.0, %v8019
        %v8021 = vpop.f32.mrf.mxu0
        %8022 = vmatprep.mubr.bf16.mxu0 0
        %8023 = vmatmul.mubr.bf16.gmra.mxu0 %v6293
        %v8024 = vpop.f32.mrf.mxu0
        %v8025 = vadd.f32 0.0, %v8024
        %v8026 = vpop.f32.mrf.mxu0
        %v8027 = vpop.f32.mrf.mxu0
        %v8028 = vadd.f32 0.0, %v8027
        %v8029 = vpop.f32.mrf.mxu0
        %8030 = vmatprep.mubr.bf16.mxu0 0
        %8031 = vmatmul.mubr.bf16.gmra.mxu0 %v6296
        %v8032 = vpop.f32.mrf.mxu0
        %v8033 = vadd.f32 0.0, %v8032
        %v8034 = vpop.f32.mrf.mxu0
        %v8035 = vpop.f32.mrf.mxu0
        %v8036 = vadd.f32 0.0, %v8035
        %v8037 = vpop.f32.mrf.mxu0
        %8038 = vmatprep.mubr.bf16.mxu0 0
        %8039 = vmatmul.mubr.bf16.gmra.mxu0 %v6299
        %v8040 = vpop.f32.mrf.mxu0
        %v8041 = vadd.f32 0.0, %v8040
        %v8042 = vpop.f32.mrf.mxu0
        %v8043 = vpop.f32.mrf.mxu0
        %v8044 = vadd.f32 0.0, %v8043
        %v8045 = vpop.f32.mrf.mxu0
        %8046 = vmatprep.mubr.bf16.mxu0 0
        %8047 = vmatmul.mubr.bf16.gmra.mxu0 %v6302
        %v8048 = vpop.f32.mrf.mxu0
        %v8049 = vadd.f32 0.0, %v8048
        %v8050 = vpop.f32.mrf.mxu0
        %v8051 = vpop.f32.mrf.mxu0
        %v8052 = vadd.f32 0.0, %v8051
        %v8053 = vpop.f32.mrf.mxu0
        %8054 = vmatprep.mubr.bf16.mxu0 0
        %8055 = vmatmul.mubr.bf16.gmra.mxu0 %v6305
        %v8056 = vpop.f32.mrf.mxu0
        %v8057 = vadd.f32 0.0, %v8056
        %v8058 = vpop.f32.mrf.mxu0
        %v8059 = vpop.f32.mrf.mxu0
        %v8060 = vadd.f32 0.0, %v8059
        %v8061 = vpop.f32.mrf.mxu0
        %8062 = vmatprep.mubr.bf16.mxu0 0
        %8063 = vmatmul.mubr.bf16.gmra.mxu0 %v6308
        %v8064 = vpop.f32.mrf.mxu0
        %v8065 = vadd.f32 0.0, %v8064
        %v8066 = vpop.f32.mrf.mxu0
        %v8067 = vpop.f32.mrf.mxu0
        %v8068 = vadd.f32 0.0, %v8067
        %v8069 = vpop.f32.mrf.mxu0
        %8070 = vmatprep.mubr.bf16.mxu0 0
        %8071 = vmatmul.mubr.bf16.gmra.mxu0 %v6311
        %v8072 = vpop.f32.mrf.mxu0
        %v8073 = vadd.f32 0.0, %v8072
        %v8074 = vpop.f32.mrf.mxu0
        %v8075 = vpop.f32.mrf.mxu0
        %v8076 = vadd.f32 0.0, %v8075
        %v8077 = vpop.f32.mrf.mxu0
        %8078 = vmatprep.mubr.bf16.mxu0 0
        %8079 = vmatmul.mubr.bf16.gmra.mxu0 %v6314
        %v8080 = vpop.f32.mrf.mxu0
        %v8081 = vadd.f32 0.0, %v8080
        %v8082 = vpop.f32.mrf.mxu0
        %v8083 = vpop.f32.mrf.mxu0
        %v8084 = vadd.f32 0.0, %v8083
        %v8085 = vpop.f32.mrf.mxu0
        %8086 = vmatprep.mubr.bf16.mxu0 0
        %8087 = vmatmul.mubr.bf16.gmra.mxu0 %v6317
        %v8088 = vpop.f32.mrf.mxu0
        %v8089 = vadd.f32 0.0, %v8088
        %v8090 = vpop.f32.mrf.mxu0
        %v8091 = vpop.f32.mrf.mxu0
        %v8092 = vadd.f32 0.0, %v8091
        %v8093 = vpop.f32.mrf.mxu0
        %8094 = vmatprep.mubr.bf16.mxu0 0
        %8095 = vmatmul.mubr.bf16.gmra.mxu0 %v6320
        %v8096 = vpop.f32.mrf.mxu0
        %v8097 = vadd.f32 0.0, %v8096
        %v8098 = vpop.f32.mrf.mxu0
        %v8099 = vpop.f32.mrf.mxu0
        %v8100 = vadd.f32 0.0, %v8099
        %v8101 = vpop.f32.mrf.mxu0
        %8102 = vmatprep.mubr.bf16.mxu0 0
        %8103 = vmatmul.mubr.bf16.gmra.mxu0 %v6323
        %v8104 = vpop.f32.mrf.mxu0
        %v8105 = vadd.f32 0.0, %v8104
        %v8106 = vpop.f32.mrf.mxu0
        %v8107 = vpop.f32.mrf.mxu0
        %v8108 = vadd.f32 0.0, %v8107
        %v8109 = vpop.f32.mrf.mxu0
        %8110 = vmatprep.mubr.bf16.mxu0 0
        %8111 = vmatmul.mubr.bf16.gmra.mxu0 %v6326
        %v8112 = vpop.f32.mrf.mxu0
        %v8113 = vadd.f32 0.0, %v8112
        %v8114 = vpop.f32.mrf.mxu0
        %v8115 = vpop.f32.mrf.mxu0
        %v8116 = vadd.f32 0.0, %v8115
        %v8117 = vpop.f32.mrf.mxu0
        %8118 = vmatprep.mubr.bf16.mxu0 0
        %8119 = vmatmul.mubr.bf16.gmra.mxu0 %v7833
        %v8120 = vpop.f32.mrf.mxu0
        %v8121 = vadd.f32 0.0, %v8120
        %v8122 = vpop.f32.mrf.mxu0
        %v8123 = vpop.f32.mrf.mxu0
        %v8124 = vadd.f32 0.0, %v8123
        %v8125 = vpop.f32.mrf.mxu0
        %8126 = vdwg.mxu0
        %v8127 = vadd.f32 %v7763, %v7873
        %v8128 = vadd.f32 %v7764, %v7876
        %v8129 = vadd.f32 %v7765, %v7881
        %v8130 = vadd.f32 %v7766, %v7884
        %v8131 = vadd.f32 %v7767, %v7889
        %v8132 = vadd.f32 %v7768, %v7892
        %v8133 = vadd.f32 %v7769, %v7897
        %v8134 = vadd.f32 %v7770, %v7900
        %v8135 = vadd.f32 %v7771, %v7905
        %v8136 = vadd.f32 %v7772, %v7908
        %v8137 = vadd.f32 %v7773, %v7913
        %v8138 = vadd.f32 %v7774, %v7916
        %v8139 = vadd.f32 %v7775, %v7921
        %v8140 = vadd.f32 %v7776, %v7924
        %v8141 = vadd.f32 %v7777, %v7929
        %v8142 = vadd.f32 %v7778, %v7932
        %v8143 = vadd.f32 %v7779, %v7937
        %v8144 = vadd.f32 %v7780, %v7940
        %v8145 = vadd.f32 %v7781, %v7945
        %v8146 = vadd.f32 %v7782, %v7948
        %v8147 = vadd.f32 %v7783, %v7953
        %v8148 = vadd.f32 %v7784, %v7956
        %v8149 = vadd.f32 %v7785, %v7961
        %v8150 = vadd.f32 %v7786, %v7964
        %v8151 = vadd.f32 %v7787, %v7969
        %v8152 = vadd.f32 %v7788, %v7972
        %v8153 = vadd.f32 %v7789, %v7977
        %v8154 = vadd.f32 %v7790, %v7980
        %v8155 = vadd.f32 %v7791, %v7985
        %v8156 = vadd.f32 %v7792, %v7988
        %v8157 = vadd.f32 %v7793, %v7993
        %v8158 = vadd.f32 %v7794, %v7996
        %v8159 = vadd.f32 %v7795, %v8001
        %v8160 = vadd.f32 %v7796, %v8004
        %v8161 = vadd.f32 %v7797, %v8009
        %v8162 = vadd.f32 %v7798, %v8012
        %v8163 = vadd.f32 %v7799, %v8017
        %v8164 = vadd.f32 %v7800, %v8020
        %v8165 = vadd.f32 %v7801, %v8025
        %v8166 = vadd.f32 %v7802, %v8028
        %v8167 = vadd.f32 %v7803, %v8033
        %v8168 = vadd.f32 %v7804, %v8036
        %v8169 = vadd.f32 %v7805, %v8041
        %v8170 = vadd.f32 %v7806, %v8044
        %v8171 = vadd.f32 %v7807, %v8049
        %v8172 = vadd.f32 %v7808, %v8052
        %v8173 = vadd.f32 %v7809, %v8057
        %v8174 = vadd.f32 %v7810, %v8060
        %v8175 = vadd.f32 %v7811, %v8065
        %v8176 = vadd.f32 %v7812, %v8068
        %v8177 = vadd.f32 %v7813, %v8073
        %v8178 = vadd.f32 %v7814, %v8076
        %v8179 = vadd.f32 %v7815, %v8081
        %v8180 = vadd.f32 %v7816, %v8084
        %v8181 = vadd.f32 %v7817, %v8089
        %v8182 = vadd.f32 %v7818, %v8092
        %v8183 = vadd.f32 %v7819, %v8097
        %v8184 = vadd.f32 %v7820, %v8100
        %v8185 = vadd.f32 %v7821, %v8105
        %v8186 = vadd.f32 %v7822, %v8108
        %v8187 = vadd.f32 %v7823, %v8113
        %v8188 = vadd.f32 %v7824, %v8116
        %v8189 = vadd.f32 %v7825, %v8121
        %v8190 = vadd.f32 %v7826, %v8124
        %s8191 = scalar_lea.vmem %s3, 20
        %v8192 = vld [vmem:[%s8191] sm:$0xf]
        %v8194 = vsel %vm5248, %v6187, 0
        %v8197 = vsel %vm5248, %v6188, 0
        %v8200 = vsel %vm6328, %v8192, 0
        %8202 = vmatprep.subr.bf16.mxu0 0
        %8203 = vmatpush1.bf16.msra.mxu0 0
        %8204 = vmatprep.subr.bf16.mxu0 0
        %8205 = vmatpush1.bf16.msra.mxu0 0
        %8206 = vmatprep.subr.bf16.mxu0 0
        %8207 = vmatpush1.bf16.msra.mxu0 0
        %8208 = vmatprep.subr.bf16.mxu0 0
        %8209 = vmatpush1.bf16.msra.mxu0 0
        %8210 = vmatprep.subr.bf16.mxu0 0
        %8211 = vmatpush1.bf16.msra.mxu0 0
        %8212 = vmatprep.subr.bf16.mxu0 0
        %8213 = vmatpush1.bf16.msra.mxu0 0
        %8214 = vmatprep.subr.bf16.mxu0 0
        %8215 = vmatpush1.bf16.msra.mxu0 0
        %8216 = vmatprep.subr.bf16.mxu0 0
        %8217 = vmatpush1.bf16.msra.mxu0 %v8200
        %8218 = vmatprep.subr.bf16.mxu0 0
        %8219 = vmatpush2.bf16.msra.mxu0 0
        %8220 = vmatprep.subr.bf16.mxu0 0
        %8221 = vmatpush2.bf16.msra.mxu0 0
        %8222 = vmatprep.subr.bf16.mxu0 0
        %8223 = vmatpush2.bf16.msra.mxu0 0
        %8224 = vmatprep.subr.bf16.mxu0 0
        %8225 = vmatpush2.bf16.msra.mxu0 0
        %8226 = vmatprep.subr.bf16.mxu0 0
        %8227 = vmatpush2.bf16.msra.mxu0 0
        %8228 = vmatprep.subr.bf16.mxu0 0
        %8229 = vmatpush2.bf16.msra.mxu0 0
        %8230 = vmatprep.subr.bf16.mxu0 0
        %8231 = vmatpush2.bf16.msra.mxu0 0
        %8232 = vmatprep.subr.bf16.mxu0 0
        %8233 = vmatpush2.bf16.msra.mxu0 0
        %8234 = vmatprep.mubr.bf16.mxu0 0
        %8235 = vmatmul.mubr.bf16.gmra.mxu0 %v7015
        %v8236 = vpop.f32.mrf.mxu0
        %v8237 = vadd.f32 0.0, %v8236
        %v8238 = vpop.f32.mrf.mxu0
        %v8239 = vpop.f32.mrf.mxu0
        %v8240 = vadd.f32 0.0, %v8239
        %v8241 = vpop.f32.mrf.mxu0
        %8242 = vmatprep.mubr.bf16.mxu0 0
        %8243 = vmatmul.mubr.bf16.gmra.mxu0 %v7018
        %v8244 = vpop.f32.mrf.mxu0
        %v8245 = vadd.f32 0.0, %v8244
        %v8246 = vpop.f32.mrf.mxu0
        %v8247 = vpop.f32.mrf.mxu0
        %v8248 = vadd.f32 0.0, %v8247
        %v8249 = vpop.f32.mrf.mxu0
        %8250 = vmatprep.mubr.bf16.mxu0 0
        %8251 = vmatmul.mubr.bf16.gmra.mxu0 %v7021
        %v8252 = vpop.f32.mrf.mxu0
        %v8253 = vadd.f32 0.0, %v8252
        %v8254 = vpop.f32.mrf.mxu0
        %v8255 = vpop.f32.mrf.mxu0
        %v8256 = vadd.f32 0.0, %v8255
        %v8257 = vpop.f32.mrf.mxu0
        %8258 = vmatprep.mubr.bf16.mxu0 0
        %8259 = vmatmul.mubr.bf16.gmra.mxu0 %v7024
        %v8260 = vpop.f32.mrf.mxu0
        %v8261 = vadd.f32 0.0, %v8260
        %v8262 = vpop.f32.mrf.mxu0
        %v8263 = vpop.f32.mrf.mxu0
        %v8264 = vadd.f32 0.0, %v8263
        %v8265 = vpop.f32.mrf.mxu0
        %8266 = vmatprep.mubr.bf16.mxu0 0
        %8267 = vmatmul.mubr.bf16.gmra.mxu0 %v7027
        %v8268 = vpop.f32.mrf.mxu0
        %v8269 = vadd.f32 0.0, %v8268
        %v8270 = vpop.f32.mrf.mxu0
        %v8271 = vpop.f32.mrf.mxu0
        %v8272 = vadd.f32 0.0, %v8271
        %v8273 = vpop.f32.mrf.mxu0
        %8274 = vmatprep.mubr.bf16.mxu0 0
        %8275 = vmatmul.mubr.bf16.gmra.mxu0 %v7030
        %v8276 = vpop.f32.mrf.mxu0
        %v8277 = vadd.f32 0.0, %v8276
        %v8278 = vpop.f32.mrf.mxu0
        %v8279 = vpop.f32.mrf.mxu0
        %v8280 = vadd.f32 0.0, %v8279
        %v8281 = vpop.f32.mrf.mxu0
        %8282 = vmatprep.mubr.bf16.mxu0 0
        %8283 = vmatmul.mubr.bf16.gmra.mxu0 %v7033
        %v8284 = vpop.f32.mrf.mxu0
        %v8285 = vadd.f32 0.0, %v8284
        %v8286 = vpop.f32.mrf.mxu0
        %v8287 = vpop.f32.mrf.mxu0
        %v8288 = vadd.f32 0.0, %v8287
        %v8289 = vpop.f32.mrf.mxu0
        %8290 = vmatprep.mubr.bf16.mxu0 0
        %8291 = vmatmul.mubr.bf16.gmra.mxu0 %v7036
        %v8292 = vpop.f32.mrf.mxu0
        %v8293 = vadd.f32 0.0, %v8292
        %v8294 = vpop.f32.mrf.mxu0
        %v8295 = vpop.f32.mrf.mxu0
        %v8296 = vadd.f32 0.0, %v8295
        %v8297 = vpop.f32.mrf.mxu0
        %8298 = vmatprep.mubr.bf16.mxu0 0
        %8299 = vmatmul.mubr.bf16.gmra.mxu0 %v7039
        %v8300 = vpop.f32.mrf.mxu0
        %v8301 = vadd.f32 0.0, %v8300
        %v8302 = vpop.f32.mrf.mxu0
        %v8303 = vpop.f32.mrf.mxu0
        %v8304 = vadd.f32 0.0, %v8303
        %v8305 = vpop.f32.mrf.mxu0
        %8306 = vmatprep.mubr.bf16.mxu0 0
        %8307 = vmatmul.mubr.bf16.gmra.mxu0 %v7042
        %v8308 = vpop.f32.mrf.mxu0
        %v8309 = vadd.f32 0.0, %v8308
        %v8310 = vpop.f32.mrf.mxu0
        %v8311 = vpop.f32.mrf.mxu0
        %v8312 = vadd.f32 0.0, %v8311
        %v8313 = vpop.f32.mrf.mxu0
        %8314 = vmatprep.mubr.bf16.mxu0 0
        %8315 = vmatmul.mubr.bf16.gmra.mxu0 %v7045
        %v8316 = vpop.f32.mrf.mxu0
        %v8317 = vadd.f32 0.0, %v8316
        %v8318 = vpop.f32.mrf.mxu0
        %v8319 = vpop.f32.mrf.mxu0
        %v8320 = vadd.f32 0.0, %v8319
        %v8321 = vpop.f32.mrf.mxu0
        %8322 = vmatprep.mubr.bf16.mxu0 0
        %8323 = vmatmul.mubr.bf16.gmra.mxu0 %v7048
        %v8324 = vpop.f32.mrf.mxu0
        %v8325 = vadd.f32 0.0, %v8324
        %v8326 = vpop.f32.mrf.mxu0
        %v8327 = vpop.f32.mrf.mxu0
        %v8328 = vadd.f32 0.0, %v8327
        %v8329 = vpop.f32.mrf.mxu0
        %8330 = vmatprep.mubr.bf16.mxu0 0
        %8331 = vmatmul.mubr.bf16.gmra.mxu0 %v7051
        %v8332 = vpop.f32.mrf.mxu0
        %v8333 = vadd.f32 0.0, %v8332
        %v8334 = vpop.f32.mrf.mxu0
        %v8335 = vpop.f32.mrf.mxu0
        %v8336 = vadd.f32 0.0, %v8335
        %v8337 = vpop.f32.mrf.mxu0
        %8338 = vmatprep.mubr.bf16.mxu0 0
        %8339 = vmatmul.mubr.bf16.gmra.mxu0 %v7054
        %v8340 = vpop.f32.mrf.mxu0
        %v8341 = vadd.f32 0.0, %v8340
        %v8342 = vpop.f32.mrf.mxu0
        %v8343 = vpop.f32.mrf.mxu0
        %v8344 = vadd.f32 0.0, %v8343
        %v8345 = vpop.f32.mrf.mxu0
        %8346 = vmatprep.mubr.bf16.mxu0 0
        %8347 = vmatmul.mubr.bf16.gmra.mxu0 %v7057
        %v8348 = vpop.f32.mrf.mxu0
        %v8349 = vadd.f32 0.0, %v8348
        %v8350 = vpop.f32.mrf.mxu0
        %v8351 = vpop.f32.mrf.mxu0
        %v8352 = vadd.f32 0.0, %v8351
        %v8353 = vpop.f32.mrf.mxu0
        %8354 = vmatprep.mubr.bf16.mxu0 0
        %8355 = vmatmul.mubr.bf16.gmra.mxu0 %v8194
        %v8356 = vpop.f32.mrf.mxu0
        %v8357 = vadd.f32 0.0, %v8356
        %v8358 = vpop.f32.mrf.mxu0
        %v8359 = vpop.f32.mrf.mxu0
        %v8360 = vadd.f32 0.0, %v8359
        %v8361 = vpop.f32.mrf.mxu0
        %8362 = vmatprep.mubr.bf16.mxu0 0
        %8363 = vmatmul.mubr.bf16.gmra.mxu0 %v7063
        %v8364 = vpop.f32.mrf.mxu0
        %v8365 = vadd.f32 0.0, %v8364
        %v8366 = vpop.f32.mrf.mxu0
        %v8367 = vpop.f32.mrf.mxu0
        %v8368 = vadd.f32 0.0, %v8367
        %v8369 = vpop.f32.mrf.mxu0
        %8370 = vmatprep.mubr.bf16.mxu0 0
        %8371 = vmatmul.mubr.bf16.gmra.mxu0 %v7066
        %v8372 = vpop.f32.mrf.mxu0
        %v8373 = vadd.f32 0.0, %v8372
        %v8374 = vpop.f32.mrf.mxu0
        %v8375 = vpop.f32.mrf.mxu0
        %v8376 = vadd.f32 0.0, %v8375
        %v8377 = vpop.f32.mrf.mxu0
        %8378 = vmatprep.mubr.bf16.mxu0 0
        %8379 = vmatmul.mubr.bf16.gmra.mxu0 %v7069
        %v8380 = vpop.f32.mrf.mxu0
        %v8381 = vadd.f32 0.0, %v8380
        %v8382 = vpop.f32.mrf.mxu0
        %v8383 = vpop.f32.mrf.mxu0
        %v8384 = vadd.f32 0.0, %v8383
        %v8385 = vpop.f32.mrf.mxu0
        %8386 = vmatprep.mubr.bf16.mxu0 0
        %8387 = vmatmul.mubr.bf16.gmra.mxu0 %v7072
        %v8388 = vpop.f32.mrf.mxu0
        %v8389 = vadd.f32 0.0, %v8388
        %v8390 = vpop.f32.mrf.mxu0
        %v8391 = vpop.f32.mrf.mxu0
        %v8392 = vadd.f32 0.0, %v8391
        %v8393 = vpop.f32.mrf.mxu0
        %8394 = vmatprep.mubr.bf16.mxu0 0
        %8395 = vmatmul.mubr.bf16.gmra.mxu0 %v7075
        %v8396 = vpop.f32.mrf.mxu0
        %v8397 = vadd.f32 0.0, %v8396
        %v8398 = vpop.f32.mrf.mxu0
        %v8399 = vpop.f32.mrf.mxu0
        %v8400 = vadd.f32 0.0, %v8399
        %v8401 = vpop.f32.mrf.mxu0
        %8402 = vmatprep.mubr.bf16.mxu0 0
        %8403 = vmatmul.mubr.bf16.gmra.mxu0 %v7078
        %v8404 = vpop.f32.mrf.mxu0
        %v8405 = vadd.f32 0.0, %v8404
        %v8406 = vpop.f32.mrf.mxu0
        %v8407 = vpop.f32.mrf.mxu0
        %v8408 = vadd.f32 0.0, %v8407
        %v8409 = vpop.f32.mrf.mxu0
        %8410 = vmatprep.mubr.bf16.mxu0 0
        %8411 = vmatmul.mubr.bf16.gmra.mxu0 %v7081
        %v8412 = vpop.f32.mrf.mxu0
        %v8413 = vadd.f32 0.0, %v8412
        %v8414 = vpop.f32.mrf.mxu0
        %v8415 = vpop.f32.mrf.mxu0
        %v8416 = vadd.f32 0.0, %v8415
        %v8417 = vpop.f32.mrf.mxu0
        %8418 = vmatprep.mubr.bf16.mxu0 0
        %8419 = vmatmul.mubr.bf16.gmra.mxu0 %v7084
        %v8420 = vpop.f32.mrf.mxu0
        %v8421 = vadd.f32 0.0, %v8420
        %v8422 = vpop.f32.mrf.mxu0
        %v8423 = vpop.f32.mrf.mxu0
        %v8424 = vadd.f32 0.0, %v8423
        %v8425 = vpop.f32.mrf.mxu0
        %8426 = vmatprep.mubr.bf16.mxu0 0
        %8427 = vmatmul.mubr.bf16.gmra.mxu0 %v7087
        %v8428 = vpop.f32.mrf.mxu0
        %v8429 = vadd.f32 0.0, %v8428
        %v8430 = vpop.f32.mrf.mxu0
        %v8431 = vpop.f32.mrf.mxu0
        %v8432 = vadd.f32 0.0, %v8431
        %v8433 = vpop.f32.mrf.mxu0
        %8434 = vmatprep.mubr.bf16.mxu0 0
        %8435 = vmatmul.mubr.bf16.gmra.mxu0 %v7090
        %v8436 = vpop.f32.mrf.mxu0
        %v8437 = vadd.f32 0.0, %v8436
        %v8438 = vpop.f32.mrf.mxu0
        %v8439 = vpop.f32.mrf.mxu0
        %v8440 = vadd.f32 0.0, %v8439
        %v8441 = vpop.f32.mrf.mxu0
        %8442 = vmatprep.mubr.bf16.mxu0 0
        %8443 = vmatmul.mubr.bf16.gmra.mxu0 %v7093
        %v8444 = vpop.f32.mrf.mxu0
        %v8445 = vadd.f32 0.0, %v8444
        %v8446 = vpop.f32.mrf.mxu0
        %v8447 = vpop.f32.mrf.mxu0
        %v8448 = vadd.f32 0.0, %v8447
        %v8449 = vpop.f32.mrf.mxu0
        %8450 = vmatprep.mubr.bf16.mxu0 0
        %8451 = vmatmul.mubr.bf16.gmra.mxu0 %v7096
        %v8452 = vpop.f32.mrf.mxu0
        %v8453 = vadd.f32 0.0, %v8452
        %v8454 = vpop.f32.mrf.mxu0
        %v8455 = vpop.f32.mrf.mxu0
        %v8456 = vadd.f32 0.0, %v8455
        %v8457 = vpop.f32.mrf.mxu0
        %8458 = vmatprep.mubr.bf16.mxu0 0
        %8459 = vmatmul.mubr.bf16.gmra.mxu0 %v7099
        %v8460 = vpop.f32.mrf.mxu0
        %v8461 = vadd.f32 0.0, %v8460
        %v8462 = vpop.f32.mrf.mxu0
        %v8463 = vpop.f32.mrf.mxu0
        %v8464 = vadd.f32 0.0, %v8463
        %v8465 = vpop.f32.mrf.mxu0
        %8466 = vmatprep.mubr.bf16.mxu0 0
        %8467 = vmatmul.mubr.bf16.gmra.mxu0 %v7102
        %v8468 = vpop.f32.mrf.mxu0
        %v8469 = vadd.f32 0.0, %v8468
        %v8470 = vpop.f32.mrf.mxu0
        %v8471 = vpop.f32.mrf.mxu0
        %v8472 = vadd.f32 0.0, %v8471
        %v8473 = vpop.f32.mrf.mxu0
        %8474 = vmatprep.mubr.bf16.mxu0 0
        %8475 = vmatmul.mubr.bf16.gmra.mxu0 %v7105
        %v8476 = vpop.f32.mrf.mxu0
        %v8477 = vadd.f32 0.0, %v8476
        %v8478 = vpop.f32.mrf.mxu0
        %v8479 = vpop.f32.mrf.mxu0
        %v8480 = vadd.f32 0.0, %v8479
        %v8481 = vpop.f32.mrf.mxu0
        %8482 = vmatprep.mubr.bf16.mxu0 0
        %8483 = vmatmul.mubr.bf16.gmra.mxu0 %v8197
        %v8484 = vpop.f32.mrf.mxu0
        %v8485 = vadd.f32 0.0, %v8484
        %v8486 = vpop.f32.mrf.mxu0
        %v8487 = vpop.f32.mrf.mxu0
        %v8488 = vadd.f32 0.0, %v8487
        %v8489 = vpop.f32.mrf.mxu0
        %8490 = vdwg.mxu0
        %v8491 = vadd.f32 %v8127, %v8237
        %v8492 = vadd.f32 %v8128, %v8240
        %v8493 = vadd.f32 %v8129, %v8245
        %v8494 = vadd.f32 %v8130, %v8248
        %v8495 = vadd.f32 %v8131, %v8253
        %v8496 = vadd.f32 %v8132, %v8256
        %v8497 = vadd.f32 %v8133, %v8261
        %v8498 = vadd.f32 %v8134, %v8264
        %v8499 = vadd.f32 %v8135, %v8269
        %v8500 = vadd.f32 %v8136, %v8272
        %v8501 = vadd.f32 %v8137, %v8277
        %v8502 = vadd.f32 %v8138, %v8280
        %v8503 = vadd.f32 %v8139, %v8285
        %v8504 = vadd.f32 %v8140, %v8288
        %v8505 = vadd.f32 %v8141, %v8293
        %v8506 = vadd.f32 %v8142, %v8296
        %v8507 = vadd.f32 %v8143, %v8301
        %v8508 = vadd.f32 %v8144, %v8304
        %v8509 = vadd.f32 %v8145, %v8309
        %v8510 = vadd.f32 %v8146, %v8312
        %v8511 = vadd.f32 %v8147, %v8317
        %v8512 = vadd.f32 %v8148, %v8320
        %v8513 = vadd.f32 %v8149, %v8325
        %v8514 = vadd.f32 %v8150, %v8328
        %v8515 = vadd.f32 %v8151, %v8333
        %v8516 = vadd.f32 %v8152, %v8336
        %v8517 = vadd.f32 %v8153, %v8341
        %v8518 = vadd.f32 %v8154, %v8344
        %v8519 = vadd.f32 %v8155, %v8349
        %v8520 = vadd.f32 %v8156, %v8352
        %v8521 = vadd.f32 %v8157, %v8357
        %v8522 = vadd.f32 %v8158, %v8360
        %v8523 = vadd.f32 %v8159, %v8365
        %v8524 = vadd.f32 %v8160, %v8368
        %v8525 = vadd.f32 %v8161, %v8373
        %v8526 = vadd.f32 %v8162, %v8376
        %v8527 = vadd.f32 %v8163, %v8381
        %v8528 = vadd.f32 %v8164, %v8384
        %v8529 = vadd.f32 %v8165, %v8389
        %v8530 = vadd.f32 %v8166, %v8392
        %v8531 = vadd.f32 %v8167, %v8397
        %v8532 = vadd.f32 %v8168, %v8400
        %v8533 = vadd.f32 %v8169, %v8405
        %v8534 = vadd.f32 %v8170, %v8408
        %v8535 = vadd.f32 %v8171, %v8413
        %v8536 = vadd.f32 %v8172, %v8416
        %v8537 = vadd.f32 %v8173, %v8421
        %v8538 = vadd.f32 %v8174, %v8424
        %v8539 = vadd.f32 %v8175, %v8429
        %v8540 = vadd.f32 %v8176, %v8432
        %v8541 = vadd.f32 %v8177, %v8437
        %v8542 = vadd.f32 %v8178, %v8440
        %v8543 = vadd.f32 %v8179, %v8445
        %v8544 = vadd.f32 %v8180, %v8448
        %v8545 = vadd.f32 %v8181, %v8453
        %v8546 = vadd.f32 %v8182, %v8456
        %v8547 = vadd.f32 %v8183, %v8461
        %v8548 = vadd.f32 %v8184, %v8464
        %v8549 = vadd.f32 %v8185, %v8469
        %v8550 = vadd.f32 %v8186, %v8472
        %v8551 = vadd.f32 %v8187, %v8477
        %v8552 = vadd.f32 %v8188, %v8480
        %v8553 = vadd.f32 %v8189, %v8485
        %v8554 = vadd.f32 %v8190, %v8488
        %s8555 = scalar_lea.vmem %s3, 24
        %v8556 = vld [vmem:[%s8555] sm:$0xf]
        %v8558 = vsel %vm5248, %v6189, 0
        %v8561 = vsel %vm5248, %v6190, 0
        %v8564 = vsel %vm6328, %v8556, 0
        %8566 = vmatprep.subr.bf16.mxu0 0
        %8567 = vmatpush1.bf16.msra.mxu0 0
        %8568 = vmatprep.subr.bf16.mxu0 0
        %8569 = vmatpush1.bf16.msra.mxu0 0
        %8570 = vmatprep.subr.bf16.mxu0 0
        %8571 = vmatpush1.bf16.msra.mxu0 0
        %8572 = vmatprep.subr.bf16.mxu0 0
        %8573 = vmatpush1.bf16.msra.mxu0 0
        %8574 = vmatprep.subr.bf16.mxu0 0
        %8575 = vmatpush1.bf16.msra.mxu0 0
        %8576 = vmatprep.subr.bf16.mxu0 0
        %8577 = vmatpush1.bf16.msra.mxu0 0
        %8578 = vmatprep.subr.bf16.mxu0 0
        %8579 = vmatpush1.bf16.msra.mxu0 0
        %8580 = vmatprep.subr.bf16.mxu0 0
        %8581 = vmatpush1.bf16.msra.mxu0 %v8564
        %8582 = vmatprep.subr.bf16.mxu0 0
        %8583 = vmatpush2.bf16.msra.mxu0 0
        %8584 = vmatprep.subr.bf16.mxu0 0
        %8585 = vmatpush2.bf16.msra.mxu0 0
        %8586 = vmatprep.subr.bf16.mxu0 0
        %8587 = vmatpush2.bf16.msra.mxu0 0
        %8588 = vmatprep.subr.bf16.mxu0 0
        %8589 = vmatpush2.bf16.msra.mxu0 0
        %8590 = vmatprep.subr.bf16.mxu0 0
        %8591 = vmatpush2.bf16.msra.mxu0 0
        %8592 = vmatprep.subr.bf16.mxu0 0
        %8593 = vmatpush2.bf16.msra.mxu0 0
        %8594 = vmatprep.subr.bf16.mxu0 0
        %8595 = vmatpush2.bf16.msra.mxu0 0
        %8596 = vmatprep.subr.bf16.mxu0 0
        %8597 = vmatpush2.bf16.msra.mxu0 0
        %8598 = vmatprep.mubr.bf16.mxu0 0
        %8599 = vmatmul.mubr.bf16.gmra.mxu0 %v6628
        %v8600 = vpop.f32.mrf.mxu0
        %v8601 = vadd.f32 0.0, %v8600
        %v8602 = vpop.f32.mrf.mxu0
        %v8603 = vpop.f32.mrf.mxu0
        %v8604 = vadd.f32 0.0, %v8603
        %v8605 = vpop.f32.mrf.mxu0
        %8606 = vmatprep.mubr.bf16.mxu0 0
        %8607 = vmatmul.mubr.bf16.gmra.mxu0 %v6631
        %v8608 = vpop.f32.mrf.mxu0
        %v8609 = vadd.f32 0.0, %v8608
        %v8610 = vpop.f32.mrf.mxu0
        %v8611 = vpop.f32.mrf.mxu0
        %v8612 = vadd.f32 0.0, %v8611
        %v8613 = vpop.f32.mrf.mxu0
        %8614 = vmatprep.mubr.bf16.mxu0 0
        %8615 = vmatmul.mubr.bf16.gmra.mxu0 %v6634
        %v8616 = vpop.f32.mrf.mxu0
        %v8617 = vadd.f32 0.0, %v8616
        %v8618 = vpop.f32.mrf.mxu0
        %v8619 = vpop.f32.mrf.mxu0
        %v8620 = vadd.f32 0.0, %v8619
        %v8621 = vpop.f32.mrf.mxu0
        %8622 = vmatprep.mubr.bf16.mxu0 0
        %8623 = vmatmul.mubr.bf16.gmra.mxu0 %v6637
        %v8624 = vpop.f32.mrf.mxu0
        %v8625 = vadd.f32 0.0, %v8624
        %v8626 = vpop.f32.mrf.mxu0
        %v8627 = vpop.f32.mrf.mxu0
        %v8628 = vadd.f32 0.0, %v8627
        %v8629 = vpop.f32.mrf.mxu0
        %8630 = vmatprep.mubr.bf16.mxu0 0
        %8631 = vmatmul.mubr.bf16.gmra.mxu0 %v6640
        %v8632 = vpop.f32.mrf.mxu0
        %v8633 = vadd.f32 0.0, %v8632
        %v8634 = vpop.f32.mrf.mxu0
        %v8635 = vpop.f32.mrf.mxu0
        %v8636 = vadd.f32 0.0, %v8635
        %v8637 = vpop.f32.mrf.mxu0
        %8638 = vmatprep.mubr.bf16.mxu0 0
        %8639 = vmatmul.mubr.bf16.gmra.mxu0 %v6643
        %v8640 = vpop.f32.mrf.mxu0
        %v8641 = vadd.f32 0.0, %v8640
        %v8642 = vpop.f32.mrf.mxu0
        %v8643 = vpop.f32.mrf.mxu0
        %v8644 = vadd.f32 0.0, %v8643
        %v8645 = vpop.f32.mrf.mxu0
        %8646 = vmatprep.mubr.bf16.mxu0 0
        %8647 = vmatmul.mubr.bf16.gmra.mxu0 %v6646
        %v8648 = vpop.f32.mrf.mxu0
        %v8649 = vadd.f32 0.0, %v8648
        %v8650 = vpop.f32.mrf.mxu0
        %v8651 = vpop.f32.mrf.mxu0
        %v8652 = vadd.f32 0.0, %v8651
        %v8653 = vpop.f32.mrf.mxu0
        %8654 = vmatprep.mubr.bf16.mxu0 0
        %8655 = vmatmul.mubr.bf16.gmra.mxu0 %v6649
        %v8656 = vpop.f32.mrf.mxu0
        %v8657 = vadd.f32 0.0, %v8656
        %v8658 = vpop.f32.mrf.mxu0
        %v8659 = vpop.f32.mrf.mxu0
        %v8660 = vadd.f32 0.0, %v8659
        %v8661 = vpop.f32.mrf.mxu0
        %8662 = vmatprep.mubr.bf16.mxu0 0
        %8663 = vmatmul.mubr.bf16.gmra.mxu0 %v6652
        %v8664 = vpop.f32.mrf.mxu0
        %v8665 = vadd.f32 0.0, %v8664
        %v8666 = vpop.f32.mrf.mxu0
        %v8667 = vpop.f32.mrf.mxu0
        %v8668 = vadd.f32 0.0, %v8667
        %v8669 = vpop.f32.mrf.mxu0
        %8670 = vmatprep.mubr.bf16.mxu0 0
        %8671 = vmatmul.mubr.bf16.gmra.mxu0 %v6655
        %v8672 = vpop.f32.mrf.mxu0
        %v8673 = vadd.f32 0.0, %v8672
        %v8674 = vpop.f32.mrf.mxu0
        %v8675 = vpop.f32.mrf.mxu0
        %v8676 = vadd.f32 0.0, %v8675
        %v8677 = vpop.f32.mrf.mxu0
        %8678 = vmatprep.mubr.bf16.mxu0 0
        %8679 = vmatmul.mubr.bf16.gmra.mxu0 %v6658
        %v8680 = vpop.f32.mrf.mxu0
        %v8681 = vadd.f32 0.0, %v8680
        %v8682 = vpop.f32.mrf.mxu0
        %v8683 = vpop.f32.mrf.mxu0
        %v8684 = vadd.f32 0.0, %v8683
        %v8685 = vpop.f32.mrf.mxu0
        %8686 = vmatprep.mubr.bf16.mxu0 0
        %8687 = vmatmul.mubr.bf16.gmra.mxu0 %v6661
        %v8688 = vpop.f32.mrf.mxu0
        %v8689 = vadd.f32 0.0, %v8688
        %v8690 = vpop.f32.mrf.mxu0
        %v8691 = vpop.f32.mrf.mxu0
        %v8692 = vadd.f32 0.0, %v8691
        %v8693 = vpop.f32.mrf.mxu0
        %8694 = vmatprep.mubr.bf16.mxu0 0
        %8695 = vmatmul.mubr.bf16.gmra.mxu0 %v6664
        %v8696 = vpop.f32.mrf.mxu0
        %v8697 = vadd.f32 0.0, %v8696
        %v8698 = vpop.f32.mrf.mxu0
        %v8699 = vpop.f32.mrf.mxu0
        %v8700 = vadd.f32 0.0, %v8699
        %v8701 = vpop.f32.mrf.mxu0
        %8702 = vmatprep.mubr.bf16.mxu0 0
        %8703 = vmatmul.mubr.bf16.gmra.mxu0 %v6667
        %v8704 = vpop.f32.mrf.mxu0
        %v8705 = vadd.f32 0.0, %v8704
        %v8706 = vpop.f32.mrf.mxu0
        %v8707 = vpop.f32.mrf.mxu0
        %v8708 = vadd.f32 0.0, %v8707
        %v8709 = vpop.f32.mrf.mxu0
        %8710 = vmatprep.mubr.bf16.mxu0 0
        %8711 = vmatmul.mubr.bf16.gmra.mxu0 %v7466
        %v8712 = vpop.f32.mrf.mxu0
        %v8713 = vadd.f32 0.0, %v8712
        %v8714 = vpop.f32.mrf.mxu0
        %v8715 = vpop.f32.mrf.mxu0
        %v8716 = vadd.f32 0.0, %v8715
        %v8717 = vpop.f32.mrf.mxu0
        %8718 = vmatprep.mubr.bf16.mxu0 0
        %8719 = vmatmul.mubr.bf16.gmra.mxu0 %v8558
        %v8720 = vpop.f32.mrf.mxu0
        %v8721 = vadd.f32 0.0, %v8720
        %v8722 = vpop.f32.mrf.mxu0
        %v8723 = vpop.f32.mrf.mxu0
        %v8724 = vadd.f32 0.0, %v8723
        %v8725 = vpop.f32.mrf.mxu0
        %8726 = vmatprep.mubr.bf16.mxu0 0
        %8727 = vmatmul.mubr.bf16.gmra.mxu0 %v6676
        %v8728 = vpop.f32.mrf.mxu0
        %v8729 = vadd.f32 0.0, %v8728
        %v8730 = vpop.f32.mrf.mxu0
        %v8731 = vpop.f32.mrf.mxu0
        %v8732 = vadd.f32 0.0, %v8731
        %v8733 = vpop.f32.mrf.mxu0
        %8734 = vmatprep.mubr.bf16.mxu0 0
        %8735 = vmatmul.mubr.bf16.gmra.mxu0 %v6679
        %v8736 = vpop.f32.mrf.mxu0
        %v8737 = vadd.f32 0.0, %v8736
        %v8738 = vpop.f32.mrf.mxu0
        %v8739 = vpop.f32.mrf.mxu0
        %v8740 = vadd.f32 0.0, %v8739
        %v8741 = vpop.f32.mrf.mxu0
        %8742 = vmatprep.mubr.bf16.mxu0 0
        %8743 = vmatmul.mubr.bf16.gmra.mxu0 %v6682
        %v8744 = vpop.f32.mrf.mxu0
        %v8745 = vadd.f32 0.0, %v8744
        %v8746 = vpop.f32.mrf.mxu0
        %v8747 = vpop.f32.mrf.mxu0
        %v8748 = vadd.f32 0.0, %v8747
        %v8749 = vpop.f32.mrf.mxu0
        %8750 = vmatprep.mubr.bf16.mxu0 0
        %8751 = vmatmul.mubr.bf16.gmra.mxu0 %v6685
        %v8752 = vpop.f32.mrf.mxu0
        %v8753 = vadd.f32 0.0, %v8752
        %v8754 = vpop.f32.mrf.mxu0
        %v8755 = vpop.f32.mrf.mxu0
        %v8756 = vadd.f32 0.0, %v8755
        %v8757 = vpop.f32.mrf.mxu0
        %8758 = vmatprep.mubr.bf16.mxu0 0
        %8759 = vmatmul.mubr.bf16.gmra.mxu0 %v6688
        %v8760 = vpop.f32.mrf.mxu0
        %v8761 = vadd.f32 0.0, %v8760
        %v8762 = vpop.f32.mrf.mxu0
        %v8763 = vpop.f32.mrf.mxu0
        %v8764 = vadd.f32 0.0, %v8763
        %v8765 = vpop.f32.mrf.mxu0
        %8766 = vmatprep.mubr.bf16.mxu0 0
        %8767 = vmatmul.mubr.bf16.gmra.mxu0 %v6691
        %v8768 = vpop.f32.mrf.mxu0
        %v8769 = vadd.f32 0.0, %v8768
        %v8770 = vpop.f32.mrf.mxu0
        %v8771 = vpop.f32.mrf.mxu0
        %v8772 = vadd.f32 0.0, %v8771
        %v8773 = vpop.f32.mrf.mxu0
        %8774 = vmatprep.mubr.bf16.mxu0 0
        %8775 = vmatmul.mubr.bf16.gmra.mxu0 %v6694
        %v8776 = vpop.f32.mrf.mxu0
        %v8777 = vadd.f32 0.0, %v8776
        %v8778 = vpop.f32.mrf.mxu0
        %v8779 = vpop.f32.mrf.mxu0
        %v8780 = vadd.f32 0.0, %v8779
        %v8781 = vpop.f32.mrf.mxu0
        %8782 = vmatprep.mubr.bf16.mxu0 0
        %8783 = vmatmul.mubr.bf16.gmra.mxu0 %v6697
        %v8784 = vpop.f32.mrf.mxu0
        %v8785 = vadd.f32 0.0, %v8784
        %v8786 = vpop.f32.mrf.mxu0
        %v8787 = vpop.f32.mrf.mxu0
        %v8788 = vadd.f32 0.0, %v8787
        %v8789 = vpop.f32.mrf.mxu0
        %8790 = vmatprep.mubr.bf16.mxu0 0
        %8791 = vmatmul.mubr.bf16.gmra.mxu0 %v6700
        %v8792 = vpop.f32.mrf.mxu0
        %v8793 = vadd.f32 0.0, %v8792
        %v8794 = vpop.f32.mrf.mxu0
        %v8795 = vpop.f32.mrf.mxu0
        %v8796 = vadd.f32 0.0, %v8795
        %v8797 = vpop.f32.mrf.mxu0
        %8798 = vmatprep.mubr.bf16.mxu0 0
        %8799 = vmatmul.mubr.bf16.gmra.mxu0 %v6703
        %v8800 = vpop.f32.mrf.mxu0
        %v8801 = vadd.f32 0.0, %v8800
        %v8802 = vpop.f32.mrf.mxu0
        %v8803 = vpop.f32.mrf.mxu0
        %v8804 = vadd.f32 0.0, %v8803
        %v8805 = vpop.f32.mrf.mxu0
        %8806 = vmatprep.mubr.bf16.mxu0 0
        %8807 = vmatmul.mubr.bf16.gmra.mxu0 %v6706
        %v8808 = vpop.f32.mrf.mxu0
        %v8809 = vadd.f32 0.0, %v8808
        %v8810 = vpop.f32.mrf.mxu0
        %v8811 = vpop.f32.mrf.mxu0
        %v8812 = vadd.f32 0.0, %v8811
        %v8813 = vpop.f32.mrf.mxu0
        %8814 = vmatprep.mubr.bf16.mxu0 0
        %8815 = vmatmul.mubr.bf16.gmra.mxu0 %v6709
        %v8816 = vpop.f32.mrf.mxu0
        %v8817 = vadd.f32 0.0, %v8816
        %v8818 = vpop.f32.mrf.mxu0
        %v8819 = vpop.f32.mrf.mxu0
        %v8820 = vadd.f32 0.0, %v8819
        %v8821 = vpop.f32.mrf.mxu0
        %8822 = vmatprep.mubr.bf16.mxu0 0
        %8823 = vmatmul.mubr.bf16.gmra.mxu0 %v6712
        %v8824 = vpop.f32.mrf.mxu0
        %v8825 = vadd.f32 0.0, %v8824
        %v8826 = vpop.f32.mrf.mxu0
        %v8827 = vpop.f32.mrf.mxu0
        %v8828 = vadd.f32 0.0, %v8827
        %v8829 = vpop.f32.mrf.mxu0
        %8830 = vmatprep.mubr.bf16.mxu0 0
        %8831 = vmatmul.mubr.bf16.gmra.mxu0 %v6715
        %v8832 = vpop.f32.mrf.mxu0
        %v8833 = vadd.f32 0.0, %v8832
        %v8834 = vpop.f32.mrf.mxu0
        %v8835 = vpop.f32.mrf.mxu0
        %v8836 = vadd.f32 0.0, %v8835
        %v8837 = vpop.f32.mrf.mxu0
        %8838 = vmatprep.mubr.bf16.mxu0 0
        %8839 = vmatmul.mubr.bf16.gmra.mxu0 %v7469
        %v8840 = vpop.f32.mrf.mxu0
        %v8841 = vadd.f32 0.0, %v8840
        %v8842 = vpop.f32.mrf.mxu0
        %v8843 = vpop.f32.mrf.mxu0
        %v8844 = vadd.f32 0.0, %v8843
        %v8845 = vpop.f32.mrf.mxu0
        %8846 = vmatprep.mubr.bf16.mxu0 0
        %8847 = vmatmul.mubr.bf16.gmra.mxu0 %v8561
        %v8848 = vpop.f32.mrf.mxu0
        %v8849 = vadd.f32 0.0, %v8848
        %v8850 = vpop.f32.mrf.mxu0
        %v8851 = vpop.f32.mrf.mxu0
        %v8852 = vadd.f32 0.0, %v8851
        %v8853 = vpop.f32.mrf.mxu0
        %8854 = vdwg.mxu0
        %v8855 = vadd.f32 %v8491, %v8601
        %v8856 = vadd.f32 %v8492, %v8604
        %v8857 = vadd.f32 %v8493, %v8609
        %v8858 = vadd.f32 %v8494, %v8612
        %v8859 = vadd.f32 %v8495, %v8617
        %v8860 = vadd.f32 %v8496, %v8620
        %v8861 = vadd.f32 %v8497, %v8625
        %v8862 = vadd.f32 %v8498, %v8628
        %v8863 = vadd.f32 %v8499, %v8633
        %v8864 = vadd.f32 %v8500, %v8636
        %v8865 = vadd.f32 %v8501, %v8641
        %v8866 = vadd.f32 %v8502, %v8644
        %v8867 = vadd.f32 %v8503, %v8649
        %v8868 = vadd.f32 %v8504, %v8652
        %v8869 = vadd.f32 %v8505, %v8657
        %v8870 = vadd.f32 %v8506, %v8660
        %v8871 = vadd.f32 %v8507, %v8665
        %v8872 = vadd.f32 %v8508, %v8668
        %v8873 = vadd.f32 %v8509, %v8673
        %v8874 = vadd.f32 %v8510, %v8676
        %v8875 = vadd.f32 %v8511, %v8681
        %v8876 = vadd.f32 %v8512, %v8684
        %v8877 = vadd.f32 %v8513, %v8689
        %v8878 = vadd.f32 %v8514, %v8692
        %v8879 = vadd.f32 %v8515, %v8697
        %v8880 = vadd.f32 %v8516, %v8700
        %v8881 = vadd.f32 %v8517, %v8705
        %v8882 = vadd.f32 %v8518, %v8708
        %v8883 = vadd.f32 %v8519, %v8713
        %v8884 = vadd.f32 %v8520, %v8716
        %v8885 = vadd.f32 %v8521, %v8721
        %v8886 = vadd.f32 %v8522, %v8724
        %v8887 = vadd.f32 %v8523, %v8729
        %v8888 = vadd.f32 %v8524, %v8732
        %v8889 = vadd.f32 %v8525, %v8737
        %v8890 = vadd.f32 %v8526, %v8740
        %v8891 = vadd.f32 %v8527, %v8745
        %v8892 = vadd.f32 %v8528, %v8748
        %v8893 = vadd.f32 %v8529, %v8753
        %v8894 = vadd.f32 %v8530, %v8756
        %v8895 = vadd.f32 %v8531, %v8761
        %v8896 = vadd.f32 %v8532, %v8764
        %v8897 = vadd.f32 %v8533, %v8769
        %v8898 = vadd.f32 %v8534, %v8772
        %v8899 = vadd.f32 %v8535, %v8777
        %v8900 = vadd.f32 %v8536, %v8780
        %v8901 = vadd.f32 %v8537, %v8785
        %v8902 = vadd.f32 %v8538, %v8788
        %v8903 = vadd.f32 %v8539, %v8793
        %v8904 = vadd.f32 %v8540, %v8796
        %v8905 = vadd.f32 %v8541, %v8801
        %v8906 = vadd.f32 %v8542, %v8804
        %v8907 = vadd.f32 %v8543, %v8809
        %v8908 = vadd.f32 %v8544, %v8812
        %v8909 = vadd.f32 %v8545, %v8817
        %v8910 = vadd.f32 %v8546, %v8820
        %v8911 = vadd.f32 %v8547, %v8825
        %v8912 = vadd.f32 %v8548, %v8828
        %v8913 = vadd.f32 %v8549, %v8833
        %v8914 = vadd.f32 %v8550, %v8836
        %v8915 = vadd.f32 %v8551, %v8841
        %v8916 = vadd.f32 %v8552, %v8844
        %v8917 = vadd.f32 %v8553, %v8849
        %v8918 = vadd.f32 %v8554, %v8852
        %s8919 = scalar_lea.vmem %s3, 28
        %v8920 = vld [vmem:[%s8919] sm:$0xf]
        %v8922 = vsel %vm5248, %v6211, 0
        %v8925 = vsel %vm5248, %v6212, 0
        %v8928 = vsel %vm6328, %v8920, 0
        %8930 = vmatprep.subr.bf16.mxu0 0
        %8931 = vmatpush1.bf16.msra.mxu0 0
        %8932 = vmatprep.subr.bf16.mxu0 0
        %8933 = vmatpush1.bf16.msra.mxu0 0
        %8934 = vmatprep.subr.bf16.mxu0 0
        %8935 = vmatpush1.bf16.msra.mxu0 0
        %8936 = vmatprep.subr.bf16.mxu0 0
        %8937 = vmatpush1.bf16.msra.mxu0 0
        %8938 = vmatprep.subr.bf16.mxu0 0
        %8939 = vmatpush1.bf16.msra.mxu0 0
        %8940 = vmatprep.subr.bf16.mxu0 0
        %8941 = vmatpush1.bf16.msra.mxu0 0
        %8942 = vmatprep.subr.bf16.mxu0 0
        %8943 = vmatpush1.bf16.msra.mxu0 0
        %8944 = vmatprep.subr.bf16.mxu0 0
        %8945 = vmatpush1.bf16.msra.mxu0 %v8928
        %8946 = vmatprep.subr.bf16.mxu0 0
        %8947 = vmatpush2.bf16.msra.mxu0 0
        %8948 = vmatprep.subr.bf16.mxu0 0
        %8949 = vmatpush2.bf16.msra.mxu0 0
        %8950 = vmatprep.subr.bf16.mxu0 0
        %8951 = vmatpush2.bf16.msra.mxu0 0
        %8952 = vmatprep.subr.bf16.mxu0 0
        %8953 = vmatpush2.bf16.msra.mxu0 0
        %8954 = vmatprep.subr.bf16.mxu0 0
        %8955 = vmatpush2.bf16.msra.mxu0 0
        %8956 = vmatprep.subr.bf16.mxu0 0
        %8957 = vmatpush2.bf16.msra.mxu0 0
        %8958 = vmatprep.subr.bf16.mxu0 0
        %8959 = vmatpush2.bf16.msra.mxu0 0
        %8960 = vmatprep.subr.bf16.mxu0 0
        %8961 = vmatpush2.bf16.msra.mxu0 0
        %8962 = vmatprep.mubr.bf16.mxu0 0
        %8963 = vmatmul.mubr.bf16.gmra.mxu0 %v6239
        %v8964 = vpop.f32.mrf.mxu0
        %v8965 = vadd.f32 0.0, %v8964
        %v8966 = vpop.f32.mrf.mxu0
        %v8967 = vpop.f32.mrf.mxu0
        %v8968 = vadd.f32 0.0, %v8967
        %v8969 = vpop.f32.mrf.mxu0
        %8970 = vmatprep.mubr.bf16.mxu0 0
        %8971 = vmatmul.mubr.bf16.gmra.mxu0 %v6242
        %v8972 = vpop.f32.mrf.mxu0
        %v8973 = vadd.f32 0.0, %v8972
        %v8974 = vpop.f32.mrf.mxu0
        %v8975 = vpop.f32.mrf.mxu0
        %v8976 = vadd.f32 0.0, %v8975
        %v8977 = vpop.f32.mrf.mxu0
        %8978 = vmatprep.mubr.bf16.mxu0 0
        %8979 = vmatmul.mubr.bf16.gmra.mxu0 %v6245
        %v8980 = vpop.f32.mrf.mxu0
        %v8981 = vadd.f32 0.0, %v8980
        %v8982 = vpop.f32.mrf.mxu0
        %v8983 = vpop.f32.mrf.mxu0
        %v8984 = vadd.f32 0.0, %v8983
        %v8985 = vpop.f32.mrf.mxu0
        %8986 = vmatprep.mubr.bf16.mxu0 0
        %8987 = vmatmul.mubr.bf16.gmra.mxu0 %v6248
        %v8988 = vpop.f32.mrf.mxu0
        %v8989 = vadd.f32 0.0, %v8988
        %v8990 = vpop.f32.mrf.mxu0
        %v8991 = vpop.f32.mrf.mxu0
        %v8992 = vadd.f32 0.0, %v8991
        %v8993 = vpop.f32.mrf.mxu0
        %8994 = vmatprep.mubr.bf16.mxu0 0
        %8995 = vmatmul.mubr.bf16.gmra.mxu0 %v6251
        %v8996 = vpop.f32.mrf.mxu0
        %v8997 = vadd.f32 0.0, %v8996
        %v8998 = vpop.f32.mrf.mxu0
        %v8999 = vpop.f32.mrf.mxu0
        %v9000 = vadd.f32 0.0, %v8999
        %v9001 = vpop.f32.mrf.mxu0
        %9002 = vmatprep.mubr.bf16.mxu0 0
        %9003 = vmatmul.mubr.bf16.gmra.mxu0 %v6254
        %v9004 = vpop.f32.mrf.mxu0
        %v9005 = vadd.f32 0.0, %v9004
        %v9006 = vpop.f32.mrf.mxu0
        %v9007 = vpop.f32.mrf.mxu0
        %v9008 = vadd.f32 0.0, %v9007
        %v9009 = vpop.f32.mrf.mxu0
        %9010 = vmatprep.mubr.bf16.mxu0 0
        %9011 = vmatmul.mubr.bf16.gmra.mxu0 %v6257
        %v9012 = vpop.f32.mrf.mxu0
        %v9013 = vadd.f32 0.0, %v9012
        %v9014 = vpop.f32.mrf.mxu0
        %v9015 = vpop.f32.mrf.mxu0
        %v9016 = vadd.f32 0.0, %v9015
        %v9017 = vpop.f32.mrf.mxu0
        %9018 = vmatprep.mubr.bf16.mxu0 0
        %9019 = vmatmul.mubr.bf16.gmra.mxu0 %v6260
        %v9020 = vpop.f32.mrf.mxu0
        %v9021 = vadd.f32 0.0, %v9020
        %v9022 = vpop.f32.mrf.mxu0
        %v9023 = vpop.f32.mrf.mxu0
        %v9024 = vadd.f32 0.0, %v9023
        %v9025 = vpop.f32.mrf.mxu0
        %9026 = vmatprep.mubr.bf16.mxu0 0
        %9027 = vmatmul.mubr.bf16.gmra.mxu0 %v6263
        %v9028 = vpop.f32.mrf.mxu0
        %v9029 = vadd.f32 0.0, %v9028
        %v9030 = vpop.f32.mrf.mxu0
        %v9031 = vpop.f32.mrf.mxu0
        %v9032 = vadd.f32 0.0, %v9031
        %v9033 = vpop.f32.mrf.mxu0
        %9034 = vmatprep.mubr.bf16.mxu0 0
        %9035 = vmatmul.mubr.bf16.gmra.mxu0 %v6266
        %v9036 = vpop.f32.mrf.mxu0
        %v9037 = vadd.f32 0.0, %v9036
        %v9038 = vpop.f32.mrf.mxu0
        %v9039 = vpop.f32.mrf.mxu0
        %v9040 = vadd.f32 0.0, %v9039
        %v9041 = vpop.f32.mrf.mxu0
        %9042 = vmatprep.mubr.bf16.mxu0 0
        %9043 = vmatmul.mubr.bf16.gmra.mxu0 %v6269
        %v9044 = vpop.f32.mrf.mxu0
        %v9045 = vadd.f32 0.0, %v9044
        %v9046 = vpop.f32.mrf.mxu0
        %v9047 = vpop.f32.mrf.mxu0
        %v9048 = vadd.f32 0.0, %v9047
        %v9049 = vpop.f32.mrf.mxu0
        %9050 = vmatprep.mubr.bf16.mxu0 0
        %9051 = vmatmul.mubr.bf16.gmra.mxu0 %v6272
        %v9052 = vpop.f32.mrf.mxu0
        %v9053 = vadd.f32 0.0, %v9052
        %v9054 = vpop.f32.mrf.mxu0
        %v9055 = vpop.f32.mrf.mxu0
        %v9056 = vadd.f32 0.0, %v9055
        %v9057 = vpop.f32.mrf.mxu0
        %9058 = vmatprep.mubr.bf16.mxu0 0
        %9059 = vmatmul.mubr.bf16.gmra.mxu0 %v6275
        %v9060 = vpop.f32.mrf.mxu0
        %v9061 = vadd.f32 0.0, %v9060
        %v9062 = vpop.f32.mrf.mxu0
        %v9063 = vpop.f32.mrf.mxu0
        %v9064 = vadd.f32 0.0, %v9063
        %v9065 = vpop.f32.mrf.mxu0
        %9066 = vmatprep.mubr.bf16.mxu0 0
        %9067 = vmatmul.mubr.bf16.gmra.mxu0 %v6278
        %v9068 = vpop.f32.mrf.mxu0
        %v9069 = vadd.f32 0.0, %v9068
        %v9070 = vpop.f32.mrf.mxu0
        %v9071 = vpop.f32.mrf.mxu0
        %v9072 = vadd.f32 0.0, %v9071
        %v9073 = vpop.f32.mrf.mxu0
        %9074 = vmatprep.mubr.bf16.mxu0 0
        %9075 = vmatmul.mubr.bf16.gmra.mxu0 %v7830
        %v9076 = vpop.f32.mrf.mxu0
        %v9077 = vadd.f32 0.0, %v9076
        %v9078 = vpop.f32.mrf.mxu0
        %v9079 = vpop.f32.mrf.mxu0
        %v9080 = vadd.f32 0.0, %v9079
        %v9081 = vpop.f32.mrf.mxu0
        %9082 = vmatprep.mubr.bf16.mxu0 0
        %9083 = vmatmul.mubr.bf16.gmra.mxu0 %v8922
        %v9084 = vpop.f32.mrf.mxu0
        %v9085 = vadd.f32 0.0, %v9084
        %v9086 = vpop.f32.mrf.mxu0
        %v9087 = vpop.f32.mrf.mxu0
        %v9088 = vadd.f32 0.0, %v9087
        %v9089 = vpop.f32.mrf.mxu0
        %9090 = vmatprep.mubr.bf16.mxu0 0
        %9091 = vmatmul.mubr.bf16.gmra.mxu0 %v6287
        %v9092 = vpop.f32.mrf.mxu0
        %v9093 = vadd.f32 0.0, %v9092
        %v9094 = vpop.f32.mrf.mxu0
        %v9095 = vpop.f32.mrf.mxu0
        %v9096 = vadd.f32 0.0, %v9095
        %v9097 = vpop.f32.mrf.mxu0
        %9098 = vmatprep.mubr.bf16.mxu0 0
        %9099 = vmatmul.mubr.bf16.gmra.mxu0 %v6290
        %v9100 = vpop.f32.mrf.mxu0
        %v9101 = vadd.f32 0.0, %v9100
        %v9102 = vpop.f32.mrf.mxu0
        %v9103 = vpop.f32.mrf.mxu0
        %v9104 = vadd.f32 0.0, %v9103
        %v9105 = vpop.f32.mrf.mxu0
        %9106 = vmatprep.mubr.bf16.mxu0 0
        %9107 = vmatmul.mubr.bf16.gmra.mxu0 %v6293
        %v9108 = vpop.f32.mrf.mxu0
        %v9109 = vadd.f32 0.0, %v9108
        %v9110 = vpop.f32.mrf.mxu0
        %v9111 = vpop.f32.mrf.mxu0
        %v9112 = vadd.f32 0.0, %v9111
        %v9113 = vpop.f32.mrf.mxu0
        %9114 = vmatprep.mubr.bf16.mxu0 0
        %9115 = vmatmul.mubr.bf16.gmra.mxu0 %v6296
        %v9116 = vpop.f32.mrf.mxu0
        %v9117 = vadd.f32 0.0, %v9116
        %v9118 = vpop.f32.mrf.mxu0
        %v9119 = vpop.f32.mrf.mxu0
        %v9120 = vadd.f32 0.0, %v9119
        %v9121 = vpop.f32.mrf.mxu0
        %9122 = vmatprep.mubr.bf16.mxu0 0
        %9123 = vmatmul.mubr.bf16.gmra.mxu0 %v6299
        %v9124 = vpop.f32.mrf.mxu0
        %v9125 = vadd.f32 0.0, %v9124
        %v9126 = vpop.f32.mrf.mxu0
        %v9127 = vpop.f32.mrf.mxu0
        %v9128 = vadd.f32 0.0, %v9127
        %v9129 = vpop.f32.mrf.mxu0
        %9130 = vmatprep.mubr.bf16.mxu0 0
        %9131 = vmatmul.mubr.bf16.gmra.mxu0 %v6302
        %v9132 = vpop.f32.mrf.mxu0
        %v9133 = vadd.f32 0.0, %v9132
        %v9134 = vpop.f32.mrf.mxu0
        %v9135 = vpop.f32.mrf.mxu0
        %v9136 = vadd.f32 0.0, %v9135
        %v9137 = vpop.f32.mrf.mxu0
        %9138 = vmatprep.mubr.bf16.mxu0 0
        %9139 = vmatmul.mubr.bf16.gmra.mxu0 %v6305
        %v9140 = vpop.f32.mrf.mxu0
        %v9141 = vadd.f32 0.0, %v9140
        %v9142 = vpop.f32.mrf.mxu0
        %v9143 = vpop.f32.mrf.mxu0
        %v9144 = vadd.f32 0.0, %v9143
        %v9145 = vpop.f32.mrf.mxu0
        %9146 = vmatprep.mubr.bf16.mxu0 0
        %9147 = vmatmul.mubr.bf16.gmra.mxu0 %v6308
        %v9148 = vpop.f32.mrf.mxu0
        %v9149 = vadd.f32 0.0, %v9148
        %v9150 = vpop.f32.mrf.mxu0
        %v9151 = vpop.f32.mrf.mxu0
        %v9152 = vadd.f32 0.0, %v9151
        %v9153 = vpop.f32.mrf.mxu0
        %9154 = vmatprep.mubr.bf16.mxu0 0
        %9155 = vmatmul.mubr.bf16.gmra.mxu0 %v6311
        %v9156 = vpop.f32.mrf.mxu0
        %v9157 = vadd.f32 0.0, %v9156
        %v9158 = vpop.f32.mrf.mxu0
        %v9159 = vpop.f32.mrf.mxu0
        %v9160 = vadd.f32 0.0, %v9159
        %v9161 = vpop.f32.mrf.mxu0
        %9162 = vmatprep.mubr.bf16.mxu0 0
        %9163 = vmatmul.mubr.bf16.gmra.mxu0 %v6314
        %v9164 = vpop.f32.mrf.mxu0
        %v9165 = vadd.f32 0.0, %v9164
        %v9166 = vpop.f32.mrf.mxu0
        %v9167 = vpop.f32.mrf.mxu0
        %v9168 = vadd.f32 0.0, %v9167
        %v9169 = vpop.f32.mrf.mxu0
        %9170 = vmatprep.mubr.bf16.mxu0 0
        %9171 = vmatmul.mubr.bf16.gmra.mxu0 %v6317
        %v9172 = vpop.f32.mrf.mxu0
        %v9173 = vadd.f32 0.0, %v9172
        %v9174 = vpop.f32.mrf.mxu0
        %v9175 = vpop.f32.mrf.mxu0
        %v9176 = vadd.f32 0.0, %v9175
        %v9177 = vpop.f32.mrf.mxu0
        %9178 = vmatprep.mubr.bf16.mxu0 0
        %9179 = vmatmul.mubr.bf16.gmra.mxu0 %v6320
        %v9180 = vpop.f32.mrf.mxu0
        %v9181 = vadd.f32 0.0, %v9180
        %v9182 = vpop.f32.mrf.mxu0
        %v9183 = vpop.f32.mrf.mxu0
        %v9184 = vadd.f32 0.0, %v9183
        %v9185 = vpop.f32.mrf.mxu0
        %9186 = vmatprep.mubr.bf16.mxu0 0
        %9187 = vmatmul.mubr.bf16.gmra.mxu0 %v6323
        %v9188 = vpop.f32.mrf.mxu0
        %v9189 = vadd.f32 0.0, %v9188
        %v9190 = vpop.f32.mrf.mxu0
        %v9191 = vpop.f32.mrf.mxu0
        %v9192 = vadd.f32 0.0, %v9191
        %v9193 = vpop.f32.mrf.mxu0
        %9194 = vmatprep.mubr.bf16.mxu0 0
        %9195 = vmatmul.mubr.bf16.gmra.mxu0 %v6326
        %v9196 = vpop.f32.mrf.mxu0
        %v9197 = vadd.f32 0.0, %v9196
        %v9198 = vpop.f32.mrf.mxu0
        %v9199 = vpop.f32.mrf.mxu0
        %v9200 = vadd.f32 0.0, %v9199
        %v9201 = vpop.f32.mrf.mxu0
        %9202 = vmatprep.mubr.bf16.mxu0 0
        %9203 = vmatmul.mubr.bf16.gmra.mxu0 %v7833
        %v9204 = vpop.f32.mrf.mxu0
        %v9205 = vadd.f32 0.0, %v9204
        %v9206 = vpop.f32.mrf.mxu0
        %v9207 = vpop.f32.mrf.mxu0
        %v9208 = vadd.f32 0.0, %v9207
        %v9209 = vpop.f32.mrf.mxu0
        %9210 = vmatprep.mubr.bf16.mxu0 0
        %9211 = vmatmul.mubr.bf16.gmra.mxu0 %v8925
        %v9212 = vpop.f32.mrf.mxu0
        %v9213 = vadd.f32 0.0, %v9212
        %v9214 = vpop.f32.mrf.mxu0
        %v9215 = vpop.f32.mrf.mxu0
        %v9216 = vadd.f32 0.0, %v9215
        %v9217 = vpop.f32.mrf.mxu0
        %9218 = vdwg.mxu0
        %v9219 = vadd.f32 %v8855, %v8965
        %v9220 = vadd.f32 %v8856, %v8968
        %v9221 = vadd.f32 %v8857, %v8973
        %v9222 = vadd.f32 %v8858, %v8976
        %v9223 = vadd.f32 %v8859, %v8981
        %v9224 = vadd.f32 %v8860, %v8984
        %v9225 = vadd.f32 %v8861, %v8989
        %v9226 = vadd.f32 %v8862, %v8992
        %v9227 = vadd.f32 %v8863, %v8997
        %v9228 = vadd.f32 %v8864, %v9000
        %v9229 = vadd.f32 %v8865, %v9005
        %v9230 = vadd.f32 %v8866, %v9008
        %v9231 = vadd.f32 %v8867, %v9013
        %v9232 = vadd.f32 %v8868, %v9016
        %v9233 = vadd.f32 %v8869, %v9021
        %v9234 = vadd.f32 %v8870, %v9024
        %v9235 = vadd.f32 %v8871, %v9029
        %v9236 = vadd.f32 %v8872, %v9032
        %v9237 = vadd.f32 %v8873, %v9037
        %v9238 = vadd.f32 %v8874, %v9040
        %v9239 = vadd.f32 %v8875, %v9045
        %v9240 = vadd.f32 %v8876, %v9048
        %v9241 = vadd.f32 %v8877, %v9053
        %v9242 = vadd.f32 %v8878, %v9056
        %v9243 = vadd.f32 %v8879, %v9061
        %v9244 = vadd.f32 %v8880, %v9064
        %v9245 = vadd.f32 %v8881, %v9069
        %v9246 = vadd.f32 %v8882, %v9072
        %v9247 = vadd.f32 %v8883, %v9077
        %v9248 = vadd.f32 %v8884, %v9080
        %v9249 = vadd.f32 %v8885, %v9085
        %v9250 = vadd.f32 %v8886, %v9088
        %v9251 = vadd.f32 %v8887, %v9093
        %v9252 = vadd.f32 %v8888, %v9096
        %v9253 = vadd.f32 %v8889, %v9101
        %v9254 = vadd.f32 %v8890, %v9104
        %v9255 = vadd.f32 %v8891, %v9109
        %v9256 = vadd.f32 %v8892, %v9112
        %v9257 = vadd.f32 %v8893, %v9117
        %v9258 = vadd.f32 %v8894, %v9120
        %v9259 = vadd.f32 %v8895, %v9125
        %v9260 = vadd.f32 %v8896, %v9128
        %v9261 = vadd.f32 %v8897, %v9133
        %v9262 = vadd.f32 %v8898, %v9136
        %v9263 = vadd.f32 %v8899, %v9141
        %v9264 = vadd.f32 %v8900, %v9144
        %v9265 = vadd.f32 %v8901, %v9149
        %v9266 = vadd.f32 %v8902, %v9152
        %v9267 = vadd.f32 %v8903, %v9157
        %v9268 = vadd.f32 %v8904, %v9160
        %v9269 = vadd.f32 %v8905, %v9165
        %v9270 = vadd.f32 %v8906, %v9168
        %v9271 = vadd.f32 %v8907, %v9173
        %v9272 = vadd.f32 %v8908, %v9176
        %v9273 = vadd.f32 %v8909, %v9181
        %v9274 = vadd.f32 %v8910, %v9184
        %v9275 = vadd.f32 %v8911, %v9189
        %v9276 = vadd.f32 %v8912, %v9192
        %v9277 = vadd.f32 %v8913, %v9197
        %v9278 = vadd.f32 %v8914, %v9200
        %v9279 = vadd.f32 %v8915, %v9205
        %v9280 = vadd.f32 %v8916, %v9208
        %v9281 = vadd.f32 %v8917, %v9213
        %v9282 = vadd.f32 %v8918, %v9216
        %s9283 = scalar_lea.vmem %s3, 32
        %v9284 = vld [vmem:[%s9283] sm:$0xf]
        %v9286 = vsel %vm5248, %v6227, 0
        %v9289 = vsel %vm5248, %v6228, 0
        %v9292 = vsel %vm6328, %v9284, 0
        %9294 = vmatprep.subr.bf16.mxu0 0
        %9295 = vmatpush1.bf16.msra.mxu0 0
        %9296 = vmatprep.subr.bf16.mxu0 0
        %9297 = vmatpush1.bf16.msra.mxu0 0
        %9298 = vmatprep.subr.bf16.mxu0 0
        %9299 = vmatpush1.bf16.msra.mxu0 0
        %9300 = vmatprep.subr.bf16.mxu0 0
        %9301 = vmatpush1.bf16.msra.mxu0 0
        %9302 = vmatprep.subr.bf16.mxu0 0
        %9303 = vmatpush1.bf16.msra.mxu0 0
        %9304 = vmatprep.subr.bf16.mxu0 0
        %9305 = vmatpush1.bf16.msra.mxu0 0
        %9306 = vmatprep.subr.bf16.mxu0 0
        %9307 = vmatpush1.bf16.msra.mxu0 0
        %9308 = vmatprep.subr.bf16.mxu0 0
        %9309 = vmatpush1.bf16.msra.mxu0 %v9292
        %9310 = vmatprep.subr.bf16.mxu0 0
        %9311 = vmatpush2.bf16.msra.mxu0 0
        %9312 = vmatprep.subr.bf16.mxu0 0
        %9313 = vmatpush2.bf16.msra.mxu0 0
        %9314 = vmatprep.subr.bf16.mxu0 0
        %9315 = vmatpush2.bf16.msra.mxu0 0
        %9316 = vmatprep.subr.bf16.mxu0 0
        %9317 = vmatpush2.bf16.msra.mxu0 0
        %9318 = vmatprep.subr.bf16.mxu0 0
        %9319 = vmatpush2.bf16.msra.mxu0 0
        %9320 = vmatprep.subr.bf16.mxu0 0
        %9321 = vmatpush2.bf16.msra.mxu0 0
        %9322 = vmatprep.subr.bf16.mxu0 0
        %9323 = vmatpush2.bf16.msra.mxu0 0
        %9324 = vmatprep.subr.bf16.mxu0 0
        %9325 = vmatpush2.bf16.msra.mxu0 0
        %9326 = vmatprep.mubr.bf16.mxu0 0
        %9327 = vmatmul.mubr.bf16.gmra.mxu0 %v7018
        %v9328 = vpop.f32.mrf.mxu0
        %v9329 = vadd.f32 0.0, %v9328
        %v9330 = vpop.f32.mrf.mxu0
        %v9331 = vpop.f32.mrf.mxu0
        %v9332 = vadd.f32 0.0, %v9331
        %v9333 = vpop.f32.mrf.mxu0
        %9334 = vmatprep.mubr.bf16.mxu0 0
        %9335 = vmatmul.mubr.bf16.gmra.mxu0 %v7021
        %v9336 = vpop.f32.mrf.mxu0
        %v9337 = vadd.f32 0.0, %v9336
        %v9338 = vpop.f32.mrf.mxu0
        %v9339 = vpop.f32.mrf.mxu0
        %v9340 = vadd.f32 0.0, %v9339
        %v9341 = vpop.f32.mrf.mxu0
        %9342 = vmatprep.mubr.bf16.mxu0 0
        %9343 = vmatmul.mubr.bf16.gmra.mxu0 %v7024
        %v9344 = vpop.f32.mrf.mxu0
        %v9345 = vadd.f32 0.0, %v9344
        %v9346 = vpop.f32.mrf.mxu0
        %v9347 = vpop.f32.mrf.mxu0
        %v9348 = vadd.f32 0.0, %v9347
        %v9349 = vpop.f32.mrf.mxu0
        %9350 = vmatprep.mubr.bf16.mxu0 0
        %9351 = vmatmul.mubr.bf16.gmra.mxu0 %v7027
        %v9352 = vpop.f32.mrf.mxu0
        %v9353 = vadd.f32 0.0, %v9352
        %v9354 = vpop.f32.mrf.mxu0
        %v9355 = vpop.f32.mrf.mxu0
        %v9356 = vadd.f32 0.0, %v9355
        %v9357 = vpop.f32.mrf.mxu0
        %9358 = vmatprep.mubr.bf16.mxu0 0
        %9359 = vmatmul.mubr.bf16.gmra.mxu0 %v7030
        %v9360 = vpop.f32.mrf.mxu0
        %v9361 = vadd.f32 0.0, %v9360
        %v9362 = vpop.f32.mrf.mxu0
        %v9363 = vpop.f32.mrf.mxu0
        %v9364 = vadd.f32 0.0, %v9363
        %v9365 = vpop.f32.mrf.mxu0
        %9366 = vmatprep.mubr.bf16.mxu0 0
        %9367 = vmatmul.mubr.bf16.gmra.mxu0 %v7033
        %v9368 = vpop.f32.mrf.mxu0
        %v9369 = vadd.f32 0.0, %v9368
        %v9370 = vpop.f32.mrf.mxu0
        %v9371 = vpop.f32.mrf.mxu0
        %v9372 = vadd.f32 0.0, %v9371
        %v9373 = vpop.f32.mrf.mxu0
        %9374 = vmatprep.mubr.bf16.mxu0 0
        %9375 = vmatmul.mubr.bf16.gmra.mxu0 %v7036
        %v9376 = vpop.f32.mrf.mxu0
        %v9377 = vadd.f32 0.0, %v9376
        %v9378 = vpop.f32.mrf.mxu0
        %v9379 = vpop.f32.mrf.mxu0
        %v9380 = vadd.f32 0.0, %v9379
        %v9381 = vpop.f32.mrf.mxu0
        %9382 = vmatprep.mubr.bf16.mxu0 0
        %9383 = vmatmul.mubr.bf16.gmra.mxu0 %v7039
        %v9384 = vpop.f32.mrf.mxu0
        %v9385 = vadd.f32 0.0, %v9384
        %v9386 = vpop.f32.mrf.mxu0
        %v9387 = vpop.f32.mrf.mxu0
        %v9388 = vadd.f32 0.0, %v9387
        %v9389 = vpop.f32.mrf.mxu0
        %9390 = vmatprep.mubr.bf16.mxu0 0
        %9391 = vmatmul.mubr.bf16.gmra.mxu0 %v7042
        %v9392 = vpop.f32.mrf.mxu0
        %v9393 = vadd.f32 0.0, %v9392
        %v9394 = vpop.f32.mrf.mxu0
        %v9395 = vpop.f32.mrf.mxu0
        %v9396 = vadd.f32 0.0, %v9395
        %v9397 = vpop.f32.mrf.mxu0
        %9398 = vmatprep.mubr.bf16.mxu0 0
        %9399 = vmatmul.mubr.bf16.gmra.mxu0 %v7045
        %v9400 = vpop.f32.mrf.mxu0
        %v9401 = vadd.f32 0.0, %v9400
        %v9402 = vpop.f32.mrf.mxu0
        %v9403 = vpop.f32.mrf.mxu0
        %v9404 = vadd.f32 0.0, %v9403
        %v9405 = vpop.f32.mrf.mxu0
        %9406 = vmatprep.mubr.bf16.mxu0 0
        %9407 = vmatmul.mubr.bf16.gmra.mxu0 %v7048
        %v9408 = vpop.f32.mrf.mxu0
        %v9409 = vadd.f32 0.0, %v9408
        %v9410 = vpop.f32.mrf.mxu0
        %v9411 = vpop.f32.mrf.mxu0
        %v9412 = vadd.f32 0.0, %v9411
        %v9413 = vpop.f32.mrf.mxu0
        %9414 = vmatprep.mubr.bf16.mxu0 0
        %9415 = vmatmul.mubr.bf16.gmra.mxu0 %v7051
        %v9416 = vpop.f32.mrf.mxu0
        %v9417 = vadd.f32 0.0, %v9416
        %v9418 = vpop.f32.mrf.mxu0
        %v9419 = vpop.f32.mrf.mxu0
        %v9420 = vadd.f32 0.0, %v9419
        %v9421 = vpop.f32.mrf.mxu0
        %9422 = vmatprep.mubr.bf16.mxu0 0
        %9423 = vmatmul.mubr.bf16.gmra.mxu0 %v7054
        %v9424 = vpop.f32.mrf.mxu0
        %v9425 = vadd.f32 0.0, %v9424
        %v9426 = vpop.f32.mrf.mxu0
        %v9427 = vpop.f32.mrf.mxu0
        %v9428 = vadd.f32 0.0, %v9427
        %v9429 = vpop.f32.mrf.mxu0
        %9430 = vmatprep.mubr.bf16.mxu0 0
        %9431 = vmatmul.mubr.bf16.gmra.mxu0 %v7057
        %v9432 = vpop.f32.mrf.mxu0
        %v9433 = vadd.f32 0.0, %v9432
        %v9434 = vpop.f32.mrf.mxu0
        %v9435 = vpop.f32.mrf.mxu0
        %v9436 = vadd.f32 0.0, %v9435
        %v9437 = vpop.f32.mrf.mxu0
        %9438 = vmatprep.mubr.bf16.mxu0 0
        %9439 = vmatmul.mubr.bf16.gmra.mxu0 %v8194
        %v9440 = vpop.f32.mrf.mxu0
        %v9441 = vadd.f32 0.0, %v9440
        %v9442 = vpop.f32.mrf.mxu0
        %v9443 = vpop.f32.mrf.mxu0
        %v9444 = vadd.f32 0.0, %v9443
        %v9445 = vpop.f32.mrf.mxu0
        %9446 = vmatprep.mubr.bf16.mxu0 0
        %9447 = vmatmul.mubr.bf16.gmra.mxu0 %v9286
        %v9448 = vpop.f32.mrf.mxu0
        %v9449 = vadd.f32 0.0, %v9448
        %v9450 = vpop.f32.mrf.mxu0
        %v9451 = vpop.f32.mrf.mxu0
        %v9452 = vadd.f32 0.0, %v9451
        %v9453 = vpop.f32.mrf.mxu0
        %9454 = vmatprep.mubr.bf16.mxu0 0
        %9455 = vmatmul.mubr.bf16.gmra.mxu0 %v7066
        %v9456 = vpop.f32.mrf.mxu0
        %v9457 = vadd.f32 0.0, %v9456
        %v9458 = vpop.f32.mrf.mxu0
        %v9459 = vpop.f32.mrf.mxu0
        %v9460 = vadd.f32 0.0, %v9459
        %v9461 = vpop.f32.mrf.mxu0
        %9462 = vmatprep.mubr.bf16.mxu0 0
        %9463 = vmatmul.mubr.bf16.gmra.mxu0 %v7069
        %v9464 = vpop.f32.mrf.mxu0
        %v9465 = vadd.f32 0.0, %v9464
        %v9466 = vpop.f32.mrf.mxu0
        %v9467 = vpop.f32.mrf.mxu0
        %v9468 = vadd.f32 0.0, %v9467
        %v9469 = vpop.f32.mrf.mxu0
        %9470 = vmatprep.mubr.bf16.mxu0 0
        %9471 = vmatmul.mubr.bf16.gmra.mxu0 %v7072
        %v9472 = vpop.f32.mrf.mxu0
        %v9473 = vadd.f32 0.0, %v9472
        %v9474 = vpop.f32.mrf.mxu0
        %v9475 = vpop.f32.mrf.mxu0
        %v9476 = vadd.f32 0.0, %v9475
        %v9477 = vpop.f32.mrf.mxu0
        %9478 = vmatprep.mubr.bf16.mxu0 0
        %9479 = vmatmul.mubr.bf16.gmra.mxu0 %v7075
        %v9480 = vpop.f32.mrf.mxu0
        %v9481 = vadd.f32 0.0, %v9480
        %v9482 = vpop.f32.mrf.mxu0
        %v9483 = vpop.f32.mrf.mxu0
        %v9484 = vadd.f32 0.0, %v9483
        %v9485 = vpop.f32.mrf.mxu0
        %9486 = vmatprep.mubr.bf16.mxu0 0
        %9487 = vmatmul.mubr.bf16.gmra.mxu0 %v7078
        %v9488 = vpop.f32.mrf.mxu0
        %v9489 = vadd.f32 0.0, %v9488
        %v9490 = vpop.f32.mrf.mxu0
        %v9491 = vpop.f32.mrf.mxu0
        %v9492 = vadd.f32 0.0, %v9491
        %v9493 = vpop.f32.mrf.mxu0
        %9494 = vmatprep.mubr.bf16.mxu0 0
        %9495 = vmatmul.mubr.bf16.gmra.mxu0 %v7081
        %v9496 = vpop.f32.mrf.mxu0
        %v9497 = vadd.f32 0.0, %v9496
        %v9498 = vpop.f32.mrf.mxu0
        %v9499 = vpop.f32.mrf.mxu0
        %v9500 = vadd.f32 0.0, %v9499
        %v9501 = vpop.f32.mrf.mxu0
        %9502 = vmatprep.mubr.bf16.mxu0 0
        %9503 = vmatmul.mubr.bf16.gmra.mxu0 %v7084
        %v9504 = vpop.f32.mrf.mxu0
        %v9505 = vadd.f32 0.0, %v9504
        %v9506 = vpop.f32.mrf.mxu0
        %v9507 = vpop.f32.mrf.mxu0
        %v9508 = vadd.f32 0.0, %v9507
        %v9509 = vpop.f32.mrf.mxu0
        %9510 = vmatprep.mubr.bf16.mxu0 0
        %9511 = vmatmul.mubr.bf16.gmra.mxu0 %v7087
        %v9512 = vpop.f32.mrf.mxu0
        %v9513 = vadd.f32 0.0, %v9512
        %v9514 = vpop.f32.mrf.mxu0
        %v9515 = vpop.f32.mrf.mxu0
        %v9516 = vadd.f32 0.0, %v9515
        %v9517 = vpop.f32.mrf.mxu0
        %9518 = vmatprep.mubr.bf16.mxu0 0
        %9519 = vmatmul.mubr.bf16.gmra.mxu0 %v7090
        %v9520 = vpop.f32.mrf.mxu0
        %v9521 = vadd.f32 0.0, %v9520
        %v9522 = vpop.f32.mrf.mxu0
        %v9523 = vpop.f32.mrf.mxu0
        %v9524 = vadd.f32 0.0, %v9523
        %v9525 = vpop.f32.mrf.mxu0
        %9526 = vmatprep.mubr.bf16.mxu0 0
        %9527 = vmatmul.mubr.bf16.gmra.mxu0 %v7093
        %v9528 = vpop.f32.mrf.mxu0
        %v9529 = vadd.f32 0.0, %v9528
        %v9530 = vpop.f32.mrf.mxu0
        %v9531 = vpop.f32.mrf.mxu0
        %v9532 = vadd.f32 0.0, %v9531
        %v9533 = vpop.f32.mrf.mxu0
        %9534 = vmatprep.mubr.bf16.mxu0 0
        %9535 = vmatmul.mubr.bf16.gmra.mxu0 %v7096
        %v9536 = vpop.f32.mrf.mxu0
        %v9537 = vadd.f32 0.0, %v9536
        %v9538 = vpop.f32.mrf.mxu0
        %v9539 = vpop.f32.mrf.mxu0
        %v9540 = vadd.f32 0.0, %v9539
        %v9541 = vpop.f32.mrf.mxu0
        %9542 = vmatprep.mubr.bf16.mxu0 0
        %9543 = vmatmul.mubr.bf16.gmra.mxu0 %v7099
        %v9544 = vpop.f32.mrf.mxu0
        %v9545 = vadd.f32 0.0, %v9544
        %v9546 = vpop.f32.mrf.mxu0
        %v9547 = vpop.f32.mrf.mxu0
        %v9548 = vadd.f32 0.0, %v9547
        %v9549 = vpop.f32.mrf.mxu0
        %9550 = vmatprep.mubr.bf16.mxu0 0
        %9551 = vmatmul.mubr.bf16.gmra.mxu0 %v7102
        %v9552 = vpop.f32.mrf.mxu0
        %v9553 = vadd.f32 0.0, %v9552
        %v9554 = vpop.f32.mrf.mxu0
        %v9555 = vpop.f32.mrf.mxu0
        %v9556 = vadd.f32 0.0, %v9555
        %v9557 = vpop.f32.mrf.mxu0
        %9558 = vmatprep.mubr.bf16.mxu0 0
        %9559 = vmatmul.mubr.bf16.gmra.mxu0 %v7105
        %v9560 = vpop.f32.mrf.mxu0
        %v9561 = vadd.f32 0.0, %v9560
        %v9562 = vpop.f32.mrf.mxu0
        %v9563 = vpop.f32.mrf.mxu0
        %v9564 = vadd.f32 0.0, %v9563
        %v9565 = vpop.f32.mrf.mxu0
        %9566 = vmatprep.mubr.bf16.mxu0 0
        %9567 = vmatmul.mubr.bf16.gmra.mxu0 %v8197
        %v9568 = vpop.f32.mrf.mxu0
        %v9569 = vadd.f32 0.0, %v9568
        %v9570 = vpop.f32.mrf.mxu0
        %v9571 = vpop.f32.mrf.mxu0
        %v9572 = vadd.f32 0.0, %v9571
        %v9573 = vpop.f32.mrf.mxu0
        %9574 = vmatprep.mubr.bf16.mxu0 0
        %9575 = vmatmul.mubr.bf16.gmra.mxu0 %v9289
        %v9576 = vpop.f32.mrf.mxu0
        %v9577 = vadd.f32 0.0, %v9576
        %v9578 = vpop.f32.mrf.mxu0
        %v9579 = vpop.f32.mrf.mxu0
        %v9580 = vadd.f32 0.0, %v9579
        %v9581 = vpop.f32.mrf.mxu0
        %9582 = vdwg.mxu0
        %v9583 = vadd.f32 %v9219, %v9329
        %v9584 = vadd.f32 %v9220, %v9332
        %v9585 = vadd.f32 %v9221, %v9337
        %v9586 = vadd.f32 %v9222, %v9340
        %v9587 = vadd.f32 %v9223, %v9345
        %v9588 = vadd.f32 %v9224, %v9348
        %v9589 = vadd.f32 %v9225, %v9353
        %v9590 = vadd.f32 %v9226, %v9356
        %v9591 = vadd.f32 %v9227, %v9361
        %v9592 = vadd.f32 %v9228, %v9364
        %v9593 = vadd.f32 %v9229, %v9369
        %v9594 = vadd.f32 %v9230, %v9372
        %v9595 = vadd.f32 %v9231, %v9377
        %v9596 = vadd.f32 %v9232, %v9380
        %v9597 = vadd.f32 %v9233, %v9385
        %v9598 = vadd.f32 %v9234, %v9388
        %v9599 = vadd.f32 %v9235, %v9393
        %v9600 = vadd.f32 %v9236, %v9396
        %v9601 = vadd.f32 %v9237, %v9401
        %v9602 = vadd.f32 %v9238, %v9404
        %v9603 = vadd.f32 %v9239, %v9409
        %v9604 = vadd.f32 %v9240, %v9412
        %v9605 = vadd.f32 %v9241, %v9417
        %v9606 = vadd.f32 %v9242, %v9420
        %v9607 = vadd.f32 %v9243, %v9425
        %v9608 = vadd.f32 %v9244, %v9428
        %v9609 = vadd.f32 %v9245, %v9433
        %v9610 = vadd.f32 %v9246, %v9436
        %v9611 = vadd.f32 %v9247, %v9441
        %v9612 = vadd.f32 %v9248, %v9444
        %v9613 = vadd.f32 %v9249, %v9449
        %v9614 = vadd.f32 %v9250, %v9452
        %v9615 = vadd.f32 %v9251, %v9457
        %v9616 = vadd.f32 %v9252, %v9460
        %v9617 = vadd.f32 %v9253, %v9465
        %v9618 = vadd.f32 %v9254, %v9468
        %v9619 = vadd.f32 %v9255, %v9473
        %v9620 = vadd.f32 %v9256, %v9476
        %v9621 = vadd.f32 %v9257, %v9481
        %v9622 = vadd.f32 %v9258, %v9484
        %v9623 = vadd.f32 %v9259, %v9489
        %v9624 = vadd.f32 %v9260, %v9492
        %v9625 = vadd.f32 %v9261, %v9497
        %v9626 = vadd.f32 %v9262, %v9500
        %v9627 = vadd.f32 %v9263, %v9505
        %v9628 = vadd.f32 %v9264, %v9508
        %v9629 = vadd.f32 %v9265, %v9513
        %v9630 = vadd.f32 %v9266, %v9516
        %v9631 = vadd.f32 %v9267, %v9521
        %v9632 = vadd.f32 %v9268, %v9524
        %v9633 = vadd.f32 %v9269, %v9529
        %v9634 = vadd.f32 %v9270, %v9532
        %v9635 = vadd.f32 %v9271, %v9537
        %v9636 = vadd.f32 %v9272, %v9540
        %v9637 = vadd.f32 %v9273, %v9545
        %v9638 = vadd.f32 %v9274, %v9548
        %v9639 = vadd.f32 %v9275, %v9553
        %v9640 = vadd.f32 %v9276, %v9556
        %v9641 = vadd.f32 %v9277, %v9561
        %v9642 = vadd.f32 %v9278, %v9564
        %v9643 = vadd.f32 %v9279, %v9569
        %v9644 = vadd.f32 %v9280, %v9572
        %v9645 = vadd.f32 %v9281, %v9577
        %v9646 = vadd.f32 %v9282, %v9580
        %v9647 = vld [vmem:[%s4] sm:$0x1]
        %v9649 = vlaneseq
        %v9650 = vshrl.u32 %v9649, 7
        %v9651 = vsub.s32 0, %v9650
        %v9652 = vrot.slane %v9647, %v9651
        %v9654 = vadd.f32 %v9583, %v9652
        %v9655 = vadd.f32 %v9584, %v9652
        %v9656 = vadd.f32 %v9585, %v9652
        %v9657 = vadd.f32 %v9586, %v9652
        %v9658 = vadd.f32 %v9587, %v9652
        %v9659 = vadd.f32 %v9588, %v9652
        %v9660 = vadd.f32 %v9589, %v9652
        %v9661 = vadd.f32 %v9590, %v9652
        %v9662 = vadd.f32 %v9591, %v9652
        %v9663 = vadd.f32 %v9592, %v9652
        %v9664 = vadd.f32 %v9593, %v9652
        %v9665 = vadd.f32 %v9594, %v9652
        %v9666 = vadd.f32 %v9595, %v9652
        %v9667 = vadd.f32 %v9596, %v9652
        %v9668 = vadd.f32 %v9597, %v9652
        %v9669 = vadd.f32 %v9598, %v9652
        %v9670 = vadd.f32 %v9599, %v9652
        %v9671 = vadd.f32 %v9600, %v9652
        %v9672 = vadd.f32 %v9601, %v9652
        %v9673 = vadd.f32 %v9602, %v9652
        %v9674 = vadd.f32 %v9603, %v9652
        %v9675 = vadd.f32 %v9604, %v9652
        %v9676 = vadd.f32 %v9605, %v9652
        %v9677 = vadd.f32 %v9606, %v9652
        %v9678 = vadd.f32 %v9607, %v9652
        %v9679 = vadd.f32 %v9608, %v9652
        %v9680 = vadd.f32 %v9609, %v9652
        %v9681 = vadd.f32 %v9610, %v9652
        %v9682 = vadd.f32 %v9611, %v9652
        %v9683 = vadd.f32 %v9612, %v9652
        %v9684 = vadd.f32 %v9613, %v9652
        %v9685 = vadd.f32 %v9614, %v9652
        %v9686 = vadd.f32 %v9615, %v9652
        %v9687 = vadd.f32 %v9616, %v9652
        %v9688 = vadd.f32 %v9617, %v9652
        %v9689 = vadd.f32 %v9618, %v9652
        %v9690 = vadd.f32 %v9619, %v9652
        %v9691 = vadd.f32 %v9620, %v9652
        %v9692 = vadd.f32 %v9621, %v9652
        %v9693 = vadd.f32 %v9622, %v9652
        %v9694 = vadd.f32 %v9623, %v9652
        %v9695 = vadd.f32 %v9624, %v9652
        %v9696 = vadd.f32 %v9625, %v9652
        %v9697 = vadd.f32 %v9626, %v9652
        %v9698 = vadd.f32 %v9627, %v9652
        %v9699 = vadd.f32 %v9628, %v9652
        %v9700 = vadd.f32 %v9629, %v9652
        %v9701 = vadd.f32 %v9630, %v9652
        %v9702 = vadd.f32 %v9631, %v9652
        %v9703 = vadd.f32 %v9632, %v9652
        %v9704 = vadd.f32 %v9633, %v9652
        %v9705 = vadd.f32 %v9634, %v9652
        %v9706 = vadd.f32 %v9635, %v9652
        %v9707 = vadd.f32 %v9636, %v9652
        %v9708 = vadd.f32 %v9637, %v9652
        %v9709 = vadd.f32 %v9638, %v9652
        %v9710 = vadd.f32 %v9639, %v9652
        %v9711 = vadd.f32 %v9640, %v9652
        %v9712 = vadd.f32 %v9641, %v9652
        %v9713 = vadd.f32 %v9642, %v9652
        %v9714 = vadd.f32 %v9643, %v9652
        %v9715 = vadd.f32 %v9644, %v9652
        %v9716 = vadd.f32 %v9645, %v9652
        %v9717 = vadd.f32 %v9646, %v9652
        %v9718 = vadd.f32 %v9654, %v4994
        %v9719 = vadd.f32 %v9655, %v4997
        %v9720 = vadd.f32 %v9656, %v5002
        %v9721 = vadd.f32 %v9657, %v5005
        %v9722 = vadd.f32 %v9658, %v5010
        %v9723 = vadd.f32 %v9659, %v5013
        %v9724 = vadd.f32 %v9660, %v5018
        %v9725 = vadd.f32 %v9661, %v5021
        %v9726 = vadd.f32 %v9662, %v5026
        %v9727 = vadd.f32 %v9663, %v5029
        %v9728 = vadd.f32 %v9664, %v5034
        %v9729 = vadd.f32 %v9665, %v5037
        %v9730 = vadd.f32 %v9666, %v5042
        %v9731 = vadd.f32 %v9667, %v5045
        %v9732 = vadd.f32 %v9668, %v5050
        %v9733 = vadd.f32 %v9669, %v5053
        %v9734 = vadd.f32 %v9670, %v5058
        %v9735 = vadd.f32 %v9671, %v5061
        %v9736 = vadd.f32 %v9672, %v5066
        %v9737 = vadd.f32 %v9673, %v5069
        %v9738 = vadd.f32 %v9674, %v5074
        %v9739 = vadd.f32 %v9675, %v5077
        %v9740 = vadd.f32 %v9676, %v5082
        %v9741 = vadd.f32 %v9677, %v5085
        %v9742 = vadd.f32 %v9678, %v5090
        %v9743 = vadd.f32 %v9679, %v5093
        %v9744 = vadd.f32 %v9680, %v5098
        %v9745 = vadd.f32 %v9681, %v5101
        %v9746 = vadd.f32 %v9682, %v5106
        %v9747 = vadd.f32 %v9683, %v5109
        %v9748 = vadd.f32 %v9684, %v5114
        %v9749 = vadd.f32 %v9685, %v5117
        %v9750 = vadd.f32 %v9686, %v5122
        %v9751 = vadd.f32 %v9687, %v5125
        %v9752 = vadd.f32 %v9688, %v5130
        %v9753 = vadd.f32 %v9689, %v5133
        %v9754 = vadd.f32 %v9690, %v5138
        %v9755 = vadd.f32 %v9691, %v5141
        %v9756 = vadd.f32 %v9692, %v5146
        %v9757 = vadd.f32 %v9693, %v5149
        %v9758 = vadd.f32 %v9694, %v5154
        %v9759 = vadd.f32 %v9695, %v5157
        %v9760 = vadd.f32 %v9696, %v5162
        %v9761 = vadd.f32 %v9697, %v5165
        %v9762 = vadd.f32 %v9698, %v5170
        %v9763 = vadd.f32 %v9699, %v5173
        %v9764 = vadd.f32 %v9700, %v5178
        %v9765 = vadd.f32 %v9701, %v5181
        %v9766 = vadd.f32 %v9702, %v5186
        %v9767 = vadd.f32 %v9703, %v5189
        %v9768 = vadd.f32 %v9704, %v5194
        %v9769 = vadd.f32 %v9705, %v5197
        %v9770 = vadd.f32 %v9706, %v5202
        %v9771 = vadd.f32 %v9707, %v5205
        %v9772 = vadd.f32 %v9708, %v5210
        %v9773 = vadd.f32 %v9709, %v5213
        %v9774 = vadd.f32 %v9710, %v5218
        %v9775 = vadd.f32 %v9711, %v5221
        %v9776 = vadd.f32 %v9712, %v5226
        %v9777 = vadd.f32 %v9713, %v5229
        %v9778 = vadd.f32 %v9714, %v5234
        %v9779 = vadd.f32 %v9715, %v5237
        %v9780 = vadd.f32 %v9716, %v5242
        %v9781 = vadd.f32 %v9717, %v5245
        %v9782 = vmax.f32 %v9718, 0.0
        %v9783 = vmax.f32 %v9719, 0.0
        %v9784 = vmax.f32 %v9720, 0.0
        %v9785 = vmax.f32 %v9721, 0.0
        %v9786 = vmax.f32 %v9722, 0.0
        %v9787 = vmax.f32 %v9723, 0.0
        %v9788 = vmax.f32 %v9724, 0.0
        %v9789 = vmax.f32 %v9725, 0.0
        %v9790 = vmax.f32 %v9726, 0.0
        %v9791 = vmax.f32 %v9727, 0.0
        %v9792 = vmax.f32 %v9728, 0.0
        %v9793 = vmax.f32 %v9729, 0.0
        %v9794 = vmax.f32 %v9730, 0.0
        %v9795 = vmax.f32 %v9731, 0.0
        %v9796 = vmax.f32 %v9732, 0.0
        %v9797 = vmax.f32 %v9733, 0.0
        %v9798 = vmax.f32 %v9734, 0.0
        %v9799 = vmax.f32 %v9735, 0.0
        %v9800 = vmax.f32 %v9736, 0.0
        %v9801 = vmax.f32 %v9737, 0.0
        %v9802 = vmax.f32 %v9738, 0.0
        %v9803 = vmax.f32 %v9739, 0.0
        %v9804 = vmax.f32 %v9740, 0.0
        %v9805 = vmax.f32 %v9741, 0.0
        %v9806 = vmax.f32 %v9742, 0.0
        %v9807 = vmax.f32 %v9743, 0.0
        %v9808 = vmax.f32 %v9744, 0.0
        %v9809 = vmax.f32 %v9745, 0.0
        %v9810 = vmax.f32 %v9746, 0.0
        %v9811 = vmax.f32 %v9747, 0.0
        %v9812 = vmax.f32 %v9748, 0.0
        %v9813 = vmax.f32 %v9749, 0.0
        %v9814 = vmax.f32 %v9750, 0.0
        %v9815 = vmax.f32 %v9751, 0.0
        %v9816 = vmax.f32 %v9752, 0.0
        %v9817 = vmax.f32 %v9753, 0.0
        %v9818 = vmax.f32 %v9754, 0.0
        %v9819 = vmax.f32 %v9755, 0.0
        %v9820 = vmax.f32 %v9756, 0.0
        %v9821 = vmax.f32 %v9757, 0.0
        %v9822 = vmax.f32 %v9758, 0.0
        %v9823 = vmax.f32 %v9759, 0.0
        %v9824 = vmax.f32 %v9760, 0.0
        %v9825 = vmax.f32 %v9761, 0.0
        %v9826 = vmax.f32 %v9762, 0.0
        %v9827 = vmax.f32 %v9763, 0.0
        %v9828 = vmax.f32 %v9764, 0.0
        %v9829 = vmax.f32 %v9765, 0.0
        %v9830 = vmax.f32 %v9766, 0.0
        %v9831 = vmax.f32 %v9767, 0.0
        %v9832 = vmax.f32 %v9768, 0.0
        %v9833 = vmax.f32 %v9769, 0.0
        %v9834 = vmax.f32 %v9770, 0.0
        %v9835 = vmax.f32 %v9771, 0.0
        %v9836 = vmax.f32 %v9772, 0.0
        %v9837 = vmax.f32 %v9773, 0.0
        %v9838 = vmax.f32 %v9774, 0.0
        %v9839 = vmax.f32 %v9775, 0.0
        %v9840 = vmax.f32 %v9776, 0.0
        %v9841 = vmax.f32 %v9777, 0.0
        %v9842 = vmax.f32 %v9778, 0.0
        %v9843 = vmax.f32 %v9779, 0.0
        %v9844 = vmax.f32 %v9780, 0.0
        %v9845 = vmax.f32 %v9781, 0.0
        %9846 = vst [vmem:[%s274] sm:$0xff] %v9782
        %9847 = vst [vmem:[%s274 + $0x8] sm:$0xff] %v9783
        %9848 = vst [vmem:[%s274 + $0x10] sm:$0xff] %v9784
        %9849 = vst [vmem:[%s274 + $0x18] sm:$0xff] %v9785
        %9850 = vst [vmem:[%s274 + $0x20] sm:$0xff] %v9786
        %9851 = vst [vmem:[%s274 + $0x28] sm:$0xff] %v9787
        %9852 = vst [vmem:[%s274 + $0x30] sm:$0xff] %v9788
        %9853 = vst [vmem:[%s274 + $0x38] sm:$0xff] %v9789
        %9854 = vst [vmem:[%s274 + $0x40] sm:$0xff] %v9790
        %9855 = vst [vmem:[%s274 + $0x48] sm:$0xff] %v9791
        %9856 = vst [vmem:[%s274 + $0x50] sm:$0xff] %v9792
        %9857 = vst [vmem:[%s274 + $0x58] sm:$0xff] %v9793
        %9858 = vst [vmem:[%s274 + $0x60] sm:$0xff] %v9794
        %9859 = vst [vmem:[%s274 + $0x68] sm:$0xff] %v9795
        %9860 = vst [vmem:[%s274 + $0x70] sm:$0xff] %v9796
        %9861 = vst [vmem:[%s274 + $0x78] sm:$0xff] %v9797
        %9862 = vst [vmem:[%s274 + $0x80] sm:$0xff] %v9798
        %9863 = vst [vmem:[%s274 + $0x88] sm:$0xff] %v9799
        %9864 = vst [vmem:[%s274 + $0x90] sm:$0xff] %v9800
        %9865 = vst [vmem:[%s274 + $0x98] sm:$0xff] %v9801
        %9866 = vst [vmem:[%s274 + $0xa0] sm:$0xff] %v9802
        %9867 = vst [vmem:[%s274 + $0xa8] sm:$0xff] %v9803
        %9868 = vst [vmem:[%s274 + $0xb0] sm:$0xff] %v9804
        %9869 = vst [vmem:[%s274 + $0xb8] sm:$0xff] %v9805
        %9870 = vst [vmem:[%s274 + $0xc0] sm:$0xff] %v9806
        %9871 = vst [vmem:[%s274 + $0xc8] sm:$0xff] %v9807
        %9872 = vst [vmem:[%s274 + $0xd0] sm:$0xff] %v9808
        %9873 = vst [vmem:[%s274 + $0xd8] sm:$0xff] %v9809
        %9874 = vst [vmem:[%s274 + $0xe0] sm:$0xff] %v9810
        %9875 = vst [vmem:[%s274 + $0xe8] sm:$0xff] %v9811
        %9876 = vst [vmem:[%s274 + $0xf0] sm:$0xff] %v9812
        %9877 = vst [vmem:[%s274 + $0xf8] sm:$0xff] %v9813
        %9878 = vst [vmem:[%s274 + $0x100] sm:$0xff] %v9814
        %9879 = vst [vmem:[%s274 + $0x108] sm:$0xff] %v9815
        %9880 = vst [vmem:[%s274 + $0x110] sm:$0xff] %v9816
        %9881 = vst [vmem:[%s274 + $0x118] sm:$0xff] %v9817
        %9882 = vst [vmem:[%s274 + $0x120] sm:$0xff] %v9818
        %9883 = vst [vmem:[%s274 + $0x128] sm:$0xff] %v9819
        %9884 = vst [vmem:[%s274 + $0x130] sm:$0xff] %v9820
        %9885 = vst [vmem:[%s274 + $0x138] sm:$0xff] %v9821
        %9886 = vst [vmem:[%s274 + $0x140] sm:$0xff] %v9822
        %9887 = vst [vmem:[%s274 + $0x148] sm:$0xff] %v9823
        %9888 = vst [vmem:[%s274 + $0x150] sm:$0xff] %v9824
        %9889 = vst [vmem:[%s274 + $0x158] sm:$0xff] %v9825
        %9890 = vst [vmem:[%s274 + $0x160] sm:$0xff] %v9826
        %9891 = vst [vmem:[%s274 + $0x168] sm:$0xff] %v9827
        %9892 = vst [vmem:[%s274 + $0x170] sm:$0xff] %v9828
        %9893 = vst [vmem:[%s274 + $0x178] sm:$0xff] %v9829
        %9894 = vst [vmem:[%s274 + $0x180] sm:$0xff] %v9830
        %9895 = vst [vmem:[%s274 + $0x188] sm:$0xff] %v9831
        %9896 = vst [vmem:[%s274 + $0x190] sm:$0xff] %v9832
        %9897 = vst [vmem:[%s274 + $0x198] sm:$0xff] %v9833
        %9898 = vst [vmem:[%s274 + $0x1a0] sm:$0xff] %v9834
        %9899 = vst [vmem:[%s274 + $0x1a8] sm:$0xff] %v9835
        %9900 = vst [vmem:[%s274 + $0x1b0] sm:$0xff] %v9836
        %9901 = vst [vmem:[%s274 + $0x1b8] sm:$0xff] %v9837
        %9902 = vst [vmem:[%s274 + $0x1c0] sm:$0xff] %v9838
        %9903 = vst [vmem:[%s274 + $0x1c8] sm:$0xff] %v9839
        %9904 = vst [vmem:[%s274 + $0x1d0] sm:$0xff] %v9840
        %9905 = vst [vmem:[%s274 + $0x1d8] sm:$0xff] %v9841
        %9906 = vst [vmem:[%s274 + $0x1e0] sm:$0xff] %v9842
        %9907 = vst [vmem:[%s274 + $0x1e8] sm:$0xff] %v9843
        %9908 = vst [vmem:[%s274 + $0x1f0] sm:$0xff] %v9844
        %9909 = vst [vmem:[%s274 + $0x1f8] sm:$0xff] %v9845
        %s9910 = sand.u32 %s181, 1
        %s9911 = scalar_lea.sflag [#allocation5], %s9910
        %s9912 = sand.u32 %s181, 1
        %s9913 = smul.addr %s9912, 512
        %s9914 = scalar_lea.vmem [#allocation4], %s9913
        // Predicated region
        $region49: #{tpu_custom_call.1} parent=47 // pred_check
          %p9915 = pneg %p191
        $region50: #{tpu_custom_call.1} parent=47 // pred_check_branch
          %9917 = sbr.rel (%p9915) target = $region52
        $region51: #{tpu_custom_call.1} parent=47 // pred_region
          %s9918 = smul.u32 2, %s21
          %s9920 = ssub.s32 8192, 8192
          %9921 = vsyncadd %s9911, %s9920
          %s9922 = smul.addr %s9918, 32
          %s9923 = smul.addr %s9922, 128
          %s9924 = scalar_lea.hbm %s7, %s9923
          %s9925 = sshll.u32 %s9914, 4
          %s9926 = int_to_ptr.vmem [resolvable:$true] %s9925
          %9931 = dma.vmem_to_hbm [thread:$0]  %s9926, 8192, %s9924, %s9911, 128, 128, 8
        $region52: #{tpu_custom_call.1} parent=47 // pred_fallthru
          _
      $region48: #{tpu_custom_call.1} parent=5 // pred_fallthru
        _
      %p9932 = scmp.le.s32.totalorder 2, %s16
      // Predicated region
      $region53: #{tpu_custom_call.1} parent=5 // pred_check
        %p9933 = pneg %p9932
      $region54: #{tpu_custom_call.1} parent=5 // pred_check_branch
        %9935 = sbr.rel (%p9933) target = $region56
      $region55: #{tpu_custom_call.1} parent=5 // pred_region
        %s9936 = ssub.s32 %s16, 2
        // Predicated region
        $region57: #{tpu_custom_call.1} parent=55 // pred_check
          %p9937 = pneg %p197
        $region58: #{tpu_custom_call.1} parent=55 // pred_check_branch
          %9939 = sbr.rel (%p9937) target = $region60
        $region59: #{tpu_custom_call.1} parent=55 // pred_region
          %s9940 = sand.u32 %s182, 1
          %s9941 = scalar_lea.sflag [#allocation5], %s9940
          %s9942 = sand.u32 %s182, 1
          %s9943 = smul.addr %s9942, 512
          %s9944 = scalar_lea.vmem [#allocation4], %s9943
          %9945 = dma.done %s9941, 8192
        $region60: #{tpu_custom_call.1} parent=55 // pred_fallthru
          _
      $region56: #{tpu_custom_call.1} parent=5 // pred_fallthru
        _
    $region6: #{tpu_custom_call.1} parent=1 // loop_footer
      %s20 = sadd.s32 1, %s16
    $region7: #{tpu_custom_call.1} parent=1 // loop_footer_branch
      %15 = sbr.rel target = $region3
    $region8: #{tpu_custom_call.1} parent=1 // loop_exit
      _
    %9946 = vsyncpa [#allocation5], 1
    %s9947 = scalar_lea.sflag [#allocation5], 1
    %9948 = vsyncpa %s9947, 1

</llo_original>
